<compile_context>
chip_gen: v7x
topology: tpu7x:2x2x1
jax: 0.10.0
libtpu: 0.0.40
codegen_flags: <defaults>
</compile_context>

<pallas_src>
import jax
import jax.numpy as jnp
from jax import lax
from jax.experimental import pallas as pl
from jax.experimental.pallas import tpu as pltpu

T_OUT = 100   # SpeechEncoder always resamples the sequence to 100 steps
LANE = 128


def _round_up(x, m):
    return ((x + m - 1) // m) * m


def _full_spec(shape):
    n = len(shape)
    return pl.BlockSpec(shape, lambda i, _n=n: (0,) * _n)


def _num_tensorcores():
    """Best-effort TensorCores per JAX device (megacore chips -> 2, else 1)."""
    try:
        kind = jax.devices()[0].device_kind.lower()
    except Exception:
        return 1
    if ("v7" in kind) or ("v5p" in kind) or ("v4" in kind):
        return 2
    return 1


# ---------------------------------------------------------------------------
# Fused kernel: conv stack + interpolation + 2-layer bidirectional LSTM
# ---------------------------------------------------------------------------
def _make_speech_encoder_kernel(num_conv, num_lstm_layers, H, Gp):
    D = 2 * H                       # LSTM input width == hidden_dim * num_layers
    L = num_lstm_layers

    def kernel(*refs):
        x_ref = refs[0]                               # (Bt, T_in, Din) f32
        conv_refs = refs[1:1 + 2 * num_conv]          # fused (w, b) per conv layer
        (imat_ref,                                    # (T_OUT, T_in) bf16 interp matrix
         pmat_ref,                                    # (T_OUT, T_OUT) bf16 time-flip matrix
         wih_ref,                                     # (L, 2*Gp, 4*Gp) bf16 fused input->gate
         whh_ref,                                     # (L, Gp, 4*Gp) bf16 fused recurrent
         bl_ref,                                      # (L, 1, 4*Gp) f32 fused gate bias
         o_ref,                                       # (Bt, T_OUT, Gp) f32 output (lane-padded)
         lay_ref,                                     # (Bt, T_OUT, Gp) f32 scratch layer io
         gx_ref) = refs[1 + 2 * num_conv:]            # (Bt, T_OUT, 4*Gp) f32 gate precompute

        Bt, T_in, _ = x_ref.shape
        T = o_ref.shape[1]                            # == T_OUT

        # ---- Stage 1: conv stack (eval-BN folded) + ReLU + concat + resample ----
        # TODO(synk): for long input T the (T, 3*cin) slab could be replaced by 3
        # accumulating matmuls with pltpu.roll-shifted inputs to avoid the 3x copy.
        for b in range(Bt):
            h = x_ref[b]                              # (T_in, Din) f32
            outs = []
            for ci in range(num_conv):
                w_ref = conv_refs[2 * ci]             # (3*cin, hid) bf16 (BN folded)
                bias_ref = conv_refs[2 * ci + 1]      # (1, hid) f32
                cin = h.shape[1]
                zero_row = jnp.zeros((1, cin), jnp.float32)
                h_prev = jnp.concatenate([zero_row, h[:T_in - 1]], axis=0)   # x[t-1]
                h_next = jnp.concatenate([h[1:], zero_row], axis=0)          # x[t+1]
                slab = jnp.concatenate([h_prev, h, h_next], axis=-1).astype(jnp.bfloat16)
                y = jnp.dot(slab, w_ref[...],
                            preferred_element_type=jnp.float32) + bias_ref[...]
                h = jnp.maximum(y, 0.0)
                outs.append(h)
            feat = jnp.concatenate(outs, axis=-1)                            # (T_in, D)
            # F.interpolate(mode='linear', align_corners=False) as a bf16 MXU matmul.
            fi = jnp.dot(imat_ref[...], feat.astype(jnp.bfloat16),
                         preferred_element_type=jnp.float32)                 # (T, D)
            if Gp > D:
                fi = jnp.concatenate(
                    [fi, jnp.zeros((T, Gp - D), jnp.float32)], axis=-1)      # zero lane pad
            lay_ref[b] = fi

        # ---- Stage 2: 2-layer bidirectional LSTM ----
        # Gate lane layout: 4 groups (i, f, g, o) of Gp lanes each; inside a group
        # lanes [0:H] = forward, [H:2H] = reverse, rest zero padding.
        for l in range(L):
            dst = o_ref if l == L - 1 else lay_ref

            # Fused x-dependent gate precompute: [x(t) | x(T-1-t)] @ Wih covers all
            # 4 gates x 2 directions; the time flip for the reverse direction is folded
            # in via the anti-diagonal matmul, so the serial loop needs no blend.
            for b in range(Bt):
                xb = lay_ref[b].astype(jnp.bfloat16)                         # (T, Gp)
                xflip = jnp.dot(pmat_ref[...], xb,
                                preferred_element_type=jnp.float32
                                ).astype(jnp.bfloat16)                       # x[T-1-t]
                xc = jnp.concatenate([xb, xflip], axis=-1)                   # (T, 2*Gp)
                gx_ref[b] = (jnp.dot(xc, wih_ref[l],
                                     preferred_element_type=jnp.float32)
                             + bl_ref[l])

            def one_step(s, carry, l=l, dst=dst):
                h, c = carry                                                 # (Bt, Gp) f32
                if Bt == 1:
                    gx_s = gx_ref[0, pl.ds(s, 1), :]                         # (1, 4*Gp)
                else:
                    gx_s = jnp.concatenate(
                        [gx_ref[b, pl.ds(s, 1), :] for b in range(Bt)], axis=0)
                # Single fused recurrent matmul: all gates, both dirs, all rows (K=Gp=128).
                gates = gx_s + jnp.dot(h.astype(jnp.bfloat16), whh_ref[l],
                                       preferred_element_type=jnp.float32)
                i_t = jax.nn.sigmoid(gates[:, 0:Gp])
                f_t = jax.nn.sigmoid(gates[:, Gp:2 * Gp])
                g_t = jnp.tanh(gates[:, 2 * Gp:3 * Gp])
                o_t = jax.nn.sigmoid(gates[:, 3 * Gp:4 * Gp])
                c_new = f_t * c + i_t * g_t
                h_new = o_t * jnp.tanh(c_new)
                h_st = h_new.astype(dst.dtype)
                r = T - 1 - s
                for b in range(Bt):                                          # off critical path
                    dst[b, pl.ds(s, 1), 0:H] = h_st[b:b + 1, 0:H]            # forward h(t=s)
                    dst[b, pl.ds(r, 1), H:D] = h_st[b:b + 1, H:D]            # reverse h(t=T-1-s)
                return (h_new, c_new)

            def two_steps(k, carry):
                carry = one_step(2 * k, carry)
                return one_step(2 * k + 1, carry)

            zeros_state = jnp.zeros((Bt, Gp), jnp.float32)
            init = (zeros_state, zeros_state)
            # h/c carried in vregs (no per-step VMEM state round trips); 2x unroll lets
            # the next step's gx load overlap the previous step's gate math.
            if T % 2 == 0:
                lax.fori_loop(0, T // 2, two_steps, init)
            else:
                lax.fori_loop(0, T, one_step, init)

    return kernel


# ---------------------------------------------------------------------------
# Parameter construction / folding / packing
# ---------------------------------------------------------------------------
def make_interp_matrix(t_in, t_out):
    """F.interpolate(mode='linear', align_corners=False) as a (t_out, t_in) matrix."""
    j = jnp.arange(t_out, dtype=jnp.float32)
    scale = t_in / t_out
    src = jnp.maximum((j + 0.5) * scale - 0.5, 0.0)
    i0 = jnp.clip(jnp.floor(src).astype(jnp.int32), 0, t_in - 1)
    i1 = jnp.minimum(i0 + 1, t_in - 1)
    lam = src - i0.astype(jnp.float32)
    cols = jnp.arange(t_in, dtype=jnp.int32)[None, :]
    w0 = (cols == i0[:, None]).astype(jnp.float32) * (1.0 - lam)[:, None]
    w1 = (cols == i1[:, None]).astype(jnp.float32) * lam[:, None]
    return w0 + w1


def init_params(key, input_dim, hidden_dim, num_layers):
    D = hidden_dim * num_layers
    H = D // 2
    keys = jax.random.split(key, 4 * num_layers + 3)
    conv = []
    for i in range(num_layers):
        cin = input_dim if i == 0 else hidden_dim
        kw, kb, kg, kbeta = keys[4 * i:4 * i + 4]
        w = 0.2 * jax.random.normal(kw, (3, cin, hidden_dim), jnp.float32)  # taps t-1,t,t+1
        b = 0.1 * jax.random.normal(kb, (hidden_dim,), jnp.float32)
        gamma = 1.0 + 0.05 * jax.random.normal(kg, (hidden_dim,), jnp.float32)
        beta = 0.05 * jax.random.normal(kbeta, (hidden_dim,), jnp.float32)
        conv.append(dict(w=w, b=b, gamma=gamma, beta=beta,
                         mean=jnp.zeros((hidden_dim,), jnp.float32),
                         var=jnp.ones((hidden_dim,), jnp.float32)))
    kih, khh, kbl = keys[4 * num_layers:4 * num_layers + 3]
    s = 1.0 / float(H) ** 0.5
    # PyTorch layout: (lstm_layer, direction, 4H, in_dim) / (..., 4H, H); gate order i,f,g,o
    wih = s * jax.random.normal(kih, (2, 2, 4 * H, D), jnp.float32)
    whh = s * jax.random.normal(khh, (2, 2, 4 * H, H), jnp.float32)
    # TODO(synk): PyTorch keeps separate b_ih and b_hh; when porting real weights sum them here.
    bias = s * jax.random.normal(kbl, (2, 2, 4 * H), jnp.float32)
    return {"conv": conv, "lstm": (wih, whh, bias)}


def _prep_conv_params(conv_params):
    """Fold eval-mode BatchNorm into the conv weight/bias and fuse the 3 taps into a
    single (3*cin, hidden) bf16 matrix."""
    # TODO(synk): BN folded with running stats (eval mode); training-mode batch stats not done.
    prepped = []
    for p in conv_params:
        scale = p["gamma"] / jnp.sqrt(p["var"] + 1e-5)
        shift = p["beta"] - p["mean"] * scale
        w_f = p["w"] * scale[None, None, :]                       # (3, cin, hidden)
        b_f = (p["b"] * scale + shift)[None, :]                   # (1, hidden)
        cin = p["w"].shape[1]
        w_cat = w_f.reshape(3 * cin, -1).astype(jnp.bfloat16)
        prepped.append((w_cat, b_f))
    return prepped


def _prep_lstm_params(wih, whh, bias, H, Gp):
    """Pack PyTorch-layout LSTM weights into the compact fused, lane-padded layout.

    Gate columns: 4 groups of Gp lanes (i, f, g, o); inside a group lanes [0:H] are the
    forward direction, [H:2H] the reverse direction.  wih rows [0:2H] consume the
    natural-time input, rows [Gp:Gp+2H] the time-flipped input (reverse direction).
    All padding rows/cols/bias lanes stay exactly zero (required so padded state lanes
    remain zero through the recurrence).
    """
    L = wih.shape[0]
    twoH = 2 * H
    wih_all = jnp.zeros((L, 2 * Gp, 4 * Gp), jnp.float32)
    whh_all = jnp.zeros((L, Gp, 4 * Gp), jnp.float32)
    b_all = jnp.zeros((L, 1, 4 * Gp), jnp.float32)
    for l in range(L):
        for g in range(4):                              # gate order i, f, g, o
            col_f = g * Gp                              # forward lanes of this gate group
            col_r = g * Gp + H                          # reverse lanes of this gate group
            # input -> gate (forward reads natural-time x, reverse reads flipped x)
            wg_f = wih[l, 0, g * H:(g + 1) * H, :]      # (H, 2H)
            wg_r = wih[l, 1, g * H:(g + 1) * H, :]
            wih_all = wih_all.at[l, 0:twoH, col_f:col_f + H].set(wg_f.T)
            wih_all = wih_all.at[l, Gp:Gp + twoH, col_r:col_r + H].set(wg_r.T)
            # hidden -> gate (block diagonal over directions)
            hg_f = whh[l, 0, g * H:(g + 1) * H, :]      # (H, H)
            hg_r = whh[l, 1, g * H:(g + 1) * H, :]
            whh_all = whh_all.at[l, 0:H, col_f:col_f + H].set(hg_f.T)
            whh_all = whh_all.at[l, H:twoH, col_r:col_r + H].set(hg_r.T)
            # bias (b_ih + b_hh summed convention)
            b_all = b_all.at[l, 0, col_f:col_f + H].set(bias[l, 0, g * H:(g + 1) * H])
            b_all = b_all.at[l, 0, col_r:col_r + H].set(bias[l, 1, g * H:(g + 1) * H])
    return wih_all.astype(jnp.bfloat16), whh_all.astype(jnp.bfloat16), b_all


# ---------------------------------------------------------------------------
# Wrapper
# ---------------------------------------------------------------------------
def speech_encoder_forward(x, params, hidden_dim, num_layers=3):
    B, T_in, input_dim = x.shape
    D = hidden_dim * num_layers
    assert D % 2 == 0
    H = D // 2
    Gp = _round_up(D, LANE)                  # compact, lane-padded gate-group / state width

    wih, whh, bias = params["lstm"]
    L = int(wih.shape[0])

    conv_prepped = _prep_conv_params(params["conv"])
    imat = make_interp_matrix(T_in, T_OUT).astype(jnp.bfloat16)
    pmat = jnp.eye(T_OUT, dtype=jnp.float32)[::-1, :].astype(jnp.bfloat16)   # time-flip matrix
    wih_all, whh_all, b_all = _prep_lstm_params(wih, whh, bias, H, Gp)

    # B-tiling: use a real parallel grid on megacore chips (v7x/v5p/v4); keep all rows
    # jointly in one program on single-TC chips (v5e/v6e) so the serial step count stays L*T.
    n_cores = _num_tensorcores()
    n_prog = n_cores if (n_cores > 1 and B >= n_cores) else 1
    Bt = -(-B // n_prog)
    B_pad = Bt * n_prog
    if B_pad != B:
        x = jnp.pad(x, ((0, B_pad - B), (0, 0), (0, 0)))

    args = [x]
    in_specs = [pl.BlockSpec((Bt, T_in, input_dim), lambda i: (i, 0, 0))]
    for w_cat, b_f in conv_prepped:
        args += [w_cat, b_f]
        in_specs += [_full_spec(w_cat.shape), _full_spec(b_f.shape)]
    args += [imat, pmat, wih_all, whh_all, b_all]
    in_specs += [_full_spec(imat.shape), _full_spec(pmat.shape),
                 _full_spec(wih_all.shape), _full_spec(whh_all.shape),
                 _full_spec(b_all.shape)]

    scratch_shapes = [pltpu.VMEM((Bt, T_OUT, Gp), jnp.float32),      # layer input/output
                      pltpu.VMEM((Bt, T_OUT, 4 * Gp), jnp.float32)]  # gate precompute

    # Explicit VMEM budget (per-program footprint; inputs/outputs double-buffered).
    in_bytes = sum(int(a.size) * a.dtype.itemsize for a in args[1:])
    in_bytes += Bt * T_in * input_dim * 4
    out_bytes = Bt * T_OUT * Gp * 4
    scratch_bytes = Bt * T_OUT * Gp * 4 + Bt * T_OUT * 4 * Gp * 4
    vmem_need = 2 * (in_bytes + out_bytes) + scratch_bytes
    vlimit = int(min(64 * 1024 * 1024, max(16 * 1024 * 1024, 2 * vmem_need)))

    kernel = _make_speech_encoder_kernel(len(conv_prepped), L, H, Gp)

    out = pl.pallas_call(
        kernel,
        out_shape=jax.ShapeDtypeStruct((B_pad, T_OUT, Gp), jnp.float32),
        grid_spec=pltpu.PrefetchScalarGridSpec(
            num_scalar_prefetch=0,
            grid=(n_prog,),
            in_specs=in_specs,
            out_specs=pl.BlockSpec((Bt, T_OUT, Gp), lambda i: (i, 0, 0)),
            scratch_shapes=scratch_shapes,
        ),
        compiler_params=pltpu.CompilerParams(
            dimension_semantics=("parallel",),
            vmem_limit_bytes=vlimit),
    )(*args)

    # Kernel output is lane-dense (Gp=128-wide); strip batch/lane padding in XLA.
    # TODO(synk): mask path (pack_padded_sequence / output masking) not implemented;
    # this covers the mask=None forward path.
    return out[:B, :, :D]


if __name__ == "__main__":
    B, T, input_dim = 2, 16, 8
    hidden_dim, num_layers = 16, 3

    key = jax.random.PRNGKey(0)
    kx, kp = jax.random.split(key)
    x = jax.random.normal(kx, (B, T, input_dim), dtype=jnp.float32)
    params = init_params(kp, input_dim, hidden_dim, num_layers)

    out = speech_encoder_forward(x, params, hidden_dim, num_layers)
    out = jax.block_until_ready(out)

    assert out.shape == (B, T_OUT, hidden_dim * num_layers), out.shape
    assert bool(jnp.all(jnp.isfinite(out)))
    print("KERNEL_OK")
</pallas_src>

<mosaic_0001>
module attributes {stable_mosaic.version = 11 : i64} {
  func.func @kernel(%arg0: i32, %arg1: memref<2x16x8xf32, #tpu.memory_space<vmem>>, %arg2: memref<24x16xbf16, #tpu.memory_space<vmem>>, %arg3: memref<1x16xf32, #tpu.memory_space<vmem>>, %arg4: memref<48x16xbf16, #tpu.memory_space<vmem>>, %arg5: memref<1x16xf32, #tpu.memory_space<vmem>>, %arg6: memref<48x16xbf16, #tpu.memory_space<vmem>>, %arg7: memref<1x16xf32, #tpu.memory_space<vmem>>, %arg8: memref<100x16xbf16, #tpu.memory_space<vmem>>, %arg9: memref<100x100xbf16, #tpu.memory_space<vmem>>, %arg10: memref<2x256x512xbf16, #tpu.memory_space<vmem>>, %arg11: memref<2x128x512xbf16, #tpu.memory_space<vmem>>, %arg12: memref<2x1x512xf32, #tpu.memory_space<vmem>>, %arg13: memref<2x100x128xf32, #tpu.memory_space<vmem>>, %arg14: memref<2x100x128xf32, #tpu.memory_space<vmem>>, %arg15: memref<2x100x512xf32, #tpu.memory_space<vmem>>) attributes {dimension_semantics = [#tpu.dimension_semantics<parallel>], iteration_bounds = array<i64: 1>, scalar_prefetch = 0 : i64, scratch_operands = 2 : i64, tpu.core_type = #tpu.core_type<tc>, window_params = [{transform_indices = @transform_0, window_bounds = array<i64: 2, 16, 8>}, {pipeline_mode = #tpu.pipeline_mode<synchronous>, transform_indices = @transform_1, window_bounds = array<i64: 24, 16>}, {pipeline_mode = #tpu.pipeline_mode<synchronous>, transform_indices = @transform_2, window_bounds = array<i64: 1, 16>}, {pipeline_mode = #tpu.pipeline_mode<synchronous>, transform_indices = @transform_3, window_bounds = array<i64: 48, 16>}, {pipeline_mode = #tpu.pipeline_mode<synchronous>, transform_indices = @transform_4, window_bounds = array<i64: 1, 16>}, {pipeline_mode = #tpu.pipeline_mode<synchronous>, transform_indices = @transform_5, window_bounds = array<i64: 48, 16>}, {pipeline_mode = #tpu.pipeline_mode<synchronous>, transform_indices = @transform_6, window_bounds = array<i64: 1, 16>}, {pipeline_mode = #tpu.pipeline_mode<synchronous>, transform_indices = @transform_7, window_bounds = array<i64: 100, 16>}, {pipeline_mode = #tpu.pipeline_mode<synchronous>, transform_indices = @transform_8, window_bounds = array<i64: 100, 100>}, {pipeline_mode = #tpu.pipeline_mode<synchronous>, transform_indices = @transform_9, window_bounds = array<i64: 2, 256, 512>}, {pipeline_mode = #tpu.pipeline_mode<synchronous>, transform_indices = @transform_10, window_bounds = array<i64: 2, 128, 512>}, {pipeline_mode = #tpu.pipeline_mode<synchronous>, transform_indices = @transform_11, window_bounds = array<i64: 2, 1, 512>}, {transform_indices = @transform_12, window_bounds = array<i64: 2, 100, 128>}]} {
    %c0 = arith.constant 0 : index
    %c0_0 = arith.constant 0 : index
    %c0_1 = arith.constant 0 : index
    %0 = vector.load %arg1[%c0, %c0_0, %c0_1] : memref<2x16x8xf32, #tpu.memory_space<vmem>>, vector<1x16x8xf32>
    %1 = vector.shape_cast %0 : vector<1x16x8xf32> to vector<16x8xf32>
    %cst = arith.constant 0.000000e+00 : f32
    %2 = vector.broadcast %cst : f32 to vector<1x8xf32>
    %3 = vector.extract_strided_slice %1 {offsets = [0, 0], sizes = [15, 8], strides = [1, 1]} : vector<16x8xf32> to vector<15x8xf32>
    %4 = tpu.concatenate %2, %3 in 0 : vector<1x8xf32>, vector<15x8xf32> -> vector<16x8xf32>
    %5 = vector.extract_strided_slice %1 {offsets = [1, 0], sizes = [15, 8], strides = [1, 1]} : vector<16x8xf32> to vector<15x8xf32>
    %6 = tpu.concatenate %5, %2 in 0 : vector<15x8xf32>, vector<1x8xf32> -> vector<16x8xf32>
    %7 = tpu.concatenate %4, %1, %6 in 1 : vector<16x8xf32>, vector<16x8xf32>, vector<16x8xf32> -> vector<16x24xf32>
    %8 = arith.truncf %7 : vector<16x24xf32> to vector<16x24xbf16>
    %c0_2 = arith.constant 0 : index
    %c0_3 = arith.constant 0 : index
    %9 = vector.load %arg2[%c0_2, %c0_3] : memref<24x16xbf16, #tpu.memory_space<vmem>>, vector<24x16xbf16>
    %cst_4 = arith.constant dense<0.000000e+00> : vector<16x16xf32>
    %10 = tpu.matmul %8, %9, %cst_4 {dimension_numbers = #tpu.dot_dimension_numbers<[1], [0], [0], [1], [0, 0, 1, 1], [], []>} : vector<16x24xbf16>, vector<24x16xbf16>, vector<16x16xf32> -> vector<16x16xf32>
    %c0_5 = arith.constant 0 : index
    %c0_6 = arith.constant 0 : index
    %11 = vector.load %arg3[%c0_5, %c0_6] : memref<1x16xf32, #tpu.memory_space<vmem>>, vector<1x16xf32>
    %12 = vector.broadcast %11 : vector<1x16xf32> to vector<16x16xf32>
    %13 = arith.addf %10, %12 : vector<16x16xf32>
    %cst_7 = arith.constant 0.000000e+00 : f32
    %14 = vector.broadcast %cst_7 : f32 to vector<16x16xf32>
    %15 = arith.maximumf %13, %14 : vector<16x16xf32>
    %cst_8 = arith.constant 0.000000e+00 : f32
    %16 = vector.broadcast %cst_8 : f32 to vector<1x16xf32>
    %17 = vector.extract_strided_slice %15 {offsets = [0, 0], sizes = [15, 16], strides = [1, 1]} : vector<16x16xf32> to vector<15x16xf32>
    %18 = tpu.concatenate %16, %17 in 0 : vector<1x16xf32>, vector<15x16xf32> -> vector<16x16xf32>
    %19 = vector.extract_strided_slice %15 {offsets = [1, 0], sizes = [15, 16], strides = [1, 1]} : vector<16x16xf32> to vector<15x16xf32>
    %20 = tpu.concatenate %19, %16 in 0 : vector<15x16xf32>, vector<1x16xf32> -> vector<16x16xf32>
    %21 = tpu.concatenate %18, %15, %20 in 1 : vector<16x16xf32>, vector<16x16xf32>, vector<16x16xf32> -> vector<16x48xf32>
    %22 = arith.truncf %21 : vector<16x48xf32> to vector<16x48xbf16>
    %c0_9 = arith.constant 0 : index
    %c0_10 = arith.constant 0 : index
    %23 = vector.load %arg4[%c0_9, %c0_10] : memref<48x16xbf16, #tpu.memory_space<vmem>>, vector<48x16xbf16>
    %cst_11 = arith.constant dense<0.000000e+00> : vector<16x16xf32>
    %24 = tpu.matmul %22, %23, %cst_11 {dimension_numbers = #tpu.dot_dimension_numbers<[1], [0], [0], [1], [0, 0, 1, 1], [], []>} : vector<16x48xbf16>, vector<48x16xbf16>, vector<16x16xf32> -> vector<16x16xf32>
    %c0_12 = arith.constant 0 : index
    %c0_13 = arith.constant 0 : index
    %25 = vector.load %arg5[%c0_12, %c0_13] : memref<1x16xf32, #tpu.memory_space<vmem>>, vector<1x16xf32>
    %26 = vector.broadcast %25 : vector<1x16xf32> to vector<16x16xf32>
    %27 = arith.addf %24, %26 : vector<16x16xf32>
    %cst_14 = arith.constant 0.000000e+00 : f32
    %28 = vector.broadcast %cst_14 : f32 to vector<16x16xf32>
    %29 = arith.maximumf %27, %28 : vector<16x16xf32>
    %cst_15 = arith.constant 0.000000e+00 : f32
    %30 = vector.broadcast %cst_15 : f32 to vector<1x16xf32>
    %31 = vector.extract_strided_slice %29 {offsets = [0, 0], sizes = [15, 16], strides = [1, 1]} : vector<16x16xf32> to vector<15x16xf32>
    %32 = tpu.concatenate %30, %31 in 0 : vector<1x16xf32>, vector<15x16xf32> -> vector<16x16xf32>
    %33 = vector.extract_strided_slice %29 {offsets = [1, 0], sizes = [15, 16], strides = [1, 1]} : vector<16x16xf32> to vector<15x16xf32>
    %34 = tpu.concatenate %33, %30 in 0 : vector<15x16xf32>, vector<1x16xf32> -> vector<16x16xf32>
    %35 = tpu.concatenate %32, %29, %34 in 1 : vector<16x16xf32>, vector<16x16xf32>, vector<16x16xf32> -> vector<16x48xf32>
    %36 = arith.truncf %35 : vector<16x48xf32> to vector<16x48xbf16>
    %c0_16 = arith.constant 0 : index
    %c0_17 = arith.constant 0 : index
    %37 = vector.load %arg6[%c0_16, %c0_17] : memref<48x16xbf16, #tpu.memory_space<vmem>>, vector<48x16xbf16>
    %cst_18 = arith.constant dense<0.000000e+00> : vector<16x16xf32>
    %38 = tpu.matmul %36, %37, %cst_18 {dimension_numbers = #tpu.dot_dimension_numbers<[1], [0], [0], [1], [0, 0, 1, 1], [], []>} : vector<16x48xbf16>, vector<48x16xbf16>, vector<16x16xf32> -> vector<16x16xf32>
    %c0_19 = arith.constant 0 : index
    %c0_20 = arith.constant 0 : index
    %39 = vector.load %arg7[%c0_19, %c0_20] : memref<1x16xf32, #tpu.memory_space<vmem>>, vector<1x16xf32>
    %40 = vector.broadcast %39 : vector<1x16xf32> to vector<16x16xf32>
    %41 = arith.addf %38, %40 : vector<16x16xf32>
    %cst_21 = arith.constant 0.000000e+00 : f32
    %42 = vector.broadcast %cst_21 : f32 to vector<16x16xf32>
    %43 = arith.maximumf %41, %42 : vector<16x16xf32>
    %44 = tpu.concatenate %15, %29, %43 in 1 : vector<16x16xf32>, vector<16x16xf32>, vector<16x16xf32> -> vector<16x48xf32>
    %c0_22 = arith.constant 0 : index
    %c0_23 = arith.constant 0 : index
    %45 = vector.load %arg8[%c0_22, %c0_23] : memref<100x16xbf16, #tpu.memory_space<vmem>>, vector<100x16xbf16>
    %46 = arith.truncf %44 : vector<16x48xf32> to vector<16x48xbf16>
    %cst_24 = arith.constant dense<0.000000e+00> : vector<100x48xf32>
    %47 = tpu.matmul %45, %46, %cst_24 {dimension_numbers = #tpu.dot_dimension_numbers<[1], [0], [0], [1], [0, 0, 1, 1], [], []>} : vector<100x16xbf16>, vector<16x48xbf16>, vector<100x48xf32> -> vector<100x48xf32>
    %cst_25 = arith.constant 0.000000e+00 : f32
    %48 = vector.broadcast %cst_25 : f32 to vector<100x80xf32>
    %49 = tpu.concatenate %47, %48 in 1 : vector<100x48xf32>, vector<100x80xf32> -> vector<100x128xf32>
    %c0_26 = arith.constant 0 : index
    %c0_27 = arith.constant 0 : index
    %c0_28 = arith.constant 0 : index
    %50 = vector.load %arg14[%c0_26, %c0_27, %c0_28] : memref<2x100x128xf32, #tpu.memory_space<vmem>>, vector<1x100x128xf32>
    %51 = vector.shape_cast %50 : vector<1x100x128xf32> to vector<100x128xf32>
    %52 = vector.shape_cast %49 : vector<100x128xf32> to vector<1x100x128xf32>
    tpu.vector_store %arg14[%c0_26, %c0_27, %c0_28], %52 {strides = array<i32>} : memref<2x100x128xf32, #tpu.memory_space<vmem>>, vector<1x100x128xf32>,
    %c1 = arith.constant 1 : index
    %c0_29 = arith.constant 0 : index
    %c0_30 = arith.constant 0 : index
    %53 = vector.load %arg1[%c1, %c0_29, %c0_30] : memref<2x16x8xf32, #tpu.memory_space<vmem>>, vector<1x16x8xf32>
    %54 = vector.shape_cast %53 : vector<1x16x8xf32> to vector<16x8xf32>
    %cst_31 = arith.constant 0.000000e+00 : f32
    %55 = vector.broadcast %cst_31 : f32 to vector<1x8xf32>
    %56 = vector.extract_strided_slice %54 {offsets = [0, 0], sizes = [15, 8], strides = [1, 1]} : vector<16x8xf32> to vector<15x8xf32>
    %57 = tpu.concatenate %55, %56 in 0 : vector<1x8xf32>, vector<15x8xf32> -> vector<16x8xf32>
    %58 = vector.extract_strided_slice %54 {offsets = [1, 0], sizes = [15, 8], strides = [1, 1]} : vector<16x8xf32> to vector<15x8xf32>
    %59 = tpu.concatenate %58, %55 in 0 : vector<15x8xf32>, vector<1x8xf32> -> vector<16x8xf32>
    %60 = tpu.concatenate %57, %54, %59 in 1 : vector<16x8xf32>, vector<16x8xf32>, vector<16x8xf32> -> vector<16x24xf32>
    %61 = arith.truncf %60 : vector<16x24xf32> to vector<16x24xbf16>
    %c0_32 = arith.constant 0 : index
    %c0_33 = arith.constant 0 : index
    %62 = vector.load %arg2[%c0_32, %c0_33] : memref<24x16xbf16, #tpu.memory_space<vmem>>, vector<24x16xbf16>
    %cst_34 = arith.constant dense<0.000000e+00> : vector<16x16xf32>
    %63 = tpu.matmul %61, %62, %cst_34 {dimension_numbers = #tpu.dot_dimension_numbers<[1], [0], [0], [1], [0, 0, 1, 1], [], []>} : vector<16x24xbf16>, vector<24x16xbf16>, vector<16x16xf32> -> vector<16x16xf32>
    %c0_35 = arith.constant 0 : index
    %c0_36 = arith.constant 0 : index
    %64 = vector.load %arg3[%c0_35, %c0_36] : memref<1x16xf32, #tpu.memory_space<vmem>>, vector<1x16xf32>
    %65 = vector.broadcast %64 : vector<1x16xf32> to vector<16x16xf32>
    %66 = arith.addf %63, %65 : vector<16x16xf32>
    %cst_37 = arith.constant 0.000000e+00 : f32
    %67 = vector.broadcast %cst_37 : f32 to vector<16x16xf32>
    %68 = arith.maximumf %66, %67 : vector<16x16xf32>
    %cst_38 = arith.constant 0.000000e+00 : f32
    %69 = vector.broadcast %cst_38 : f32 to vector<1x16xf32>
    %70 = vector.extract_strided_slice %68 {offsets = [0, 0], sizes = [15, 16], strides = [1, 1]} : vector<16x16xf32> to vector<15x16xf32>
    %71 = tpu.concatenate %69, %70 in 0 : vector<1x16xf32>, vector<15x16xf32> -> vector<16x16xf32>
    %72 = vector.extract_strided_slice %68 {offsets = [1, 0], sizes = [15, 16], strides = [1, 1]} : vector<16x16xf32> to vector<15x16xf32>
    %73 = tpu.concatenate %72, %69 in 0 : vector<15x16xf32>, vector<1x16xf32> -> vector<16x16xf32>
    %74 = tpu.concatenate %71, %68, %73 in 1 : vector<16x16xf32>, vector<16x16xf32>, vector<16x16xf32> -> vector<16x48xf32>
    %75 = arith.truncf %74 : vector<16x48xf32> to vector<16x48xbf16>
    %c0_39 = arith.constant 0 : index
    %c0_40 = arith.constant 0 : index
    %76 = vector.load %arg4[%c0_39, %c0_40] : memref<48x16xbf16, #tpu.memory_space<vmem>>, vector<48x16xbf16>
    %cst_41 = arith.constant dense<0.000000e+00> : vector<16x16xf32>
    %77 = tpu.matmul %75, %76, %cst_41 {dimension_numbers = #tpu.dot_dimension_numbers<[1], [0], [0], [1], [0, 0, 1, 1], [], []>} : vector<16x48xbf16>, vector<48x16xbf16>, vector<16x16xf32> -> vector<16x16xf32>
    %c0_42 = arith.constant 0 : index
    %c0_43 = arith.constant 0 : index
    %78 = vector.load %arg5[%c0_42, %c0_43] : memref<1x16xf32, #tpu.memory_space<vmem>>, vector<1x16xf32>
    %79 = vector.broadcast %78 : vector<1x16xf32> to vector<16x16xf32>
    %80 = arith.addf %77, %79 : vector<16x16xf32>
    %cst_44 = arith.constant 0.000000e+00 : f32
    %81 = vector.broadcast %cst_44 : f32 to vector<16x16xf32>
    %82 = arith.maximumf %80, %81 : vector<16x16xf32>
    %cst_45 = arith.constant 0.000000e+00 : f32
    %83 = vector.broadcast %cst_45 : f32 to vector<1x16xf32>
    %84 = vector.extract_strided_slice %82 {offsets = [0, 0], sizes = [15, 16], strides = [1, 1]} : vector<16x16xf32> to vector<15x16xf32>
    %85 = tpu.concatenate %83, %84 in 0 : vector<1x16xf32>, vector<15x16xf32> -> vector<16x16xf32>
    %86 = vector.extract_strided_slice %82 {offsets = [1, 0], sizes = [15, 16], strides = [1, 1]} : vector<16x16xf32> to vector<15x16xf32>
    %87 = tpu.concatenate %86, %83 in 0 : vector<15x16xf32>, vector<1x16xf32> -> vector<16x16xf32>
    %88 = tpu.concatenate %85, %82, %87 in 1 : vector<16x16xf32>, vector<16x16xf32>, vector<16x16xf32> -> vector<16x48xf32>
    %89 = arith.truncf %88 : vector<16x48xf32> to vector<16x48xbf16>
    %c0_46 = arith.constant 0 : index
    %c0_47 = arith.constant 0 : index
    %90 = vector.load %arg6[%c0_46, %c0_47] : memref<48x16xbf16, #tpu.memory_space<vmem>>, vector<48x16xbf16>
    %cst_48 = arith.constant dense<0.000000e+00> : vector<16x16xf32>
    %91 = tpu.matmul %89, %90, %cst_48 {dimension_numbers = #tpu.dot_dimension_numbers<[1], [0], [0], [1], [0, 0, 1, 1], [], []>} : vector<16x48xbf16>, vector<48x16xbf16>, vector<16x16xf32> -> vector<16x16xf32>
    %c0_49 = arith.constant 0 : index
    %c0_50 = arith.constant 0 : index
    %92 = vector.load %arg7[%c0_49, %c0_50] : memref<1x16xf32, #tpu.memory_space<vmem>>, vector<1x16xf32>
    %93 = vector.broadcast %92 : vector<1x16xf32> to vector<16x16xf32>
    %94 = arith.addf %91, %93 : vector<16x16xf32>
    %cst_51 = arith.constant 0.000000e+00 : f32
    %95 = vector.broadcast %cst_51 : f32 to vector<16x16xf32>
    %96 = arith.maximumf %94, %95 : vector<16x16xf32>
    %97 = tpu.concatenate %68, %82, %96 in 1 : vector<16x16xf32>, vector<16x16xf32>, vector<16x16xf32> -> vector<16x48xf32>
    %c0_52 = arith.constant 0 : index
    %c0_53 = arith.constant 0 : index
    %98 = vector.load %arg8[%c0_52, %c0_53] : memref<100x16xbf16, #tpu.memory_space<vmem>>, vector<100x16xbf16>
    %99 = arith.truncf %97 : vector<16x48xf32> to vector<16x48xbf16>
    %cst_54 = arith.constant dense<0.000000e+00> : vector<100x48xf32>
    %100 = tpu.matmul %98, %99, %cst_54 {dimension_numbers = #tpu.dot_dimension_numbers<[1], [0], [0], [1], [0, 0, 1, 1], [], []>} : vector<100x16xbf16>, vector<16x48xbf16>, vector<100x48xf32> -> vector<100x48xf32>
    %cst_55 = arith.constant 0.000000e+00 : f32
    %101 = vector.broadcast %cst_55 : f32 to vector<100x80xf32>
    %102 = tpu.concatenate %100, %101 in 1 : vector<100x48xf32>, vector<100x80xf32> -> vector<100x128xf32>
    %c1_56 = arith.constant 1 : index
    %c0_57 = arith.constant 0 : index
    %c0_58 = arith.constant 0 : index
    %103 = vector.load %arg14[%c1_56, %c0_57, %c0_58] : memref<2x100x128xf32, #tpu.memory_space<vmem>>, vector<1x100x128xf32>
    %104 = vector.shape_cast %103 : vector<1x100x128xf32> to vector<100x128xf32>
    %105 = vector.shape_cast %102 : vector<100x128xf32> to vector<1x100x128xf32>
    tpu.vector_store %arg14[%c1_56, %c0_57, %c0_58], %105 {strides = array<i32>} : memref<2x100x128xf32, #tpu.memory_space<vmem>>, vector<1x100x128xf32>,
    %c0_59 = arith.constant 0 : index
    %c0_60 = arith.constant 0 : index
    %c0_61 = arith.constant 0 : index
    %106 = vector.load %arg14[%c0_59, %c0_60, %c0_61] : memref<2x100x128xf32, #tpu.memory_space<vmem>>, vector<1x100x128xf32>
    %107 = vector.shape_cast %106 : vector<1x100x128xf32> to vector<100x128xf32>
    %108 = arith.truncf %107 : vector<100x128xf32> to vector<100x128xbf16>
    %c0_62 = arith.constant 0 : index
    %c0_63 = arith.constant 0 : index
    %109 = vector.load %arg9[%c0_62, %c0_63] : memref<100x100xbf16, #tpu.memory_space<vmem>>, vector<100x100xbf16>
    %cst_64 = arith.constant dense<0.000000e+00> : vector<100x128xf32>
    %110 = tpu.matmul %109, %108, %cst_64 {dimension_numbers = #tpu.dot_dimension_numbers<[1], [0], [0], [1], [0, 0, 1, 1], [], []>} : vector<100x100xbf16>, vector<100x128xbf16>, vector<100x128xf32> -> vector<100x128xf32>
    %111 = arith.truncf %110 : vector<100x128xf32> to vector<100x128xbf16>
    %112 = tpu.concatenate %108, %111 in 1 : vector<100x128xbf16>, vector<100x128xbf16> -> vector<100x256xbf16>
    %c0_65 = arith.constant 0 : index
    %c0_66 = arith.constant 0 : index
    %c0_67 = arith.constant 0 : index
    %113 = vector.load %arg10[%c0_65, %c0_66, %c0_67] : memref<2x256x512xbf16, #tpu.memory_space<vmem>>, vector<1x256x512xbf16>
    %114 = vector.shape_cast %113 : vector<1x256x512xbf16> to vector<256x512xbf16>
    %cst_68 = arith.constant dense<0.000000e+00> : vector<100x512xf32>
    %115 = tpu.matmul %112, %114, %cst_68 {dimension_numbers = #tpu.dot_dimension_numbers<[1], [0], [0], [1], [0, 0, 1, 1], [], []>} : vector<100x256xbf16>, vector<256x512xbf16>, vector<100x512xf32> -> vector<100x512xf32>
    %c0_69 = arith.constant 0 : index
    %c0_70 = arith.constant 0 : index
    %c0_71 = arith.constant 0 : index
    %116 = vector.load %arg12[%c0_69, %c0_70, %c0_71] : memref<2x1x512xf32, #tpu.memory_space<vmem>>, vector<1x1x512xf32>
    %117 = vector.shape_cast %116 : vector<1x1x512xf32> to vector<1x512xf32>
    %118 = vector.broadcast %117 : vector<1x512xf32> to vector<100x512xf32>
    %119 = arith.addf %115, %118 : vector<100x512xf32>
    %c0_72 = arith.constant 0 : index
    %c0_73 = arith.constant 0 : index
    %c0_74 = arith.constant 0 : index
    %120 = vector.load %arg15[%c0_72, %c0_73, %c0_74] : memref<2x100x512xf32, #tpu.memory_space<vmem>>, vector<1x100x512xf32>
    %121 = vector.shape_cast %120 : vector<1x100x512xf32> to vector<100x512xf32>
    %122 = vector.shape_cast %119 : vector<100x512xf32> to vector<1x100x512xf32>
    tpu.vector_store %arg15[%c0_72, %c0_73, %c0_74], %122 {strides = array<i32>} : memref<2x100x512xf32, #tpu.memory_space<vmem>>, vector<1x100x512xf32>,
    %c1_75 = arith.constant 1 : index
    %c0_76 = arith.constant 0 : index
    %c0_77 = arith.constant 0 : index
    %123 = vector.load %arg14[%c1_75, %c0_76, %c0_77] : memref<2x100x128xf32, #tpu.memory_space<vmem>>, vector<1x100x128xf32>
    %124 = vector.shape_cast %123 : vector<1x100x128xf32> to vector<100x128xf32>
    %125 = arith.truncf %124 : vector<100x128xf32> to vector<100x128xbf16>
    %c0_78 = arith.constant 0 : index
    %c0_79 = arith.constant 0 : index
    %126 = vector.load %arg9[%c0_78, %c0_79] : memref<100x100xbf16, #tpu.memory_space<vmem>>, vector<100x100xbf16>
    %cst_80 = arith.constant dense<0.000000e+00> : vector<100x128xf32>
    %127 = tpu.matmul %126, %125, %cst_80 {dimension_numbers = #tpu.dot_dimension_numbers<[1], [0], [0], [1], [0, 0, 1, 1], [], []>} : vector<100x100xbf16>, vector<100x128xbf16>, vector<100x128xf32> -> vector<100x128xf32>
    %128 = arith.truncf %127 : vector<100x128xf32> to vector<100x128xbf16>
    %129 = tpu.concatenate %125, %128 in 1 : vector<100x128xbf16>, vector<100x128xbf16> -> vector<100x256xbf16>
    %c0_81 = arith.constant 0 : index
    %c0_82 = arith.constant 0 : index
    %c0_83 = arith.constant 0 : index
    %130 = vector.load %arg10[%c0_81, %c0_82, %c0_83] : memref<2x256x512xbf16, #tpu.memory_space<vmem>>, vector<1x256x512xbf16>
    %131 = vector.shape_cast %130 : vector<1x256x512xbf16> to vector<256x512xbf16>
    %cst_84 = arith.constant dense<0.000000e+00> : vector<100x512xf32>
    %132 = tpu.matmul %129, %131, %cst_84 {dimension_numbers = #tpu.dot_dimension_numbers<[1], [0], [0], [1], [0, 0, 1, 1], [], []>} : vector<100x256xbf16>, vector<256x512xbf16>, vector<100x512xf32> -> vector<100x512xf32>
    %c0_85 = arith.constant 0 : index
    %c0_86 = arith.constant 0 : index
    %c0_87 = arith.constant 0 : index
    %133 = vector.load %arg12[%c0_85, %c0_86, %c0_87] : memref<2x1x512xf32, #tpu.memory_space<vmem>>, vector<1x1x512xf32>
    %134 = vector.shape_cast %133 : vector<1x1x512xf32> to vector<1x512xf32>
    %135 = vector.broadcast %134 : vector<1x512xf32> to vector<100x512xf32>
    %136 = arith.addf %132, %135 : vector<100x512xf32>
    %c1_88 = arith.constant 1 : index
    %c0_89 = arith.constant 0 : index
    %c0_90 = arith.constant 0 : index
    %137 = vector.load %arg15[%c1_88, %c0_89, %c0_90] : memref<2x100x512xf32, #tpu.memory_space<vmem>>, vector<1x100x512xf32>
    %138 = vector.shape_cast %137 : vector<1x100x512xf32> to vector<100x512xf32>
    %139 = vector.shape_cast %136 : vector<100x512xf32> to vector<1x100x512xf32>
    tpu.vector_store %arg15[%c1_88, %c0_89, %c0_90], %139 {strides = array<i32>} : memref<2x100x512xf32, #tpu.memory_space<vmem>>, vector<1x100x512xf32>,
    %cst_91 = arith.constant 0.000000e+00 : f32
    %140 = vector.broadcast %cst_91 : f32 to vector<2x128xf32>
    %c0_i32 = arith.constant 0 : i32
    %c50_i32 = arith.constant 50 : i32
    %141 = arith.addi %c0_i32, %c50_i32 : i32
    %c1_i32 = arith.constant 1 : i32
    %142:2 = scf.for %arg16 = %c0_i32 to %141 step %c1_i32 iter_args(%arg17 = %140, %arg18 = %140) -> (vector<2x128xf32>, vector<2x128xf32>)  : i32 {
      %c2_i32 = arith.constant 2 : i32
      %180 = arith.muli %c2_i32, %arg16 : i32
      %c0_130 = arith.constant 0 : index
      %181 = arith.index_cast %180 : i32 to index
      %c0_131 = arith.constant 0 : index
      %182 = vector.load %arg15[%c0_130, %181, %c0_131] : memref<2x100x512xf32, #tpu.memory_space<vmem>>, vector<1x1x512xf32>
      %183 = vector.shape_cast %182 : vector<1x1x512xf32> to vector<1x512xf32>
      %c1_132 = arith.constant 1 : index
      %184 = arith.index_cast %180 : i32 to index
      %c0_133 = arith.constant 0 : index
      %185 = vector.load %arg15[%c1_132, %184, %c0_133] : memref<2x100x512xf32, #tpu.memory_space<vmem>>, vector<1x1x512xf32>
      %186 = vector.shape_cast %185 : vector<1x1x512xf32> to vector<1x512xf32>
      %187 = tpu.concatenate %183, %186 in 0 : vector<1x512xf32>, vector<1x512xf32> -> vector<2x512xf32>
      %188 = arith.truncf %arg17 : vector<2x128xf32> to vector<2x128xbf16>
      %c0_134 = arith.constant 0 : index
      %c0_135 = arith.constant 0 : index
      %c0_136 = arith.constant 0 : index
      %189 = vector.load %arg11[%c0_134, %c0_135, %c0_136] : memref<2x128x512xbf16, #tpu.memory_space<vmem>>, vector<1x128x512xbf16>
      %190 = vector.shape_cast %189 : vector<1x128x512xbf16> to vector<128x512xbf16>
      %cst_137 = arith.constant dense<0.000000e+00> : vector<2x512xf32>
      %191 = tpu.matmul %188, %190, %cst_137 {dimension_numbers = #tpu.dot_dimension_numbers<[1], [0], [0], [1], [0, 0, 1, 1], [], []>} : vector<2x128xbf16>, vector<128x512xbf16>, vector<2x512xf32> -> vector<2x512xf32>
      %192 = arith.addf %187, %191 : vector<2x512xf32>
      %193 = vector.extract_strided_slice %192 {offsets = [0, 0], sizes = [2, 128], strides = [1, 1]} : vector<2x512xf32> to vector<2x128xf32>
      %194 = arith.negf %193 : vector<2x128xf32>
      %195 = math.exp %194 : vector<2x128xf32>
      %cst_138 = arith.constant 1.000000e+00 : f32
      %196 = vector.broadcast %cst_138 : f32 to vector<2x128xf32>
      %197 = arith.addf %196, %195 : vector<2x128xf32>
      %198 = arith.divf %196, %197 : vector<2x128xf32>
      %199 = vector.extract_strided_slice %192 {offsets = [0, 128], sizes = [2, 128], strides = [1, 1]} : vector<2x512xf32> to vector<2x128xf32>
      %200 = arith.negf %199 : vector<2x128xf32>
      %201 = math.exp %200 : vector<2x128xf32>
      %cst_139 = arith.constant 1.000000e+00 : f32
      %202 = vector.broadcast %cst_139 : f32 to vector<2x128xf32>
      %203 = arith.addf %202, %201 : vector<2x128xf32>
      %204 = arith.divf %202, %203 : vector<2x128xf32>
      %205 = vector.extract_strided_slice %192 {offsets = [0, 256], sizes = [2, 128], strides = [1, 1]} : vector<2x512xf32> to vector<2x128xf32>
      %206 = math.tanh %205 : vector<2x128xf32>
      %207 = vector.extract_strided_slice %192 {offsets = [0, 384], sizes = [2, 128], strides = [1, 1]} : vector<2x512xf32> to vector<2x128xf32>
      %208 = arith.negf %207 : vector<2x128xf32>
      %209 = math.exp %208 : vector<2x128xf32>
      %cst_140 = arith.constant 1.000000e+00 : f32
      %210 = vector.broadcast %cst_140 : f32 to vector<2x128xf32>
      %211 = arith.addf %210, %209 : vector<2x128xf32>
      %212 = arith.divf %210, %211 : vector<2x128xf32>
      %213 = arith.mulf %204, %arg18 : vector<2x128xf32>
      %214 = arith.mulf %198, %206 : vector<2x128xf32>
      %215 = arith.addf %213, %214 : vector<2x128xf32>
      %216 = math.tanh %215 : vector<2x128xf32>
      %217 = arith.mulf %212, %216 : vector<2x128xf32>
      %c99_i32 = arith.constant 99 : i32
      %218 = arith.subi %c99_i32, %180 : i32
      %219 = vector.extract_strided_slice %217 {offsets = [0, 0], sizes = [1, 24], strides = [1, 1]} : vector<2x128xf32> to vector<1x24xf32>
      %c0_141 = arith.constant 0 : index
      %220 = arith.index_cast %180 : i32 to index
      %c0_142 = arith.constant 0 : index
      %221 = vector.load %arg14[%c0_141, %220, %c0_142] : memref<2x100x128xf32, #tpu.memory_space<vmem>>, vector<1x1x24xf32>
      %222 = vector.shape_cast %221 : vector<1x1x24xf32> to vector<1x24xf32>
      %223 = vector.shape_cast %219 : vector<1x24xf32> to vector<1x1x24xf32>
      tpu.vector_store %arg14[%c0_141, %220, %c0_142], %223 {strides = array<i32>} : memref<2x100x128xf32, #tpu.memory_space<vmem>>, vector<1x1x24xf32>,
      %224 = vector.extract_strided_slice %217 {offsets = [0, 24], sizes = [1, 24], strides = [1, 1]} : vector<2x128xf32> to vector<1x24xf32>
      %c0_143 = arith.constant 0 : index
      %225 = arith.index_cast %218 : i32 to index
      %c24 = arith.constant 24 : index
      %226 = vector.load %arg14[%c0_143, %225, %c24] : memref<2x100x128xf32, #tpu.memory_space<vmem>>, vector<1x1x24xf32>
      %227 = vector.shape_cast %226 : vector<1x1x24xf32> to vector<1x24xf32>
      %228 = vector.shape_cast %224 : vector<1x24xf32> to vector<1x1x24xf32>
      tpu.vector_store %arg14[%c0_143, %225, %c24], %228 {strides = array<i32>} : memref<2x100x128xf32, #tpu.memory_space<vmem>>, vector<1x1x24xf32>,
      %229 = vector.extract_strided_slice %217 {offsets = [1, 0], sizes = [1, 24], strides = [1, 1]} : vector<2x128xf32> to vector<1x24xf32>
      %c1_144 = arith.constant 1 : index
      %230 = arith.index_cast %180 : i32 to index
      %c0_145 = arith.constant 0 : index
      %231 = vector.load %arg14[%c1_144, %230, %c0_145] : memref<2x100x128xf32, #tpu.memory_space<vmem>>, vector<1x1x24xf32>
      %232 = vector.shape_cast %231 : vector<1x1x24xf32> to vector<1x24xf32>
      %233 = vector.shape_cast %229 : vector<1x24xf32> to vector<1x1x24xf32>
      tpu.vector_store %arg14[%c1_144, %230, %c0_145], %233 {strides = array<i32>} : memref<2x100x128xf32, #tpu.memory_space<vmem>>, vector<1x1x24xf32>,
      %234 = vector.extract_strided_slice %217 {offsets = [1, 24], sizes = [1, 24], strides = [1, 1]} : vector<2x128xf32> to vector<1x24xf32>
      %c1_146 = arith.constant 1 : index
      %235 = arith.index_cast %218 : i32 to index
      %c24_147 = arith.constant 24 : index
      %236 = vector.load %arg14[%c1_146, %235, %c24_147] : memref<2x100x128xf32, #tpu.memory_space<vmem>>, vector<1x1x24xf32>
      %237 = vector.shape_cast %236 : vector<1x1x24xf32> to vector<1x24xf32>
      %238 = vector.shape_cast %234 : vector<1x24xf32> to vector<1x1x24xf32>
      tpu.vector_store %arg14[%c1_146, %235, %c24_147], %238 {strides = array<i32>} : memref<2x100x128xf32, #tpu.memory_space<vmem>>, vector<1x1x24xf32>,
      %c2_i32_148 = arith.constant 2 : i32
      %239 = arith.muli %c2_i32_148, %arg16 : i32
      %c1_i32_149 = arith.constant 1 : i32
      %240 = arith.addi %239, %c1_i32_149 : i32
      %c0_150 = arith.constant 0 : index
      %241 = arith.index_cast %240 : i32 to index
      %c0_151 = arith.constant 0 : index
      %242 = vector.load %arg15[%c0_150, %241, %c0_151] : memref<2x100x512xf32, #tpu.memory_space<vmem>>, vector<1x1x512xf32>
      %243 = vector.shape_cast %242 : vector<1x1x512xf32> to vector<1x512xf32>
      %c1_152 = arith.constant 1 : index
      %244 = arith.index_cast %240 : i32 to index
      %c0_153 = arith.constant 0 : index
      %245 = vector.load %arg15[%c1_152, %244, %c0_153] : memref<2x100x512xf32, #tpu.memory_space<vmem>>, vector<1x1x512xf32>
      %246 = vector.shape_cast %245 : vector<1x1x512xf32> to vector<1x512xf32>
      %247 = tpu.concatenate %243, %246 in 0 : vector<1x512xf32>, vector<1x512xf32> -> vector<2x512xf32>
      %248 = arith.truncf %217 : vector<2x128xf32> to vector<2x128xbf16>
      %c0_154 = arith.constant 0 : index
      %c0_155 = arith.constant 0 : index
      %c0_156 = arith.constant 0 : index
      %249 = vector.load %arg11[%c0_154, %c0_155, %c0_156] : memref<2x128x512xbf16, #tpu.memory_space<vmem>>, vector<1x128x512xbf16>
      %250 = vector.shape_cast %249 : vector<1x128x512xbf16> to vector<128x512xbf16>
      %cst_157 = arith.constant dense<0.000000e+00> : vector<2x512xf32>
      %251 = tpu.matmul %248, %250, %cst_157 {dimension_numbers = #tpu.dot_dimension_numbers<[1], [0], [0], [1], [0, 0, 1, 1], [], []>} : vector<2x128xbf16>, vector<128x512xbf16>, vector<2x512xf32> -> vector<2x512xf32>
      %252 = arith.addf %247, %251 : vector<2x512xf32>
      %253 = vector.extract_strided_slice %252 {offsets = [0, 0], sizes = [2, 128], strides = [1, 1]} : vector<2x512xf32> to vector<2x128xf32>
      %254 = arith.negf %253 : vector<2x128xf32>
      %255 = math.exp %254 : vector<2x128xf32>
      %cst_158 = arith.constant 1.000000e+00 : f32
      %256 = vector.broadcast %cst_158 : f32 to vector<2x128xf32>
      %257 = arith.addf %256, %255 : vector<2x128xf32>
      %258 = arith.divf %256, %257 : vector<2x128xf32>
      %259 = vector.extract_strided_slice %252 {offsets = [0, 128], sizes = [2, 128], strides = [1, 1]} : vector<2x512xf32> to vector<2x128xf32>
      %260 = arith.negf %259 : vector<2x128xf32>
      %261 = math.exp %260 : vector<2x128xf32>
      %cst_159 = arith.constant 1.000000e+00 : f32
      %262 = vector.broadcast %cst_159 : f32 to vector<2x128xf32>
      %263 = arith.addf %262, %261 : vector<2x128xf32>
      %264 = arith.divf %262, %263 : vector<2x128xf32>
      %265 = vector.extract_strided_slice %252 {offsets = [0, 256], sizes = [2, 128], strides = [1, 1]} : vector<2x512xf32> to vector<2x128xf32>
      %266 = math.tanh %265 : vector<2x128xf32>
      %267 = vector.extract_strided_slice %252 {offsets = [0, 384], sizes = [2, 128], strides = [1, 1]} : vector<2x512xf32> to vector<2x128xf32>
      %268 = arith.negf %267 : vector<2x128xf32>
      %269 = math.exp %268 : vector<2x128xf32>
      %cst_160 = arith.constant 1.000000e+00 : f32
      %270 = vector.broadcast %cst_160 : f32 to vector<2x128xf32>
      %271 = arith.addf %270, %269 : vector<2x128xf32>
      %272 = arith.divf %270, %271 : vector<2x128xf32>
      %273 = arith.mulf %264, %215 : vector<2x128xf32>
      %274 = arith.mulf %258, %266 : vector<2x128xf32>
      %275 = arith.addf %273, %274 : vector<2x128xf32>
      %276 = math.tanh %275 : vector<2x128xf32>
      %277 = arith.mulf %272, %276 : vector<2x128xf32>
      %c99_i32_161 = arith.constant 99 : i32
      %278 = arith.subi %c99_i32_161, %240 : i32
      %279 = vector.extract_strided_slice %277 {offsets = [0, 0], sizes = [1, 24], strides = [1, 1]} : vector<2x128xf32> to vector<1x24xf32>
      %c0_162 = arith.constant 0 : index
      %280 = arith.index_cast %240 : i32 to index
      %c0_163 = arith.constant 0 : index
      %281 = vector.load %arg14[%c0_162, %280, %c0_163] : memref<2x100x128xf32, #tpu.memory_space<vmem>>, vector<1x1x24xf32>
      %282 = vector.shape_cast %281 : vector<1x1x24xf32> to vector<1x24xf32>
      %283 = vector.shape_cast %279 : vector<1x24xf32> to vector<1x1x24xf32>
      tpu.vector_store %arg14[%c0_162, %280, %c0_163], %283 {strides = array<i32>} : memref<2x100x128xf32, #tpu.memory_space<vmem>>, vector<1x1x24xf32>,
      %284 = vector.extract_strided_slice %277 {offsets = [0, 24], sizes = [1, 24], strides = [1, 1]} : vector<2x128xf32> to vector<1x24xf32>
      %c0_164 = arith.constant 0 : index
      %285 = arith.index_cast %278 : i32 to index
      %c24_165 = arith.constant 24 : index
      %286 = vector.load %arg14[%c0_164, %285, %c24_165] : memref<2x100x128xf32, #tpu.memory_space<vmem>>, vector<1x1x24xf32>
      %287 = vector.shape_cast %286 : vector<1x1x24xf32> to vector<1x24xf32>
      %288 = vector.shape_cast %284 : vector<1x24xf32> to vector<1x1x24xf32>
      tpu.vector_store %arg14[%c0_164, %285, %c24_165], %288 {strides = array<i32>} : memref<2x100x128xf32, #tpu.memory_space<vmem>>, vector<1x1x24xf32>,
      %289 = vector.extract_strided_slice %277 {offsets = [1, 0], sizes = [1, 24], strides = [1, 1]} : vector<2x128xf32> to vector<1x24xf32>
      %c1_166 = arith.constant 1 : index
      %290 = arith.index_cast %240 : i32 to index
      %c0_167 = arith.constant 0 : index
      %291 = vector.load %arg14[%c1_166, %290, %c0_167] : memref<2x100x128xf32, #tpu.memory_space<vmem>>, vector<1x1x24xf32>
      %292 = vector.shape_cast %291 : vector<1x1x24xf32> to vector<1x24xf32>
      %293 = vector.shape_cast %289 : vector<1x24xf32> to vector<1x1x24xf32>
      tpu.vector_store %arg14[%c1_166, %290, %c0_167], %293 {strides = array<i32>} : memref<2x100x128xf32, #tpu.memory_space<vmem>>, vector<1x1x24xf32>,
      %294 = vector.extract_strided_slice %277 {offsets = [1, 24], sizes = [1, 24], strides = [1, 1]} : vector<2x128xf32> to vector<1x24xf32>
      %c1_168 = arith.constant 1 : index
      %295 = arith.index_cast %278 : i32 to index
      %c24_169 = arith.constant 24 : index
      %296 = vector.load %arg14[%c1_168, %295, %c24_169] : memref<2x100x128xf32, #tpu.memory_space<vmem>>, vector<1x1x24xf32>
      %297 = vector.shape_cast %296 : vector<1x1x24xf32> to vector<1x24xf32>
      %298 = vector.shape_cast %294 : vector<1x24xf32> to vector<1x1x24xf32>
      tpu.vector_store %arg14[%c1_168, %295, %c24_169], %298 {strides = array<i32>} : memref<2x100x128xf32, #tpu.memory_space<vmem>>, vector<1x1x24xf32>,
      scf.yield %277, %275 : vector<2x128xf32>, vector<2x128xf32>
    }
    %c50_i32_92 = arith.constant 50 : i32
    %c0_93 = arith.constant 0 : index
    %c0_94 = arith.constant 0 : index
    %c0_95 = arith.constant 0 : index
    %143 = vector.load %arg14[%c0_93, %c0_94, %c0_95] : memref<2x100x128xf32, #tpu.memory_space<vmem>>, vector<1x100x128xf32>
    %144 = vector.shape_cast %143 : vector<1x100x128xf32> to vector<100x128xf32>
    %145 = arith.truncf %144 : vector<100x128xf32> to vector<100x128xbf16>
    %c0_96 = arith.constant 0 : index
    %c0_97 = arith.constant 0 : index
    %146 = vector.load %arg9[%c0_96, %c0_97] : memref<100x100xbf16, #tpu.memory_space<vmem>>, vector<100x100xbf16>
    %cst_98 = arith.constant dense<0.000000e+00> : vector<100x128xf32>
    %147 = tpu.matmul %146, %145, %cst_98 {dimension_numbers = #tpu.dot_dimension_numbers<[1], [0], [0], [1], [0, 0, 1, 1], [], []>} : vector<100x100xbf16>, vector<100x128xbf16>, vector<100x128xf32> -> vector<100x128xf32>
    %148 = arith.truncf %147 : vector<100x128xf32> to vector<100x128xbf16>
    %149 = tpu.concatenate %145, %148 in 1 : vector<100x128xbf16>, vector<100x128xbf16> -> vector<100x256xbf16>
    %c1_99 = arith.constant 1 : index
    %c0_100 = arith.constant 0 : index
    %c0_101 = arith.constant 0 : index
    %150 = vector.load %arg10[%c1_99, %c0_100, %c0_101] : memref<2x256x512xbf16, #tpu.memory_space<vmem>>, vector<1x256x512xbf16>
    %151 = vector.shape_cast %150 : vector<1x256x512xbf16> to vector<256x512xbf16>
    %cst_102 = arith.constant dense<0.000000e+00> : vector<100x512xf32>
    %152 = tpu.matmul %149, %151, %cst_102 {dimension_numbers = #tpu.dot_dimension_numbers<[1], [0], [0], [1], [0, 0, 1, 1], [], []>} : vector<100x256xbf16>, vector<256x512xbf16>, vector<100x512xf32> -> vector<100x512xf32>
    %c1_103 = arith.constant 1 : index
    %c0_104 = arith.constant 0 : index
    %c0_105 = arith.constant 0 : index
    %153 = vector.load %arg12[%c1_103, %c0_104, %c0_105] : memref<2x1x512xf32, #tpu.memory_space<vmem>>, vector<1x1x512xf32>
    %154 = vector.shape_cast %153 : vector<1x1x512xf32> to vector<1x512xf32>
    %155 = vector.broadcast %154 : vector<1x512xf32> to vector<100x512xf32>
    %156 = arith.addf %152, %155 : vector<100x512xf32>
    %c0_106 = arith.constant 0 : index
    %c0_107 = arith.constant 0 : index
    %c0_108 = arith.constant 0 : index
    %157 = vector.load %arg15[%c0_106, %c0_107, %c0_108] : memref<2x100x512xf32, #tpu.memory_space<vmem>>, vector<1x100x512xf32>
    %158 = vector.shape_cast %157 : vector<1x100x512xf32> to vector<100x512xf32>
    %159 = vector.shape_cast %156 : vector<100x512xf32> to vector<1x100x512xf32>
    tpu.vector_store %arg15[%c0_106, %c0_107, %c0_108], %159 {strides = array<i32>} : memref<2x100x512xf32, #tpu.memory_space<vmem>>, vector<1x100x512xf32>,
    %c1_109 = arith.constant 1 : index
    %c0_110 = arith.constant 0 : index
    %c0_111 = arith.constant 0 : index
    %160 = vector.load %arg14[%c1_109, %c0_110, %c0_111] : memref<2x100x128xf32, #tpu.memory_space<vmem>>, vector<1x100x128xf32>
    %161 = vector.shape_cast %160 : vector<1x100x128xf32> to vector<100x128xf32>
    %162 = arith.truncf %161 : vector<100x128xf32> to vector<100x128xbf16>
    %c0_112 = arith.constant 0 : index
    %c0_113 = arith.constant 0 : index
    %163 = vector.load %arg9[%c0_112, %c0_113] : memref<100x100xbf16, #tpu.memory_space<vmem>>, vector<100x100xbf16>
    %cst_114 = arith.constant dense<0.000000e+00> : vector<100x128xf32>
    %164 = tpu.matmul %163, %162, %cst_114 {dimension_numbers = #tpu.dot_dimension_numbers<[1], [0], [0], [1], [0, 0, 1, 1], [], []>} : vector<100x100xbf16>, vector<100x128xbf16>, vector<100x128xf32> -> vector<100x128xf32>
    %165 = arith.truncf %164 : vector<100x128xf32> to vector<100x128xbf16>
    %166 = tpu.concatenate %162, %165 in 1 : vector<100x128xbf16>, vector<100x128xbf16> -> vector<100x256xbf16>
    %c1_115 = arith.constant 1 : index
    %c0_116 = arith.constant 0 : index
    %c0_117 = arith.constant 0 : index
    %167 = vector.load %arg10[%c1_115, %c0_116, %c0_117] : memref<2x256x512xbf16, #tpu.memory_space<vmem>>, vector<1x256x512xbf16>
    %168 = vector.shape_cast %167 : vector<1x256x512xbf16> to vector<256x512xbf16>
    %cst_118 = arith.constant dense<0.000000e+00> : vector<100x512xf32>
    %169 = tpu.matmul %166, %168, %cst_118 {dimension_numbers = #tpu.dot_dimension_numbers<[1], [0], [0], [1], [0, 0, 1, 1], [], []>} : vector<100x256xbf16>, vector<256x512xbf16>, vector<100x512xf32> -> vector<100x512xf32>
    %c1_119 = arith.constant 1 : index
    %c0_120 = arith.constant 0 : index
    %c0_121 = arith.constant 0 : index
    %170 = vector.load %arg12[%c1_119, %c0_120, %c0_121] : memref<2x1x512xf32, #tpu.memory_space<vmem>>, vector<1x1x512xf32>
    %171 = vector.shape_cast %170 : vector<1x1x512xf32> to vector<1x512xf32>
    %172 = vector.broadcast %171 : vector<1x512xf32> to vector<100x512xf32>
    %173 = arith.addf %169, %172 : vector<100x512xf32>
    %c1_122 = arith.constant 1 : index
    %c0_123 = arith.constant 0 : index
    %c0_124 = arith.constant 0 : index
    %174 = vector.load %arg15[%c1_122, %c0_123, %c0_124] : memref<2x100x512xf32, #tpu.memory_space<vmem>>, vector<1x100x512xf32>
    %175 = vector.shape_cast %174 : vector<1x100x512xf32> to vector<100x512xf32>
    %176 = vector.shape_cast %173 : vector<100x512xf32> to vector<1x100x512xf32>
    tpu.vector_store %arg15[%c1_122, %c0_123, %c0_124], %176 {strides = array<i32>} : memref<2x100x512xf32, #tpu.memory_space<vmem>>, vector<1x100x512xf32>,
    %cst_125 = arith.constant 0.000000e+00 : f32
    %177 = vector.broadcast %cst_125 : f32 to vector<2x128xf32>
    %c0_i32_126 = arith.constant 0 : i32
    %c50_i32_127 = arith.constant 50 : i32
    %178 = arith.addi %c0_i32_126, %c50_i32_127 : i32
    %c1_i32_128 = arith.constant 1 : i32
    %179:2 = scf.for %arg16 = %c0_i32_126 to %178 step %c1_i32_128 iter_args(%arg17 = %177, %arg18 = %177) -> (vector<2x128xf32>, vector<2x128xf32>)  : i32 {
      %c2_i32 = arith.constant 2 : i32
      %180 = arith.muli %c2_i32, %arg16 : i32
      %c0_130 = arith.constant 0 : index
      %181 = arith.index_cast %180 : i32 to index
      %c0_131 = arith.constant 0 : index
      %182 = vector.load %arg15[%c0_130, %181, %c0_131] : memref<2x100x512xf32, #tpu.memory_space<vmem>>, vector<1x1x512xf32>
      %183 = vector.shape_cast %182 : vector<1x1x512xf32> to vector<1x512xf32>
      %c1_132 = arith.constant 1 : index
      %184 = arith.index_cast %180 : i32 to index
      %c0_133 = arith.constant 0 : index
      %185 = vector.load %arg15[%c1_132, %184, %c0_133] : memref<2x100x512xf32, #tpu.memory_space<vmem>>, vector<1x1x512xf32>
      %186 = vector.shape_cast %185 : vector<1x1x512xf32> to vector<1x512xf32>
      %187 = tpu.concatenate %183, %186 in 0 : vector<1x512xf32>, vector<1x512xf32> -> vector<2x512xf32>
      %188 = arith.truncf %arg17 : vector<2x128xf32> to vector<2x128xbf16>
      %c1_134 = arith.constant 1 : index
      %c0_135 = arith.constant 0 : index
      %c0_136 = arith.constant 0 : index
      %189 = vector.load %arg11[%c1_134, %c0_135, %c0_136] : memref<2x128x512xbf16, #tpu.memory_space<vmem>>, vector<1x128x512xbf16>
      %190 = vector.shape_cast %189 : vector<1x128x512xbf16> to vector<128x512xbf16>
      %cst_137 = arith.constant dense<0.000000e+00> : vector<2x512xf32>
      %191 = tpu.matmul %188, %190, %cst_137 {dimension_numbers = #tpu.dot_dimension_numbers<[1], [0], [0], [1], [0, 0, 1, 1], [], []>} : vector<2x128xbf16>, vector<128x512xbf16>, vector<2x512xf32> -> vector<2x512xf32>
      %192 = arith.addf %187, %191 : vector<2x512xf32>
      %193 = vector.extract_strided_slice %192 {offsets = [0, 0], sizes = [2, 128], strides = [1, 1]} : vector<2x512xf32> to vector<2x128xf32>
      %194 = arith.negf %193 : vector<2x128xf32>
      %195 = math.exp %194 : vector<2x128xf32>
      %cst_138 = arith.constant 1.000000e+00 : f32
      %196 = vector.broadcast %cst_138 : f32 to vector<2x128xf32>
      %197 = arith.addf %196, %195 : vector<2x128xf32>
      %198 = arith.divf %196, %197 : vector<2x128xf32>
      %199 = vector.extract_strided_slice %192 {offsets = [0, 128], sizes = [2, 128], strides = [1, 1]} : vector<2x512xf32> to vector<2x128xf32>
      %200 = arith.negf %199 : vector<2x128xf32>
      %201 = math.exp %200 : vector<2x128xf32>
      %cst_139 = arith.constant 1.000000e+00 : f32
      %202 = vector.broadcast %cst_139 : f32 to vector<2x128xf32>
      %203 = arith.addf %202, %201 : vector<2x128xf32>
      %204 = arith.divf %202, %203 : vector<2x128xf32>
      %205 = vector.extract_strided_slice %192 {offsets = [0, 256], sizes = [2, 128], strides = [1, 1]} : vector<2x512xf32> to vector<2x128xf32>
      %206 = math.tanh %205 : vector<2x128xf32>
      %207 = vector.extract_strided_slice %192 {offsets = [0, 384], sizes = [2, 128], strides = [1, 1]} : vector<2x512xf32> to vector<2x128xf32>
      %208 = arith.negf %207 : vector<2x128xf32>
      %209 = math.exp %208 : vector<2x128xf32>
      %cst_140 = arith.constant 1.000000e+00 : f32
      %210 = vector.broadcast %cst_140 : f32 to vector<2x128xf32>
      %211 = arith.addf %210, %209 : vector<2x128xf32>
      %212 = arith.divf %210, %211 : vector<2x128xf32>
      %213 = arith.mulf %204, %arg18 : vector<2x128xf32>
      %214 = arith.mulf %198, %206 : vector<2x128xf32>
      %215 = arith.addf %213, %214 : vector<2x128xf32>
      %216 = math.tanh %215 : vector<2x128xf32>
      %217 = arith.mulf %212, %216 : vector<2x128xf32>
      %c99_i32 = arith.constant 99 : i32
      %218 = arith.subi %c99_i32, %180 : i32
      %219 = vector.extract_strided_slice %217 {offsets = [0, 0], sizes = [1, 24], strides = [1, 1]} : vector<2x128xf32> to vector<1x24xf32>
      %c0_141 = arith.constant 0 : index
      %220 = arith.index_cast %180 : i32 to index
      %c0_142 = arith.constant 0 : index
      %221 = vector.load %arg13[%c0_141, %220, %c0_142] : memref<2x100x128xf32, #tpu.memory_space<vmem>>, vector<1x1x24xf32>
      %222 = vector.shape_cast %221 : vector<1x1x24xf32> to vector<1x24xf32>
      %223 = vector.shape_cast %219 : vector<1x24xf32> to vector<1x1x24xf32>
      tpu.vector_store %arg13[%c0_141, %220, %c0_142], %223 {strides = array<i32>} : memref<2x100x128xf32, #tpu.memory_space<vmem>>, vector<1x1x24xf32>,
      %224 = vector.extract_strided_slice %217 {offsets = [0, 24], sizes = [1, 24], strides = [1, 1]} : vector<2x128xf32> to vector<1x24xf32>
      %c0_143 = arith.constant 0 : index
      %225 = arith.index_cast %218 : i32 to index
      %c24 = arith.constant 24 : index
      %226 = vector.load %arg13[%c0_143, %225, %c24] : memref<2x100x128xf32, #tpu.memory_space<vmem>>, vector<1x1x24xf32>
      %227 = vector.shape_cast %226 : vector<1x1x24xf32> to vector<1x24xf32>
      %228 = vector.shape_cast %224 : vector<1x24xf32> to vector<1x1x24xf32>
      tpu.vector_store %arg13[%c0_143, %225, %c24], %228 {strides = array<i32>} : memref<2x100x128xf32, #tpu.memory_space<vmem>>, vector<1x1x24xf32>,
      %229 = vector.extract_strided_slice %217 {offsets = [1, 0], sizes = [1, 24], strides = [1, 1]} : vector<2x128xf32> to vector<1x24xf32>
      %c1_144 = arith.constant 1 : index
      %230 = arith.index_cast %180 : i32 to index
      %c0_145 = arith.constant 0 : index
      %231 = vector.load %arg13[%c1_144, %230, %c0_145] : memref<2x100x128xf32, #tpu.memory_space<vmem>>, vector<1x1x24xf32>
      %232 = vector.shape_cast %231 : vector<1x1x24xf32> to vector<1x24xf32>
      %233 = vector.shape_cast %229 : vector<1x24xf32> to vector<1x1x24xf32>
      tpu.vector_store %arg13[%c1_144, %230, %c0_145], %233 {strides = array<i32>} : memref<2x100x128xf32, #tpu.memory_space<vmem>>, vector<1x1x24xf32>,
      %234 = vector.extract_strided_slice %217 {offsets = [1, 24], sizes = [1, 24], strides = [1, 1]} : vector<2x128xf32> to vector<1x24xf32>
      %c1_146 = arith.constant 1 : index
      %235 = arith.index_cast %218 : i32 to index
      %c24_147 = arith.constant 24 : index
      %236 = vector.load %arg13[%c1_146, %235, %c24_147] : memref<2x100x128xf32, #tpu.memory_space<vmem>>, vector<1x1x24xf32>
      %237 = vector.shape_cast %236 : vector<1x1x24xf32> to vector<1x24xf32>
      %238 = vector.shape_cast %234 : vector<1x24xf32> to vector<1x1x24xf32>
      tpu.vector_store %arg13[%c1_146, %235, %c24_147], %238 {strides = array<i32>} : memref<2x100x128xf32, #tpu.memory_space<vmem>>, vector<1x1x24xf32>,
      %c2_i32_148 = arith.constant 2 : i32
      %239 = arith.muli %c2_i32_148, %arg16 : i32
      %c1_i32_149 = arith.constant 1 : i32
      %240 = arith.addi %239, %c1_i32_149 : i32
      %c0_150 = arith.constant 0 : index
      %241 = arith.index_cast %240 : i32 to index
      %c0_151 = arith.constant 0 : index
      %242 = vector.load %arg15[%c0_150, %241, %c0_151] : memref<2x100x512xf32, #tpu.memory_space<vmem>>, vector<1x1x512xf32>
      %243 = vector.shape_cast %242 : vector<1x1x512xf32> to vector<1x512xf32>
      %c1_152 = arith.constant 1 : index
      %244 = arith.index_cast %240 : i32 to index
      %c0_153 = arith.constant 0 : index
      %245 = vector.load %arg15[%c1_152, %244, %c0_153] : memref<2x100x512xf32, #tpu.memory_space<vmem>>, vector<1x1x512xf32>
      %246 = vector.shape_cast %245 : vector<1x1x512xf32> to vector<1x512xf32>
      %247 = tpu.concatenate %243, %246 in 0 : vector<1x512xf32>, vector<1x512xf32> -> vector<2x512xf32>
      %248 = arith.truncf %217 : vector<2x128xf32> to vector<2x128xbf16>
      %c1_154 = arith.constant 1 : index
      %c0_155 = arith.constant 0 : index
      %c0_156 = arith.constant 0 : index
      %249 = vector.load %arg11[%c1_154, %c0_155, %c0_156] : memref<2x128x512xbf16, #tpu.memory_space<vmem>>, vector<1x128x512xbf16>
      %250 = vector.shape_cast %249 : vector<1x128x512xbf16> to vector<128x512xbf16>
      %cst_157 = arith.constant dense<0.000000e+00> : vector<2x512xf32>
      %251 = tpu.matmul %248, %250, %cst_157 {dimension_numbers = #tpu.dot_dimension_numbers<[1], [0], [0], [1], [0, 0, 1, 1], [], []>} : vector<2x128xbf16>, vector<128x512xbf16>, vector<2x512xf32> -> vector<2x512xf32>
      %252 = arith.addf %247, %251 : vector<2x512xf32>
      %253 = vector.extract_strided_slice %252 {offsets = [0, 0], sizes = [2, 128], strides = [1, 1]} : vector<2x512xf32> to vector<2x128xf32>
      %254 = arith.negf %253 : vector<2x128xf32>
      %255 = math.exp %254 : vector<2x128xf32>
      %cst_158 = arith.constant 1.000000e+00 : f32
      %256 = vector.broadcast %cst_158 : f32 to vector<2x128xf32>
      %257 = arith.addf %256, %255 : vector<2x128xf32>
      %258 = arith.divf %256, %257 : vector<2x128xf32>
      %259 = vector.extract_strided_slice %252 {offsets = [0, 128], sizes = [2, 128], strides = [1, 1]} : vector<2x512xf32> to vector<2x128xf32>
      %260 = arith.negf %259 : vector<2x128xf32>
      %261 = math.exp %260 : vector<2x128xf32>
      %cst_159 = arith.constant 1.000000e+00 : f32
      %262 = vector.broadcast %cst_159 : f32 to vector<2x128xf32>
      %263 = arith.addf %262, %261 : vector<2x128xf32>
      %264 = arith.divf %262, %263 : vector<2x128xf32>
      %265 = vector.extract_strided_slice %252 {offsets = [0, 256], sizes = [2, 128], strides = [1, 1]} : vector<2x512xf32> to vector<2x128xf32>
      %266 = math.tanh %265 : vector<2x128xf32>
      %267 = vector.extract_strided_slice %252 {offsets = [0, 384], sizes = [2, 128], strides = [1, 1]} : vector<2x512xf32> to vector<2x128xf32>
      %268 = arith.negf %267 : vector<2x128xf32>
      %269 = math.exp %268 : vector<2x128xf32>
      %cst_160 = arith.constant 1.000000e+00 : f32
      %270 = vector.broadcast %cst_160 : f32 to vector<2x128xf32>
      %271 = arith.addf %270, %269 : vector<2x128xf32>
      %272 = arith.divf %270, %271 : vector<2x128xf32>
      %273 = arith.mulf %264, %215 : vector<2x128xf32>
      %274 = arith.mulf %258, %266 : vector<2x128xf32>
      %275 = arith.addf %273, %274 : vector<2x128xf32>
      %276 = math.tanh %275 : vector<2x128xf32>
      %277 = arith.mulf %272, %276 : vector<2x128xf32>
      %c99_i32_161 = arith.constant 99 : i32
      %278 = arith.subi %c99_i32_161, %240 : i32
      %279 = vector.extract_strided_slice %277 {offsets = [0, 0], sizes = [1, 24], strides = [1, 1]} : vector<2x128xf32> to vector<1x24xf32>
      %c0_162 = arith.constant 0 : index
      %280 = arith.index_cast %240 : i32 to index
      %c0_163 = arith.constant 0 : index
      %281 = vector.load %arg13[%c0_162, %280, %c0_163] : memref<2x100x128xf32, #tpu.memory_space<vmem>>, vector<1x1x24xf32>
      %282 = vector.shape_cast %281 : vector<1x1x24xf32> to vector<1x24xf32>
      %283 = vector.shape_cast %279 : vector<1x24xf32> to vector<1x1x24xf32>
      tpu.vector_store %arg13[%c0_162, %280, %c0_163], %283 {strides = array<i32>} : memref<2x100x128xf32, #tpu.memory_space<vmem>>, vector<1x1x24xf32>,
      %284 = vector.extract_strided_slice %277 {offsets = [0, 24], sizes = [1, 24], strides = [1, 1]} : vector<2x128xf32> to vector<1x24xf32>
      %c0_164 = arith.constant 0 : index
      %285 = arith.index_cast %278 : i32 to index
      %c24_165 = arith.constant 24 : index
      %286 = vector.load %arg13[%c0_164, %285, %c24_165] : memref<2x100x128xf32, #tpu.memory_space<vmem>>, vector<1x1x24xf32>
      %287 = vector.shape_cast %286 : vector<1x1x24xf32> to vector<1x24xf32>
      %288 = vector.shape_cast %284 : vector<1x24xf32> to vector<1x1x24xf32>
      tpu.vector_store %arg13[%c0_164, %285, %c24_165], %288 {strides = array<i32>} : memref<2x100x128xf32, #tpu.memory_space<vmem>>, vector<1x1x24xf32>,
      %289 = vector.extract_strided_slice %277 {offsets = [1, 0], sizes = [1, 24], strides = [1, 1]} : vector<2x128xf32> to vector<1x24xf32>
      %c1_166 = arith.constant 1 : index
      %290 = arith.index_cast %240 : i32 to index
      %c0_167 = arith.constant 0 : index
      %291 = vector.load %arg13[%c1_166, %290, %c0_167] : memref<2x100x128xf32, #tpu.memory_space<vmem>>, vector<1x1x24xf32>
      %292 = vector.shape_cast %291 : vector<1x1x24xf32> to vector<1x24xf32>
      %293 = vector.shape_cast %289 : vector<1x24xf32> to vector<1x1x24xf32>
      tpu.vector_store %arg13[%c1_166, %290, %c0_167], %293 {strides = array<i32>} : memref<2x100x128xf32, #tpu.memory_space<vmem>>, vector<1x1x24xf32>,
      %294 = vector.extract_strided_slice %277 {offsets = [1, 24], sizes = [1, 24], strides = [1, 1]} : vector<2x128xf32> to vector<1x24xf32>
      %c1_168 = arith.constant 1 : index
      %295 = arith.index_cast %278 : i32 to index
      %c24_169 = arith.constant 24 : index
      %296 = vector.load %arg13[%c1_168, %295, %c24_169] : memref<2x100x128xf32, #tpu.memory_space<vmem>>, vector<1x1x24xf32>
      %297 = vector.shape_cast %296 : vector<1x1x24xf32> to vector<1x24xf32>
      %298 = vector.shape_cast %294 : vector<1x24xf32> to vector<1x1x24xf32>
      tpu.vector_store %arg13[%c1_168, %295, %c24_169], %298 {strides = array<i32>} : memref<2x100x128xf32, #tpu.memory_space<vmem>>, vector<1x1x24xf32>,
      scf.yield %277, %275 : vector<2x128xf32>, vector<2x128xf32>
    }
    %c50_i32_129 = arith.constant 50 : i32
    return
  }
  func.func @transform_0(%arg0: i32) -> (i32, i32, i32) {
    %c0_i32 = arith.constant 0 : i32
    %c0_i32_0 = arith.constant 0 : i32
    %c0_i32_1 = arith.constant 0 : i32
    return %arg0, %c0_i32, %c0_i32_0 : i32, i32, i32
  }
  func.func @transform_1(%arg0: i32) -> (i32, i32) {
    %c0_i32 = arith.constant 0 : i32
    %c0_i32_0 = arith.constant 0 : i32
    %c0_i32_1 = arith.constant 0 : i32
    return %c0_i32, %c0_i32_0 : i32, i32
  }
  func.func @transform_2(%arg0: i32) -> (i32, i32) {
    %c0_i32 = arith.constant 0 : i32
    %c0_i32_0 = arith.constant 0 : i32
    %c0_i32_1 = arith.constant 0 : i32
    return %c0_i32, %c0_i32_0 : i32, i32
  }
  func.func @transform_3(%arg0: i32) -> (i32, i32) {
    %c0_i32 = arith.constant 0 : i32
    %c0_i32_0 = arith.constant 0 : i32
    %c0_i32_1 = arith.constant 0 : i32
    return %c0_i32, %c0_i32_0 : i32, i32
  }
  func.func @transform_4(%arg0: i32) -> (i32, i32) {
    %c0_i32 = arith.constant 0 : i32
    %c0_i32_0 = arith.constant 0 : i32
    %c0_i32_1 = arith.constant 0 : i32
    return %c0_i32, %c0_i32_0 : i32, i32
  }
  func.func @transform_5(%arg0: i32) -> (i32, i32) {
    %c0_i32 = arith.constant 0 : i32
    %c0_i32_0 = arith.constant 0 : i32
    %c0_i32_1 = arith.constant 0 : i32
    return %c0_i32, %c0_i32_0 : i32, i32
  }
  func.func @transform_6(%arg0: i32) -> (i32, i32) {
    %c0_i32 = arith.constant 0 : i32
    %c0_i32_0 = arith.constant 0 : i32
    %c0_i32_1 = arith.constant 0 : i32
    return %c0_i32, %c0_i32_0 : i32, i32
  }
  func.func @transform_7(%arg0: i32) -> (i32, i32) {
    %c0_i32 = arith.constant 0 : i32
    %c0_i32_0 = arith.constant 0 : i32
    %c0_i32_1 = arith.constant 0 : i32
    return %c0_i32, %c0_i32_0 : i32, i32
  }
  func.func @transform_8(%arg0: i32) -> (i32, i32) {
    %c0_i32 = arith.constant 0 : i32
    %c0_i32_0 = arith.constant 0 : i32
    %c0_i32_1 = arith.constant 0 : i32
    return %c0_i32, %c0_i32_0 : i32, i32
  }
  func.func @transform_9(%arg0: i32) -> (i32, i32, i32) {
    %c0_i32 = arith.constant 0 : i32
    %c0_i32_0 = arith.constant 0 : i32
    %c0_i32_1 = arith.constant 0 : i32
    %c0_i32_2 = arith.constant 0 : i32
    return %c0_i32, %c0_i32_0, %c0_i32_1 : i32, i32, i32
  }
  func.func @transform_10(%arg0: i32) -> (i32, i32, i32) {
    %c0_i32 = arith.constant 0 : i32
    %c0_i32_0 = arith.constant 0 : i32
    %c0_i32_1 = arith.constant 0 : i32
    %c0_i32_2 = arith.constant 0 : i32
    return %c0_i32, %c0_i32_0, %c0_i32_1 : i32, i32, i32
  }
  func.func @transform_11(%arg0: i32) -> (i32, i32, i32) {
    %c0_i32 = arith.constant 0 : i32
    %c0_i32_0 = arith.constant 0 : i32
    %c0_i32_1 = arith.constant 0 : i32
    %c0_i32_2 = arith.constant 0 : i32
    return %c0_i32, %c0_i32_0, %c0_i32_1 : i32, i32, i32
  }
  func.func @transform_12(%arg0: i32) -> (i32, i32, i32) {
    %c0_i32 = arith.constant 0 : i32
    %c0_i32_0 = arith.constant 0 : i32
    %c0_i32_1 = arith.constant 0 : i32
    return %arg0, %c0_i32, %c0_i32_0 : i32, i32, i32
  }
}

</mosaic_0001>

<llo_original>
// kernel: tpu_custom_call.1
$region0: #{tpu_custom_call.1}
  #allocation0 [shape = 'u32[]', space=smem, size = 0x4, offset = 0x4, fixed_abs, tag = 'smem constant byte address 0x4 - core index']
  #allocation1 [shape = 'u32[144,128]{1,0:T(1,128)}', space=vmem, size = 0x12000, scoped, tag = 'internal scratch']
  #allocation2 [shape = 'f32[2,100,128]{2,1,0:T(8,128)}', space=vmem, size = 0x1a000, scoped, tag = 'scratch operand']
  #allocation3 [shape = 'f32[2,100,512]{2,1,0:T(8,128)}', space=vmem, size = 0x68000, scoped, tag = 'scratch operand']
  %s0 = inlined_call_operand.vmem [shape: f32[2,16,8], index: 0, kind: input, shape index: {}]
  %s1 = inlined_call_operand.vmem [shape: bf16[24,16], index: 1, kind: input, shape index: {}]
  %s2 = inlined_call_operand.vmem [shape: f32[1,16], index: 2, kind: input, shape index: {}]
  %s3 = inlined_call_operand.vmem [shape: bf16[48,16], index: 3, kind: input, shape index: {}]
  %s4 = inlined_call_operand.vmem [shape: f32[1,16], index: 4, kind: input, shape index: {}]
  %s5 = inlined_call_operand.vmem [shape: bf16[48,16], index: 5, kind: input, shape index: {}]
  %s6 = inlined_call_operand.vmem [shape: f32[1,16], index: 6, kind: input, shape index: {}]
  %s7 = inlined_call_operand.vmem [shape: bf16[100,16], index: 7, kind: input, shape index: {}]
  %s8 = inlined_call_operand.vmem [shape: bf16[100,100], index: 8, kind: input, shape index: {}]
  %s9 = inlined_call_operand.hbm [shape: bf16[2,256,512], index: 9, kind: input, shape index: {}]
  %s10 = inlined_call_operand.hbm [shape: bf16[2,128,512], index: 10, kind: input, shape index: {}]
  %s11 = inlined_call_operand.vmem [shape: f32[2,1,512], index: 11, kind: input, shape index: {}]
  %s12 = inlined_call_operand.vmem [shape: f32[2,100,128], index: 12, kind: output, shape index: {}]
  %s13 = sld [smem:[#allocation0]]
  $region80: #{tpu_custom_call.1} parent=0
    _
  %s15 = ssub.s32 1, %s13
  %s16 = scalar_select 0, %s15, %s13
  $region1: #{tpu_custom_call.1} parent=0
    #allocation4 [shape = 'u8[524288]{0}', space=vmem, size = 0x80000, scoped, tag = 'input window, operand 9, single buffered']
    #allocation5 [shape = 's32[1]{0}', space=sflag, size = 0x4, scoped, tag = 'scoped memory for tpu_custom_call.1']
    #allocation6 [shape = 'u8[262144]{0}', space=vmem, size = 0x40000, scoped, tag = 'input window, operand 10, single buffered']
    #allocation7 [shape = 's32[1]{0}', space=sflag, size = 0x4, scoped, tag = 'scoped memory for tpu_custom_call.1']
    %17 = vsyncpa [#allocation5], 0
    %18 = vsyncpa [#allocation7], 0
    // Predicated region
    $region2: #{tpu_custom_call.1} parent=1 // pred_check
      _
    $region3: #{tpu_custom_call.1} parent=1 // pred_check_branch
      %20 = sbr.rel (0) target = $region5
    $region4: #{tpu_custom_call.1} parent=1 // pred_region
      _
    $region5: #{tpu_custom_call.1} parent=1 // pred_fallthru
      _
    // Predicated region
    $region6: #{tpu_custom_call.1} parent=1 // pred_check
      _
    $region7: #{tpu_custom_call.1} parent=1 // pred_check_branch
      %22 = sbr.rel (0) target = $region9
    $region8: #{tpu_custom_call.1} parent=1 // pred_region
      _
    $region9: #{tpu_custom_call.1} parent=1 // pred_fallthru
      _
    // Predicated region
    $region10: #{tpu_custom_call.1} parent=1 // pred_check
      _
    $region11: #{tpu_custom_call.1} parent=1 // pred_check_branch
      %24 = sbr.rel (0) target = $region13
    $region12: #{tpu_custom_call.1} parent=1 // pred_region
      _
    $region13: #{tpu_custom_call.1} parent=1 // pred_fallthru
      _
    // Predicated region
    $region14: #{tpu_custom_call.1} parent=1 // pred_check
      _
    $region15: #{tpu_custom_call.1} parent=1 // pred_check_branch
      %26 = sbr.rel (0) target = $region17
    $region16: #{tpu_custom_call.1} parent=1 // pred_region
      _
    $region17: #{tpu_custom_call.1} parent=1 // pred_fallthru
      _
    // Predicated region
    $region18: #{tpu_custom_call.1} parent=1 // pred_check
      _
    $region19: #{tpu_custom_call.1} parent=1 // pred_check_branch
      %28 = sbr.rel (0) target = $region21
    $region20: #{tpu_custom_call.1} parent=1 // pred_region
      _
    $region21: #{tpu_custom_call.1} parent=1 // pred_fallthru
      _
    // Predicated region
    $region22: #{tpu_custom_call.1} parent=1 // pred_check
      _
    $region23: #{tpu_custom_call.1} parent=1 // pred_check_branch
      %30 = sbr.rel (0) target = $region25
    $region24: #{tpu_custom_call.1} parent=1 // pred_region
      _
    $region25: #{tpu_custom_call.1} parent=1 // pred_fallthru
      _
    // Predicated region
    $region26: #{tpu_custom_call.1} parent=1 // pred_check
      _
    $region27: #{tpu_custom_call.1} parent=1 // pred_check_branch
      %32 = sbr.rel (0) target = $region29
    $region28: #{tpu_custom_call.1} parent=1 // pred_region
      _
    $region29: #{tpu_custom_call.1} parent=1 // pred_fallthru
      _
    // Predicated region
    $region30: #{tpu_custom_call.1} parent=1 // pred_check
      _
    $region31: #{tpu_custom_call.1} parent=1 // pred_check_branch
      %34 = sbr.rel (0) target = $region33
    $region32: #{tpu_custom_call.1} parent=1 // pred_region
      _
    $region33: #{tpu_custom_call.1} parent=1 // pred_fallthru
      _
    // Predicated region
    $region34: #{tpu_custom_call.1} parent=1 // pred_check
      _
    $region35: #{tpu_custom_call.1} parent=1 // pred_check_branch
      %36 = sbr.rel (0) target = $region37
    $region36: #{tpu_custom_call.1} parent=1 // pred_region
      _
    $region37: #{tpu_custom_call.1} parent=1 // pred_fallthru
      _
    // Predicated region
    $region38: #{tpu_custom_call.1} parent=1 // pred_check
      _
    $region39: #{tpu_custom_call.1} parent=1 // pred_check_branch
      %38 = sbr.rel (0) target = $region41
    $region40: #{tpu_custom_call.1} parent=1 // pred_region
      %s40 = ssub.s32 16384, 16384
      %41 = vsyncadd [#allocation5], %s40
      %s42 = sshll.u32 [#allocation4], 4
      %s43 = int_to_ptr.vmem [resolvable:$true] %s42
      %48 = dma.hbm_to_vmem [thread:$0]  %s9, 16384, %s43, [#allocation5], 256, 256, 16
    $region41: #{tpu_custom_call.1} parent=1 // pred_fallthru
      _
    // Predicated region
    $region42: #{tpu_custom_call.1} parent=1 // pred_check
      _
    $region43: #{tpu_custom_call.1} parent=1 // pred_check_branch
      %50 = sbr.rel (0) target = $region45
    $region44: #{tpu_custom_call.1} parent=1 // pred_region
      %s52 = ssub.s32 8192, 8192
      %53 = vsyncadd [#allocation7], %s52
      %s54 = sshll.u32 [#allocation6], 4
      %s55 = int_to_ptr.vmem [resolvable:$true] %s54
      %60 = dma.hbm_to_vmem [thread:$0]  %s10, 8192, %s55, [#allocation7], 256, 256, 16
    $region45: #{tpu_custom_call.1} parent=1 // pred_fallthru
      _
    // Predicated region
    $region46: #{tpu_custom_call.1} parent=1 // pred_check
      _
    $region47: #{tpu_custom_call.1} parent=1 // pred_check_branch
      %62 = sbr.rel (0) target = $region49
    $region48: #{tpu_custom_call.1} parent=1 // pred_region
      _
    $region49: #{tpu_custom_call.1} parent=1 // pred_fallthru
      _
    // Predicated region
    $region50: #{tpu_custom_call.1} parent=1 // pred_check
      _
    $region51: #{tpu_custom_call.1} parent=1 // pred_check_branch
      %64 = sbr.rel (0) target = $region53
    $region52: #{tpu_custom_call.1} parent=1 // pred_region
      %65 = dma.done [#allocation5], 16384
    $region53: #{tpu_custom_call.1} parent=1 // pred_fallthru
      _
    // Predicated region
    $region54: #{tpu_custom_call.1} parent=1 // pred_check
      _
    $region55: #{tpu_custom_call.1} parent=1 // pred_check_branch
      %67 = sbr.rel (0) target = $region57
    $region56: #{tpu_custom_call.1} parent=1 // pred_region
      %68 = dma.done [#allocation7], 8192
    $region57: #{tpu_custom_call.1} parent=1 // pred_fallthru
      _
    %v70 = vld [vmem:[%s0] sm:$0xff]
    %v71 = vld [vmem:[%s0 + $0x8] sm:$0xff]
    %vm74 = vcmask 1040384
    %v75 = vrot.slane %v70, 7
    %v76 = vrot.slane %v71, 7
    %v77 = vsel %vm74, %v75, %v76
    %v80 = vsel %vm74, 0.0, %v75
    %vm81 = vcmask 1046528
    %v82 = vrot.slane %v70, 1
    %v83 = vrot.slane %v71, 1
    %v84 = vsel %vm81, %v82, %v83
    %v86 = vsel %vm81, %v83, 0.0
    %87 = vrot.lane.b32.xlu0 %v70, 8
    %v88 = vpop.permute.xlu0 %87
    %89 = vrot.lane.b32.xlu0 %v71, 8
    %v90 = vpop.permute.xlu0 %89
    %94 = vrot.lane.b32.xlu0 %v84, 16
    %v95 = vpop.permute.xlu0 %94
    %96 = vrot.lane.b32.xlu0 %v86, 16
    %v97 = vpop.permute.xlu0 %96
    %vm100 = vcmask 64512
    %v101 = vsel %vm100, %v80, %v88
    %v102 = vsel %vm100, %v77, %v90
    %vm103 = vcmask 130048
    %v104 = vsel %vm103, %v101, %v95
    %v105 = vsel %vm103, %v102, %v97
    %v106 = vpack.c.bf16 %v105, %v104
    %v107 = vld [vmem:[%s1] sm:$0xf]
    %v108 = vld [vmem:[%s1 + $0x4] sm:$0xf]
    %v109 = vld [vmem:[%s1 + $0x8] sm:$0xf]
    %v110 = vld [vmem:[%s2] sm:$0x1]
    %v112 = vlaneseq
    %v113 = vshrl.u32 %v112, 7
    %v114 = vsub.s32 0, %v113
    %v115 = vrot.slane %v110, %v114
    %v120 = vunpack.c.l.b16 %v107
    %v121 = vunpack.c.l.b16 %v108
    %v122 = vunpack.c.l.b16 %v109
    %v123 = vpack.c.b16 %v121, %v120
    %v124 = vpack.c.b16 %v122, %v122
    %vm126 = vcmask 195584
    %v128 = vsel %vm126, %v106, 0
    %vm130 = vcmask 1043456
    %v132 = vsel %vm130, %v124, 0
    %134 = vmatprep.subr.bf16.mxu0 0
    %135 = vmatpush1.bf16.msra.mxu0 %v123
    %136 = vmatprep.subr.bf16.mxu0 0
    %137 = vmatpush1.bf16.msra.mxu0 %v132
    %138 = vmatprep.subr.bf16.mxu0 0
    %139 = vmatpush1.bf16.msra.mxu0 0
    %140 = vmatprep.subr.bf16.mxu0 0
    %141 = vmatpush1.bf16.msra.mxu0 0
    %142 = vmatprep.subr.bf16.mxu0 0
    %143 = vmatpush1.bf16.msra.mxu0 0
    %144 = vmatprep.subr.bf16.mxu0 0
    %145 = vmatpush1.bf16.msra.mxu0 0
    %146 = vmatprep.subr.bf16.mxu0 0
    %147 = vmatpush1.bf16.msra.mxu0 0
    %148 = vmatprep.subr.bf16.mxu0 0
    %149 = vmatpush1.bf16.msra.mxu0 0
    %150 = vmatprep.subr.bf16.mxu0 0
    %151 = vmatpush1.bf16.msra.mxu0 0
    %152 = vmatprep.subr.bf16.mxu0 0
    %153 = vmatpush1.bf16.msra.mxu0 0
    %154 = vmatprep.subr.bf16.mxu0 0
    %155 = vmatpush1.bf16.msra.mxu0 0
    %156 = vmatprep.subr.bf16.mxu0 0
    %157 = vmatpush1.bf16.msra.mxu0 0
    %158 = vmatprep.subr.bf16.mxu0 0
    %159 = vmatpush1.bf16.msra.mxu0 0
    %160 = vmatprep.subr.bf16.mxu0 0
    %161 = vmatpush1.bf16.msra.mxu0 0
    %162 = vmatprep.subr.bf16.mxu0 0
    %163 = vmatpush1.bf16.msra.mxu0 0
    %164 = vmatprep.subr.bf16.mxu0 0
    %165 = vmatpush1.bf16.msra.mxu0 0
    %166 = vmatprep.mubr.bf16.mxu0 0
    %167 = vmatmul.mubr.bf16.gmra.mrb[0].mxu0 %v128
    %v168 = vpop.f32.mrb[0].mxu0
    %v169 = vadd.f32 %v115, %v168
    %v170 = vpop.f32.mrb[0].mxu0
    %v171 = vpop.f32.mrb[0].mxu0
    %v172 = vadd.f32 %v115, %v171
    %v173 = vpop.f32.mrb[0].mxu0
    %174 = vdwg.mxu0
    %v175 = vmax.f32 %v169, 0.0
    %v176 = vmax.f32 %v172, 0.0
    %v179 = vrot.slane %v175, 7
    %v180 = vrot.slane %v176, 7
    %v181 = vsel %vm74, %v179, %v180
    %v184 = vsel %vm74, 0.0, %v179
    %v185 = vrot.slane %v175, 1
    %v186 = vrot.slane %v176, 1
    %v187 = vsel %vm81, %v185, %v186
    %v189 = vsel %vm81, %v186, 0.0
    %190 = vrot.lane.b32.xlu0 %v175, 16
    %v191 = vpop.permute.xlu0 %190
    %192 = vrot.lane.b32.xlu0 %v176, 16
    %v193 = vpop.permute.xlu0 %192
    %197 = vrot.lane.b32.xlu0 %v187, 32
    %v198 = vpop.permute.xlu0 %197
    %199 = vrot.lane.b32.xlu0 %v189, 32
    %v200 = vpop.permute.xlu0 %199
    %v203 = vsel %vm103, %v184, %v191
    %v204 = vsel %vm103, %v181, %v193
    %vm205 = vcmask 261120
    %v206 = vsel %vm205, %v203, %v198
    %v207 = vsel %vm205, %v204, %v200
    %v208 = vpack.c.bf16 %v207, %v206
    %v209 = vld [vmem:[%s3] sm:$0xf]
    %v210 = vld [vmem:[%s3 + $0x4] sm:$0xf]
    %v211 = vld [vmem:[%s3 + $0x8] sm:$0xf]
    %v212 = vld [vmem:[%s3 + $0xc] sm:$0xf]
    %v213 = vld [vmem:[%s3 + $0x10] sm:$0xf]
    %v214 = vld [vmem:[%s3 + $0x14] sm:$0xf]
    %v215 = vld [vmem:[%s4] sm:$0x1]
    %v217 = vlaneseq
    %v218 = vshrl.u32 %v217, 7
    %v219 = vsub.s32 0, %v218
    %v220 = vrot.slane %v215, %v219
    %v228 = vunpack.c.l.b16 %v209
    %v229 = vunpack.c.l.b16 %v210
    %v230 = vunpack.c.l.b16 %v211
    %v231 = vunpack.c.l.b16 %v212
    %v232 = vunpack.c.l.b16 %v213
    %v233 = vunpack.c.l.b16 %v214
    %v234 = vpack.c.b16 %v229, %v228
    %v235 = vpack.c.b16 %v231, %v230
    %v236 = vpack.c.b16 %v233, %v232
    %vm240 = vcmask 392192
    %v242 = vsel %vm240, %v208, 0
    %244 = vmatprep.subr.bf16.mxu0 0
    %245 = vmatpush1.bf16.msra.mxu0 %v234
    %246 = vmatprep.subr.bf16.mxu0 0
    %247 = vmatpush1.bf16.msra.mxu0 %v235
    %248 = vmatprep.subr.bf16.mxu0 0
    %249 = vmatpush1.bf16.msra.mxu0 %v236
    %250 = vmatprep.subr.bf16.mxu0 0
    %251 = vmatpush1.bf16.msra.mxu0 0
    %252 = vmatprep.subr.bf16.mxu0 0
    %253 = vmatpush1.bf16.msra.mxu0 0
    %254 = vmatprep.subr.bf16.mxu0 0
    %255 = vmatpush1.bf16.msra.mxu0 0
    %256 = vmatprep.subr.bf16.mxu0 0
    %257 = vmatpush1.bf16.msra.mxu0 0
    %258 = vmatprep.subr.bf16.mxu0 0
    %259 = vmatpush1.bf16.msra.mxu0 0
    %260 = vmatprep.subr.bf16.mxu0 0
    %261 = vmatpush1.bf16.msra.mxu0 0
    %262 = vmatprep.subr.bf16.mxu0 0
    %263 = vmatpush1.bf16.msra.mxu0 0
    %264 = vmatprep.subr.bf16.mxu0 0
    %265 = vmatpush1.bf16.msra.mxu0 0
    %266 = vmatprep.subr.bf16.mxu0 0
    %267 = vmatpush1.bf16.msra.mxu0 0
    %268 = vmatprep.subr.bf16.mxu0 0
    %269 = vmatpush1.bf16.msra.mxu0 0
    %270 = vmatprep.subr.bf16.mxu0 0
    %271 = vmatpush1.bf16.msra.mxu0 0
    %272 = vmatprep.subr.bf16.mxu0 0
    %273 = vmatpush1.bf16.msra.mxu0 0
    %274 = vmatprep.subr.bf16.mxu0 0
    %275 = vmatpush1.bf16.msra.mxu0 0
    %276 = vmatprep.mubr.bf16.mxu0 0
    %277 = vmatmul.mubr.bf16.gmra.mrb[0].mxu0 %v242
    %v278 = vpop.f32.mrb[0].mxu0
    %v279 = vadd.f32 %v220, %v278
    %v280 = vpop.f32.mrb[0].mxu0
    %v281 = vpop.f32.mrb[0].mxu0
    %v282 = vadd.f32 %v220, %v281
    %v283 = vpop.f32.mrb[0].mxu0
    %284 = vdwg.mxu0
    %v285 = vmax.f32 %v279, 0.0
    %v286 = vmax.f32 %v282, 0.0
    %v289 = vrot.slane %v285, 7
    %v290 = vrot.slane %v286, 7
    %v291 = vsel %vm74, %v289, %v290
    %v294 = vsel %vm74, 0.0, %v289
    %v295 = vrot.slane %v285, 1
    %v296 = vrot.slane %v286, 1
    %v297 = vsel %vm81, %v295, %v296
    %v299 = vsel %vm81, %v296, 0.0
    %300 = vrot.lane.b32.xlu0 %v285, 16
    %v301 = vpop.permute.xlu0 %300
    %302 = vrot.lane.b32.xlu0 %v286, 16
    %v303 = vpop.permute.xlu0 %302
    %307 = vrot.lane.b32.xlu0 %v297, 32
    %v308 = vpop.permute.xlu0 %307
    %309 = vrot.lane.b32.xlu0 %v299, 32
    %v310 = vpop.permute.xlu0 %309
    %v313 = vsel %vm103, %v294, %v301
    %v314 = vsel %vm103, %v291, %v303
    %v315 = vsel %vm205, %v313, %v308
    %v316 = vsel %vm205, %v314, %v310
    %v317 = vpack.c.bf16 %v316, %v315
    %v318 = vld [vmem:[%s5] sm:$0xf]
    %v319 = vld [vmem:[%s5 + $0x4] sm:$0xf]
    %v320 = vld [vmem:[%s5 + $0x8] sm:$0xf]
    %v321 = vld [vmem:[%s5 + $0xc] sm:$0xf]
    %v322 = vld [vmem:[%s5 + $0x10] sm:$0xf]
    %v323 = vld [vmem:[%s5 + $0x14] sm:$0xf]
    %v324 = vld [vmem:[%s6] sm:$0x1]
    %v326 = vlaneseq
    %v327 = vshrl.u32 %v326, 7
    %v328 = vsub.s32 0, %v327
    %v329 = vrot.slane %v324, %v328
    %v337 = vunpack.c.l.b16 %v318
    %v338 = vunpack.c.l.b16 %v319
    %v339 = vunpack.c.l.b16 %v320
    %v340 = vunpack.c.l.b16 %v321
    %v341 = vunpack.c.l.b16 %v322
    %v342 = vunpack.c.l.b16 %v323
    %v343 = vpack.c.b16 %v338, %v337
    %v344 = vpack.c.b16 %v340, %v339
    %v345 = vpack.c.b16 %v342, %v341
    %v350 = vsel %vm240, %v317, 0
    %352 = vmatprep.subr.bf16.mxu0 0
    %353 = vmatpush1.bf16.msra.mxu0 %v343
    %354 = vmatprep.subr.bf16.mxu0 0
    %355 = vmatpush1.bf16.msra.mxu0 %v344
    %356 = vmatprep.subr.bf16.mxu0 0
    %357 = vmatpush1.bf16.msra.mxu0 %v345
    %358 = vmatprep.subr.bf16.mxu0 0
    %359 = vmatpush1.bf16.msra.mxu0 0
    %360 = vmatprep.subr.bf16.mxu0 0
    %361 = vmatpush1.bf16.msra.mxu0 0
    %362 = vmatprep.subr.bf16.mxu0 0
    %363 = vmatpush1.bf16.msra.mxu0 0
    %364 = vmatprep.subr.bf16.mxu0 0
    %365 = vmatpush1.bf16.msra.mxu0 0
    %366 = vmatprep.subr.bf16.mxu0 0
    %367 = vmatpush1.bf16.msra.mxu0 0
    %368 = vmatprep.subr.bf16.mxu0 0
    %369 = vmatpush1.bf16.msra.mxu0 0
    %370 = vmatprep.subr.bf16.mxu0 0
    %371 = vmatpush1.bf16.msra.mxu0 0
    %372 = vmatprep.subr.bf16.mxu0 0
    %373 = vmatpush1.bf16.msra.mxu0 0
    %374 = vmatprep.subr.bf16.mxu0 0
    %375 = vmatpush1.bf16.msra.mxu0 0
    %376 = vmatprep.subr.bf16.mxu0 0
    %377 = vmatpush1.bf16.msra.mxu0 0
    %378 = vmatprep.subr.bf16.mxu0 0
    %379 = vmatpush1.bf16.msra.mxu0 0
    %380 = vmatprep.subr.bf16.mxu0 0
    %381 = vmatpush1.bf16.msra.mxu0 0
    %382 = vmatprep.subr.bf16.mxu0 0
    %383 = vmatpush1.bf16.msra.mxu0 0
    %384 = vmatprep.mubr.bf16.mxu0 0
    %385 = vmatmul.mubr.bf16.gmra.mrb[0].mxu0 %v350
    %v386 = vpop.f32.mrb[0].mxu0
    %v387 = vadd.f32 %v329, %v386
    %v388 = vpop.f32.mrb[0].mxu0
    %v389 = vpop.f32.mrb[0].mxu0
    %v390 = vadd.f32 %v329, %v389
    %v391 = vpop.f32.mrb[0].mxu0
    %392 = vdwg.mxu0
    %v393 = vmax.f32 %v387, 0.0
    %v394 = vmax.f32 %v390, 0.0
    %397 = vrot.lane.b32.xlu0 %v393, 32
    %v398 = vpop.permute.xlu0 %397
    %399 = vrot.lane.b32.xlu0 %v394, 32
    %v400 = vpop.permute.xlu0 %399
    %v403 = vsel %vm103, %v175, %v301
    %v404 = vsel %vm103, %v176, %v303
    %v405 = vsel %vm205, %v403, %v398
    %v406 = vsel %vm205, %v404, %v400
    %v407 = vld [vmem:[%s7] sm:$0xf]
    %v408 = vld [vmem:[%s7 + $0x4] sm:$0xf]
    %v409 = vld [vmem:[%s7 + $0x8] sm:$0xf]
    %v410 = vld [vmem:[%s7 + $0xc] sm:$0xf]
    %v411 = vld [vmem:[%s7 + $0x10] sm:$0xf]
    %v412 = vld [vmem:[%s7 + $0x14] sm:$0xf]
    %v413 = vld [vmem:[%s7 + $0x18] sm:$0xf]
    %v414 = vld [vmem:[%s7 + $0x1c] sm:$0xf]
    %v415 = vld [vmem:[%s7 + $0x20] sm:$0xf]
    %v416 = vld [vmem:[%s7 + $0x24] sm:$0xf]
    %v417 = vld [vmem:[%s7 + $0x28] sm:$0xf]
    %v418 = vld [vmem:[%s7 + $0x2c] sm:$0xf]
    %v419 = vld [vmem:[%s7 + $0x30] sm:$0x3]
    %v420 = vpack.c.bf16 %v406, %v405
    %v434 = vunpack.c.l.b16 %v407
    %v435 = vunpack.c.l.b16 %v408
    %v436 = vunpack.c.l.b16 %v409
    %v437 = vunpack.c.l.b16 %v410
    %v438 = vunpack.c.l.b16 %v411
    %v439 = vunpack.c.l.b16 %v412
    %v440 = vunpack.c.l.b16 %v413
    %v441 = vunpack.c.l.b16 %v414
    %v442 = vunpack.c.l.b16 %v415
    %v443 = vunpack.c.l.b16 %v416
    %v444 = vunpack.c.l.b16 %v417
    %v445 = vunpack.c.l.b16 %v418
    %v446 = vunpack.c.l.b16 %v419
    %v447 = vpack.c.b16 %v435, %v434
    %v448 = vpack.c.b16 %v437, %v436
    %v449 = vpack.c.b16 %v439, %v438
    %v450 = vpack.c.b16 %v441, %v440
    %v451 = vpack.c.b16 %v443, %v442
    %v452 = vpack.c.b16 %v445, %v444
    %v453 = vpack.c.b16 %v446, %v446
    %v455 = vsel %vm103, %v447, 0
    %v458 = vsel %vm103, %v448, 0
    %v461 = vsel %vm103, %v449, 0
    %v464 = vsel %vm103, %v450, 0
    %v467 = vsel %vm103, %v451, 0
    %v470 = vsel %vm103, %v452, 0
    %v473 = vsel %vm103, %v453, 0
    %475 = vmatprep.subr.bf16.mxu0 0
    %476 = vmatpush1.bf16.msra.mxu0 %v420
    %477 = vmatprep.subr.bf16.mxu0 0
    %478 = vmatpush1.bf16.msra.mxu0 0
    %479 = vmatprep.subr.bf16.mxu0 0
    %480 = vmatpush1.bf16.msra.mxu0 0
    %481 = vmatprep.subr.bf16.mxu0 0
    %482 = vmatpush1.bf16.msra.mxu0 0
    %483 = vmatprep.subr.bf16.mxu0 0
    %484 = vmatpush1.bf16.msra.mxu0 0
    %485 = vmatprep.subr.bf16.mxu0 0
    %486 = vmatpush1.bf16.msra.mxu0 0
    %487 = vmatprep.subr.bf16.mxu0 0
    %488 = vmatpush1.bf16.msra.mxu0 0
    %489 = vmatprep.subr.bf16.mxu0 0
    %490 = vmatpush1.bf16.msra.mxu0 0
    %491 = vmatprep.subr.bf16.mxu0 0
    %492 = vmatpush1.bf16.msra.mxu0 0
    %493 = vmatprep.subr.bf16.mxu0 0
    %494 = vmatpush1.bf16.msra.mxu0 0
    %495 = vmatprep.subr.bf16.mxu0 0
    %496 = vmatpush1.bf16.msra.mxu0 0
    %497 = vmatprep.subr.bf16.mxu0 0
    %498 = vmatpush1.bf16.msra.mxu0 0
    %499 = vmatprep.subr.bf16.mxu0 0
    %500 = vmatpush1.bf16.msra.mxu0 0
    %501 = vmatprep.subr.bf16.mxu0 0
    %502 = vmatpush1.bf16.msra.mxu0 0
    %503 = vmatprep.subr.bf16.mxu0 0
    %504 = vmatpush1.bf16.msra.mxu0 0
    %505 = vmatprep.subr.bf16.mxu0 0
    %506 = vmatpush1.bf16.msra.mxu0 0
    %507 = vmatprep.mubr.bf16.mxu0 0
    %508 = vmatmul.mubr.bf16.gmra.mrb[0].mxu0 %v455
    %v509 = vpop.f32.mrb[0].mxu0
    %v510 = vadd.f32 0.0, %v509
    %v511 = vpop.f32.mrb[0].mxu0
    %v512 = vpop.f32.mrb[0].mxu0
    %v513 = vadd.f32 0.0, %v512
    %v514 = vpop.f32.mrb[0].mxu0
    %515 = vmatprep.mubr.bf16.mxu0 0
    %516 = vmatmul.mubr.bf16.gmra.mrb[0].mxu0 %v458
    %v517 = vpop.f32.mrb[0].mxu0
    %v518 = vadd.f32 0.0, %v517
    %v519 = vpop.f32.mrb[0].mxu0
    %v520 = vpop.f32.mrb[0].mxu0
    %v521 = vadd.f32 0.0, %v520
    %v522 = vpop.f32.mrb[0].mxu0
    %523 = vmatprep.mubr.bf16.mxu0 0
    %524 = vmatmul.mubr.bf16.gmra.mrb[0].mxu0 %v461
    %v525 = vpop.f32.mrb[0].mxu0
    %v526 = vadd.f32 0.0, %v525
    %v527 = vpop.f32.mrb[0].mxu0
    %v528 = vpop.f32.mrb[0].mxu0
    %v529 = vadd.f32 0.0, %v528
    %v530 = vpop.f32.mrb[0].mxu0
    %531 = vmatprep.mubr.bf16.mxu0 0
    %532 = vmatmul.mubr.bf16.gmra.mrb[0].mxu0 %v464
    %v533 = vpop.f32.mrb[0].mxu0
    %v534 = vadd.f32 0.0, %v533
    %v535 = vpop.f32.mrb[0].mxu0
    %v536 = vpop.f32.mrb[0].mxu0
    %v537 = vadd.f32 0.0, %v536
    %v538 = vpop.f32.mrb[0].mxu0
    %539 = vmatprep.mubr.bf16.mxu0 0
    %540 = vmatmul.mubr.bf16.gmra.mrb[0].mxu0 %v467
    %v541 = vpop.f32.mrb[0].mxu0
    %v542 = vadd.f32 0.0, %v541
    %v543 = vpop.f32.mrb[0].mxu0
    %v544 = vpop.f32.mrb[0].mxu0
    %v545 = vadd.f32 0.0, %v544
    %v546 = vpop.f32.mrb[0].mxu0
    %547 = vmatprep.mubr.bf16.mxu0 0
    %548 = vmatmul.mubr.bf16.gmra.mrb[0].mxu0 %v470
    %v549 = vpop.f32.mrb[0].mxu0
    %v550 = vadd.f32 0.0, %v549
    %v551 = vpop.f32.mrb[0].mxu0
    %v552 = vpop.f32.mrb[0].mxu0
    %v553 = vadd.f32 0.0, %v552
    %v554 = vpop.f32.mrb[0].mxu0
    %555 = vmatprep.mubr.bf16.mxu0 0
    %556 = vmatmul.mubr.bf16.gmra.mrb[0].mxu0 %v473
    %v557 = vpop.f32.mrb[0].mxu0
    %v558 = vadd.f32 0.0, %v557
    %v559 = vpop.f32.mrb[0].mxu0
    %v560 = vpop.f32.mrb[0].mxu0
    %v561 = vpop.f32.mrb[0].mxu0
    %562 = vdwg.mxu0
    %v563 = vsel %vm240, %v510, 0.0
    %v564 = vsel %vm240, %v513, 0.0
    %v565 = vsel %vm240, %v518, 0.0
    %v566 = vsel %vm240, %v521, 0.0
    %v567 = vsel %vm240, %v526, 0.0
    %v568 = vsel %vm240, %v529, 0.0
    %v569 = vsel %vm240, %v534, 0.0
    %v570 = vsel %vm240, %v537, 0.0
    %v571 = vsel %vm240, %v542, 0.0
    %v572 = vsel %vm240, %v545, 0.0
    %v573 = vsel %vm240, %v550, 0.0
    %v574 = vsel %vm240, %v553, 0.0
    %v575 = vsel %vm240, %v558, 0.0
    %576 = vst [vmem:[#allocation2] sm:$0xff] %v563
    %577 = vst [vmem:[#allocation2 + $0x8] sm:$0xff] %v564
    %578 = vst [vmem:[#allocation2 + $0x10] sm:$0xff] %v565
    %579 = vst [vmem:[#allocation2 + $0x18] sm:$0xff] %v566
    %580 = vst [vmem:[#allocation2 + $0x20] sm:$0xff] %v567
    %581 = vst [vmem:[#allocation2 + $0x28] sm:$0xff] %v568
    %582 = vst [vmem:[#allocation2 + $0x30] sm:$0xff] %v569
    %583 = vst [vmem:[#allocation2 + $0x38] sm:$0xff] %v570
    %584 = vst [vmem:[#allocation2 + $0x40] sm:$0xff] %v571
    %585 = vst [vmem:[#allocation2 + $0x48] sm:$0xff] %v572
    %586 = vst [vmem:[#allocation2 + $0x50] sm:$0xff] %v573
    %587 = vst [vmem:[#allocation2 + $0x58] sm:$0xff] %v574
    %588 = vst [vmem:[#allocation2 + $0x60] sm:$0xf] %v575
    %s589 = scalar_lea.vmem %s0, 16
    %v590 = vld [vmem:[%s589] sm:$0xff]
    %v591 = vld [vmem:[%s589 + $0x8] sm:$0xff]
    %v594 = vrot.slane %v590, 7
    %v595 = vrot.slane %v591, 7
    %v596 = vsel %vm74, %v594, %v595
    %v599 = vsel %vm74, 0.0, %v594
    %v600 = vrot.slane %v590, 1
    %v601 = vrot.slane %v591, 1
    %v602 = vsel %vm81, %v600, %v601
    %v604 = vsel %vm81, %v601, 0.0
    %605 = vrot.lane.b32.xlu0 %v590, 8
    %v606 = vpop.permute.xlu0 %605
    %607 = vrot.lane.b32.xlu0 %v591, 8
    %v608 = vpop.permute.xlu0 %607
    %612 = vrot.lane.b32.xlu0 %v602, 16
    %v613 = vpop.permute.xlu0 %612
    %614 = vrot.lane.b32.xlu0 %v604, 16
    %v615 = vpop.permute.xlu0 %614
    %v618 = vsel %vm100, %v599, %v606
    %v619 = vsel %vm100, %v596, %v608
    %v620 = vsel %vm103, %v618, %v613
    %v621 = vsel %vm103, %v619, %v615
    %v622 = vpack.c.bf16 %v621, %v620
    %v623 = vld [vmem:[%s1] sm:$0xf]
    %v624 = vld [vmem:[%s1 + $0x4] sm:$0xf]
    %v625 = vld [vmem:[%s1 + $0x8] sm:$0xf]
    %v626 = vld [vmem:[%s2] sm:$0x1]
    %v628 = vlaneseq
    %v629 = vshrl.u32 %v628, 7
    %v630 = vsub.s32 0, %v629
    %v631 = vrot.slane %v626, %v630
    %v636 = vunpack.c.l.b16 %v623
    %v637 = vunpack.c.l.b16 %v624
    %v638 = vunpack.c.l.b16 %v625
    %v639 = vpack.c.b16 %v637, %v636
    %v640 = vpack.c.b16 %v638, %v638
    %v643 = vsel %vm126, %v622, 0
    %v646 = vsel %vm130, %v640, 0
    %648 = vmatprep.subr.bf16.mxu0 0
    %649 = vmatpush1.bf16.msra.mxu0 %v639
    %650 = vmatprep.subr.bf16.mxu0 0
    %651 = vmatpush1.bf16.msra.mxu0 %v646
    %652 = vmatprep.subr.bf16.mxu0 0
    %653 = vmatpush1.bf16.msra.mxu0 0
    %654 = vmatprep.subr.bf16.mxu0 0
    %655 = vmatpush1.bf16.msra.mxu0 0
    %656 = vmatprep.subr.bf16.mxu0 0
    %657 = vmatpush1.bf16.msra.mxu0 0
    %658 = vmatprep.subr.bf16.mxu0 0
    %659 = vmatpush1.bf16.msra.mxu0 0
    %660 = vmatprep.subr.bf16.mxu0 0
    %661 = vmatpush1.bf16.msra.mxu0 0
    %662 = vmatprep.subr.bf16.mxu0 0
    %663 = vmatpush1.bf16.msra.mxu0 0
    %664 = vmatprep.subr.bf16.mxu0 0
    %665 = vmatpush1.bf16.msra.mxu0 0
    %666 = vmatprep.subr.bf16.mxu0 0
    %667 = vmatpush1.bf16.msra.mxu0 0
    %668 = vmatprep.subr.bf16.mxu0 0
    %669 = vmatpush1.bf16.msra.mxu0 0
    %670 = vmatprep.subr.bf16.mxu0 0
    %671 = vmatpush1.bf16.msra.mxu0 0
    %672 = vmatprep.subr.bf16.mxu0 0
    %673 = vmatpush1.bf16.msra.mxu0 0
    %674 = vmatprep.subr.bf16.mxu0 0
    %675 = vmatpush1.bf16.msra.mxu0 0
    %676 = vmatprep.subr.bf16.mxu0 0
    %677 = vmatpush1.bf16.msra.mxu0 0
    %678 = vmatprep.subr.bf16.mxu0 0
    %679 = vmatpush1.bf16.msra.mxu0 0
    %680 = vmatprep.mubr.bf16.mxu0 0
    %681 = vmatmul.mubr.bf16.gmra.mrb[0].mxu0 %v643
    %v682 = vpop.f32.mrb[0].mxu0
    %v683 = vadd.f32 %v631, %v682
    %v684 = vpop.f32.mrb[0].mxu0
    %v685 = vpop.f32.mrb[0].mxu0
    %v686 = vadd.f32 %v631, %v685
    %v687 = vpop.f32.mrb[0].mxu0
    %688 = vdwg.mxu0
    %v689 = vmax.f32 %v683, 0.0
    %v690 = vmax.f32 %v686, 0.0
    %v693 = vrot.slane %v689, 7
    %v694 = vrot.slane %v690, 7
    %v695 = vsel %vm74, %v693, %v694
    %v698 = vsel %vm74, 0.0, %v693
    %v699 = vrot.slane %v689, 1
    %v700 = vrot.slane %v690, 1
    %v701 = vsel %vm81, %v699, %v700
    %v703 = vsel %vm81, %v700, 0.0
    %704 = vrot.lane.b32.xlu0 %v689, 16
    %v705 = vpop.permute.xlu0 %704
    %706 = vrot.lane.b32.xlu0 %v690, 16
    %v707 = vpop.permute.xlu0 %706
    %711 = vrot.lane.b32.xlu0 %v701, 32
    %v712 = vpop.permute.xlu0 %711
    %713 = vrot.lane.b32.xlu0 %v703, 32
    %v714 = vpop.permute.xlu0 %713
    %v717 = vsel %vm103, %v698, %v705
    %v718 = vsel %vm103, %v695, %v707
    %v719 = vsel %vm205, %v717, %v712
    %v720 = vsel %vm205, %v718, %v714
    %v721 = vpack.c.bf16 %v720, %v719
    %v722 = vld [vmem:[%s3] sm:$0xf]
    %v723 = vld [vmem:[%s3 + $0x4] sm:$0xf]
    %v724 = vld [vmem:[%s3 + $0x8] sm:$0xf]
    %v725 = vld [vmem:[%s3 + $0xc] sm:$0xf]
    %v726 = vld [vmem:[%s3 + $0x10] sm:$0xf]
    %v727 = vld [vmem:[%s3 + $0x14] sm:$0xf]
    %v728 = vld [vmem:[%s4] sm:$0x1]
    %v730 = vlaneseq
    %v731 = vshrl.u32 %v730, 7
    %v732 = vsub.s32 0, %v731
    %v733 = vrot.slane %v728, %v732
    %v741 = vunpack.c.l.b16 %v722
    %v742 = vunpack.c.l.b16 %v723
    %v743 = vunpack.c.l.b16 %v724
    %v744 = vunpack.c.l.b16 %v725
    %v745 = vunpack.c.l.b16 %v726
    %v746 = vunpack.c.l.b16 %v727
    %v747 = vpack.c.b16 %v742, %v741
    %v748 = vpack.c.b16 %v744, %v743
    %v749 = vpack.c.b16 %v746, %v745
    %v754 = vsel %vm240, %v721, 0
    %756 = vmatprep.subr.bf16.mxu0 0
    %757 = vmatpush1.bf16.msra.mxu0 %v747
    %758 = vmatprep.subr.bf16.mxu0 0
    %759 = vmatpush1.bf16.msra.mxu0 %v748
    %760 = vmatprep.subr.bf16.mxu0 0
    %761 = vmatpush1.bf16.msra.mxu0 %v749
    %762 = vmatprep.subr.bf16.mxu0 0
    %763 = vmatpush1.bf16.msra.mxu0 0
    %764 = vmatprep.subr.bf16.mxu0 0
    %765 = vmatpush1.bf16.msra.mxu0 0
    %766 = vmatprep.subr.bf16.mxu0 0
    %767 = vmatpush1.bf16.msra.mxu0 0
    %768 = vmatprep.subr.bf16.mxu0 0
    %769 = vmatpush1.bf16.msra.mxu0 0
    %770 = vmatprep.subr.bf16.mxu0 0
    %771 = vmatpush1.bf16.msra.mxu0 0
    %772 = vmatprep.subr.bf16.mxu0 0
    %773 = vmatpush1.bf16.msra.mxu0 0
    %774 = vmatprep.subr.bf16.mxu0 0
    %775 = vmatpush1.bf16.msra.mxu0 0
    %776 = vmatprep.subr.bf16.mxu0 0
    %777 = vmatpush1.bf16.msra.mxu0 0
    %778 = vmatprep.subr.bf16.mxu0 0
    %779 = vmatpush1.bf16.msra.mxu0 0
    %780 = vmatprep.subr.bf16.mxu0 0
    %781 = vmatpush1.bf16.msra.mxu0 0
    %782 = vmatprep.subr.bf16.mxu0 0
    %783 = vmatpush1.bf16.msra.mxu0 0
    %784 = vmatprep.subr.bf16.mxu0 0
    %785 = vmatpush1.bf16.msra.mxu0 0
    %786 = vmatprep.subr.bf16.mxu0 0
    %787 = vmatpush1.bf16.msra.mxu0 0
    %788 = vmatprep.mubr.bf16.mxu0 0
    %789 = vmatmul.mubr.bf16.gmra.mrb[0].mxu0 %v754
    %v790 = vpop.f32.mrb[0].mxu0
    %v791 = vadd.f32 %v733, %v790
    %v792 = vpop.f32.mrb[0].mxu0
    %v793 = vpop.f32.mrb[0].mxu0
    %v794 = vadd.f32 %v733, %v793
    %v795 = vpop.f32.mrb[0].mxu0
    %796 = vdwg.mxu0
    %v797 = vmax.f32 %v791, 0.0
    %v798 = vmax.f32 %v794, 0.0
    %v801 = vrot.slane %v797, 7
    %v802 = vrot.slane %v798, 7
    %v803 = vsel %vm74, %v801, %v802
    %v806 = vsel %vm74, 0.0, %v801
    %v807 = vrot.slane %v797, 1
    %v808 = vrot.slane %v798, 1
    %v809 = vsel %vm81, %v807, %v808
    %v811 = vsel %vm81, %v808, 0.0
    %812 = vrot.lane.b32.xlu0 %v797, 16
    %v813 = vpop.permute.xlu0 %812
    %814 = vrot.lane.b32.xlu0 %v798, 16
    %v815 = vpop.permute.xlu0 %814
    %819 = vrot.lane.b32.xlu0 %v809, 32
    %v820 = vpop.permute.xlu0 %819
    %821 = vrot.lane.b32.xlu0 %v811, 32
    %v822 = vpop.permute.xlu0 %821
    %v825 = vsel %vm103, %v806, %v813
    %v826 = vsel %vm103, %v803, %v815
    %v827 = vsel %vm205, %v825, %v820
    %v828 = vsel %vm205, %v826, %v822
    %v829 = vpack.c.bf16 %v828, %v827
    %v830 = vld [vmem:[%s5] sm:$0xf]
    %v831 = vld [vmem:[%s5 + $0x4] sm:$0xf]
    %v832 = vld [vmem:[%s5 + $0x8] sm:$0xf]
    %v833 = vld [vmem:[%s5 + $0xc] sm:$0xf]
    %v834 = vld [vmem:[%s5 + $0x10] sm:$0xf]
    %v835 = vld [vmem:[%s5 + $0x14] sm:$0xf]
    %v836 = vld [vmem:[%s6] sm:$0x1]
    %v838 = vlaneseq
    %v839 = vshrl.u32 %v838, 7
    %v840 = vsub.s32 0, %v839
    %v841 = vrot.slane %v836, %v840
    %v849 = vunpack.c.l.b16 %v830
    %v850 = vunpack.c.l.b16 %v831
    %v851 = vunpack.c.l.b16 %v832
    %v852 = vunpack.c.l.b16 %v833
    %v853 = vunpack.c.l.b16 %v834
    %v854 = vunpack.c.l.b16 %v835
    %v855 = vpack.c.b16 %v850, %v849
    %v856 = vpack.c.b16 %v852, %v851
    %v857 = vpack.c.b16 %v854, %v853
    %v862 = vsel %vm240, %v829, 0
    %864 = vmatprep.subr.bf16.mxu0 0
    %865 = vmatpush1.bf16.msra.mxu0 %v855
    %866 = vmatprep.subr.bf16.mxu0 0
    %867 = vmatpush1.bf16.msra.mxu0 %v856
    %868 = vmatprep.subr.bf16.mxu0 0
    %869 = vmatpush1.bf16.msra.mxu0 %v857
    %870 = vmatprep.subr.bf16.mxu0 0
    %871 = vmatpush1.bf16.msra.mxu0 0
    %872 = vmatprep.subr.bf16.mxu0 0
    %873 = vmatpush1.bf16.msra.mxu0 0
    %874 = vmatprep.subr.bf16.mxu0 0
    %875 = vmatpush1.bf16.msra.mxu0 0
    %876 = vmatprep.subr.bf16.mxu0 0
    %877 = vmatpush1.bf16.msra.mxu0 0
    %878 = vmatprep.subr.bf16.mxu0 0
    %879 = vmatpush1.bf16.msra.mxu0 0
    %880 = vmatprep.subr.bf16.mxu0 0
    %881 = vmatpush1.bf16.msra.mxu0 0
    %882 = vmatprep.subr.bf16.mxu0 0
    %883 = vmatpush1.bf16.msra.mxu0 0
    %884 = vmatprep.subr.bf16.mxu0 0
    %885 = vmatpush1.bf16.msra.mxu0 0
    %886 = vmatprep.subr.bf16.mxu0 0
    %887 = vmatpush1.bf16.msra.mxu0 0
    %888 = vmatprep.subr.bf16.mxu0 0
    %889 = vmatpush1.bf16.msra.mxu0 0
    %890 = vmatprep.subr.bf16.mxu0 0
    %891 = vmatpush1.bf16.msra.mxu0 0
    %892 = vmatprep.subr.bf16.mxu0 0
    %893 = vmatpush1.bf16.msra.mxu0 0
    %894 = vmatprep.subr.bf16.mxu0 0
    %895 = vmatpush1.bf16.msra.mxu0 0
    %896 = vmatprep.mubr.bf16.mxu0 0
    %897 = vmatmul.mubr.bf16.gmra.mrb[0].mxu0 %v862
    %v898 = vpop.f32.mrb[0].mxu0
    %v899 = vadd.f32 %v841, %v898
    %v900 = vpop.f32.mrb[0].mxu0
    %v901 = vpop.f32.mrb[0].mxu0
    %v902 = vadd.f32 %v841, %v901
    %v903 = vpop.f32.mrb[0].mxu0
    %904 = vdwg.mxu0
    %v905 = vmax.f32 %v899, 0.0
    %v906 = vmax.f32 %v902, 0.0
    %909 = vrot.lane.b32.xlu0 %v905, 32
    %v910 = vpop.permute.xlu0 %909
    %911 = vrot.lane.b32.xlu0 %v906, 32
    %v912 = vpop.permute.xlu0 %911
    %v915 = vsel %vm103, %v689, %v813
    %v916 = vsel %vm103, %v690, %v815
    %v917 = vsel %vm205, %v915, %v910
    %v918 = vsel %vm205, %v916, %v912
    %v919 = vld [vmem:[%s7] sm:$0xf]
    %v920 = vld [vmem:[%s7 + $0x4] sm:$0xf]
    %v921 = vld [vmem:[%s7 + $0x8] sm:$0xf]
    %v922 = vld [vmem:[%s7 + $0xc] sm:$0xf]
    %v923 = vld [vmem:[%s7 + $0x10] sm:$0xf]
    %v924 = vld [vmem:[%s7 + $0x14] sm:$0xf]
    %v925 = vld [vmem:[%s7 + $0x18] sm:$0xf]
    %v926 = vld [vmem:[%s7 + $0x1c] sm:$0xf]
    %v927 = vld [vmem:[%s7 + $0x20] sm:$0xf]
    %v928 = vld [vmem:[%s7 + $0x24] sm:$0xf]
    %v929 = vld [vmem:[%s7 + $0x28] sm:$0xf]
    %v930 = vld [vmem:[%s7 + $0x2c] sm:$0xf]
    %v931 = vld [vmem:[%s7 + $0x30] sm:$0x3]
    %v932 = vpack.c.bf16 %v918, %v917
    %v946 = vunpack.c.l.b16 %v919
    %v947 = vunpack.c.l.b16 %v920
    %v948 = vunpack.c.l.b16 %v921
    %v949 = vunpack.c.l.b16 %v922
    %v950 = vunpack.c.l.b16 %v923
    %v951 = vunpack.c.l.b16 %v924
    %v952 = vunpack.c.l.b16 %v925
    %v953 = vunpack.c.l.b16 %v926
    %v954 = vunpack.c.l.b16 %v927
    %v955 = vunpack.c.l.b16 %v928
    %v956 = vunpack.c.l.b16 %v929
    %v957 = vunpack.c.l.b16 %v930
    %v958 = vunpack.c.l.b16 %v931
    %v959 = vpack.c.b16 %v947, %v946
    %v960 = vpack.c.b16 %v949, %v948
    %v961 = vpack.c.b16 %v951, %v950
    %v962 = vpack.c.b16 %v953, %v952
    %v963 = vpack.c.b16 %v955, %v954
    %v964 = vpack.c.b16 %v957, %v956
    %v965 = vpack.c.b16 %v958, %v958
    %v967 = vsel %vm103, %v959, 0
    %v970 = vsel %vm103, %v960, 0
    %v973 = vsel %vm103, %v961, 0
    %v976 = vsel %vm103, %v962, 0
    %v979 = vsel %vm103, %v963, 0
    %v982 = vsel %vm103, %v964, 0
    %v985 = vsel %vm103, %v965, 0
    %987 = vmatprep.subr.bf16.mxu0 0
    %988 = vmatpush1.bf16.msra.mxu0 %v932
    %989 = vmatprep.subr.bf16.mxu0 0
    %990 = vmatpush1.bf16.msra.mxu0 0
    %991 = vmatprep.subr.bf16.mxu0 0
    %992 = vmatpush1.bf16.msra.mxu0 0
    %993 = vmatprep.subr.bf16.mxu0 0
    %994 = vmatpush1.bf16.msra.mxu0 0
    %995 = vmatprep.subr.bf16.mxu0 0
    %996 = vmatpush1.bf16.msra.mxu0 0
    %997 = vmatprep.subr.bf16.mxu0 0
    %998 = vmatpush1.bf16.msra.mxu0 0
    %999 = vmatprep.subr.bf16.mxu0 0
    %1000 = vmatpush1.bf16.msra.mxu0 0
    %1001 = vmatprep.subr.bf16.mxu0 0
    %1002 = vmatpush1.bf16.msra.mxu0 0
    %1003 = vmatprep.subr.bf16.mxu0 0
    %1004 = vmatpush1.bf16.msra.mxu0 0
    %1005 = vmatprep.subr.bf16.mxu0 0
    %1006 = vmatpush1.bf16.msra.mxu0 0
    %1007 = vmatprep.subr.bf16.mxu0 0
    %1008 = vmatpush1.bf16.msra.mxu0 0
    %1009 = vmatprep.subr.bf16.mxu0 0
    %1010 = vmatpush1.bf16.msra.mxu0 0
    %1011 = vmatprep.subr.bf16.mxu0 0
    %1012 = vmatpush1.bf16.msra.mxu0 0
    %1013 = vmatprep.subr.bf16.mxu0 0
    %1014 = vmatpush1.bf16.msra.mxu0 0
    %1015 = vmatprep.subr.bf16.mxu0 0
    %1016 = vmatpush1.bf16.msra.mxu0 0
    %1017 = vmatprep.subr.bf16.mxu0 0
    %1018 = vmatpush1.bf16.msra.mxu0 0
    %1019 = vmatprep.mubr.bf16.mxu0 0
    %1020 = vmatmul.mubr.bf16.gmra.mrb[0].mxu0 %v967
    %v1021 = vpop.f32.mrb[0].mxu0
    %v1022 = vadd.f32 0.0, %v1021
    %v1023 = vpop.f32.mrb[0].mxu0
    %v1024 = vpop.f32.mrb[0].mxu0
    %v1025 = vadd.f32 0.0, %v1024
    %v1026 = vpop.f32.mrb[0].mxu0
    %1027 = vmatprep.mubr.bf16.mxu0 0
    %1028 = vmatmul.mubr.bf16.gmra.mrb[0].mxu0 %v970
    %v1029 = vpop.f32.mrb[0].mxu0
    %v1030 = vadd.f32 0.0, %v1029
    %v1031 = vpop.f32.mrb[0].mxu0
    %v1032 = vpop.f32.mrb[0].mxu0
    %v1033 = vadd.f32 0.0, %v1032
    %v1034 = vpop.f32.mrb[0].mxu0
    %1035 = vmatprep.mubr.bf16.mxu0 0
    %1036 = vmatmul.mubr.bf16.gmra.mrb[0].mxu0 %v973
    %v1037 = vpop.f32.mrb[0].mxu0
    %v1038 = vadd.f32 0.0, %v1037
    %v1039 = vpop.f32.mrb[0].mxu0
    %v1040 = vpop.f32.mrb[0].mxu0
    %v1041 = vadd.f32 0.0, %v1040
    %v1042 = vpop.f32.mrb[0].mxu0
    %1043 = vmatprep.mubr.bf16.mxu0 0
    %1044 = vmatmul.mubr.bf16.gmra.mrb[0].mxu0 %v976
    %v1045 = vpop.f32.mrb[0].mxu0
    %v1046 = vadd.f32 0.0, %v1045
    %v1047 = vpop.f32.mrb[0].mxu0
    %v1048 = vpop.f32.mrb[0].mxu0
    %v1049 = vadd.f32 0.0, %v1048
    %v1050 = vpop.f32.mrb[0].mxu0
    %1051 = vmatprep.mubr.bf16.mxu0 0
    %1052 = vmatmul.mubr.bf16.gmra.mrb[0].mxu0 %v979
    %v1053 = vpop.f32.mrb[0].mxu0
    %v1054 = vadd.f32 0.0, %v1053
    %v1055 = vpop.f32.mrb[0].mxu0
    %v1056 = vpop.f32.mrb[0].mxu0
    %v1057 = vadd.f32 0.0, %v1056
    %v1058 = vpop.f32.mrb[0].mxu0
    %1059 = vmatprep.mubr.bf16.mxu0 0
    %1060 = vmatmul.mubr.bf16.gmra.mrb[0].mxu0 %v982
    %v1061 = vpop.f32.mrb[0].mxu0
    %v1062 = vadd.f32 0.0, %v1061
    %v1063 = vpop.f32.mrb[0].mxu0
    %v1064 = vpop.f32.mrb[0].mxu0
    %v1065 = vadd.f32 0.0, %v1064
    %v1066 = vpop.f32.mrb[0].mxu0
    %1067 = vmatprep.mubr.bf16.mxu0 0
    %1068 = vmatmul.mubr.bf16.gmra.mrb[0].mxu0 %v985
    %v1069 = vpop.f32.mrb[0].mxu0
    %v1070 = vadd.f32 0.0, %v1069
    %v1071 = vpop.f32.mrb[0].mxu0
    %v1072 = vpop.f32.mrb[0].mxu0
    %v1073 = vpop.f32.mrb[0].mxu0
    %1074 = vdwg.mxu0
    %v1075 = vsel %vm240, %v1022, 0.0
    %v1076 = vsel %vm240, %v1025, 0.0
    %v1077 = vsel %vm240, %v1030, 0.0
    %v1078 = vsel %vm240, %v1033, 0.0
    %v1079 = vsel %vm240, %v1038, 0.0
    %v1080 = vsel %vm240, %v1041, 0.0
    %v1081 = vsel %vm240, %v1046, 0.0
    %v1082 = vsel %vm240, %v1049, 0.0
    %v1083 = vsel %vm240, %v1054, 0.0
    %v1084 = vsel %vm240, %v1057, 0.0
    %v1085 = vsel %vm240, %v1062, 0.0
    %v1086 = vsel %vm240, %v1065, 0.0
    %v1087 = vsel %vm240, %v1070, 0.0
    %s1088 = scalar_lea.vmem [#allocation2], 104
    %1089 = vst [vmem:[%s1088] sm:$0xff] %v1075
    %1090 = vst [vmem:[%s1088 + $0x8] sm:$0xff] %v1076
    %1091 = vst [vmem:[%s1088 + $0x10] sm:$0xff] %v1077
    %1092 = vst [vmem:[%s1088 + $0x18] sm:$0xff] %v1078
    %1093 = vst [vmem:[%s1088 + $0x20] sm:$0xff] %v1079
    %1094 = vst [vmem:[%s1088 + $0x28] sm:$0xff] %v1080
    %1095 = vst [vmem:[%s1088 + $0x30] sm:$0xff] %v1081
    %1096 = vst [vmem:[%s1088 + $0x38] sm:$0xff] %v1082
    %1097 = vst [vmem:[%s1088 + $0x40] sm:$0xff] %v1083
    %1098 = vst [vmem:[%s1088 + $0x48] sm:$0xff] %v1084
    %1099 = vst [vmem:[%s1088 + $0x50] sm:$0xff] %v1085
    %1100 = vst [vmem:[%s1088 + $0x58] sm:$0xff] %v1086
    %1101 = vst [vmem:[%s1088 + $0x60] sm:$0xf] %v1087
    %v1102 = vld [vmem:[#allocation2] sm:$0xff]
    %v1103 = vld [vmem:[#allocation2 + $0x8] sm:$0xff]
    %v1104 = vld [vmem:[#allocation2 + $0x10] sm:$0xff]
    %v1105 = vld [vmem:[#allocation2 + $0x18] sm:$0xff]
    %v1106 = vld [vmem:[#allocation2 + $0x20] sm:$0xff]
    %v1107 = vld [vmem:[#allocation2 + $0x28] sm:$0xff]
    %v1108 = vld [vmem:[#allocation2 + $0x30] sm:$0xff]
    %v1109 = vld [vmem:[#allocation2 + $0x38] sm:$0xff]
    %v1110 = vld [vmem:[#allocation2 + $0x40] sm:$0xff]
    %v1111 = vld [vmem:[#allocation2 + $0x48] sm:$0xff]
    %v1112 = vld [vmem:[#allocation2 + $0x50] sm:$0xff]
    %v1113 = vld [vmem:[#allocation2 + $0x58] sm:$0xff]
    %v1114 = vld [vmem:[#allocation2 + $0x60] sm:$0xf]
    %v1115 = vpack.c.bf16 %v1103, %v1102
    %v1116 = vpack.c.bf16 %v1105, %v1104
    %v1117 = vpack.c.bf16 %v1107, %v1106
    %v1118 = vpack.c.bf16 %v1109, %v1108
    %v1119 = vpack.c.bf16 %v1111, %v1110
    %v1120 = vpack.c.bf16 %v1113, %v1112
    %v1121 = vpack.c.bf16 %v1114, %v1114
    %v1122 = vld [vmem:[%s8] sm:$0xf]
    %v1123 = vld [vmem:[%s8 + $0x4] sm:$0xf]
    %v1124 = vld [vmem:[%s8 + $0x8] sm:$0xf]
    %v1125 = vld [vmem:[%s8 + $0xc] sm:$0xf]
    %v1126 = vld [vmem:[%s8 + $0x10] sm:$0xf]
    %v1127 = vld [vmem:[%s8 + $0x14] sm:$0xf]
    %v1128 = vld [vmem:[%s8 + $0x18] sm:$0xf]
    %v1129 = vld [vmem:[%s8 + $0x1c] sm:$0xf]
    %v1130 = vld [vmem:[%s8 + $0x20] sm:$0xf]
    %v1131 = vld [vmem:[%s8 + $0x24] sm:$0xf]
    %v1132 = vld [vmem:[%s8 + $0x28] sm:$0xf]
    %v1133 = vld [vmem:[%s8 + $0x2c] sm:$0xf]
    %v1134 = vld [vmem:[%s8 + $0x30] sm:$0x3]
    %v1148 = vunpack.c.l.b16 %v1122
    %v1149 = vunpack.c.l.b16 %v1123
    %v1150 = vunpack.c.l.b16 %v1124
    %v1151 = vunpack.c.l.b16 %v1125
    %v1152 = vunpack.c.l.b16 %v1126
    %v1153 = vunpack.c.l.b16 %v1127
    %v1154 = vunpack.c.l.b16 %v1128
    %v1155 = vunpack.c.l.b16 %v1129
    %v1156 = vunpack.c.l.b16 %v1130
    %v1157 = vunpack.c.l.b16 %v1131
    %v1158 = vunpack.c.l.b16 %v1132
    %v1159 = vunpack.c.l.b16 %v1133
    %v1160 = vunpack.c.l.b16 %v1134
    %v1161 = vpack.c.b16 %v1149, %v1148
    %v1162 = vpack.c.b16 %v1151, %v1150
    %v1163 = vpack.c.b16 %v1153, %v1152
    %v1164 = vpack.c.b16 %v1155, %v1154
    %v1165 = vpack.c.b16 %v1157, %v1156
    %v1166 = vpack.c.b16 %v1159, %v1158
    %v1167 = vpack.c.b16 %v1160, %v1160
    %vm1168 = vcmask 818176
    %v1170 = vsel %vm1168, %v1161, 0
    %v1173 = vsel %vm1168, %v1162, 0
    %v1176 = vsel %vm1168, %v1163, 0
    %v1179 = vsel %vm1168, %v1164, 0
    %v1182 = vsel %vm1168, %v1165, 0
    %v1185 = vsel %vm1168, %v1166, 0
    %v1188 = vsel %vm1168, %v1167, 0
    %vm1190 = vcmask 1041408
    %v1192 = vsel %vm1190, %v1121, 0
    %1194 = vmatprep.subr.bf16.mxu0 0
    %1195 = vmatpush1.bf16.msra.mxu0 %v1115
    %1196 = vmatprep.subr.bf16.mxu0 0
    %1197 = vmatpush1.bf16.msra.mxu0 %v1116
    %1198 = vmatprep.subr.bf16.mxu0 0
    %1199 = vmatpush1.bf16.msra.mxu0 %v1117
    %1200 = vmatprep.subr.bf16.mxu0 0
    %1201 = vmatpush1.bf16.msra.mxu0 %v1118
    %1202 = vmatprep.subr.bf16.mxu0 0
    %1203 = vmatpush1.bf16.msra.mxu0 %v1119
    %1204 = vmatprep.subr.bf16.mxu0 0
    %1205 = vmatpush1.bf16.msra.mxu0 %v1120
    %1206 = vmatprep.subr.bf16.mxu0 0
    %1207 = vmatpush1.bf16.msra.mxu0 %v1192
    %1208 = vmatprep.subr.bf16.mxu0 0
    %1209 = vmatpush1.bf16.msra.mxu0 0
    %1210 = vmatprep.subr.bf16.mxu0 0
    %1211 = vmatpush1.bf16.msra.mxu0 0
    %1212 = vmatprep.subr.bf16.mxu0 0
    %1213 = vmatpush1.bf16.msra.mxu0 0
    %1214 = vmatprep.subr.bf16.mxu0 0
    %1215 = vmatpush1.bf16.msra.mxu0 0
    %1216 = vmatprep.subr.bf16.mxu0 0
    %1217 = vmatpush1.bf16.msra.mxu0 0
    %1218 = vmatprep.subr.bf16.mxu0 0
    %1219 = vmatpush1.bf16.msra.mxu0 0
    %1220 = vmatprep.subr.bf16.mxu0 0
    %1221 = vmatpush1.bf16.msra.mxu0 0
    %1222 = vmatprep.subr.bf16.mxu0 0
    %1223 = vmatpush1.bf16.msra.mxu0 0
    %1224 = vmatprep.subr.bf16.mxu0 0
    %1225 = vmatpush1.bf16.msra.mxu0 0
    %1226 = vmatprep.mubr.bf16.mxu0 0
    %1227 = vmatmul.mubr.bf16.gmra.mrb[0].mxu0 %v1170
    %v1228 = vpop.f32.mrb[0].mxu0
    %v1229 = vadd.f32 0.0, %v1228
    %v1230 = vpop.f32.mrb[0].mxu0
    %v1231 = vpop.f32.mrb[0].mxu0
    %v1232 = vadd.f32 0.0, %v1231
    %v1233 = vpop.f32.mrb[0].mxu0
    %1234 = vmatprep.mubr.bf16.mxu0 0
    %1235 = vmatmul.mubr.bf16.gmra.mrb[0].mxu0 %v1173
    %v1236 = vpop.f32.mrb[0].mxu0
    %v1237 = vadd.f32 0.0, %v1236
    %v1238 = vpop.f32.mrb[0].mxu0
    %v1239 = vpop.f32.mrb[0].mxu0
    %v1240 = vadd.f32 0.0, %v1239
    %v1241 = vpop.f32.mrb[0].mxu0
    %1242 = vmatprep.mubr.bf16.mxu0 0
    %1243 = vmatmul.mubr.bf16.gmra.mrb[0].mxu0 %v1176
    %v1244 = vpop.f32.mrb[0].mxu0
    %v1245 = vadd.f32 0.0, %v1244
    %v1246 = vpop.f32.mrb[0].mxu0
    %v1247 = vpop.f32.mrb[0].mxu0
    %v1248 = vadd.f32 0.0, %v1247
    %v1249 = vpop.f32.mrb[0].mxu0
    %1250 = vmatprep.mubr.bf16.mxu0 0
    %1251 = vmatmul.mubr.bf16.gmra.mrb[0].mxu0 %v1179
    %v1252 = vpop.f32.mrb[0].mxu0
    %v1253 = vadd.f32 0.0, %v1252
    %v1254 = vpop.f32.mrb[0].mxu0
    %v1255 = vpop.f32.mrb[0].mxu0
    %v1256 = vadd.f32 0.0, %v1255
    %v1257 = vpop.f32.mrb[0].mxu0
    %1258 = vmatprep.mubr.bf16.mxu0 0
    %1259 = vmatmul.mubr.bf16.gmra.mrb[0].mxu0 %v1182
    %v1260 = vpop.f32.mrb[0].mxu0
    %v1261 = vadd.f32 0.0, %v1260
    %v1262 = vpop.f32.mrb[0].mxu0
    %v1263 = vpop.f32.mrb[0].mxu0
    %v1264 = vadd.f32 0.0, %v1263
    %v1265 = vpop.f32.mrb[0].mxu0
    %1266 = vmatprep.mubr.bf16.mxu0 0
    %1267 = vmatmul.mubr.bf16.gmra.mrb[0].mxu0 %v1185
    %v1268 = vpop.f32.mrb[0].mxu0
    %v1269 = vadd.f32 0.0, %v1268
    %v1270 = vpop.f32.mrb[0].mxu0
    %v1271 = vpop.f32.mrb[0].mxu0
    %v1272 = vadd.f32 0.0, %v1271
    %v1273 = vpop.f32.mrb[0].mxu0
    %1274 = vmatprep.mubr.bf16.mxu0 0
    %1275 = vmatmul.mubr.bf16.gmra.mrb[0].mxu0 %v1188
    %v1276 = vpop.f32.mrb[0].mxu0
    %v1277 = vadd.f32 0.0, %v1276
    %v1278 = vpop.f32.mrb[0].mxu0
    %v1279 = vpop.f32.mrb[0].mxu0
    %v1280 = vpop.f32.mrb[0].mxu0
    %1281 = vdwg.mxu0
    %v1282 = vpack.c.bf16 %v1232, %v1229
    %v1283 = vpack.c.bf16 %v1240, %v1237
    %v1284 = vpack.c.bf16 %v1248, %v1245
    %v1285 = vpack.c.bf16 %v1256, %v1253
    %v1286 = vpack.c.bf16 %v1264, %v1261
    %v1287 = vpack.c.bf16 %v1272, %v1269
    %v1288 = vpack.c.bf16 %v1277, %v1277
    %v1289 = vld [vmem:[#allocation4] sm:$0xff]
    %v1290 = vld [vmem:[#allocation4 + $0x8] sm:$0xff]
    %v1291 = vld [vmem:[#allocation4 + $0x10] sm:$0xff]
    %v1292 = vld [vmem:[#allocation4 + $0x18] sm:$0xff]
    %v1293 = vld [vmem:[#allocation4 + $0x20] sm:$0xff]
    %v1294 = vld [vmem:[#allocation4 + $0x28] sm:$0xff]
    %v1295 = vld [vmem:[#allocation4 + $0x30] sm:$0xff]
    %v1296 = vld [vmem:[#allocation4 + $0x38] sm:$0xff]
    %v1297 = vld [vmem:[#allocation4 + $0x40] sm:$0xff]
    %v1298 = vld [vmem:[#allocation4 + $0x48] sm:$0xff]
    %v1299 = vld [vmem:[#allocation4 + $0x50] sm:$0xff]
    %v1300 = vld [vmem:[#allocation4 + $0x58] sm:$0xff]
    %v1301 = vld [vmem:[#allocation4 + $0x60] sm:$0xff]
    %v1302 = vld [vmem:[#allocation4 + $0x68] sm:$0xff]
    %v1303 = vld [vmem:[#allocation4 + $0x70] sm:$0xff]
    %v1304 = vld [vmem:[#allocation4 + $0x78] sm:$0xff]
    %v1305 = vld [vmem:[#allocation4 + $0x80] sm:$0xff]
    %v1306 = vld [vmem:[#allocation4 + $0x88] sm:$0xff]
    %v1307 = vld [vmem:[#allocation4 + $0x90] sm:$0xff]
    %v1308 = vld [vmem:[#allocation4 + $0x98] sm:$0xff]
    %v1309 = vld [vmem:[#allocation4 + $0xa0] sm:$0xff]
    %v1310 = vld [vmem:[#allocation4 + $0xa8] sm:$0xff]
    %v1311 = vld [vmem:[#allocation4 + $0xb0] sm:$0xff]
    %v1312 = vld [vmem:[#allocation4 + $0xb8] sm:$0xff]
    %v1313 = vld [vmem:[#allocation4 + $0xc0] sm:$0xff]
    %v1314 = vld [vmem:[#allocation4 + $0xc8] sm:$0xff]
    %v1315 = vld [vmem:[#allocation4 + $0xd0] sm:$0xff]
    %v1316 = vld [vmem:[#allocation4 + $0xd8] sm:$0xff]
    %v1317 = vld [vmem:[#allocation4 + $0xe0] sm:$0xff]
    %v1318 = vld [vmem:[#allocation4 + $0xe8] sm:$0xff]
    %v1319 = vld [vmem:[#allocation4 + $0xf0] sm:$0xff]
    %v1320 = vld [vmem:[#allocation4 + $0xf8] sm:$0xff]
    %v1321 = vld [vmem:[#allocation4 + $0x100] sm:$0xff]
    %v1322 = vld [vmem:[#allocation4 + $0x108] sm:$0xff]
    %v1323 = vld [vmem:[#allocation4 + $0x110] sm:$0xff]
    %v1324 = vld [vmem:[#allocation4 + $0x118] sm:$0xff]
    %v1325 = vld [vmem:[#allocation4 + $0x120] sm:$0xff]
    %v1326 = vld [vmem:[#allocation4 + $0x128] sm:$0xff]
    %v1327 = vld [vmem:[#allocation4 + $0x130] sm:$0xff]
    %v1328 = vld [vmem:[#allocation4 + $0x138] sm:$0xff]
    %v1329 = vld [vmem:[#allocation4 + $0x140] sm:$0xff]
    %v1330 = vld [vmem:[#allocation4 + $0x148] sm:$0xff]
    %v1331 = vld [vmem:[#allocation4 + $0x150] sm:$0xff]
    %v1332 = vld [vmem:[#allocation4 + $0x158] sm:$0xff]
    %v1333 = vld [vmem:[#allocation4 + $0x160] sm:$0xff]
    %v1334 = vld [vmem:[#allocation4 + $0x168] sm:$0xff]
    %v1335 = vld [vmem:[#allocation4 + $0x170] sm:$0xff]
    %v1336 = vld [vmem:[#allocation4 + $0x178] sm:$0xff]
    %v1337 = vld [vmem:[#allocation4 + $0x180] sm:$0xff]
    %v1338 = vld [vmem:[#allocation4 + $0x188] sm:$0xff]
    %v1339 = vld [vmem:[#allocation4 + $0x190] sm:$0xff]
    %v1340 = vld [vmem:[#allocation4 + $0x198] sm:$0xff]
    %v1341 = vld [vmem:[#allocation4 + $0x1a0] sm:$0xff]
    %v1342 = vld [vmem:[#allocation4 + $0x1a8] sm:$0xff]
    %v1343 = vld [vmem:[#allocation4 + $0x1b0] sm:$0xff]
    %v1344 = vld [vmem:[#allocation4 + $0x1b8] sm:$0xff]
    %v1345 = vld [vmem:[#allocation4 + $0x1c0] sm:$0xff]
    %v1346 = vld [vmem:[#allocation4 + $0x1c8] sm:$0xff]
    %v1347 = vld [vmem:[#allocation4 + $0x1d0] sm:$0xff]
    %v1348 = vld [vmem:[#allocation4 + $0x1d8] sm:$0xff]
    %v1349 = vld [vmem:[#allocation4 + $0x1e0] sm:$0xff]
    %v1350 = vld [vmem:[#allocation4 + $0x1e8] sm:$0xff]
    %v1351 = vld [vmem:[#allocation4 + $0x1f0] sm:$0xff]
    %v1352 = vld [vmem:[#allocation4 + $0x1f8] sm:$0xff]
    %v1353 = vld [vmem:[%s11] sm:$0xf]
    %v1355 = vlaneseq
    %v1356 = vshrl.u32 %v1355, 7
    %v1357 = vsub.s32 0, %v1356
    %v1358 = vrot.slane %v1353, %v1357
    %v1359 = vlaneseq
    %v1360 = vshrl.u32 %v1359, 7
    %v1361 = vsub.s32 1, %v1360
    %v1362 = vrot.slane %v1353, %v1361
    %v1363 = vlaneseq
    %v1364 = vshrl.u32 %v1363, 7
    %v1365 = vsub.s32 2, %v1364
    %v1366 = vrot.slane %v1353, %v1365
    %v1367 = vlaneseq
    %v1368 = vshrl.u32 %v1367, 7
    %v1369 = vsub.s32 3, %v1368
    %v1370 = vrot.slane %v1353, %v1369
    %v1439 = vunpack.c.l.b16 %v1289
    %v1440 = vunpack.c.h.b16 %v1289
    %v1441 = vunpack.c.l.b16 %v1290
    %v1442 = vunpack.c.h.b16 %v1290
    %v1443 = vunpack.c.l.b16 %v1291
    %v1444 = vunpack.c.h.b16 %v1291
    %v1445 = vunpack.c.l.b16 %v1292
    %v1446 = vunpack.c.h.b16 %v1292
    %v1447 = vunpack.c.l.b16 %v1293
    %v1448 = vunpack.c.h.b16 %v1293
    %v1449 = vunpack.c.l.b16 %v1294
    %v1450 = vunpack.c.h.b16 %v1294
    %v1451 = vunpack.c.l.b16 %v1295
    %v1452 = vunpack.c.h.b16 %v1295
    %v1453 = vunpack.c.l.b16 %v1296
    %v1454 = vunpack.c.h.b16 %v1296
    %v1455 = vunpack.c.l.b16 %v1297
    %v1456 = vunpack.c.h.b16 %v1297
    %v1457 = vunpack.c.l.b16 %v1298
    %v1458 = vunpack.c.h.b16 %v1298
    %v1459 = vunpack.c.l.b16 %v1299
    %v1460 = vunpack.c.h.b16 %v1299
    %v1461 = vunpack.c.l.b16 %v1300
    %v1462 = vunpack.c.h.b16 %v1300
    %v1463 = vunpack.c.l.b16 %v1301
    %v1464 = vunpack.c.h.b16 %v1301
    %v1465 = vunpack.c.l.b16 %v1302
    %v1466 = vunpack.c.h.b16 %v1302
    %v1467 = vunpack.c.l.b16 %v1303
    %v1468 = vunpack.c.h.b16 %v1303
    %v1469 = vunpack.c.l.b16 %v1304
    %v1470 = vunpack.c.h.b16 %v1304
    %v1471 = vunpack.c.l.b16 %v1305
    %v1472 = vunpack.c.h.b16 %v1305
    %v1473 = vunpack.c.l.b16 %v1306
    %v1474 = vunpack.c.h.b16 %v1306
    %v1475 = vunpack.c.l.b16 %v1307
    %v1476 = vunpack.c.h.b16 %v1307
    %v1477 = vunpack.c.l.b16 %v1308
    %v1478 = vunpack.c.h.b16 %v1308
    %v1479 = vunpack.c.l.b16 %v1309
    %v1480 = vunpack.c.h.b16 %v1309
    %v1481 = vunpack.c.l.b16 %v1310
    %v1482 = vunpack.c.h.b16 %v1310
    %v1483 = vunpack.c.l.b16 %v1311
    %v1484 = vunpack.c.h.b16 %v1311
    %v1485 = vunpack.c.l.b16 %v1312
    %v1486 = vunpack.c.h.b16 %v1312
    %v1487 = vunpack.c.l.b16 %v1313
    %v1488 = vunpack.c.h.b16 %v1313
    %v1489 = vunpack.c.l.b16 %v1314
    %v1490 = vunpack.c.h.b16 %v1314
    %v1491 = vunpack.c.l.b16 %v1315
    %v1492 = vunpack.c.h.b16 %v1315
    %v1493 = vunpack.c.l.b16 %v1316
    %v1494 = vunpack.c.h.b16 %v1316
    %v1495 = vunpack.c.l.b16 %v1317
    %v1496 = vunpack.c.h.b16 %v1317
    %v1497 = vunpack.c.l.b16 %v1318
    %v1498 = vunpack.c.h.b16 %v1318
    %v1499 = vunpack.c.l.b16 %v1319
    %v1500 = vunpack.c.h.b16 %v1319
    %v1501 = vunpack.c.l.b16 %v1320
    %v1502 = vunpack.c.h.b16 %v1320
    %v1503 = vunpack.c.l.b16 %v1321
    %v1504 = vunpack.c.h.b16 %v1321
    %v1505 = vunpack.c.l.b16 %v1322
    %v1506 = vunpack.c.h.b16 %v1322
    %v1507 = vunpack.c.l.b16 %v1323
    %v1508 = vunpack.c.h.b16 %v1323
    %v1509 = vunpack.c.l.b16 %v1324
    %v1510 = vunpack.c.h.b16 %v1324
    %v1511 = vunpack.c.l.b16 %v1325
    %v1512 = vunpack.c.h.b16 %v1325
    %v1513 = vunpack.c.l.b16 %v1326
    %v1514 = vunpack.c.h.b16 %v1326
    %v1515 = vunpack.c.l.b16 %v1327
    %v1516 = vunpack.c.h.b16 %v1327
    %v1517 = vunpack.c.l.b16 %v1328
    %v1518 = vunpack.c.h.b16 %v1328
    %v1519 = vunpack.c.l.b16 %v1329
    %v1520 = vunpack.c.h.b16 %v1329
    %v1521 = vunpack.c.l.b16 %v1330
    %v1522 = vunpack.c.h.b16 %v1330
    %v1523 = vunpack.c.l.b16 %v1331
    %v1524 = vunpack.c.h.b16 %v1331
    %v1525 = vunpack.c.l.b16 %v1332
    %v1526 = vunpack.c.h.b16 %v1332
    %v1527 = vunpack.c.l.b16 %v1333
    %v1528 = vunpack.c.h.b16 %v1333
    %v1529 = vunpack.c.l.b16 %v1334
    %v1530 = vunpack.c.h.b16 %v1334
    %v1531 = vunpack.c.l.b16 %v1335
    %v1532 = vunpack.c.h.b16 %v1335
    %v1533 = vunpack.c.l.b16 %v1336
    %v1534 = vunpack.c.h.b16 %v1336
    %v1535 = vunpack.c.l.b16 %v1337
    %v1536 = vunpack.c.h.b16 %v1337
    %v1537 = vunpack.c.l.b16 %v1338
    %v1538 = vunpack.c.h.b16 %v1338
    %v1539 = vunpack.c.l.b16 %v1339
    %v1540 = vunpack.c.h.b16 %v1339
    %v1541 = vunpack.c.l.b16 %v1340
    %v1542 = vunpack.c.h.b16 %v1340
    %v1543 = vunpack.c.l.b16 %v1341
    %v1544 = vunpack.c.h.b16 %v1341
    %v1545 = vunpack.c.l.b16 %v1342
    %v1546 = vunpack.c.h.b16 %v1342
    %v1547 = vunpack.c.l.b16 %v1343
    %v1548 = vunpack.c.h.b16 %v1343
    %v1549 = vunpack.c.l.b16 %v1344
    %v1550 = vunpack.c.h.b16 %v1344
    %v1551 = vunpack.c.l.b16 %v1345
    %v1552 = vunpack.c.h.b16 %v1345
    %v1553 = vunpack.c.l.b16 %v1346
    %v1554 = vunpack.c.h.b16 %v1346
    %v1555 = vunpack.c.l.b16 %v1347
    %v1556 = vunpack.c.h.b16 %v1347
    %v1557 = vunpack.c.l.b16 %v1348
    %v1558 = vunpack.c.h.b16 %v1348
    %v1559 = vunpack.c.l.b16 %v1349
    %v1560 = vunpack.c.h.b16 %v1349
    %v1561 = vunpack.c.l.b16 %v1350
    %v1562 = vunpack.c.h.b16 %v1350
    %v1563 = vunpack.c.l.b16 %v1351
    %v1564 = vunpack.c.h.b16 %v1351
    %v1565 = vunpack.c.l.b16 %v1352
    %v1566 = vunpack.c.h.b16 %v1352
    %v1567 = vpack.c.b16 %v1443, %v1439
    %v1568 = vpack.c.b16 %v1444, %v1440
    %v1569 = vpack.c.b16 %v1445, %v1441
    %v1570 = vpack.c.b16 %v1446, %v1442
    %v1571 = vpack.c.b16 %v1451, %v1447
    %v1572 = vpack.c.b16 %v1452, %v1448
    %v1573 = vpack.c.b16 %v1453, %v1449
    %v1574 = vpack.c.b16 %v1454, %v1450
    %v1575 = vpack.c.b16 %v1459, %v1455
    %v1576 = vpack.c.b16 %v1460, %v1456
    %v1577 = vpack.c.b16 %v1461, %v1457
    %v1578 = vpack.c.b16 %v1462, %v1458
    %v1579 = vpack.c.b16 %v1467, %v1463
    %v1580 = vpack.c.b16 %v1468, %v1464
    %v1581 = vpack.c.b16 %v1469, %v1465
    %v1582 = vpack.c.b16 %v1470, %v1466
    %v1583 = vpack.c.b16 %v1475, %v1471
    %v1584 = vpack.c.b16 %v1476, %v1472
    %v1585 = vpack.c.b16 %v1477, %v1473
    %v1586 = vpack.c.b16 %v1478, %v1474
    %v1587 = vpack.c.b16 %v1483, %v1479
    %v1588 = vpack.c.b16 %v1484, %v1480
    %v1589 = vpack.c.b16 %v1485, %v1481
    %v1590 = vpack.c.b16 %v1486, %v1482
    %v1591 = vpack.c.b16 %v1491, %v1487
    %v1592 = vpack.c.b16 %v1492, %v1488
    %v1593 = vpack.c.b16 %v1493, %v1489
    %v1594 = vpack.c.b16 %v1494, %v1490
    %v1595 = vpack.c.b16 %v1499, %v1495
    %v1596 = vpack.c.b16 %v1500, %v1496
    %v1597 = vpack.c.b16 %v1501, %v1497
    %v1598 = vpack.c.b16 %v1502, %v1498
    %v1599 = vpack.c.b16 %v1507, %v1503
    %v1600 = vpack.c.b16 %v1508, %v1504
    %v1601 = vpack.c.b16 %v1509, %v1505
    %v1602 = vpack.c.b16 %v1510, %v1506
    %v1603 = vpack.c.b16 %v1515, %v1511
    %v1604 = vpack.c.b16 %v1516, %v1512
    %v1605 = vpack.c.b16 %v1517, %v1513
    %v1606 = vpack.c.b16 %v1518, %v1514
    %v1607 = vpack.c.b16 %v1523, %v1519
    %v1608 = vpack.c.b16 %v1524, %v1520
    %v1609 = vpack.c.b16 %v1525, %v1521
    %v1610 = vpack.c.b16 %v1526, %v1522
    %v1611 = vpack.c.b16 %v1531, %v1527
    %v1612 = vpack.c.b16 %v1532, %v1528
    %v1613 = vpack.c.b16 %v1533, %v1529
    %v1614 = vpack.c.b16 %v1534, %v1530
    %v1615 = vpack.c.b16 %v1539, %v1535
    %v1616 = vpack.c.b16 %v1540, %v1536
    %v1617 = vpack.c.b16 %v1541, %v1537
    %v1618 = vpack.c.b16 %v1542, %v1538
    %v1619 = vpack.c.b16 %v1547, %v1543
    %v1620 = vpack.c.b16 %v1548, %v1544
    %v1621 = vpack.c.b16 %v1549, %v1545
    %v1622 = vpack.c.b16 %v1550, %v1546
    %v1623 = vpack.c.b16 %v1555, %v1551
    %v1624 = vpack.c.b16 %v1556, %v1552
    %v1625 = vpack.c.b16 %v1557, %v1553
    %v1626 = vpack.c.b16 %v1558, %v1554
    %v1627 = vpack.c.b16 %v1563, %v1559
    %v1628 = vpack.c.b16 %v1564, %v1560
    %v1629 = vpack.c.b16 %v1565, %v1561
    %v1630 = vpack.c.b16 %v1566, %v1562
    %1695 = vmatprep.subr.bf16.mxu0 %v1568
    %1696 = vmatpush1.bf16.msra.mxu0 %v1567
    %1697 = vmatprep.subr.bf16.mxu0 %v1572
    %1698 = vmatpush1.bf16.msra.mxu0 %v1571
    %1699 = vmatprep.subr.bf16.mxu0 %v1576
    %1700 = vmatpush1.bf16.msra.mxu0 %v1575
    %1701 = vmatprep.subr.bf16.mxu0 %v1580
    %1702 = vmatpush1.bf16.msra.mxu0 %v1579
    %1703 = vmatprep.subr.bf16.mxu0 %v1584
    %1704 = vmatpush1.bf16.msra.mxu0 %v1583
    %1705 = vmatprep.subr.bf16.mxu0 %v1588
    %1706 = vmatpush1.bf16.msra.mxu0 %v1587
    %1707 = vmatprep.subr.bf16.mxu0 %v1592
    %1708 = vmatpush1.bf16.msra.mxu0 %v1591
    %1709 = vmatprep.subr.bf16.mxu0 %v1596
    %1710 = vmatpush1.bf16.msra.mxu0 %v1595
    %1711 = vmatprep.subr.bf16.mxu0 %v1600
    %1712 = vmatpush1.bf16.msra.mxu0 %v1599
    %1713 = vmatprep.subr.bf16.mxu0 %v1604
    %1714 = vmatpush1.bf16.msra.mxu0 %v1603
    %1715 = vmatprep.subr.bf16.mxu0 %v1608
    %1716 = vmatpush1.bf16.msra.mxu0 %v1607
    %1717 = vmatprep.subr.bf16.mxu0 %v1612
    %1718 = vmatpush1.bf16.msra.mxu0 %v1611
    %1719 = vmatprep.subr.bf16.mxu0 %v1616
    %1720 = vmatpush1.bf16.msra.mxu0 %v1615
    %1721 = vmatprep.subr.bf16.mxu0 %v1620
    %1722 = vmatpush1.bf16.msra.mxu0 %v1619
    %1723 = vmatprep.subr.bf16.mxu0 %v1624
    %1724 = vmatpush1.bf16.msra.mxu0 %v1623
    %1725 = vmatprep.subr.bf16.mxu0 %v1628
    %1726 = vmatpush1.bf16.msra.mxu0 %v1627
    %1727 = vmatprep.mubr.bf16.mxu0 %v1282
    %1728 = vmatmul.mubr.bf16.gmra.mrb[0].mxu0 %v1115
    %v1729 = vpop.f32.mrb[0].mxu0
    %v1730 = vadd.f32 %v1358, %v1729
    %v1731 = vpop.f32.mrb[0].mxu0
    %v1732 = vadd.f32 %v1362, %v1731
    %v1733 = vpop.f32.mrb[0].mxu0
    %v1734 = vadd.f32 %v1358, %v1733
    %v1735 = vpop.f32.mrb[0].mxu0
    %v1736 = vadd.f32 %v1362, %v1735
    %1737 = vmatprep.mubr.bf16.mxu0 %v1283
    %1738 = vmatmul.mubr.bf16.gmra.mrb[0].mxu0 %v1116
    %v1739 = vpop.f32.mrb[0].mxu0
    %v1740 = vadd.f32 %v1358, %v1739
    %v1741 = vpop.f32.mrb[0].mxu0
    %v1742 = vadd.f32 %v1362, %v1741
    %v1743 = vpop.f32.mrb[0].mxu0
    %v1744 = vadd.f32 %v1358, %v1743
    %v1745 = vpop.f32.mrb[0].mxu0
    %v1746 = vadd.f32 %v1362, %v1745
    %1747 = vmatprep.mubr.bf16.mxu0 %v1284
    %1748 = vmatmul.mubr.bf16.gmra.mrb[0].mxu0 %v1117
    %v1749 = vpop.f32.mrb[0].mxu0
    %v1750 = vadd.f32 %v1358, %v1749
    %v1751 = vpop.f32.mrb[0].mxu0
    %v1752 = vadd.f32 %v1362, %v1751
    %v1753 = vpop.f32.mrb[0].mxu0
    %v1754 = vadd.f32 %v1358, %v1753
    %v1755 = vpop.f32.mrb[0].mxu0
    %v1756 = vadd.f32 %v1362, %v1755
    %1757 = vmatprep.mubr.bf16.mxu0 %v1285
    %1758 = vmatmul.mubr.bf16.gmra.mrb[0].mxu0 %v1118
    %v1759 = vpop.f32.mrb[0].mxu0
    %v1760 = vadd.f32 %v1358, %v1759
    %v1761 = vpop.f32.mrb[0].mxu0
    %v1762 = vadd.f32 %v1362, %v1761
    %v1763 = vpop.f32.mrb[0].mxu0
    %v1764 = vadd.f32 %v1358, %v1763
    %v1765 = vpop.f32.mrb[0].mxu0
    %v1766 = vadd.f32 %v1362, %v1765
    %1767 = vmatprep.mubr.bf16.mxu0 %v1286
    %1768 = vmatmul.mubr.bf16.gmra.mrb[0].mxu0 %v1119
    %v1769 = vpop.f32.mrb[0].mxu0
    %v1770 = vadd.f32 %v1358, %v1769
    %v1771 = vpop.f32.mrb[0].mxu0
    %v1772 = vadd.f32 %v1362, %v1771
    %v1773 = vpop.f32.mrb[0].mxu0
    %v1774 = vadd.f32 %v1358, %v1773
    %v1775 = vpop.f32.mrb[0].mxu0
    %v1776 = vadd.f32 %v1362, %v1775
    %1777 = vmatprep.mubr.bf16.mxu0 %v1287
    %1778 = vmatmul.mubr.bf16.gmra.mrb[0].mxu0 %v1120
    %v1779 = vpop.f32.mrb[0].mxu0
    %v1780 = vadd.f32 %v1358, %v1779
    %v1781 = vpop.f32.mrb[0].mxu0
    %v1782 = vadd.f32 %v1362, %v1781
    %v1783 = vpop.f32.mrb[0].mxu0
    %v1784 = vadd.f32 %v1358, %v1783
    %v1785 = vpop.f32.mrb[0].mxu0
    %v1786 = vadd.f32 %v1362, %v1785
    %1787 = vmatprep.mubr.bf16.mxu0 %v1288
    %1788 = vmatmul.mubr.bf16.gmra.mrb[0].mxu0 %v1121
    %v1789 = vpop.f32.mrb[0].mxu0
    %v1790 = vadd.f32 %v1358, %v1789
    %v1791 = vpop.f32.mrb[0].mxu0
    %v1792 = vadd.f32 %v1362, %v1791
    %v1793 = vpop.f32.mrb[0].mxu0
    %v1794 = vpop.f32.mrb[0].mxu0
    %1795 = vdwg.mxu0
    %1796 = vmatprep.subr.bf16.mxu0 %v1570
    %1797 = vmatpush1.bf16.msra.mxu0 %v1569
    %1798 = vmatprep.subr.bf16.mxu0 %v1574
    %1799 = vmatpush1.bf16.msra.mxu0 %v1573
    %1800 = vmatprep.subr.bf16.mxu0 %v1578
    %1801 = vmatpush1.bf16.msra.mxu0 %v1577
    %1802 = vmatprep.subr.bf16.mxu0 %v1582
    %1803 = vmatpush1.bf16.msra.mxu0 %v1581
    %1804 = vmatprep.subr.bf16.mxu0 %v1586
    %1805 = vmatpush1.bf16.msra.mxu0 %v1585
    %1806 = vmatprep.subr.bf16.mxu0 %v1590
    %1807 = vmatpush1.bf16.msra.mxu0 %v1589
    %1808 = vmatprep.subr.bf16.mxu0 %v1594
    %1809 = vmatpush1.bf16.msra.mxu0 %v1593
    %1810 = vmatprep.subr.bf16.mxu0 %v1598
    %1811 = vmatpush1.bf16.msra.mxu0 %v1597
    %1812 = vmatprep.subr.bf16.mxu0 %v1602
    %1813 = vmatpush1.bf16.msra.mxu0 %v1601
    %1814 = vmatprep.subr.bf16.mxu0 %v1606
    %1815 = vmatpush1.bf16.msra.mxu0 %v1605
    %1816 = vmatprep.subr.bf16.mxu0 %v1610
    %1817 = vmatpush1.bf16.msra.mxu0 %v1609
    %1818 = vmatprep.subr.bf16.mxu0 %v1614
    %1819 = vmatpush1.bf16.msra.mxu0 %v1613
    %1820 = vmatprep.subr.bf16.mxu0 %v1618
    %1821 = vmatpush1.bf16.msra.mxu0 %v1617
    %1822 = vmatprep.subr.bf16.mxu0 %v1622
    %1823 = vmatpush1.bf16.msra.mxu0 %v1621
    %1824 = vmatprep.subr.bf16.mxu0 %v1626
    %1825 = vmatpush1.bf16.msra.mxu0 %v1625
    %1826 = vmatprep.subr.bf16.mxu0 %v1630
    %1827 = vmatpush1.bf16.msra.mxu0 %v1629
    %1828 = vmatprep.mubr.bf16.mxu0 %v1282
    %1829 = vmatmul.mubr.bf16.gmra.mrb[0].mxu0 %v1115
    %v1830 = vpop.f32.mrb[0].mxu0
    %v1831 = vadd.f32 %v1366, %v1830
    %v1832 = vpop.f32.mrb[0].mxu0
    %v1833 = vadd.f32 %v1370, %v1832
    %v1834 = vpop.f32.mrb[0].mxu0
    %v1835 = vadd.f32 %v1366, %v1834
    %v1836 = vpop.f32.mrb[0].mxu0
    %v1837 = vadd.f32 %v1370, %v1836
    %1838 = vmatprep.mubr.bf16.mxu0 %v1283
    %1839 = vmatmul.mubr.bf16.gmra.mrb[0].mxu0 %v1116
    %v1840 = vpop.f32.mrb[0].mxu0
    %v1841 = vadd.f32 %v1366, %v1840
    %v1842 = vpop.f32.mrb[0].mxu0
    %v1843 = vadd.f32 %v1370, %v1842
    %v1844 = vpop.f32.mrb[0].mxu0
    %v1845 = vadd.f32 %v1366, %v1844
    %v1846 = vpop.f32.mrb[0].mxu0
    %v1847 = vadd.f32 %v1370, %v1846
    %1848 = vmatprep.mubr.bf16.mxu0 %v1284
    %1849 = vmatmul.mubr.bf16.gmra.mrb[0].mxu0 %v1117
    %v1850 = vpop.f32.mrb[0].mxu0
    %v1851 = vadd.f32 %v1366, %v1850
    %v1852 = vpop.f32.mrb[0].mxu0
    %v1853 = vadd.f32 %v1370, %v1852
    %v1854 = vpop.f32.mrb[0].mxu0
    %v1855 = vadd.f32 %v1366, %v1854
    %v1856 = vpop.f32.mrb[0].mxu0
    %v1857 = vadd.f32 %v1370, %v1856
    %1858 = vmatprep.mubr.bf16.mxu0 %v1285
    %1859 = vmatmul.mubr.bf16.gmra.mrb[0].mxu0 %v1118
    %v1860 = vpop.f32.mrb[0].mxu0
    %v1861 = vadd.f32 %v1366, %v1860
    %v1862 = vpop.f32.mrb[0].mxu0
    %v1863 = vadd.f32 %v1370, %v1862
    %v1864 = vpop.f32.mrb[0].mxu0
    %v1865 = vadd.f32 %v1366, %v1864
    %v1866 = vpop.f32.mrb[0].mxu0
    %v1867 = vadd.f32 %v1370, %v1866
    %1868 = vmatprep.mubr.bf16.mxu0 %v1286
    %1869 = vmatmul.mubr.bf16.gmra.mrb[0].mxu0 %v1119
    %v1870 = vpop.f32.mrb[0].mxu0
    %v1871 = vadd.f32 %v1366, %v1870
    %v1872 = vpop.f32.mrb[0].mxu0
    %v1873 = vadd.f32 %v1370, %v1872
    %v1874 = vpop.f32.mrb[0].mxu0
    %v1875 = vadd.f32 %v1366, %v1874
    %v1876 = vpop.f32.mrb[0].mxu0
    %v1877 = vadd.f32 %v1370, %v1876
    %1878 = vmatprep.mubr.bf16.mxu0 %v1287
    %1879 = vmatmul.mubr.bf16.gmra.mrb[0].mxu0 %v1120
    %v1880 = vpop.f32.mrb[0].mxu0
    %v1881 = vadd.f32 %v1366, %v1880
    %v1882 = vpop.f32.mrb[0].mxu0
    %v1883 = vadd.f32 %v1370, %v1882
    %v1884 = vpop.f32.mrb[0].mxu0
    %v1885 = vadd.f32 %v1366, %v1884
    %v1886 = vpop.f32.mrb[0].mxu0
    %v1887 = vadd.f32 %v1370, %v1886
    %1888 = vmatprep.mubr.bf16.mxu0 %v1288
    %1889 = vmatmul.mubr.bf16.gmra.mrb[0].mxu0 %v1121
    %v1890 = vpop.f32.mrb[0].mxu0
    %v1891 = vadd.f32 %v1366, %v1890
    %v1892 = vpop.f32.mrb[0].mxu0
    %v1893 = vadd.f32 %v1370, %v1892
    %v1894 = vpop.f32.mrb[0].mxu0
    %v1895 = vpop.f32.mrb[0].mxu0
    %1896 = vdwg.mxu0
    %1897 = vst [vmem:[#allocation3] sm:$0xff] %v1730
    %1898 = vst [vmem:[#allocation3 + $0x8] sm:$0xff] %v1732
    %1899 = vst [vmem:[#allocation3 + $0x10] sm:$0xff] %v1831
    %1900 = vst [vmem:[#allocation3 + $0x18] sm:$0xff] %v1833
    %1901 = vst [vmem:[#allocation3 + $0x20] sm:$0xff] %v1734
    %1902 = vst [vmem:[#allocation3 + $0x28] sm:$0xff] %v1736
    %1903 = vst [vmem:[#allocation3 + $0x30] sm:$0xff] %v1835
    %1904 = vst [vmem:[#allocation3 + $0x38] sm:$0xff] %v1837
    %1905 = vst [vmem:[#allocation3 + $0x40] sm:$0xff] %v1740
    %1906 = vst [vmem:[#allocation3 + $0x48] sm:$0xff] %v1742
    %1907 = vst [vmem:[#allocation3 + $0x50] sm:$0xff] %v1841
    %1908 = vst [vmem:[#allocation3 + $0x58] sm:$0xff] %v1843
    %1909 = vst [vmem:[#allocation3 + $0x60] sm:$0xff] %v1744
    %1910 = vst [vmem:[#allocation3 + $0x68] sm:$0xff] %v1746
    %1911 = vst [vmem:[#allocation3 + $0x70] sm:$0xff] %v1845
    %1912 = vst [vmem:[#allocation3 + $0x78] sm:$0xff] %v1847
    %1913 = vst [vmem:[#allocation3 + $0x80] sm:$0xff] %v1750
    %1914 = vst [vmem:[#allocation3 + $0x88] sm:$0xff] %v1752
    %1915 = vst [vmem:[#allocation3 + $0x90] sm:$0xff] %v1851
    %1916 = vst [vmem:[#allocation3 + $0x98] sm:$0xff] %v1853
    %1917 = vst [vmem:[#allocation3 + $0xa0] sm:$0xff] %v1754
    %1918 = vst [vmem:[#allocation3 + $0xa8] sm:$0xff] %v1756
    %1919 = vst [vmem:[#allocation3 + $0xb0] sm:$0xff] %v1855
    %1920 = vst [vmem:[#allocation3 + $0xb8] sm:$0xff] %v1857
    %1921 = vst [vmem:[#allocation3 + $0xc0] sm:$0xff] %v1760
    %1922 = vst [vmem:[#allocation3 + $0xc8] sm:$0xff] %v1762
    %1923 = vst [vmem:[#allocation3 + $0xd0] sm:$0xff] %v1861
    %1924 = vst [vmem:[#allocation3 + $0xd8] sm:$0xff] %v1863
    %1925 = vst [vmem:[#allocation3 + $0xe0] sm:$0xff] %v1764
    %1926 = vst [vmem:[#allocation3 + $0xe8] sm:$0xff] %v1766
    %1927 = vst [vmem:[#allocation3 + $0xf0] sm:$0xff] %v1865
    %1928 = vst [vmem:[#allocation3 + $0xf8] sm:$0xff] %v1867
    %1929 = vst [vmem:[#allocation3 + $0x100] sm:$0xff] %v1770
    %1930 = vst [vmem:[#allocation3 + $0x108] sm:$0xff] %v1772
    %1931 = vst [vmem:[#allocation3 + $0x110] sm:$0xff] %v1871
    %1932 = vst [vmem:[#allocation3 + $0x118] sm:$0xff] %v1873
    %1933 = vst [vmem:[#allocation3 + $0x120] sm:$0xff] %v1774
    %1934 = vst [vmem:[#allocation3 + $0x128] sm:$0xff] %v1776
    %1935 = vst [vmem:[#allocation3 + $0x130] sm:$0xff] %v1875
    %1936 = vst [vmem:[#allocation3 + $0x138] sm:$0xff] %v1877
    %1937 = vst [vmem:[#allocation3 + $0x140] sm:$0xff] %v1780
    %1938 = vst [vmem:[#allocation3 + $0x148] sm:$0xff] %v1782
    %1939 = vst [vmem:[#allocation3 + $0x150] sm:$0xff] %v1881
    %1940 = vst [vmem:[#allocation3 + $0x158] sm:$0xff] %v1883
    %1941 = vst [vmem:[#allocation3 + $0x160] sm:$0xff] %v1784
    %1942 = vst [vmem:[#allocation3 + $0x168] sm:$0xff] %v1786
    %1943 = vst [vmem:[#allocation3 + $0x170] sm:$0xff] %v1885
    %1944 = vst [vmem:[#allocation3 + $0x178] sm:$0xff] %v1887
    %1945 = vst [vmem:[#allocation3 + $0x180] sm:$0xf] %v1790
    %1946 = vst [vmem:[#allocation3 + $0x188] sm:$0xf] %v1792
    %1947 = vst [vmem:[#allocation3 + $0x190] sm:$0xf] %v1891
    %1948 = vst [vmem:[#allocation3 + $0x198] sm:$0xf] %v1893
    %v1949 = vld [vmem:[%s1088] sm:$0xff]
    %v1950 = vld [vmem:[%s1088 + $0x8] sm:$0xff]
    %v1951 = vld [vmem:[%s1088 + $0x10] sm:$0xff]
    %v1952 = vld [vmem:[%s1088 + $0x18] sm:$0xff]
    %v1953 = vld [vmem:[%s1088 + $0x20] sm:$0xff]
    %v1954 = vld [vmem:[%s1088 + $0x28] sm:$0xff]
    %v1955 = vld [vmem:[%s1088 + $0x30] sm:$0xff]
    %v1956 = vld [vmem:[%s1088 + $0x38] sm:$0xff]
    %v1957 = vld [vmem:[%s1088 + $0x40] sm:$0xff]
    %v1958 = vld [vmem:[%s1088 + $0x48] sm:$0xff]
    %v1959 = vld [vmem:[%s1088 + $0x50] sm:$0xff]
    %v1960 = vld [vmem:[%s1088 + $0x58] sm:$0xff]
    %v1961 = vld [vmem:[%s1088 + $0x60] sm:$0xf]
    %v1962 = vpack.c.bf16 %v1950, %v1949
    %v1963 = vpack.c.bf16 %v1952, %v1951
    %v1964 = vpack.c.bf16 %v1954, %v1953
    %v1965 = vpack.c.bf16 %v1956, %v1955
    %v1966 = vpack.c.bf16 %v1958, %v1957
    %v1967 = vpack.c.bf16 %v1960, %v1959
    %v1968 = vpack.c.bf16 %v1961, %v1961
    %v1969 = vld [vmem:[%s8] sm:$0xf]
    %v1970 = vld [vmem:[%s8 + $0x4] sm:$0xf]
    %v1971 = vld [vmem:[%s8 + $0x8] sm:$0xf]
    %v1972 = vld [vmem:[%s8 + $0xc] sm:$0xf]
    %v1973 = vld [vmem:[%s8 + $0x10] sm:$0xf]
    %v1974 = vld [vmem:[%s8 + $0x14] sm:$0xf]
    %v1975 = vld [vmem:[%s8 + $0x18] sm:$0xf]
    %v1976 = vld [vmem:[%s8 + $0x1c] sm:$0xf]
    %v1977 = vld [vmem:[%s8 + $0x20] sm:$0xf]
    %v1978 = vld [vmem:[%s8 + $0x24] sm:$0xf]
    %v1979 = vld [vmem:[%s8 + $0x28] sm:$0xf]
    %v1980 = vld [vmem:[%s8 + $0x2c] sm:$0xf]
    %v1981 = vld [vmem:[%s8 + $0x30] sm:$0x3]
    %v1995 = vunpack.c.l.b16 %v1969
    %v1996 = vunpack.c.l.b16 %v1970
    %v1997 = vunpack.c.l.b16 %v1971
    %v1998 = vunpack.c.l.b16 %v1972
    %v1999 = vunpack.c.l.b16 %v1973
    %v2000 = vunpack.c.l.b16 %v1974
    %v2001 = vunpack.c.l.b16 %v1975
    %v2002 = vunpack.c.l.b16 %v1976
    %v2003 = vunpack.c.l.b16 %v1977
    %v2004 = vunpack.c.l.b16 %v1978
    %v2005 = vunpack.c.l.b16 %v1979
    %v2006 = vunpack.c.l.b16 %v1980
    %v2007 = vunpack.c.l.b16 %v1981
    %v2008 = vpack.c.b16 %v1996, %v1995
    %v2009 = vpack.c.b16 %v1998, %v1997
    %v2010 = vpack.c.b16 %v2000, %v1999
    %v2011 = vpack.c.b16 %v2002, %v2001
    %v2012 = vpack.c.b16 %v2004, %v2003
    %v2013 = vpack.c.b16 %v2006, %v2005
    %v2014 = vpack.c.b16 %v2007, %v2007
    %v2016 = vsel %vm1168, %v2008, 0
    %v2019 = vsel %vm1168, %v2009, 0
    %v2022 = vsel %vm1168, %v2010, 0
    %v2025 = vsel %vm1168, %v2011, 0
    %v2028 = vsel %vm1168, %v2012, 0
    %v2031 = vsel %vm1168, %v2013, 0
    %v2034 = vsel %vm1168, %v2014, 0
    %v2037 = vsel %vm1190, %v1968, 0
    %2039 = vmatprep.subr.bf16.mxu0 0
    %2040 = vmatpush1.bf16.msra.mxu0 %v1962
    %2041 = vmatprep.subr.bf16.mxu0 0
    %2042 = vmatpush1.bf16.msra.mxu0 %v1963
    %2043 = vmatprep.subr.bf16.mxu0 0
    %2044 = vmatpush1.bf16.msra.mxu0 %v1964
    %2045 = vmatprep.subr.bf16.mxu0 0
    %2046 = vmatpush1.bf16.msra.mxu0 %v1965
    %2047 = vmatprep.subr.bf16.mxu0 0
    %2048 = vmatpush1.bf16.msra.mxu0 %v1966
    %2049 = vmatprep.subr.bf16.mxu0 0
    %2050 = vmatpush1.bf16.msra.mxu0 %v1967
    %2051 = vmatprep.subr.bf16.mxu0 0
    %2052 = vmatpush1.bf16.msra.mxu0 %v2037
    %2053 = vmatprep.subr.bf16.mxu0 0
    %2054 = vmatpush1.bf16.msra.mxu0 0
    %2055 = vmatprep.subr.bf16.mxu0 0
    %2056 = vmatpush1.bf16.msra.mxu0 0
    %2057 = vmatprep.subr.bf16.mxu0 0
    %2058 = vmatpush1.bf16.msra.mxu0 0
    %2059 = vmatprep.subr.bf16.mxu0 0
    %2060 = vmatpush1.bf16.msra.mxu0 0
    %2061 = vmatprep.subr.bf16.mxu0 0
    %2062 = vmatpush1.bf16.msra.mxu0 0
    %2063 = vmatprep.subr.bf16.mxu0 0
    %2064 = vmatpush1.bf16.msra.mxu0 0
    %2065 = vmatprep.subr.bf16.mxu0 0
    %2066 = vmatpush1.bf16.msra.mxu0 0
    %2067 = vmatprep.subr.bf16.mxu0 0
    %2068 = vmatpush1.bf16.msra.mxu0 0
    %2069 = vmatprep.subr.bf16.mxu0 0
    %2070 = vmatpush1.bf16.msra.mxu0 0
    %2071 = vmatprep.mubr.bf16.mxu0 0
    %2072 = vmatmul.mubr.bf16.gmra.mrb[0].mxu0 %v2016
    %v2073 = vpop.f32.mrb[0].mxu0
    %v2074 = vadd.f32 0.0, %v2073
    %v2075 = vpop.f32.mrb[0].mxu0
    %v2076 = vpop.f32.mrb[0].mxu0
    %v2077 = vadd.f32 0.0, %v2076
    %v2078 = vpop.f32.mrb[0].mxu0
    %2079 = vmatprep.mubr.bf16.mxu0 0
    %2080 = vmatmul.mubr.bf16.gmra.mrb[0].mxu0 %v2019
    %v2081 = vpop.f32.mrb[0].mxu0
    %v2082 = vadd.f32 0.0, %v2081
    %v2083 = vpop.f32.mrb[0].mxu0
    %v2084 = vpop.f32.mrb[0].mxu0
    %v2085 = vadd.f32 0.0, %v2084
    %v2086 = vpop.f32.mrb[0].mxu0
    %2087 = vmatprep.mubr.bf16.mxu0 0
    %2088 = vmatmul.mubr.bf16.gmra.mrb[0].mxu0 %v2022
    %v2089 = vpop.f32.mrb[0].mxu0
    %v2090 = vadd.f32 0.0, %v2089
    %v2091 = vpop.f32.mrb[0].mxu0
    %v2092 = vpop.f32.mrb[0].mxu0
    %v2093 = vadd.f32 0.0, %v2092
    %v2094 = vpop.f32.mrb[0].mxu0
    %2095 = vmatprep.mubr.bf16.mxu0 0
    %2096 = vmatmul.mubr.bf16.gmra.mrb[0].mxu0 %v2025
    %v2097 = vpop.f32.mrb[0].mxu0
    %v2098 = vadd.f32 0.0, %v2097
    %v2099 = vpop.f32.mrb[0].mxu0
    %v2100 = vpop.f32.mrb[0].mxu0
    %v2101 = vadd.f32 0.0, %v2100
    %v2102 = vpop.f32.mrb[0].mxu0
    %2103 = vmatprep.mubr.bf16.mxu0 0
    %2104 = vmatmul.mubr.bf16.gmra.mrb[0].mxu0 %v2028
    %v2105 = vpop.f32.mrb[0].mxu0
    %v2106 = vadd.f32 0.0, %v2105
    %v2107 = vpop.f32.mrb[0].mxu0
    %v2108 = vpop.f32.mrb[0].mxu0
    %v2109 = vadd.f32 0.0, %v2108
    %v2110 = vpop.f32.mrb[0].mxu0
    %2111 = vmatprep.mubr.bf16.mxu0 0
    %2112 = vmatmul.mubr.bf16.gmra.mrb[0].mxu0 %v2031
    %v2113 = vpop.f32.mrb[0].mxu0
    %v2114 = vadd.f32 0.0, %v2113
    %v2115 = vpop.f32.mrb[0].mxu0
    %v2116 = vpop.f32.mrb[0].mxu0
    %v2117 = vadd.f32 0.0, %v2116
    %v2118 = vpop.f32.mrb[0].mxu0
    %2119 = vmatprep.mubr.bf16.mxu0 0
    %2120 = vmatmul.mubr.bf16.gmra.mrb[0].mxu0 %v2034
    %v2121 = vpop.f32.mrb[0].mxu0
    %v2122 = vadd.f32 0.0, %v2121
    %v2123 = vpop.f32.mrb[0].mxu0
    %v2124 = vpop.f32.mrb[0].mxu0
    %v2125 = vpop.f32.mrb[0].mxu0
    %2126 = vdwg.mxu0
    %v2127 = vpack.c.bf16 %v2077, %v2074
    %v2128 = vpack.c.bf16 %v2085, %v2082
    %v2129 = vpack.c.bf16 %v2093, %v2090
    %v2130 = vpack.c.bf16 %v2101, %v2098
    %v2131 = vpack.c.bf16 %v2109, %v2106
    %v2132 = vpack.c.bf16 %v2117, %v2114
    %v2133 = vpack.c.bf16 %v2122, %v2122
    %v2134 = vld [vmem:[#allocation4] sm:$0xff]
    %v2135 = vld [vmem:[#allocation4 + $0x8] sm:$0xff]
    %v2136 = vld [vmem:[#allocation4 + $0x10] sm:$0xff]
    %v2137 = vld [vmem:[#allocation4 + $0x18] sm:$0xff]
    %v2138 = vld [vmem:[#allocation4 + $0x20] sm:$0xff]
    %v2139 = vld [vmem:[#allocation4 + $0x28] sm:$0xff]
    %v2140 = vld [vmem:[#allocation4 + $0x30] sm:$0xff]
    %v2141 = vld [vmem:[#allocation4 + $0x38] sm:$0xff]
    %v2142 = vld [vmem:[#allocation4 + $0x40] sm:$0xff]
    %v2143 = vld [vmem:[#allocation4 + $0x48] sm:$0xff]
    %v2144 = vld [vmem:[#allocation4 + $0x50] sm:$0xff]
    %v2145 = vld [vmem:[#allocation4 + $0x58] sm:$0xff]
    %v2146 = vld [vmem:[#allocation4 + $0x60] sm:$0xff]
    %v2147 = vld [vmem:[#allocation4 + $0x68] sm:$0xff]
    %v2148 = vld [vmem:[#allocation4 + $0x70] sm:$0xff]
    %v2149 = vld [vmem:[#allocation4 + $0x78] sm:$0xff]
    %v2150 = vld [vmem:[#allocation4 + $0x80] sm:$0xff]
    %v2151 = vld [vmem:[#allocation4 + $0x88] sm:$0xff]
    %v2152 = vld [vmem:[#allocation4 + $0x90] sm:$0xff]
    %v2153 = vld [vmem:[#allocation4 + $0x98] sm:$0xff]
    %v2154 = vld [vmem:[#allocation4 + $0xa0] sm:$0xff]
    %v2155 = vld [vmem:[#allocation4 + $0xa8] sm:$0xff]
    %v2156 = vld [vmem:[#allocation4 + $0xb0] sm:$0xff]
    %v2157 = vld [vmem:[#allocation4 + $0xb8] sm:$0xff]
    %v2158 = vld [vmem:[#allocation4 + $0xc0] sm:$0xff]
    %v2159 = vld [vmem:[#allocation4 + $0xc8] sm:$0xff]
    %v2160 = vld [vmem:[#allocation4 + $0xd0] sm:$0xff]
    %v2161 = vld [vmem:[#allocation4 + $0xd8] sm:$0xff]
    %v2162 = vld [vmem:[#allocation4 + $0xe0] sm:$0xff]
    %v2163 = vld [vmem:[#allocation4 + $0xe8] sm:$0xff]
    %v2164 = vld [vmem:[#allocation4 + $0xf0] sm:$0xff]
    %v2165 = vld [vmem:[#allocation4 + $0xf8] sm:$0xff]
    %v2166 = vld [vmem:[#allocation4 + $0x100] sm:$0xff]
    %v2167 = vld [vmem:[#allocation4 + $0x108] sm:$0xff]
    %v2168 = vld [vmem:[#allocation4 + $0x110] sm:$0xff]
    %v2169 = vld [vmem:[#allocation4 + $0x118] sm:$0xff]
    %v2170 = vld [vmem:[#allocation4 + $0x120] sm:$0xff]
    %v2171 = vld [vmem:[#allocation4 + $0x128] sm:$0xff]
    %v2172 = vld [vmem:[#allocation4 + $0x130] sm:$0xff]
    %v2173 = vld [vmem:[#allocation4 + $0x138] sm:$0xff]
    %v2174 = vld [vmem:[#allocation4 + $0x140] sm:$0xff]
    %v2175 = vld [vmem:[#allocation4 + $0x148] sm:$0xff]
    %v2176 = vld [vmem:[#allocation4 + $0x150] sm:$0xff]
    %v2177 = vld [vmem:[#allocation4 + $0x158] sm:$0xff]
    %v2178 = vld [vmem:[#allocation4 + $0x160] sm:$0xff]
    %v2179 = vld [vmem:[#allocation4 + $0x168] sm:$0xff]
    %v2180 = vld [vmem:[#allocation4 + $0x170] sm:$0xff]
    %v2181 = vld [vmem:[#allocation4 + $0x178] sm:$0xff]
    %v2182 = vld [vmem:[#allocation4 + $0x180] sm:$0xff]
    %v2183 = vld [vmem:[#allocation4 + $0x188] sm:$0xff]
    %v2184 = vld [vmem:[#allocation4 + $0x190] sm:$0xff]
    %v2185 = vld [vmem:[#allocation4 + $0x198] sm:$0xff]
    %v2186 = vld [vmem:[#allocation4 + $0x1a0] sm:$0xff]
    %v2187 = vld [vmem:[#allocation4 + $0x1a8] sm:$0xff]
    %v2188 = vld [vmem:[#allocation4 + $0x1b0] sm:$0xff]
    %v2189 = vld [vmem:[#allocation4 + $0x1b8] sm:$0xff]
    %v2190 = vld [vmem:[#allocation4 + $0x1c0] sm:$0xff]
    %v2191 = vld [vmem:[#allocation4 + $0x1c8] sm:$0xff]
    %v2192 = vld [vmem:[#allocation4 + $0x1d0] sm:$0xff]
    %v2193 = vld [vmem:[#allocation4 + $0x1d8] sm:$0xff]
    %v2194 = vld [vmem:[#allocation4 + $0x1e0] sm:$0xff]
    %v2195 = vld [vmem:[#allocation4 + $0x1e8] sm:$0xff]
    %v2196 = vld [vmem:[#allocation4 + $0x1f0] sm:$0xff]
    %v2197 = vld [vmem:[#allocation4 + $0x1f8] sm:$0xff]
    %v2198 = vld [vmem:[%s11] sm:$0xf]
    %v2200 = vlaneseq
    %v2201 = vshrl.u32 %v2200, 7
    %v2202 = vsub.s32 0, %v2201
    %v2203 = vrot.slane %v2198, %v2202
    %v2204 = vlaneseq
    %v2205 = vshrl.u32 %v2204, 7
    %v2206 = vsub.s32 1, %v2205
    %v2207 = vrot.slane %v2198, %v2206
    %v2208 = vlaneseq
    %v2209 = vshrl.u32 %v2208, 7
    %v2210 = vsub.s32 2, %v2209
    %v2211 = vrot.slane %v2198, %v2210
    %v2212 = vlaneseq
    %v2213 = vshrl.u32 %v2212, 7
    %v2214 = vsub.s32 3, %v2213
    %v2215 = vrot.slane %v2198, %v2214
    %v2284 = vunpack.c.l.b16 %v2134
    %v2285 = vunpack.c.h.b16 %v2134
    %v2286 = vunpack.c.l.b16 %v2135
    %v2287 = vunpack.c.h.b16 %v2135
    %v2288 = vunpack.c.l.b16 %v2136
    %v2289 = vunpack.c.h.b16 %v2136
    %v2290 = vunpack.c.l.b16 %v2137
    %v2291 = vunpack.c.h.b16 %v2137
    %v2292 = vunpack.c.l.b16 %v2138
    %v2293 = vunpack.c.h.b16 %v2138
    %v2294 = vunpack.c.l.b16 %v2139
    %v2295 = vunpack.c.h.b16 %v2139
    %v2296 = vunpack.c.l.b16 %v2140
    %v2297 = vunpack.c.h.b16 %v2140
    %v2298 = vunpack.c.l.b16 %v2141
    %v2299 = vunpack.c.h.b16 %v2141
    %v2300 = vunpack.c.l.b16 %v2142
    %v2301 = vunpack.c.h.b16 %v2142
    %v2302 = vunpack.c.l.b16 %v2143
    %v2303 = vunpack.c.h.b16 %v2143
    %v2304 = vunpack.c.l.b16 %v2144
    %v2305 = vunpack.c.h.b16 %v2144
    %v2306 = vunpack.c.l.b16 %v2145
    %v2307 = vunpack.c.h.b16 %v2145
    %v2308 = vunpack.c.l.b16 %v2146
    %v2309 = vunpack.c.h.b16 %v2146
    %v2310 = vunpack.c.l.b16 %v2147
    %v2311 = vunpack.c.h.b16 %v2147
    %v2312 = vunpack.c.l.b16 %v2148
    %v2313 = vunpack.c.h.b16 %v2148
    %v2314 = vunpack.c.l.b16 %v2149
    %v2315 = vunpack.c.h.b16 %v2149
    %v2316 = vunpack.c.l.b16 %v2150
    %v2317 = vunpack.c.h.b16 %v2150
    %v2318 = vunpack.c.l.b16 %v2151
    %v2319 = vunpack.c.h.b16 %v2151
    %v2320 = vunpack.c.l.b16 %v2152
    %v2321 = vunpack.c.h.b16 %v2152
    %v2322 = vunpack.c.l.b16 %v2153
    %v2323 = vunpack.c.h.b16 %v2153
    %v2324 = vunpack.c.l.b16 %v2154
    %v2325 = vunpack.c.h.b16 %v2154
    %v2326 = vunpack.c.l.b16 %v2155
    %v2327 = vunpack.c.h.b16 %v2155
    %v2328 = vunpack.c.l.b16 %v2156
    %v2329 = vunpack.c.h.b16 %v2156
    %v2330 = vunpack.c.l.b16 %v2157
    %v2331 = vunpack.c.h.b16 %v2157
    %v2332 = vunpack.c.l.b16 %v2158
    %v2333 = vunpack.c.h.b16 %v2158
    %v2334 = vunpack.c.l.b16 %v2159
    %v2335 = vunpack.c.h.b16 %v2159
    %v2336 = vunpack.c.l.b16 %v2160
    %v2337 = vunpack.c.h.b16 %v2160
    %v2338 = vunpack.c.l.b16 %v2161
    %v2339 = vunpack.c.h.b16 %v2161
    %v2340 = vunpack.c.l.b16 %v2162
    %v2341 = vunpack.c.h.b16 %v2162
    %v2342 = vunpack.c.l.b16 %v2163
    %v2343 = vunpack.c.h.b16 %v2163
    %v2344 = vunpack.c.l.b16 %v2164
    %v2345 = vunpack.c.h.b16 %v2164
    %v2346 = vunpack.c.l.b16 %v2165
    %v2347 = vunpack.c.h.b16 %v2165
    %v2348 = vunpack.c.l.b16 %v2166
    %v2349 = vunpack.c.h.b16 %v2166
    %v2350 = vunpack.c.l.b16 %v2167
    %v2351 = vunpack.c.h.b16 %v2167
    %v2352 = vunpack.c.l.b16 %v2168
    %v2353 = vunpack.c.h.b16 %v2168
    %v2354 = vunpack.c.l.b16 %v2169
    %v2355 = vunpack.c.h.b16 %v2169
    %v2356 = vunpack.c.l.b16 %v2170
    %v2357 = vunpack.c.h.b16 %v2170
    %v2358 = vunpack.c.l.b16 %v2171
    %v2359 = vunpack.c.h.b16 %v2171
    %v2360 = vunpack.c.l.b16 %v2172
    %v2361 = vunpack.c.h.b16 %v2172
    %v2362 = vunpack.c.l.b16 %v2173
    %v2363 = vunpack.c.h.b16 %v2173
    %v2364 = vunpack.c.l.b16 %v2174
    %v2365 = vunpack.c.h.b16 %v2174
    %v2366 = vunpack.c.l.b16 %v2175
    %v2367 = vunpack.c.h.b16 %v2175
    %v2368 = vunpack.c.l.b16 %v2176
    %v2369 = vunpack.c.h.b16 %v2176
    %v2370 = vunpack.c.l.b16 %v2177
    %v2371 = vunpack.c.h.b16 %v2177
    %v2372 = vunpack.c.l.b16 %v2178
    %v2373 = vunpack.c.h.b16 %v2178
    %v2374 = vunpack.c.l.b16 %v2179
    %v2375 = vunpack.c.h.b16 %v2179
    %v2376 = vunpack.c.l.b16 %v2180
    %v2377 = vunpack.c.h.b16 %v2180
    %v2378 = vunpack.c.l.b16 %v2181
    %v2379 = vunpack.c.h.b16 %v2181
    %v2380 = vunpack.c.l.b16 %v2182
    %v2381 = vunpack.c.h.b16 %v2182
    %v2382 = vunpack.c.l.b16 %v2183
    %v2383 = vunpack.c.h.b16 %v2183
    %v2384 = vunpack.c.l.b16 %v2184
    %v2385 = vunpack.c.h.b16 %v2184
    %v2386 = vunpack.c.l.b16 %v2185
    %v2387 = vunpack.c.h.b16 %v2185
    %v2388 = vunpack.c.l.b16 %v2186
    %v2389 = vunpack.c.h.b16 %v2186
    %v2390 = vunpack.c.l.b16 %v2187
    %v2391 = vunpack.c.h.b16 %v2187
    %v2392 = vunpack.c.l.b16 %v2188
    %v2393 = vunpack.c.h.b16 %v2188
    %v2394 = vunpack.c.l.b16 %v2189
    %v2395 = vunpack.c.h.b16 %v2189
    %v2396 = vunpack.c.l.b16 %v2190
    %v2397 = vunpack.c.h.b16 %v2190
    %v2398 = vunpack.c.l.b16 %v2191
    %v2399 = vunpack.c.h.b16 %v2191
    %v2400 = vunpack.c.l.b16 %v2192
    %v2401 = vunpack.c.h.b16 %v2192
    %v2402 = vunpack.c.l.b16 %v2193
    %v2403 = vunpack.c.h.b16 %v2193
    %v2404 = vunpack.c.l.b16 %v2194
    %v2405 = vunpack.c.h.b16 %v2194
    %v2406 = vunpack.c.l.b16 %v2195
    %v2407 = vunpack.c.h.b16 %v2195
    %v2408 = vunpack.c.l.b16 %v2196
    %v2409 = vunpack.c.h.b16 %v2196
    %v2410 = vunpack.c.l.b16 %v2197
    %v2411 = vunpack.c.h.b16 %v2197
    %v2412 = vpack.c.b16 %v2288, %v2284
    %v2413 = vpack.c.b16 %v2289, %v2285
    %v2414 = vpack.c.b16 %v2290, %v2286
    %v2415 = vpack.c.b16 %v2291, %v2287
    %v2416 = vpack.c.b16 %v2296, %v2292
    %v2417 = vpack.c.b16 %v2297, %v2293
    %v2418 = vpack.c.b16 %v2298, %v2294
    %v2419 = vpack.c.b16 %v2299, %v2295
    %v2420 = vpack.c.b16 %v2304, %v2300
    %v2421 = vpack.c.b16 %v2305, %v2301
    %v2422 = vpack.c.b16 %v2306, %v2302
    %v2423 = vpack.c.b16 %v2307, %v2303
    %v2424 = vpack.c.b16 %v2312, %v2308
    %v2425 = vpack.c.b16 %v2313, %v2309
    %v2426 = vpack.c.b16 %v2314, %v2310
    %v2427 = vpack.c.b16 %v2315, %v2311
    %v2428 = vpack.c.b16 %v2320, %v2316
    %v2429 = vpack.c.b16 %v2321, %v2317
    %v2430 = vpack.c.b16 %v2322, %v2318
    %v2431 = vpack.c.b16 %v2323, %v2319
    %v2432 = vpack.c.b16 %v2328, %v2324
    %v2433 = vpack.c.b16 %v2329, %v2325
    %v2434 = vpack.c.b16 %v2330, %v2326
    %v2435 = vpack.c.b16 %v2331, %v2327
    %v2436 = vpack.c.b16 %v2336, %v2332
    %v2437 = vpack.c.b16 %v2337, %v2333
    %v2438 = vpack.c.b16 %v2338, %v2334
    %v2439 = vpack.c.b16 %v2339, %v2335
    %v2440 = vpack.c.b16 %v2344, %v2340
    %v2441 = vpack.c.b16 %v2345, %v2341
    %v2442 = vpack.c.b16 %v2346, %v2342
    %v2443 = vpack.c.b16 %v2347, %v2343
    %v2444 = vpack.c.b16 %v2352, %v2348
    %v2445 = vpack.c.b16 %v2353, %v2349
    %v2446 = vpack.c.b16 %v2354, %v2350
    %v2447 = vpack.c.b16 %v2355, %v2351
    %v2448 = vpack.c.b16 %v2360, %v2356
    %v2449 = vpack.c.b16 %v2361, %v2357
    %v2450 = vpack.c.b16 %v2362, %v2358
    %v2451 = vpack.c.b16 %v2363, %v2359
    %v2452 = vpack.c.b16 %v2368, %v2364
    %v2453 = vpack.c.b16 %v2369, %v2365
    %v2454 = vpack.c.b16 %v2370, %v2366
    %v2455 = vpack.c.b16 %v2371, %v2367
    %v2456 = vpack.c.b16 %v2376, %v2372
    %v2457 = vpack.c.b16 %v2377, %v2373
    %v2458 = vpack.c.b16 %v2378, %v2374
    %v2459 = vpack.c.b16 %v2379, %v2375
    %v2460 = vpack.c.b16 %v2384, %v2380
    %v2461 = vpack.c.b16 %v2385, %v2381
    %v2462 = vpack.c.b16 %v2386, %v2382
    %v2463 = vpack.c.b16 %v2387, %v2383
    %v2464 = vpack.c.b16 %v2392, %v2388
    %v2465 = vpack.c.b16 %v2393, %v2389
    %v2466 = vpack.c.b16 %v2394, %v2390
    %v2467 = vpack.c.b16 %v2395, %v2391
    %v2468 = vpack.c.b16 %v2400, %v2396
    %v2469 = vpack.c.b16 %v2401, %v2397
    %v2470 = vpack.c.b16 %v2402, %v2398
    %v2471 = vpack.c.b16 %v2403, %v2399
    %v2472 = vpack.c.b16 %v2408, %v2404
    %v2473 = vpack.c.b16 %v2409, %v2405
    %v2474 = vpack.c.b16 %v2410, %v2406
    %v2475 = vpack.c.b16 %v2411, %v2407
    %2540 = vmatprep.subr.bf16.mxu0 %v2413
    %2541 = vmatpush1.bf16.msra.mxu0 %v2412
    %2542 = vmatprep.subr.bf16.mxu0 %v2417
    %2543 = vmatpush1.bf16.msra.mxu0 %v2416
    %2544 = vmatprep.subr.bf16.mxu0 %v2421
    %2545 = vmatpush1.bf16.msra.mxu0 %v2420
    %2546 = vmatprep.subr.bf16.mxu0 %v2425
    %2547 = vmatpush1.bf16.msra.mxu0 %v2424
    %2548 = vmatprep.subr.bf16.mxu0 %v2429
    %2549 = vmatpush1.bf16.msra.mxu0 %v2428
    %2550 = vmatprep.subr.bf16.mxu0 %v2433
    %2551 = vmatpush1.bf16.msra.mxu0 %v2432
    %2552 = vmatprep.subr.bf16.mxu0 %v2437
    %2553 = vmatpush1.bf16.msra.mxu0 %v2436
    %2554 = vmatprep.subr.bf16.mxu0 %v2441
    %2555 = vmatpush1.bf16.msra.mxu0 %v2440
    %2556 = vmatprep.subr.bf16.mxu0 %v2445
    %2557 = vmatpush1.bf16.msra.mxu0 %v2444
    %2558 = vmatprep.subr.bf16.mxu0 %v2449
    %2559 = vmatpush1.bf16.msra.mxu0 %v2448
    %2560 = vmatprep.subr.bf16.mxu0 %v2453
    %2561 = vmatpush1.bf16.msra.mxu0 %v2452
    %2562 = vmatprep.subr.bf16.mxu0 %v2457
    %2563 = vmatpush1.bf16.msra.mxu0 %v2456
    %2564 = vmatprep.subr.bf16.mxu0 %v2461
    %2565 = vmatpush1.bf16.msra.mxu0 %v2460
    %2566 = vmatprep.subr.bf16.mxu0 %v2465
    %2567 = vmatpush1.bf16.msra.mxu0 %v2464
    %2568 = vmatprep.subr.bf16.mxu0 %v2469
    %2569 = vmatpush1.bf16.msra.mxu0 %v2468
    %2570 = vmatprep.subr.bf16.mxu0 %v2473
    %2571 = vmatpush1.bf16.msra.mxu0 %v2472
    %2572 = vmatprep.mubr.bf16.mxu0 %v2127
    %2573 = vmatmul.mubr.bf16.gmra.mrb[0].mxu0 %v1962
    %v2574 = vpop.f32.mrb[0].mxu0
    %v2575 = vadd.f32 %v2203, %v2574
    %v2576 = vpop.f32.mrb[0].mxu0
    %v2577 = vadd.f32 %v2207, %v2576
    %v2578 = vpop.f32.mrb[0].mxu0
    %v2579 = vadd.f32 %v2203, %v2578
    %v2580 = vpop.f32.mrb[0].mxu0
    %v2581 = vadd.f32 %v2207, %v2580
    %2582 = vmatprep.mubr.bf16.mxu0 %v2128
    %2583 = vmatmul.mubr.bf16.gmra.mrb[0].mxu0 %v1963
    %v2584 = vpop.f32.mrb[0].mxu0
    %v2585 = vadd.f32 %v2203, %v2584
    %v2586 = vpop.f32.mrb[0].mxu0
    %v2587 = vadd.f32 %v2207, %v2586
    %v2588 = vpop.f32.mrb[0].mxu0
    %v2589 = vadd.f32 %v2203, %v2588
    %v2590 = vpop.f32.mrb[0].mxu0
    %v2591 = vadd.f32 %v2207, %v2590
    %2592 = vmatprep.mubr.bf16.mxu0 %v2129
    %2593 = vmatmul.mubr.bf16.gmra.mrb[0].mxu0 %v1964
    %v2594 = vpop.f32.mrb[0].mxu0
    %v2595 = vadd.f32 %v2203, %v2594
    %v2596 = vpop.f32.mrb[0].mxu0
    %v2597 = vadd.f32 %v2207, %v2596
    %v2598 = vpop.f32.mrb[0].mxu0
    %v2599 = vadd.f32 %v2203, %v2598
    %v2600 = vpop.f32.mrb[0].mxu0
    %v2601 = vadd.f32 %v2207, %v2600
    %2602 = vmatprep.mubr.bf16.mxu0 %v2130
    %2603 = vmatmul.mubr.bf16.gmra.mrb[0].mxu0 %v1965
    %v2604 = vpop.f32.mrb[0].mxu0
    %v2605 = vadd.f32 %v2203, %v2604
    %v2606 = vpop.f32.mrb[0].mxu0
    %v2607 = vadd.f32 %v2207, %v2606
    %v2608 = vpop.f32.mrb[0].mxu0
    %v2609 = vadd.f32 %v2203, %v2608
    %v2610 = vpop.f32.mrb[0].mxu0
    %v2611 = vadd.f32 %v2207, %v2610
    %2612 = vmatprep.mubr.bf16.mxu0 %v2131
    %2613 = vmatmul.mubr.bf16.gmra.mrb[0].mxu0 %v1966
    %v2614 = vpop.f32.mrb[0].mxu0
    %v2615 = vadd.f32 %v2203, %v2614
    %v2616 = vpop.f32.mrb[0].mxu0
    %v2617 = vadd.f32 %v2207, %v2616
    %v2618 = vpop.f32.mrb[0].mxu0
    %v2619 = vadd.f32 %v2203, %v2618
    %v2620 = vpop.f32.mrb[0].mxu0
    %v2621 = vadd.f32 %v2207, %v2620
    %2622 = vmatprep.mubr.bf16.mxu0 %v2132
    %2623 = vmatmul.mubr.bf16.gmra.mrb[0].mxu0 %v1967
    %v2624 = vpop.f32.mrb[0].mxu0
    %v2625 = vadd.f32 %v2203, %v2624
    %v2626 = vpop.f32.mrb[0].mxu0
    %v2627 = vadd.f32 %v2207, %v2626
    %v2628 = vpop.f32.mrb[0].mxu0
    %v2629 = vadd.f32 %v2203, %v2628
    %v2630 = vpop.f32.mrb[0].mxu0
    %v2631 = vadd.f32 %v2207, %v2630
    %2632 = vmatprep.mubr.bf16.mxu0 %v2133
    %2633 = vmatmul.mubr.bf16.gmra.mrb[0].mxu0 %v1968
    %v2634 = vpop.f32.mrb[0].mxu0
    %v2635 = vadd.f32 %v2203, %v2634
    %v2636 = vpop.f32.mrb[0].mxu0
    %v2637 = vadd.f32 %v2207, %v2636
    %v2638 = vpop.f32.mrb[0].mxu0
    %v2639 = vpop.f32.mrb[0].mxu0
    %2640 = vdwg.mxu0
    %2641 = vmatprep.subr.bf16.mxu0 %v2415
    %2642 = vmatpush1.bf16.msra.mxu0 %v2414
    %2643 = vmatprep.subr.bf16.mxu0 %v2419
    %2644 = vmatpush1.bf16.msra.mxu0 %v2418
    %2645 = vmatprep.subr.bf16.mxu0 %v2423
    %2646 = vmatpush1.bf16.msra.mxu0 %v2422
    %2647 = vmatprep.subr.bf16.mxu0 %v2427
    %2648 = vmatpush1.bf16.msra.mxu0 %v2426
    %2649 = vmatprep.subr.bf16.mxu0 %v2431
    %2650 = vmatpush1.bf16.msra.mxu0 %v2430
    %2651 = vmatprep.subr.bf16.mxu0 %v2435
    %2652 = vmatpush1.bf16.msra.mxu0 %v2434
    %2653 = vmatprep.subr.bf16.mxu0 %v2439
    %2654 = vmatpush1.bf16.msra.mxu0 %v2438
    %2655 = vmatprep.subr.bf16.mxu0 %v2443
    %2656 = vmatpush1.bf16.msra.mxu0 %v2442
    %2657 = vmatprep.subr.bf16.mxu0 %v2447
    %2658 = vmatpush1.bf16.msra.mxu0 %v2446
    %2659 = vmatprep.subr.bf16.mxu0 %v2451
    %2660 = vmatpush1.bf16.msra.mxu0 %v2450
    %2661 = vmatprep.subr.bf16.mxu0 %v2455
    %2662 = vmatpush1.bf16.msra.mxu0 %v2454
    %2663 = vmatprep.subr.bf16.mxu0 %v2459
    %2664 = vmatpush1.bf16.msra.mxu0 %v2458
    %2665 = vmatprep.subr.bf16.mxu0 %v2463
    %2666 = vmatpush1.bf16.msra.mxu0 %v2462
    %2667 = vmatprep.subr.bf16.mxu0 %v2467
    %2668 = vmatpush1.bf16.msra.mxu0 %v2466
    %2669 = vmatprep.subr.bf16.mxu0 %v2471
    %2670 = vmatpush1.bf16.msra.mxu0 %v2470
    %2671 = vmatprep.subr.bf16.mxu0 %v2475
    %2672 = vmatpush1.bf16.msra.mxu0 %v2474
    %2673 = vmatprep.mubr.bf16.mxu0 %v2127
    %2674 = vmatmul.mubr.bf16.gmra.mrb[0].mxu0 %v1962
    %v2675 = vpop.f32.mrb[0].mxu0
    %v2676 = vadd.f32 %v2211, %v2675
    %v2677 = vpop.f32.mrb[0].mxu0
    %v2678 = vadd.f32 %v2215, %v2677
    %v2679 = vpop.f32.mrb[0].mxu0
    %v2680 = vadd.f32 %v2211, %v2679
    %v2681 = vpop.f32.mrb[0].mxu0
    %v2682 = vadd.f32 %v2215, %v2681
    %2683 = vmatprep.mubr.bf16.mxu0 %v2128
    %2684 = vmatmul.mubr.bf16.gmra.mrb[0].mxu0 %v1963
    %v2685 = vpop.f32.mrb[0].mxu0
    %v2686 = vadd.f32 %v2211, %v2685
    %v2687 = vpop.f32.mrb[0].mxu0
    %v2688 = vadd.f32 %v2215, %v2687
    %v2689 = vpop.f32.mrb[0].mxu0
    %v2690 = vadd.f32 %v2211, %v2689
    %v2691 = vpop.f32.mrb[0].mxu0
    %v2692 = vadd.f32 %v2215, %v2691
    %2693 = vmatprep.mubr.bf16.mxu0 %v2129
    %2694 = vmatmul.mubr.bf16.gmra.mrb[0].mxu0 %v1964
    %v2695 = vpop.f32.mrb[0].mxu0
    %v2696 = vadd.f32 %v2211, %v2695
    %v2697 = vpop.f32.mrb[0].mxu0
    %v2698 = vadd.f32 %v2215, %v2697
    %v2699 = vpop.f32.mrb[0].mxu0
    %v2700 = vadd.f32 %v2211, %v2699
    %v2701 = vpop.f32.mrb[0].mxu0
    %v2702 = vadd.f32 %v2215, %v2701
    %2703 = vmatprep.mubr.bf16.mxu0 %v2130
    %2704 = vmatmul.mubr.bf16.gmra.mrb[0].mxu0 %v1965
    %v2705 = vpop.f32.mrb[0].mxu0
    %v2706 = vadd.f32 %v2211, %v2705
    %v2707 = vpop.f32.mrb[0].mxu0
    %v2708 = vadd.f32 %v2215, %v2707
    %v2709 = vpop.f32.mrb[0].mxu0
    %v2710 = vadd.f32 %v2211, %v2709
    %v2711 = vpop.f32.mrb[0].mxu0
    %v2712 = vadd.f32 %v2215, %v2711
    %2713 = vmatprep.mubr.bf16.mxu0 %v2131
    %2714 = vmatmul.mubr.bf16.gmra.mrb[0].mxu0 %v1966
    %v2715 = vpop.f32.mrb[0].mxu0
    %v2716 = vadd.f32 %v2211, %v2715
    %v2717 = vpop.f32.mrb[0].mxu0
    %v2718 = vadd.f32 %v2215, %v2717
    %v2719 = vpop.f32.mrb[0].mxu0
    %v2720 = vadd.f32 %v2211, %v2719
    %v2721 = vpop.f32.mrb[0].mxu0
    %v2722 = vadd.f32 %v2215, %v2721
    %2723 = vmatprep.mubr.bf16.mxu0 %v2132
    %2724 = vmatmul.mubr.bf16.gmra.mrb[0].mxu0 %v1967
    %v2725 = vpop.f32.mrb[0].mxu0
    %v2726 = vadd.f32 %v2211, %v2725
    %v2727 = vpop.f32.mrb[0].mxu0
    %v2728 = vadd.f32 %v2215, %v2727
    %v2729 = vpop.f32.mrb[0].mxu0
    %v2730 = vadd.f32 %v2211, %v2729
    %v2731 = vpop.f32.mrb[0].mxu0
    %v2732 = vadd.f32 %v2215, %v2731
    %2733 = vmatprep.mubr.bf16.mxu0 %v2133
    %2734 = vmatmul.mubr.bf16.gmra.mrb[0].mxu0 %v1968
    %v2735 = vpop.f32.mrb[0].mxu0
    %v2736 = vadd.f32 %v2211, %v2735
    %v2737 = vpop.f32.mrb[0].mxu0
    %v2738 = vadd.f32 %v2215, %v2737
    %v2739 = vpop.f32.mrb[0].mxu0
    %v2740 = vpop.f32.mrb[0].mxu0
    %2741 = vdwg.mxu0
    %s2742 = scalar_lea.vmem [#allocation3], 416
    %2743 = vst [vmem:[%s2742] sm:$0xff] %v2575
    %2744 = vst [vmem:[%s2742 + $0x8] sm:$0xff] %v2577
    %2745 = vst [vmem:[%s2742 + $0x10] sm:$0xff] %v2676
    %2746 = vst [vmem:[%s2742 + $0x18] sm:$0xff] %v2678
    %2747 = vst [vmem:[%s2742 + $0x20] sm:$0xff] %v2579
    %2748 = vst [vmem:[%s2742 + $0x28] sm:$0xff] %v2581
    %2749 = vst [vmem:[%s2742 + $0x30] sm:$0xff] %v2680
    %2750 = vst [vmem:[%s2742 + $0x38] sm:$0xff] %v2682
    %2751 = vst [vmem:[%s2742 + $0x40] sm:$0xff] %v2585
    %2752 = vst [vmem:[%s2742 + $0x48] sm:$0xff] %v2587
    %2753 = vst [vmem:[%s2742 + $0x50] sm:$0xff] %v2686
    %2754 = vst [vmem:[%s2742 + $0x58] sm:$0xff] %v2688
    %2755 = vst [vmem:[%s2742 + $0x60] sm:$0xff] %v2589
    %2756 = vst [vmem:[%s2742 + $0x68] sm:$0xff] %v2591
    %2757 = vst [vmem:[%s2742 + $0x70] sm:$0xff] %v2690
    %2758 = vst [vmem:[%s2742 + $0x78] sm:$0xff] %v2692
    %2759 = vst [vmem:[%s2742 + $0x80] sm:$0xff] %v2595
    %2760 = vst [vmem:[%s2742 + $0x88] sm:$0xff] %v2597
    %2761 = vst [vmem:[%s2742 + $0x90] sm:$0xff] %v2696
    %2762 = vst [vmem:[%s2742 + $0x98] sm:$0xff] %v2698
    %2763 = vst [vmem:[%s2742 + $0xa0] sm:$0xff] %v2599
    %2764 = vst [vmem:[%s2742 + $0xa8] sm:$0xff] %v2601
    %2765 = vst [vmem:[%s2742 + $0xb0] sm:$0xff] %v2700
    %2766 = vst [vmem:[%s2742 + $0xb8] sm:$0xff] %v2702
    %2767 = vst [vmem:[%s2742 + $0xc0] sm:$0xff] %v2605
    %2768 = vst [vmem:[%s2742 + $0xc8] sm:$0xff] %v2607
    %2769 = vst [vmem:[%s2742 + $0xd0] sm:$0xff] %v2706
    %2770 = vst [vmem:[%s2742 + $0xd8] sm:$0xff] %v2708
    %2771 = vst [vmem:[%s2742 + $0xe0] sm:$0xff] %v2609
    %2772 = vst [vmem:[%s2742 + $0xe8] sm:$0xff] %v2611
    %2773 = vst [vmem:[%s2742 + $0xf0] sm:$0xff] %v2710
    %2774 = vst [vmem:[%s2742 + $0xf8] sm:$0xff] %v2712
    %2775 = vst [vmem:[%s2742 + $0x100] sm:$0xff] %v2615
    %2776 = vst [vmem:[%s2742 + $0x108] sm:$0xff] %v2617
    %2777 = vst [vmem:[%s2742 + $0x110] sm:$0xff] %v2716
    %2778 = vst [vmem:[%s2742 + $0x118] sm:$0xff] %v2718
    %2779 = vst [vmem:[%s2742 + $0x120] sm:$0xff] %v2619
    %2780 = vst [vmem:[%s2742 + $0x128] sm:$0xff] %v2621
    %2781 = vst [vmem:[%s2742 + $0x130] sm:$0xff] %v2720
    %2782 = vst [vmem:[%s2742 + $0x138] sm:$0xff] %v2722
    %2783 = vst [vmem:[%s2742 + $0x140] sm:$0xff] %v2625
    %2784 = vst [vmem:[%s2742 + $0x148] sm:$0xff] %v2627
    %2785 = vst [vmem:[%s2742 + $0x150] sm:$0xff] %v2726
    %2786 = vst [vmem:[%s2742 + $0x158] sm:$0xff] %v2728
    %2787 = vst [vmem:[%s2742 + $0x160] sm:$0xff] %v2629
    %2788 = vst [vmem:[%s2742 + $0x168] sm:$0xff] %v2631
    %2789 = vst [vmem:[%s2742 + $0x170] sm:$0xff] %v2730
    %2790 = vst [vmem:[%s2742 + $0x178] sm:$0xff] %v2732
    %2791 = vst [vmem:[%s2742 + $0x180] sm:$0xf] %v2635
    %2792 = vst [vmem:[%s2742 + $0x188] sm:$0xf] %v2637
    %2793 = vst [vmem:[%s2742 + $0x190] sm:$0xf] %v2736
    %2794 = vst [vmem:[%s2742 + $0x198] sm:$0xf] %v2738
    loop: start=0, step=1, limit=50
    $region58: #{tpu_custom_call.1} parent=1 // loop_pre_header
      _
    $region59: #{tpu_custom_call.1} parent=1 // loop_header
      %s2796 = sphi 0, %s2800
      %p2797 = scmp.ge.s32.totalorder %s2796, 50
      %v2801 = vphi 0.0, %v3541
      %v2802 = vphi 0.0, %v3539
    $region60: #{tpu_custom_call.1} parent=1 // loop_header_branch
      %2799 = sbr.rel (%p2797) target = $region64
    $region61: #{tpu_custom_call.1} parent=1 // loop_body
      %s2803 = smul.u32 %s2796, 2
      %s2804 = sshra.s32 %s2803, 3
      %s2805 = sand.u32 %s2803, 7
      %s2806 = sshra.s32 %s2803, 3
      %s2807 = sand.u32 %s2803, 7
      %s2808 = smul.u32 %s2804, 4
      %s2809 = smul.u32 %s2808, 8
      %s2810 = sadd.s32 %s2809, %s2807
      %s2811 = scalar_lea.vmem [#allocation3], %s2810
      %v2812 = vld [vmem:[%s2811] ss:$8 sm:$0xf]
      %s2813 = sadd.s32 416, %s2810
      %s2814 = scalar_lea.vmem [#allocation3], %s2813
      %v2815 = vld [vmem:[%s2814] ss:$8 sm:$0xf]
      %v2817 = vlaneseq
      %v2818 = vshrl.u32 %v2817, 7
      %v2819 = vsub.s32 0, %v2818
      %v2820 = vrot.slane %v2812, %v2819
      %v2821 = vlaneseq
      %v2822 = vshrl.u32 %v2821, 7
      %v2823 = vsub.s32 1, %v2822
      %v2824 = vrot.slane %v2812, %v2823
      %v2825 = vlaneseq
      %v2826 = vshrl.u32 %v2825, 7
      %v2827 = vsub.s32 2, %v2826
      %v2828 = vrot.slane %v2812, %v2827
      %v2829 = vlaneseq
      %v2830 = vshrl.u32 %v2829, 7
      %v2831 = vsub.s32 3, %v2830
      %v2832 = vrot.slane %v2812, %v2831
      %v2838 = vlaneseq
      %v2839 = vshrl.u32 %v2838, 7
      %v2840 = vsub.s32 0, %v2839
      %v2841 = vrot.slane %v2815, %v2840
      %v2842 = vlaneseq
      %v2843 = vshrl.u32 %v2842, 7
      %v2844 = vsub.s32 1, %v2843
      %v2845 = vrot.slane %v2815, %v2844
      %v2846 = vlaneseq
      %v2847 = vshrl.u32 %v2846, 7
      %v2848 = vsub.s32 2, %v2847
      %v2849 = vrot.slane %v2815, %v2848
      %v2850 = vlaneseq
      %v2851 = vshrl.u32 %v2850, 7
      %v2852 = vsub.s32 3, %v2851
      %v2853 = vrot.slane %v2815, %v2852
      %v2858 = vsel %vm74, %v2820, %v2841
      %v2859 = vsel %vm74, %v2824, %v2845
      %v2860 = vsel %vm74, %v2828, %v2849
      %v2861 = vsel %vm74, %v2832, %v2853
      %v2862 = vpack.c.bf16 %v2801, %v2801
      %v2863 = vld [vmem:[#allocation6] sm:$0xff]
      %v2864 = vld [vmem:[#allocation6 + $0x8] sm:$0xff]
      %v2865 = vld [vmem:[#allocation6 + $0x10] sm:$0xff]
      %v2866 = vld [vmem:[#allocation6 + $0x18] sm:$0xff]
      %v2867 = vld [vmem:[#allocation6 + $0x20] sm:$0xff]
      %v2868 = vld [vmem:[#allocation6 + $0x28] sm:$0xff]
      %v2869 = vld [vmem:[#allocation6 + $0x30] sm:$0xff]
      %v2870 = vld [vmem:[#allocation6 + $0x38] sm:$0xff]
      %v2871 = vld [vmem:[#allocation6 + $0x40] sm:$0xff]
      %v2872 = vld [vmem:[#allocation6 + $0x48] sm:$0xff]
      %v2873 = vld [vmem:[#allocation6 + $0x50] sm:$0xff]
      %v2874 = vld [vmem:[#allocation6 + $0x58] sm:$0xff]
      %v2875 = vld [vmem:[#allocation6 + $0x60] sm:$0xff]
      %v2876 = vld [vmem:[#allocation6 + $0x68] sm:$0xff]
      %v2877 = vld [vmem:[#allocation6 + $0x70] sm:$0xff]
      %v2878 = vld [vmem:[#allocation6 + $0x78] sm:$0xff]
      %v2879 = vld [vmem:[#allocation6 + $0x80] sm:$0xff]
      %v2880 = vld [vmem:[#allocation6 + $0x88] sm:$0xff]
      %v2881 = vld [vmem:[#allocation6 + $0x90] sm:$0xff]
      %v2882 = vld [vmem:[#allocation6 + $0x98] sm:$0xff]
      %v2883 = vld [vmem:[#allocation6 + $0xa0] sm:$0xff]
      %v2884 = vld [vmem:[#allocation6 + $0xa8] sm:$0xff]
      %v2885 = vld [vmem:[#allocation6 + $0xb0] sm:$0xff]
      %v2886 = vld [vmem:[#allocation6 + $0xb8] sm:$0xff]
      %v2887 = vld [vmem:[#allocation6 + $0xc0] sm:$0xff]
      %v2888 = vld [vmem:[#allocation6 + $0xc8] sm:$0xff]
      %v2889 = vld [vmem:[#allocation6 + $0xd0] sm:$0xff]
      %v2890 = vld [vmem:[#allocation6 + $0xd8] sm:$0xff]
      %v2891 = vld [vmem:[#allocation6 + $0xe0] sm:$0xff]
      %v2892 = vld [vmem:[#allocation6 + $0xe8] sm:$0xff]
      %v2893 = vld [vmem:[#allocation6 + $0xf0] sm:$0xff]
      %v2894 = vld [vmem:[#allocation6 + $0xf8] sm:$0xff]
      %v2927 = vunpack.c.l.b16 %v2863
      %v2928 = vunpack.c.h.b16 %v2863
      %v2929 = vunpack.c.l.b16 %v2864
      %v2930 = vunpack.c.h.b16 %v2864
      %v2931 = vunpack.c.l.b16 %v2865
      %v2932 = vunpack.c.h.b16 %v2865
      %v2933 = vunpack.c.l.b16 %v2866
      %v2934 = vunpack.c.h.b16 %v2866
      %v2935 = vunpack.c.l.b16 %v2867
      %v2936 = vunpack.c.h.b16 %v2867
      %v2937 = vunpack.c.l.b16 %v2868
      %v2938 = vunpack.c.h.b16 %v2868
      %v2939 = vunpack.c.l.b16 %v2869
      %v2940 = vunpack.c.h.b16 %v2869
      %v2941 = vunpack.c.l.b16 %v2870
      %v2942 = vunpack.c.h.b16 %v2870
      %v2943 = vunpack.c.l.b16 %v2871
      %v2944 = vunpack.c.h.b16 %v2871
      %v2945 = vunpack.c.l.b16 %v2872
      %v2946 = vunpack.c.h.b16 %v2872
      %v2947 = vunpack.c.l.b16 %v2873
      %v2948 = vunpack.c.h.b16 %v2873
      %v2949 = vunpack.c.l.b16 %v2874
      %v2950 = vunpack.c.h.b16 %v2874
      %v2951 = vunpack.c.l.b16 %v2875
      %v2952 = vunpack.c.h.b16 %v2875
      %v2953 = vunpack.c.l.b16 %v2876
      %v2954 = vunpack.c.h.b16 %v2876
      %v2955 = vunpack.c.l.b16 %v2877
      %v2956 = vunpack.c.h.b16 %v2877
      %v2957 = vunpack.c.l.b16 %v2878
      %v2958 = vunpack.c.h.b16 %v2878
      %v2959 = vunpack.c.l.b16 %v2879
      %v2960 = vunpack.c.h.b16 %v2879
      %v2961 = vunpack.c.l.b16 %v2880
      %v2962 = vunpack.c.h.b16 %v2880
      %v2963 = vunpack.c.l.b16 %v2881
      %v2964 = vunpack.c.h.b16 %v2881
      %v2965 = vunpack.c.l.b16 %v2882
      %v2966 = vunpack.c.h.b16 %v2882
      %v2967 = vunpack.c.l.b16 %v2883
      %v2968 = vunpack.c.h.b16 %v2883
      %v2969 = vunpack.c.l.b16 %v2884
      %v2970 = vunpack.c.h.b16 %v2884
      %v2971 = vunpack.c.l.b16 %v2885
      %v2972 = vunpack.c.h.b16 %v2885
      %v2973 = vunpack.c.l.b16 %v2886
      %v2974 = vunpack.c.h.b16 %v2886
      %v2975 = vunpack.c.l.b16 %v2887
      %v2976 = vunpack.c.h.b16 %v2887
      %v2977 = vunpack.c.l.b16 %v2888
      %v2978 = vunpack.c.h.b16 %v2888
      %v2979 = vunpack.c.l.b16 %v2889
      %v2980 = vunpack.c.h.b16 %v2889
      %v2981 = vunpack.c.l.b16 %v2890
      %v2982 = vunpack.c.h.b16 %v2890
      %v2983 = vunpack.c.l.b16 %v2891
      %v2984 = vunpack.c.h.b16 %v2891
      %v2985 = vunpack.c.l.b16 %v2892
      %v2986 = vunpack.c.h.b16 %v2892
      %v2987 = vunpack.c.l.b16 %v2893
      %v2988 = vunpack.c.h.b16 %v2893
      %v2989 = vunpack.c.l.b16 %v2894
      %v2990 = vunpack.c.h.b16 %v2894
      %v2991 = vpack.c.b16 %v2931, %v2927
      %v2992 = vpack.c.b16 %v2932, %v2928
      %v2993 = vpack.c.b16 %v2933, %v2929
      %v2994 = vpack.c.b16 %v2934, %v2930
      %v2995 = vpack.c.b16 %v2939, %v2935
      %v2996 = vpack.c.b16 %v2940, %v2936
      %v2997 = vpack.c.b16 %v2941, %v2937
      %v2998 = vpack.c.b16 %v2942, %v2938
      %v2999 = vpack.c.b16 %v2947, %v2943
      %v3000 = vpack.c.b16 %v2948, %v2944
      %v3001 = vpack.c.b16 %v2949, %v2945
      %v3002 = vpack.c.b16 %v2950, %v2946
      %v3003 = vpack.c.b16 %v2955, %v2951
      %v3004 = vpack.c.b16 %v2956, %v2952
      %v3005 = vpack.c.b16 %v2957, %v2953
      %v3006 = vpack.c.b16 %v2958, %v2954
      %v3007 = vpack.c.b16 %v2963, %v2959
      %v3008 = vpack.c.b16 %v2964, %v2960
      %v3009 = vpack.c.b16 %v2965, %v2961
      %v3010 = vpack.c.b16 %v2966, %v2962
      %v3011 = vpack.c.b16 %v2971, %v2967
      %v3012 = vpack.c.b16 %v2972, %v2968
      %v3013 = vpack.c.b16 %v2973, %v2969
      %v3014 = vpack.c.b16 %v2974, %v2970
      %v3015 = vpack.c.b16 %v2979, %v2975
      %v3016 = vpack.c.b16 %v2980, %v2976
      %v3017 = vpack.c.b16 %v2981, %v2977
      %v3018 = vpack.c.b16 %v2982, %v2978
      %v3019 = vpack.c.b16 %v2987, %v2983
      %v3020 = vpack.c.b16 %v2988, %v2984
      %v3021 = vpack.c.b16 %v2989, %v2985
      %v3022 = vpack.c.b16 %v2990, %v2986
      %3055 = vmatprep.subr.bf16.mxu0 %v2992
      %3056 = vmatpush1.bf16.msra.mxu0 %v2991
      %3057 = vmatprep.subr.bf16.mxu0 %v2996
      %3058 = vmatpush1.bf16.msra.mxu0 %v2995
      %3059 = vmatprep.subr.bf16.mxu0 %v3000
      %3060 = vmatpush1.bf16.msra.mxu0 %v2999
      %3061 = vmatprep.subr.bf16.mxu0 %v3004
      %3062 = vmatpush1.bf16.msra.mxu0 %v3003
      %3063 = vmatprep.subr.bf16.mxu0 %v3008
      %3064 = vmatpush1.bf16.msra.mxu0 %v3007
      %3065 = vmatprep.subr.bf16.mxu0 %v3012
      %3066 = vmatpush1.bf16.msra.mxu0 %v3011
      %3067 = vmatprep.subr.bf16.mxu0 %v3016
      %3068 = vmatpush1.bf16.msra.mxu0 %v3015
      %3069 = vmatprep.subr.bf16.mxu0 %v3020
      %3070 = vmatpush1.bf16.msra.mxu0 %v3019
      %3071 = vmatprep.subr.bf16.mxu0 0
      %3072 = vmatpush1.bf16.msra.mxu0 0
      %3073 = vmatprep.subr.bf16.mxu0 0
      %3074 = vmatpush1.bf16.msra.mxu0 0
      %3075 = vmatprep.subr.bf16.mxu0 0
      %3076 = vmatpush1.bf16.msra.mxu0 0
      %3077 = vmatprep.subr.bf16.mxu0 0
      %3078 = vmatpush1.bf16.msra.mxu0 0
      %3079 = vmatprep.subr.bf16.mxu0 0
      %3080 = vmatpush1.bf16.msra.mxu0 0
      %3081 = vmatprep.subr.bf16.mxu0 0
      %3082 = vmatpush1.bf16.msra.mxu0 0
      %3083 = vmatprep.subr.bf16.mxu0 0
      %3084 = vmatpush1.bf16.msra.mxu0 0
      %3085 = vmatprep.subr.bf16.mxu0 0
      %3086 = vmatpush1.bf16.msra.mxu0 0
      %3087 = vmatprep.mubr.bf16.mxu0 0
      %3088 = vmatmul.mubr.bf16.gmra.mrb[0].mxu0 %v2862
      %v3089 = vpop.f32.mrb[0].mxu0
      %v3090 = vadd.f32 0.0, %v3089
      %v3091 = vpop.f32.mrb[0].mxu0
      %v3092 = vadd.f32 0.0, %v3091
      %v3093 = vpop.f32.mrb[0].mxu0
      %v3094 = vpop.f32.mrb[0].mxu0
      %3095 = vdwg.mxu0
      %3096 = vmatprep.subr.bf16.mxu0 %v2994
      %3097 = vmatpush1.bf16.msra.mxu0 %v2993
      %3098 = vmatprep.subr.bf16.mxu0 %v2998
      %3099 = vmatpush1.bf16.msra.mxu0 %v2997
      %3100 = vmatprep.subr.bf16.mxu0 %v3002
      %3101 = vmatpush1.bf16.msra.mxu0 %v3001
      %3102 = vmatprep.subr.bf16.mxu0 %v3006
      %3103 = vmatpush1.bf16.msra.mxu0 %v3005
      %3104 = vmatprep.subr.bf16.mxu0 %v3010
      %3105 = vmatpush1.bf16.msra.mxu0 %v3009
      %3106 = vmatprep.subr.bf16.mxu0 %v3014
      %3107 = vmatpush1.bf16.msra.mxu0 %v3013
      %3108 = vmatprep.subr.bf16.mxu0 %v3018
      %3109 = vmatpush1.bf16.msra.mxu0 %v3017
      %3110 = vmatprep.subr.bf16.mxu0 %v3022
      %3111 = vmatpush1.bf16.msra.mxu0 %v3021
      %3112 = vmatprep.subr.bf16.mxu0 0
      %3113 = vmatpush1.bf16.msra.mxu0 0
      %3114 = vmatprep.subr.bf16.mxu0 0
      %3115 = vmatpush1.bf16.msra.mxu0 0
      %3116 = vmatprep.subr.bf16.mxu0 0
      %3117 = vmatpush1.bf16.msra.mxu0 0
      %3118 = vmatprep.subr.bf16.mxu0 0
      %3119 = vmatpush1.bf16.msra.mxu0 0
      %3120 = vmatprep.subr.bf16.mxu0 0
      %3121 = vmatpush1.bf16.msra.mxu0 0
      %3122 = vmatprep.subr.bf16.mxu0 0
      %3123 = vmatpush1.bf16.msra.mxu0 0
      %3124 = vmatprep.subr.bf16.mxu0 0
      %3125 = vmatpush1.bf16.msra.mxu0 0
      %3126 = vmatprep.subr.bf16.mxu0 0
      %3127 = vmatpush1.bf16.msra.mxu0 0
      %3128 = vmatprep.mubr.bf16.mxu0 0
      %3129 = vmatmul.mubr.bf16.gmra.mrb[0].mxu0 %v2862
      %v3130 = vpop.f32.mrb[0].mxu0
      %v3131 = vadd.f32 0.0, %v3130
      %v3132 = vpop.f32.mrb[0].mxu0
      %v3133 = vadd.f32 0.0, %v3132
      %v3134 = vpop.f32.mrb[0].mxu0
      %v3135 = vpop.f32.mrb[0].mxu0
      %3136 = vdwg.mxu0
      %v3137 = vadd.f32 %v2858, %v3090
      %v3138 = vadd.f32 %v2859, %v3092
      %v3139 = vadd.f32 %v2860, %v3131
      %v3140 = vadd.f32 %v2861, %v3133
      %v3141 = vxor.u32 %v3137, 2147483648
      %v3142 = vmul.f32 %v3141, 1.442695
      %v3143 = vpow.pop %v3142
      %v3144 = vadd.f32 %v3143, 1.0
      %v3145 = vrcp.pop %v3144
      %v3146 = vmul.f32 1.0, %v3145
      %v3147 = vxor.u32 %v3138, 2147483648
      %v3148 = vmul.f32 %v3147, 1.442695
      %v3149 = vpow.pop %v3148
      %v3150 = vadd.f32 %v3149, 1.0
      %v3151 = vrcp.pop %v3150
      %v3152 = vmul.f32 1.0, %v3151
      %v3153 = vtanh.pop %v3139
      %v3154 = vxor.u32 %v3140, 2147483648
      %v3155 = vmul.f32 %v3154, 1.442695
      %v3156 = vpow.pop %v3155
      %v3157 = vadd.f32 %v3156, 1.0
      %v3158 = vrcp.pop %v3157
      %v3159 = vmul.f32 1.0, %v3158
      %v3160 = vmul.f32 %v3152, %v2802
      %v3161 = vmul.f32 %v3146, %v3153
      %v3162 = vadd.f32 %v3160, %v3161
      %v3163 = vtanh.pop %v3162
      %v3164 = vmul.f32 %v3159, %v3163
      %s3165 = ssub.s32 99, %s2803
      %s3166 = scalar_lea.vmem [#allocation2], %s2803
      %vm3167 = vcmask 188416
      %3168 = vst.msk [vmem:[%s3166] sm:$0x1] %vm3167, %v3164
      %s3169 = scalar_lea.vmem [#allocation2], %s3165
      %vm3170 = vcmask 385216
      %3171 = vst.msk [vmem:[%s3169] sm:$0x1] %vm3170, %v3164
      %s3172 = sadd.s32 %s2803, 104
      %s3173 = scalar_lea.vmem [#allocation2], %s3172
      %vm3174 = vcmask 189441
      %3175 = vst.msk [vmem:[%s3173 - $0x1] sm:$0x2] %vm3174, %v3164
      %s3176 = sadd.s32 %s3165, 104
      %s3177 = scalar_lea.vmem [#allocation2], %s3176
      %vm3178 = vcmask 386241
      %3179 = vst.msk [vmem:[%s3177 - $0x1] sm:$0x2] %vm3178, %v3164
      %s3180 = sadd.s32 %s2803, 1
      %s3181 = sshra.s32 %s3180, 3
      %s3182 = sand.u32 %s3180, 7
      %s3183 = sshra.s32 %s3180, 3
      %s3184 = sand.u32 %s3180, 7
      %s3185 = smul.u32 %s3181, 4
      %s3186 = smul.u32 %s3185, 8
      %s3187 = sadd.s32 %s3186, %s3184
      %s3188 = scalar_lea.vmem [#allocation3], %s3187
      %v3189 = vld [vmem:[%s3188] ss:$8 sm:$0xf]
      %s3190 = sadd.s32 416, %s3187
      %s3191 = scalar_lea.vmem [#allocation3], %s3190
      %v3192 = vld [vmem:[%s3191] ss:$8 sm:$0xf]
      %v3194 = vlaneseq
      %v3195 = vshrl.u32 %v3194, 7
      %v3196 = vsub.s32 0, %v3195
      %v3197 = vrot.slane %v3189, %v3196
      %v3198 = vlaneseq
      %v3199 = vshrl.u32 %v3198, 7
      %v3200 = vsub.s32 1, %v3199
      %v3201 = vrot.slane %v3189, %v3200
      %v3202 = vlaneseq
      %v3203 = vshrl.u32 %v3202, 7
      %v3204 = vsub.s32 2, %v3203
      %v3205 = vrot.slane %v3189, %v3204
      %v3206 = vlaneseq
      %v3207 = vshrl.u32 %v3206, 7
      %v3208 = vsub.s32 3, %v3207
      %v3209 = vrot.slane %v3189, %v3208
      %v3215 = vlaneseq
      %v3216 = vshrl.u32 %v3215, 7
      %v3217 = vsub.s32 0, %v3216
      %v3218 = vrot.slane %v3192, %v3217
      %v3219 = vlaneseq
      %v3220 = vshrl.u32 %v3219, 7
      %v3221 = vsub.s32 1, %v3220
      %v3222 = vrot.slane %v3192, %v3221
      %v3223 = vlaneseq
      %v3224 = vshrl.u32 %v3223, 7
      %v3225 = vsub.s32 2, %v3224
      %v3226 = vrot.slane %v3192, %v3225
      %v3227 = vlaneseq
      %v3228 = vshrl.u32 %v3227, 7
      %v3229 = vsub.s32 3, %v3228
      %v3230 = vrot.slane %v3192, %v3229
      %v3235 = vsel %vm74, %v3197, %v3218
      %v3236 = vsel %vm74, %v3201, %v3222
      %v3237 = vsel %vm74, %v3205, %v3226
      %v3238 = vsel %vm74, %v3209, %v3230
      %v3239 = vpack.c.bf16 %v3164, %v3164
      %v3240 = vld [vmem:[#allocation6] sm:$0xff]
      %v3241 = vld [vmem:[#allocation6 + $0x8] sm:$0xff]
      %v3242 = vld [vmem:[#allocation6 + $0x10] sm:$0xff]
      %v3243 = vld [vmem:[#allocation6 + $0x18] sm:$0xff]
      %v3244 = vld [vmem:[#allocation6 + $0x20] sm:$0xff]
      %v3245 = vld [vmem:[#allocation6 + $0x28] sm:$0xff]
      %v3246 = vld [vmem:[#allocation6 + $0x30] sm:$0xff]
      %v3247 = vld [vmem:[#allocation6 + $0x38] sm:$0xff]
      %v3248 = vld [vmem:[#allocation6 + $0x40] sm:$0xff]
      %v3249 = vld [vmem:[#allocation6 + $0x48] sm:$0xff]
      %v3250 = vld [vmem:[#allocation6 + $0x50] sm:$0xff]
      %v3251 = vld [vmem:[#allocation6 + $0x58] sm:$0xff]
      %v3252 = vld [vmem:[#allocation6 + $0x60] sm:$0xff]
      %v3253 = vld [vmem:[#allocation6 + $0x68] sm:$0xff]
      %v3254 = vld [vmem:[#allocation6 + $0x70] sm:$0xff]
      %v3255 = vld [vmem:[#allocation6 + $0x78] sm:$0xff]
      %v3256 = vld [vmem:[#allocation6 + $0x80] sm:$0xff]
      %v3257 = vld [vmem:[#allocation6 + $0x88] sm:$0xff]
      %v3258 = vld [vmem:[#allocation6 + $0x90] sm:$0xff]
      %v3259 = vld [vmem:[#allocation6 + $0x98] sm:$0xff]
      %v3260 = vld [vmem:[#allocation6 + $0xa0] sm:$0xff]
      %v3261 = vld [vmem:[#allocation6 + $0xa8] sm:$0xff]
      %v3262 = vld [vmem:[#allocation6 + $0xb0] sm:$0xff]
      %v3263 = vld [vmem:[#allocation6 + $0xb8] sm:$0xff]
      %v3264 = vld [vmem:[#allocation6 + $0xc0] sm:$0xff]
      %v3265 = vld [vmem:[#allocation6 + $0xc8] sm:$0xff]
      %v3266 = vld [vmem:[#allocation6 + $0xd0] sm:$0xff]
      %v3267 = vld [vmem:[#allocation6 + $0xd8] sm:$0xff]
      %v3268 = vld [vmem:[#allocation6 + $0xe0] sm:$0xff]
      %v3269 = vld [vmem:[#allocation6 + $0xe8] sm:$0xff]
      %v3270 = vld [vmem:[#allocation6 + $0xf0] sm:$0xff]
      %v3271 = vld [vmem:[#allocation6 + $0xf8] sm:$0xff]
      %v3304 = vunpack.c.l.b16 %v3240
      %v3305 = vunpack.c.h.b16 %v3240
      %v3306 = vunpack.c.l.b16 %v3241
      %v3307 = vunpack.c.h.b16 %v3241
      %v3308 = vunpack.c.l.b16 %v3242
      %v3309 = vunpack.c.h.b16 %v3242
      %v3310 = vunpack.c.l.b16 %v3243
      %v3311 = vunpack.c.h.b16 %v3243
      %v3312 = vunpack.c.l.b16 %v3244
      %v3313 = vunpack.c.h.b16 %v3244
      %v3314 = vunpack.c.l.b16 %v3245
      %v3315 = vunpack.c.h.b16 %v3245
      %v3316 = vunpack.c.l.b16 %v3246
      %v3317 = vunpack.c.h.b16 %v3246
      %v3318 = vunpack.c.l.b16 %v3247
      %v3319 = vunpack.c.h.b16 %v3247
      %v3320 = vunpack.c.l.b16 %v3248
      %v3321 = vunpack.c.h.b16 %v3248
      %v3322 = vunpack.c.l.b16 %v3249
      %v3323 = vunpack.c.h.b16 %v3249
      %v3324 = vunpack.c.l.b16 %v3250
      %v3325 = vunpack.c.h.b16 %v3250
      %v3326 = vunpack.c.l.b16 %v3251
      %v3327 = vunpack.c.h.b16 %v3251
      %v3328 = vunpack.c.l.b16 %v3252
      %v3329 = vunpack.c.h.b16 %v3252
      %v3330 = vunpack.c.l.b16 %v3253
      %v3331 = vunpack.c.h.b16 %v3253
      %v3332 = vunpack.c.l.b16 %v3254
      %v3333 = vunpack.c.h.b16 %v3254
      %v3334 = vunpack.c.l.b16 %v3255
      %v3335 = vunpack.c.h.b16 %v3255
      %v3336 = vunpack.c.l.b16 %v3256
      %v3337 = vunpack.c.h.b16 %v3256
      %v3338 = vunpack.c.l.b16 %v3257
      %v3339 = vunpack.c.h.b16 %v3257
      %v3340 = vunpack.c.l.b16 %v3258
      %v3341 = vunpack.c.h.b16 %v3258
      %v3342 = vunpack.c.l.b16 %v3259
      %v3343 = vunpack.c.h.b16 %v3259
      %v3344 = vunpack.c.l.b16 %v3260
      %v3345 = vunpack.c.h.b16 %v3260
      %v3346 = vunpack.c.l.b16 %v3261
      %v3347 = vunpack.c.h.b16 %v3261
      %v3348 = vunpack.c.l.b16 %v3262
      %v3349 = vunpack.c.h.b16 %v3262
      %v3350 = vunpack.c.l.b16 %v3263
      %v3351 = vunpack.c.h.b16 %v3263
      %v3352 = vunpack.c.l.b16 %v3264
      %v3353 = vunpack.c.h.b16 %v3264
      %v3354 = vunpack.c.l.b16 %v3265
      %v3355 = vunpack.c.h.b16 %v3265
      %v3356 = vunpack.c.l.b16 %v3266
      %v3357 = vunpack.c.h.b16 %v3266
      %v3358 = vunpack.c.l.b16 %v3267
      %v3359 = vunpack.c.h.b16 %v3267
      %v3360 = vunpack.c.l.b16 %v3268
      %v3361 = vunpack.c.h.b16 %v3268
      %v3362 = vunpack.c.l.b16 %v3269
      %v3363 = vunpack.c.h.b16 %v3269
      %v3364 = vunpack.c.l.b16 %v3270
      %v3365 = vunpack.c.h.b16 %v3270
      %v3366 = vunpack.c.l.b16 %v3271
      %v3367 = vunpack.c.h.b16 %v3271
      %v3368 = vpack.c.b16 %v3308, %v3304
      %v3369 = vpack.c.b16 %v3309, %v3305
      %v3370 = vpack.c.b16 %v3310, %v3306
      %v3371 = vpack.c.b16 %v3311, %v3307
      %v3372 = vpack.c.b16 %v3316, %v3312
      %v3373 = vpack.c.b16 %v3317, %v3313
      %v3374 = vpack.c.b16 %v3318, %v3314
      %v3375 = vpack.c.b16 %v3319, %v3315
      %v3376 = vpack.c.b16 %v3324, %v3320
      %v3377 = vpack.c.b16 %v3325, %v3321
      %v3378 = vpack.c.b16 %v3326, %v3322
      %v3379 = vpack.c.b16 %v3327, %v3323
      %v3380 = vpack.c.b16 %v3332, %v3328
      %v3381 = vpack.c.b16 %v3333, %v3329
      %v3382 = vpack.c.b16 %v3334, %v3330
      %v3383 = vpack.c.b16 %v3335, %v3331
      %v3384 = vpack.c.b16 %v3340, %v3336
      %v3385 = vpack.c.b16 %v3341, %v3337
      %v3386 = vpack.c.b16 %v3342, %v3338
      %v3387 = vpack.c.b16 %v3343, %v3339
      %v3388 = vpack.c.b16 %v3348, %v3344
      %v3389 = vpack.c.b16 %v3349, %v3345
      %v3390 = vpack.c.b16 %v3350, %v3346
      %v3391 = vpack.c.b16 %v3351, %v3347
      %v3392 = vpack.c.b16 %v3356, %v3352
      %v3393 = vpack.c.b16 %v3357, %v3353
      %v3394 = vpack.c.b16 %v3358, %v3354
      %v3395 = vpack.c.b16 %v3359, %v3355
      %v3396 = vpack.c.b16 %v3364, %v3360
      %v3397 = vpack.c.b16 %v3365, %v3361
      %v3398 = vpack.c.b16 %v3366, %v3362
      %v3399 = vpack.c.b16 %v3367, %v3363
      %3432 = vmatprep.subr.bf16.mxu0 %v3369
      %3433 = vmatpush1.bf16.msra.mxu0 %v3368
      %3434 = vmatprep.subr.bf16.mxu0 %v3373
      %3435 = vmatpush1.bf16.msra.mxu0 %v3372
      %3436 = vmatprep.subr.bf16.mxu0 %v3377
      %3437 = vmatpush1.bf16.msra.mxu0 %v3376
      %3438 = vmatprep.subr.bf16.mxu0 %v3381
      %3439 = vmatpush1.bf16.msra.mxu0 %v3380
      %3440 = vmatprep.subr.bf16.mxu0 %v3385
      %3441 = vmatpush1.bf16.msra.mxu0 %v3384
      %3442 = vmatprep.subr.bf16.mxu0 %v3389
      %3443 = vmatpush1.bf16.msra.mxu0 %v3388
      %3444 = vmatprep.subr.bf16.mxu0 %v3393
      %3445 = vmatpush1.bf16.msra.mxu0 %v3392
      %3446 = vmatprep.subr.bf16.mxu0 %v3397
      %3447 = vmatpush1.bf16.msra.mxu0 %v3396
      %3448 = vmatprep.subr.bf16.mxu0 0
      %3449 = vmatpush1.bf16.msra.mxu0 0
      %3450 = vmatprep.subr.bf16.mxu0 0
      %3451 = vmatpush1.bf16.msra.mxu0 0
      %3452 = vmatprep.subr.bf16.mxu0 0
      %3453 = vmatpush1.bf16.msra.mxu0 0
      %3454 = vmatprep.subr.bf16.mxu0 0
      %3455 = vmatpush1.bf16.msra.mxu0 0
      %3456 = vmatprep.subr.bf16.mxu0 0
      %3457 = vmatpush1.bf16.msra.mxu0 0
      %3458 = vmatprep.subr.bf16.mxu0 0
      %3459 = vmatpush1.bf16.msra.mxu0 0
      %3460 = vmatprep.subr.bf16.mxu0 0
      %3461 = vmatpush1.bf16.msra.mxu0 0
      %3462 = vmatprep.subr.bf16.mxu0 0
      %3463 = vmatpush1.bf16.msra.mxu0 0
      %3464 = vmatprep.mubr.bf16.mxu0 0
      %3465 = vmatmul.mubr.bf16.gmra.mrb[0].mxu0 %v3239
      %v3466 = vpop.f32.mrb[0].mxu0
      %v3467 = vadd.f32 0.0, %v3466
      %v3468 = vpop.f32.mrb[0].mxu0
      %v3469 = vadd.f32 0.0, %v3468
      %v3470 = vpop.f32.mrb[0].mxu0
      %v3471 = vpop.f32.mrb[0].mxu0
      %3472 = vdwg.mxu0
      %3473 = vmatprep.subr.bf16.mxu0 %v3371
      %3474 = vmatpush1.bf16.msra.mxu0 %v3370
      %3475 = vmatprep.subr.bf16.mxu0 %v3375
      %3476 = vmatpush1.bf16.msra.mxu0 %v3374
      %3477 = vmatprep.subr.bf16.mxu0 %v3379
      %3478 = vmatpush1.bf16.msra.mxu0 %v3378
      %3479 = vmatprep.subr.bf16.mxu0 %v3383
      %3480 = vmatpush1.bf16.msra.mxu0 %v3382
      %3481 = vmatprep.subr.bf16.mxu0 %v3387
      %3482 = vmatpush1.bf16.msra.mxu0 %v3386
      %3483 = vmatprep.subr.bf16.mxu0 %v3391
      %3484 = vmatpush1.bf16.msra.mxu0 %v3390
      %3485 = vmatprep.subr.bf16.mxu0 %v3395
      %3486 = vmatpush1.bf16.msra.mxu0 %v3394
      %3487 = vmatprep.subr.bf16.mxu0 %v3399
      %3488 = vmatpush1.bf16.msra.mxu0 %v3398
      %3489 = vmatprep.subr.bf16.mxu0 0
      %3490 = vmatpush1.bf16.msra.mxu0 0
      %3491 = vmatprep.subr.bf16.mxu0 0
      %3492 = vmatpush1.bf16.msra.mxu0 0
      %3493 = vmatprep.subr.bf16.mxu0 0
      %3494 = vmatpush1.bf16.msra.mxu0 0
      %3495 = vmatprep.subr.bf16.mxu0 0
      %3496 = vmatpush1.bf16.msra.mxu0 0
      %3497 = vmatprep.subr.bf16.mxu0 0
      %3498 = vmatpush1.bf16.msra.mxu0 0
      %3499 = vmatprep.subr.bf16.mxu0 0
      %3500 = vmatpush1.bf16.msra.mxu0 0
      %3501 = vmatprep.subr.bf16.mxu0 0
      %3502 = vmatpush1.bf16.msra.mxu0 0
      %3503 = vmatprep.subr.bf16.mxu0 0
      %3504 = vmatpush1.bf16.msra.mxu0 0
      %3505 = vmatprep.mubr.bf16.mxu0 0
      %3506 = vmatmul.mubr.bf16.gmra.mrb[0].mxu0 %v3239
      %v3507 = vpop.f32.mrb[0].mxu0
      %v3508 = vadd.f32 0.0, %v3507
      %v3509 = vpop.f32.mrb[0].mxu0
      %v3510 = vadd.f32 0.0, %v3509
      %v3511 = vpop.f32.mrb[0].mxu0
      %v3512 = vpop.f32.mrb[0].mxu0
      %3513 = vdwg.mxu0
      %v3514 = vadd.f32 %v3235, %v3467
      %v3515 = vadd.f32 %v3236, %v3469
      %v3516 = vadd.f32 %v3237, %v3508
      %v3517 = vadd.f32 %v3238, %v3510
      %v3518 = vxor.u32 %v3514, 2147483648
      %v3519 = vmul.f32 %v3518, 1.442695
      %v3520 = vpow.pop %v3519
      %v3521 = vadd.f32 %v3520, 1.0
      %v3522 = vrcp.pop %v3521
      %v3523 = vmul.f32 1.0, %v3522
      %v3524 = vxor.u32 %v3515, 2147483648
      %v3525 = vmul.f32 %v3524, 1.442695
      %v3526 = vpow.pop %v3525
      %v3527 = vadd.f32 %v3526, 1.0
      %v3528 = vrcp.pop %v3527
      %v3529 = vmul.f32 1.0, %v3528
      %v3530 = vtanh.pop %v3516
      %v3531 = vxor.u32 %v3517, 2147483648
      %v3532 = vmul.f32 %v3531, 1.442695
      %v3533 = vpow.pop %v3532
      %v3534 = vadd.f32 %v3533, 1.0
      %v3535 = vrcp.pop %v3534
      %v3536 = vmul.f32 1.0, %v3535
      %v3537 = vmul.f32 %v3529, %v3162
      %v3538 = vmul.f32 %v3523, %v3530
      %v3539 = vadd.f32 %v3537, %v3538
      %v3540 = vtanh.pop %v3539
      %v3541 = vmul.f32 %v3536, %v3540
      %s3542 = ssub.s32 98, %s2803
      %s3543 = scalar_lea.vmem [#allocation2], %s3180
      %3544 = vst.msk [vmem:[%s3543] sm:$0x1] %vm3167, %v3541
      %s3545 = scalar_lea.vmem [#allocation2], %s3542
      %3546 = vst.msk [vmem:[%s3545] sm:$0x1] %vm3170, %v3541
      %s3547 = sadd.s32 %s3180, 104
      %s3548 = scalar_lea.vmem [#allocation2], %s3547
      %3549 = vst.msk [vmem:[%s3548 - $0x1] sm:$0x2] %vm3174, %v3541
      %s3550 = sadd.s32 %s3542, 104
      %s3551 = scalar_lea.vmem [#allocation2], %s3550
      %3552 = vst.msk [vmem:[%s3551 - $0x1] sm:$0x2] %vm3178, %v3541
    $region62: #{tpu_custom_call.1} parent=1 // loop_footer
      %s2800 = sadd.s32 1, %s2796
    $region63: #{tpu_custom_call.1} parent=1 // loop_footer_branch
      %2795 = sbr.rel target = $region59
    $region64: #{tpu_custom_call.1} parent=1 // loop_exit
      _
    %v3553 = vld [vmem:[#allocation2] sm:$0xff]
    %v3554 = vld [vmem:[#allocation2 + $0x8] sm:$0xff]
    %v3555 = vld [vmem:[#allocation2 + $0x10] sm:$0xff]
    %v3556 = vld [vmem:[#allocation2 + $0x18] sm:$0xff]
    %v3557 = vld [vmem:[#allocation2 + $0x20] sm:$0xff]
    %v3558 = vld [vmem:[#allocation2 + $0x28] sm:$0xff]
    %v3559 = vld [vmem:[#allocation2 + $0x30] sm:$0xff]
    %v3560 = vld [vmem:[#allocation2 + $0x38] sm:$0xff]
    %v3561 = vld [vmem:[#allocation2 + $0x40] sm:$0xff]
    %v3562 = vld [vmem:[#allocation2 + $0x48] sm:$0xff]
    %v3563 = vld [vmem:[#allocation2 + $0x50] sm:$0xff]
    %v3564 = vld [vmem:[#allocation2 + $0x58] sm:$0xff]
    %v3565 = vld [vmem:[#allocation2 + $0x60] sm:$0xf]
    %v3566 = vpack.c.bf16 %v3554, %v3553
    %v3567 = vpack.c.bf16 %v3556, %v3555
    %v3568 = vpack.c.bf16 %v3558, %v3557
    %v3569 = vpack.c.bf16 %v3560, %v3559
    %v3570 = vpack.c.bf16 %v3562, %v3561
    %v3571 = vpack.c.bf16 %v3564, %v3563
    %v3572 = vpack.c.bf16 %v3565, %v3565
    %v3573 = vld [vmem:[%s8] sm:$0xf]
    %v3574 = vld [vmem:[%s8 + $0x4] sm:$0xf]
    %v3575 = vld [vmem:[%s8 + $0x8] sm:$0xf]
    %v3576 = vld [vmem:[%s8 + $0xc] sm:$0xf]
    %v3577 = vld [vmem:[%s8 + $0x10] sm:$0xf]
    %v3578 = vld [vmem:[%s8 + $0x14] sm:$0xf]
    %v3579 = vld [vmem:[%s8 + $0x18] sm:$0xf]
    %v3580 = vld [vmem:[%s8 + $0x1c] sm:$0xf]
    %v3581 = vld [vmem:[%s8 + $0x20] sm:$0xf]
    %v3582 = vld [vmem:[%s8 + $0x24] sm:$0xf]
    %v3583 = vld [vmem:[%s8 + $0x28] sm:$0xf]
    %v3584 = vld [vmem:[%s8 + $0x2c] sm:$0xf]
    %v3585 = vld [vmem:[%s8 + $0x30] sm:$0x3]
    %v3599 = vunpack.c.l.b16 %v3573
    %v3600 = vunpack.c.l.b16 %v3574
    %v3601 = vunpack.c.l.b16 %v3575
    %v3602 = vunpack.c.l.b16 %v3576
    %v3603 = vunpack.c.l.b16 %v3577
    %v3604 = vunpack.c.l.b16 %v3578
    %v3605 = vunpack.c.l.b16 %v3579
    %v3606 = vunpack.c.l.b16 %v3580
    %v3607 = vunpack.c.l.b16 %v3581
    %v3608 = vunpack.c.l.b16 %v3582
    %v3609 = vunpack.c.l.b16 %v3583
    %v3610 = vunpack.c.l.b16 %v3584
    %v3611 = vunpack.c.l.b16 %v3585
    %v3612 = vpack.c.b16 %v3600, %v3599
    %v3613 = vpack.c.b16 %v3602, %v3601
    %v3614 = vpack.c.b16 %v3604, %v3603
    %v3615 = vpack.c.b16 %v3606, %v3605
    %v3616 = vpack.c.b16 %v3608, %v3607
    %v3617 = vpack.c.b16 %v3610, %v3609
    %v3618 = vpack.c.b16 %v3611, %v3611
    %v3620 = vsel %vm1168, %v3612, 0
    %v3623 = vsel %vm1168, %v3613, 0
    %v3626 = vsel %vm1168, %v3614, 0
    %v3629 = vsel %vm1168, %v3615, 0
    %v3632 = vsel %vm1168, %v3616, 0
    %v3635 = vsel %vm1168, %v3617, 0
    %v3638 = vsel %vm1168, %v3618, 0
    %v3641 = vsel %vm1190, %v3572, 0
    %3643 = vmatprep.subr.bf16.mxu0 0
    %3644 = vmatpush1.bf16.msra.mxu0 %v3566
    %3645 = vmatprep.subr.bf16.mxu0 0
    %3646 = vmatpush1.bf16.msra.mxu0 %v3567
    %3647 = vmatprep.subr.bf16.mxu0 0
    %3648 = vmatpush1.bf16.msra.mxu0 %v3568
    %3649 = vmatprep.subr.bf16.mxu0 0
    %3650 = vmatpush1.bf16.msra.mxu0 %v3569
    %3651 = vmatprep.subr.bf16.mxu0 0
    %3652 = vmatpush1.bf16.msra.mxu0 %v3570
    %3653 = vmatprep.subr.bf16.mxu0 0
    %3654 = vmatpush1.bf16.msra.mxu0 %v3571
    %3655 = vmatprep.subr.bf16.mxu0 0
    %3656 = vmatpush1.bf16.msra.mxu0 %v3641
    %3657 = vmatprep.subr.bf16.mxu0 0
    %3658 = vmatpush1.bf16.msra.mxu0 0
    %3659 = vmatprep.subr.bf16.mxu0 0
    %3660 = vmatpush1.bf16.msra.mxu0 0
    %3661 = vmatprep.subr.bf16.mxu0 0
    %3662 = vmatpush1.bf16.msra.mxu0 0
    %3663 = vmatprep.subr.bf16.mxu0 0
    %3664 = vmatpush1.bf16.msra.mxu0 0
    %3665 = vmatprep.subr.bf16.mxu0 0
    %3666 = vmatpush1.bf16.msra.mxu0 0
    %3667 = vmatprep.subr.bf16.mxu0 0
    %3668 = vmatpush1.bf16.msra.mxu0 0
    %3669 = vmatprep.subr.bf16.mxu0 0
    %3670 = vmatpush1.bf16.msra.mxu0 0
    %3671 = vmatprep.subr.bf16.mxu0 0
    %3672 = vmatpush1.bf16.msra.mxu0 0
    %3673 = vmatprep.subr.bf16.mxu0 0
    %3674 = vmatpush1.bf16.msra.mxu0 0
    %3675 = vmatprep.mubr.bf16.mxu0 0
    %3676 = vmatmul.mubr.bf16.gmra.mrb[0].mxu0 %v3620
    %v3677 = vpop.f32.mrb[0].mxu0
    %v3678 = vadd.f32 0.0, %v3677
    %v3679 = vpop.f32.mrb[0].mxu0
    %v3680 = vpop.f32.mrb[0].mxu0
    %v3681 = vadd.f32 0.0, %v3680
    %v3682 = vpop.f32.mrb[0].mxu0
    %3683 = vmatprep.mubr.bf16.mxu0 0
    %3684 = vmatmul.mubr.bf16.gmra.mrb[0].mxu0 %v3623
    %v3685 = vpop.f32.mrb[0].mxu0
    %v3686 = vadd.f32 0.0, %v3685
    %v3687 = vpop.f32.mrb[0].mxu0
    %v3688 = vpop.f32.mrb[0].mxu0
    %v3689 = vadd.f32 0.0, %v3688
    %v3690 = vpop.f32.mrb[0].mxu0
    %3691 = vmatprep.mubr.bf16.mxu0 0
    %3692 = vmatmul.mubr.bf16.gmra.mrb[0].mxu0 %v3626
    %v3693 = vpop.f32.mrb[0].mxu0
    %v3694 = vadd.f32 0.0, %v3693
    %v3695 = vpop.f32.mrb[0].mxu0
    %v3696 = vpop.f32.mrb[0].mxu0
    %v3697 = vadd.f32 0.0, %v3696
    %v3698 = vpop.f32.mrb[0].mxu0
    %3699 = vmatprep.mubr.bf16.mxu0 0
    %3700 = vmatmul.mubr.bf16.gmra.mrb[0].mxu0 %v3629
    %v3701 = vpop.f32.mrb[0].mxu0
    %v3702 = vadd.f32 0.0, %v3701
    %v3703 = vpop.f32.mrb[0].mxu0
    %v3704 = vpop.f32.mrb[0].mxu0
    %v3705 = vadd.f32 0.0, %v3704
    %v3706 = vpop.f32.mrb[0].mxu0
    %3707 = vmatprep.mubr.bf16.mxu0 0
    %3708 = vmatmul.mubr.bf16.gmra.mrb[0].mxu0 %v3632
    %v3709 = vpop.f32.mrb[0].mxu0
    %v3710 = vadd.f32 0.0, %v3709
    %v3711 = vpop.f32.mrb[0].mxu0
    %v3712 = vpop.f32.mrb[0].mxu0
    %v3713 = vadd.f32 0.0, %v3712
    %v3714 = vpop.f32.mrb[0].mxu0
    %3715 = vmatprep.mubr.bf16.mxu0 0
    %3716 = vmatmul.mubr.bf16.gmra.mrb[0].mxu0 %v3635
    %v3717 = vpop.f32.mrb[0].mxu0
    %v3718 = vadd.f32 0.0, %v3717
    %v3719 = vpop.f32.mrb[0].mxu0
    %v3720 = vpop.f32.mrb[0].mxu0
    %v3721 = vadd.f32 0.0, %v3720
    %v3722 = vpop.f32.mrb[0].mxu0
    %3723 = vmatprep.mubr.bf16.mxu0 0
    %3724 = vmatmul.mubr.bf16.gmra.mrb[0].mxu0 %v3638
    %v3725 = vpop.f32.mrb[0].mxu0
    %v3726 = vadd.f32 0.0, %v3725
    %v3727 = vpop.f32.mrb[0].mxu0
    %v3728 = vpop.f32.mrb[0].mxu0
    %v3729 = vpop.f32.mrb[0].mxu0
    %3730 = vdwg.mxu0
    %v3731 = vpack.c.bf16 %v3681, %v3678
    %v3732 = vpack.c.bf16 %v3689, %v3686
    %v3733 = vpack.c.bf16 %v3697, %v3694
    %v3734 = vpack.c.bf16 %v3705, %v3702
    %v3735 = vpack.c.bf16 %v3713, %v3710
    %v3736 = vpack.c.bf16 %v3721, %v3718
    %v3737 = vpack.c.bf16 %v3726, %v3726
    %s3738 = scalar_lea.vmem [#allocation4], 512
    %v3739 = vld [vmem:[%s3738] sm:$0xff]
    %v3740 = vld [vmem:[%s3738 + $0x8] sm:$0xff]
    %v3741 = vld [vmem:[%s3738 + $0x10] sm:$0xff]
    %v3742 = vld [vmem:[%s3738 + $0x18] sm:$0xff]
    %v3743 = vld [vmem:[%s3738 + $0x20] sm:$0xff]
    %v3744 = vld [vmem:[%s3738 + $0x28] sm:$0xff]
    %v3745 = vld [vmem:[%s3738 + $0x30] sm:$0xff]
    %v3746 = vld [vmem:[%s3738 + $0x38] sm:$0xff]
    %v3747 = vld [vmem:[%s3738 + $0x40] sm:$0xff]
    %v3748 = vld [vmem:[%s3738 + $0x48] sm:$0xff]
    %v3749 = vld [vmem:[%s3738 + $0x50] sm:$0xff]
    %v3750 = vld [vmem:[%s3738 + $0x58] sm:$0xff]
    %v3751 = vld [vmem:[%s3738 + $0x60] sm:$0xff]
    %v3752 = vld [vmem:[%s3738 + $0x68] sm:$0xff]
    %v3753 = vld [vmem:[%s3738 + $0x70] sm:$0xff]
    %v3754 = vld [vmem:[%s3738 + $0x78] sm:$0xff]
    %v3755 = vld [vmem:[%s3738 + $0x80] sm:$0xff]
    %v3756 = vld [vmem:[%s3738 + $0x88] sm:$0xff]
    %v3757 = vld [vmem:[%s3738 + $0x90] sm:$0xff]
    %v3758 = vld [vmem:[%s3738 + $0x98] sm:$0xff]
    %v3759 = vld [vmem:[%s3738 + $0xa0] sm:$0xff]
    %v3760 = vld [vmem:[%s3738 + $0xa8] sm:$0xff]
    %v3761 = vld [vmem:[%s3738 + $0xb0] sm:$0xff]
    %v3762 = vld [vmem:[%s3738 + $0xb8] sm:$0xff]
    %v3763 = vld [vmem:[%s3738 + $0xc0] sm:$0xff]
    %v3764 = vld [vmem:[%s3738 + $0xc8] sm:$0xff]
    %v3765 = vld [vmem:[%s3738 + $0xd0] sm:$0xff]
    %v3766 = vld [vmem:[%s3738 + $0xd8] sm:$0xff]
    %v3767 = vld [vmem:[%s3738 + $0xe0] sm:$0xff]
    %v3768 = vld [vmem:[%s3738 + $0xe8] sm:$0xff]
    %v3769 = vld [vmem:[%s3738 + $0xf0] sm:$0xff]
    %v3770 = vld [vmem:[%s3738 + $0xf8] sm:$0xff]
    %v3771 = vld [vmem:[%s3738 + $0x100] sm:$0xff]
    %v3772 = vld [vmem:[%s3738 + $0x108] sm:$0xff]
    %v3773 = vld [vmem:[%s3738 + $0x110] sm:$0xff]
    %v3774 = vld [vmem:[%s3738 + $0x118] sm:$0xff]
    %v3775 = vld [vmem:[%s3738 + $0x120] sm:$0xff]
    %v3776 = vld [vmem:[%s3738 + $0x128] sm:$0xff]
    %v3777 = vld [vmem:[%s3738 + $0x130] sm:$0xff]
    %v3778 = vld [vmem:[%s3738 + $0x138] sm:$0xff]
    %v3779 = vld [vmem:[%s3738 + $0x140] sm:$0xff]
    %v3780 = vld [vmem:[%s3738 + $0x148] sm:$0xff]
    %v3781 = vld [vmem:[%s3738 + $0x150] sm:$0xff]
    %v3782 = vld [vmem:[%s3738 + $0x158] sm:$0xff]
    %v3783 = vld [vmem:[%s3738 + $0x160] sm:$0xff]
    %v3784 = vld [vmem:[%s3738 + $0x168] sm:$0xff]
    %v3785 = vld [vmem:[%s3738 + $0x170] sm:$0xff]
    %v3786 = vld [vmem:[%s3738 + $0x178] sm:$0xff]
    %v3787 = vld [vmem:[%s3738 + $0x180] sm:$0xff]
    %v3788 = vld [vmem:[%s3738 + $0x188] sm:$0xff]
    %v3789 = vld [vmem:[%s3738 + $0x190] sm:$0xff]
    %v3790 = vld [vmem:[%s3738 + $0x198] sm:$0xff]
    %v3791 = vld [vmem:[%s3738 + $0x1a0] sm:$0xff]
    %v3792 = vld [vmem:[%s3738 + $0x1a8] sm:$0xff]
    %v3793 = vld [vmem:[%s3738 + $0x1b0] sm:$0xff]
    %v3794 = vld [vmem:[%s3738 + $0x1b8] sm:$0xff]
    %v3795 = vld [vmem:[%s3738 + $0x1c0] sm:$0xff]
    %v3796 = vld [vmem:[%s3738 + $0x1c8] sm:$0xff]
    %v3797 = vld [vmem:[%s3738 + $0x1d0] sm:$0xff]
    %v3798 = vld [vmem:[%s3738 + $0x1d8] sm:$0xff]
    %v3799 = vld [vmem:[%s3738 + $0x1e0] sm:$0xff]
    %v3800 = vld [vmem:[%s3738 + $0x1e8] sm:$0xff]
    %v3801 = vld [vmem:[%s3738 + $0x1f0] sm:$0xff]
    %v3802 = vld [vmem:[%s3738 + $0x1f8] sm:$0xff]
    %s3803 = scalar_lea.vmem %s11, 4
    %v3804 = vld [vmem:[%s3803] sm:$0xf]
    %v3806 = vlaneseq
    %v3807 = vshrl.u32 %v3806, 7
    %v3808 = vsub.s32 0, %v3807
    %v3809 = vrot.slane %v3804, %v3808
    %v3810 = vlaneseq
    %v3811 = vshrl.u32 %v3810, 7
    %v3812 = vsub.s32 1, %v3811
    %v3813 = vrot.slane %v3804, %v3812
    %v3814 = vlaneseq
    %v3815 = vshrl.u32 %v3814, 7
    %v3816 = vsub.s32 2, %v3815
    %v3817 = vrot.slane %v3804, %v3816
    %v3818 = vlaneseq
    %v3819 = vshrl.u32 %v3818, 7
    %v3820 = vsub.s32 3, %v3819
    %v3821 = vrot.slane %v3804, %v3820
    %v3890 = vunpack.c.l.b16 %v3739
    %v3891 = vunpack.c.h.b16 %v3739
    %v3892 = vunpack.c.l.b16 %v3740
    %v3893 = vunpack.c.h.b16 %v3740
    %v3894 = vunpack.c.l.b16 %v3741
    %v3895 = vunpack.c.h.b16 %v3741
    %v3896 = vunpack.c.l.b16 %v3742
    %v3897 = vunpack.c.h.b16 %v3742
    %v3898 = vunpack.c.l.b16 %v3743
    %v3899 = vunpack.c.h.b16 %v3743
    %v3900 = vunpack.c.l.b16 %v3744
    %v3901 = vunpack.c.h.b16 %v3744
    %v3902 = vunpack.c.l.b16 %v3745
    %v3903 = vunpack.c.h.b16 %v3745
    %v3904 = vunpack.c.l.b16 %v3746
    %v3905 = vunpack.c.h.b16 %v3746
    %v3906 = vunpack.c.l.b16 %v3747
    %v3907 = vunpack.c.h.b16 %v3747
    %v3908 = vunpack.c.l.b16 %v3748
    %v3909 = vunpack.c.h.b16 %v3748
    %v3910 = vunpack.c.l.b16 %v3749
    %v3911 = vunpack.c.h.b16 %v3749
    %v3912 = vunpack.c.l.b16 %v3750
    %v3913 = vunpack.c.h.b16 %v3750
    %v3914 = vunpack.c.l.b16 %v3751
    %v3915 = vunpack.c.h.b16 %v3751
    %v3916 = vunpack.c.l.b16 %v3752
    %v3917 = vunpack.c.h.b16 %v3752
    %v3918 = vunpack.c.l.b16 %v3753
    %v3919 = vunpack.c.h.b16 %v3753
    %v3920 = vunpack.c.l.b16 %v3754
    %v3921 = vunpack.c.h.b16 %v3754
    %v3922 = vunpack.c.l.b16 %v3755
    %v3923 = vunpack.c.h.b16 %v3755
    %v3924 = vunpack.c.l.b16 %v3756
    %v3925 = vunpack.c.h.b16 %v3756
    %v3926 = vunpack.c.l.b16 %v3757
    %v3927 = vunpack.c.h.b16 %v3757
    %v3928 = vunpack.c.l.b16 %v3758
    %v3929 = vunpack.c.h.b16 %v3758
    %v3930 = vunpack.c.l.b16 %v3759
    %v3931 = vunpack.c.h.b16 %v3759
    %v3932 = vunpack.c.l.b16 %v3760
    %v3933 = vunpack.c.h.b16 %v3760
    %v3934 = vunpack.c.l.b16 %v3761
    %v3935 = vunpack.c.h.b16 %v3761
    %v3936 = vunpack.c.l.b16 %v3762
    %v3937 = vunpack.c.h.b16 %v3762
    %v3938 = vunpack.c.l.b16 %v3763
    %v3939 = vunpack.c.h.b16 %v3763
    %v3940 = vunpack.c.l.b16 %v3764
    %v3941 = vunpack.c.h.b16 %v3764
    %v3942 = vunpack.c.l.b16 %v3765
    %v3943 = vunpack.c.h.b16 %v3765
    %v3944 = vunpack.c.l.b16 %v3766
    %v3945 = vunpack.c.h.b16 %v3766
    %v3946 = vunpack.c.l.b16 %v3767
    %v3947 = vunpack.c.h.b16 %v3767
    %v3948 = vunpack.c.l.b16 %v3768
    %v3949 = vunpack.c.h.b16 %v3768
    %v3950 = vunpack.c.l.b16 %v3769
    %v3951 = vunpack.c.h.b16 %v3769
    %v3952 = vunpack.c.l.b16 %v3770
    %v3953 = vunpack.c.h.b16 %v3770
    %v3954 = vunpack.c.l.b16 %v3771
    %v3955 = vunpack.c.h.b16 %v3771
    %v3956 = vunpack.c.l.b16 %v3772
    %v3957 = vunpack.c.h.b16 %v3772
    %v3958 = vunpack.c.l.b16 %v3773
    %v3959 = vunpack.c.h.b16 %v3773
    %v3960 = vunpack.c.l.b16 %v3774
    %v3961 = vunpack.c.h.b16 %v3774
    %v3962 = vunpack.c.l.b16 %v3775
    %v3963 = vunpack.c.h.b16 %v3775
    %v3964 = vunpack.c.l.b16 %v3776
    %v3965 = vunpack.c.h.b16 %v3776
    %v3966 = vunpack.c.l.b16 %v3777
    %v3967 = vunpack.c.h.b16 %v3777
    %v3968 = vunpack.c.l.b16 %v3778
    %v3969 = vunpack.c.h.b16 %v3778
    %v3970 = vunpack.c.l.b16 %v3779
    %v3971 = vunpack.c.h.b16 %v3779
    %v3972 = vunpack.c.l.b16 %v3780
    %v3973 = vunpack.c.h.b16 %v3780
    %v3974 = vunpack.c.l.b16 %v3781
    %v3975 = vunpack.c.h.b16 %v3781
    %v3976 = vunpack.c.l.b16 %v3782
    %v3977 = vunpack.c.h.b16 %v3782
    %v3978 = vunpack.c.l.b16 %v3783
    %v3979 = vunpack.c.h.b16 %v3783
    %v3980 = vunpack.c.l.b16 %v3784
    %v3981 = vunpack.c.h.b16 %v3784
    %v3982 = vunpack.c.l.b16 %v3785
    %v3983 = vunpack.c.h.b16 %v3785
    %v3984 = vunpack.c.l.b16 %v3786
    %v3985 = vunpack.c.h.b16 %v3786
    %v3986 = vunpack.c.l.b16 %v3787
    %v3987 = vunpack.c.h.b16 %v3787
    %v3988 = vunpack.c.l.b16 %v3788
    %v3989 = vunpack.c.h.b16 %v3788
    %v3990 = vunpack.c.l.b16 %v3789
    %v3991 = vunpack.c.h.b16 %v3789
    %v3992 = vunpack.c.l.b16 %v3790
    %v3993 = vunpack.c.h.b16 %v3790
    %v3994 = vunpack.c.l.b16 %v3791
    %v3995 = vunpack.c.h.b16 %v3791
    %v3996 = vunpack.c.l.b16 %v3792
    %v3997 = vunpack.c.h.b16 %v3792
    %v3998 = vunpack.c.l.b16 %v3793
    %v3999 = vunpack.c.h.b16 %v3793
    %v4000 = vunpack.c.l.b16 %v3794
    %v4001 = vunpack.c.h.b16 %v3794
    %v4002 = vunpack.c.l.b16 %v3795
    %v4003 = vunpack.c.h.b16 %v3795
    %v4004 = vunpack.c.l.b16 %v3796
    %v4005 = vunpack.c.h.b16 %v3796
    %v4006 = vunpack.c.l.b16 %v3797
    %v4007 = vunpack.c.h.b16 %v3797
    %v4008 = vunpack.c.l.b16 %v3798
    %v4009 = vunpack.c.h.b16 %v3798
    %v4010 = vunpack.c.l.b16 %v3799
    %v4011 = vunpack.c.h.b16 %v3799
    %v4012 = vunpack.c.l.b16 %v3800
    %v4013 = vunpack.c.h.b16 %v3800
    %v4014 = vunpack.c.l.b16 %v3801
    %v4015 = vunpack.c.h.b16 %v3801
    %v4016 = vunpack.c.l.b16 %v3802
    %v4017 = vunpack.c.h.b16 %v3802
    %v4018 = vpack.c.b16 %v3894, %v3890
    %v4019 = vpack.c.b16 %v3895, %v3891
    %v4020 = vpack.c.b16 %v3896, %v3892
    %v4021 = vpack.c.b16 %v3897, %v3893
    %v4022 = vpack.c.b16 %v3902, %v3898
    %v4023 = vpack.c.b16 %v3903, %v3899
    %v4024 = vpack.c.b16 %v3904, %v3900
    %v4025 = vpack.c.b16 %v3905, %v3901
    %v4026 = vpack.c.b16 %v3910, %v3906
    %v4027 = vpack.c.b16 %v3911, %v3907
    %v4028 = vpack.c.b16 %v3912, %v3908
    %v4029 = vpack.c.b16 %v3913, %v3909
    %v4030 = vpack.c.b16 %v3918, %v3914
    %v4031 = vpack.c.b16 %v3919, %v3915
    %v4032 = vpack.c.b16 %v3920, %v3916
    %v4033 = vpack.c.b16 %v3921, %v3917
    %v4034 = vpack.c.b16 %v3926, %v3922
    %v4035 = vpack.c.b16 %v3927, %v3923
    %v4036 = vpack.c.b16 %v3928, %v3924
    %v4037 = vpack.c.b16 %v3929, %v3925
    %v4038 = vpack.c.b16 %v3934, %v3930
    %v4039 = vpack.c.b16 %v3935, %v3931
    %v4040 = vpack.c.b16 %v3936, %v3932
    %v4041 = vpack.c.b16 %v3937, %v3933
    %v4042 = vpack.c.b16 %v3942, %v3938
    %v4043 = vpack.c.b16 %v3943, %v3939
    %v4044 = vpack.c.b16 %v3944, %v3940
    %v4045 = vpack.c.b16 %v3945, %v3941
    %v4046 = vpack.c.b16 %v3950, %v3946
    %v4047 = vpack.c.b16 %v3951, %v3947
    %v4048 = vpack.c.b16 %v3952, %v3948
    %v4049 = vpack.c.b16 %v3953, %v3949
    %v4050 = vpack.c.b16 %v3958, %v3954
    %v4051 = vpack.c.b16 %v3959, %v3955
    %v4052 = vpack.c.b16 %v3960, %v3956
    %v4053 = vpack.c.b16 %v3961, %v3957
    %v4054 = vpack.c.b16 %v3966, %v3962
    %v4055 = vpack.c.b16 %v3967, %v3963
    %v4056 = vpack.c.b16 %v3968, %v3964
    %v4057 = vpack.c.b16 %v3969, %v3965
    %v4058 = vpack.c.b16 %v3974, %v3970
    %v4059 = vpack.c.b16 %v3975, %v3971
    %v4060 = vpack.c.b16 %v3976, %v3972
    %v4061 = vpack.c.b16 %v3977, %v3973
    %v4062 = vpack.c.b16 %v3982, %v3978
    %v4063 = vpack.c.b16 %v3983, %v3979
    %v4064 = vpack.c.b16 %v3984, %v3980
    %v4065 = vpack.c.b16 %v3985, %v3981
    %v4066 = vpack.c.b16 %v3990, %v3986
    %v4067 = vpack.c.b16 %v3991, %v3987
    %v4068 = vpack.c.b16 %v3992, %v3988
    %v4069 = vpack.c.b16 %v3993, %v3989
    %v4070 = vpack.c.b16 %v3998, %v3994
    %v4071 = vpack.c.b16 %v3999, %v3995
    %v4072 = vpack.c.b16 %v4000, %v3996
    %v4073 = vpack.c.b16 %v4001, %v3997
    %v4074 = vpack.c.b16 %v4006, %v4002
    %v4075 = vpack.c.b16 %v4007, %v4003
    %v4076 = vpack.c.b16 %v4008, %v4004
    %v4077 = vpack.c.b16 %v4009, %v4005
    %v4078 = vpack.c.b16 %v4014, %v4010
    %v4079 = vpack.c.b16 %v4015, %v4011
    %v4080 = vpack.c.b16 %v4016, %v4012
    %v4081 = vpack.c.b16 %v4017, %v4013
    %4146 = vmatprep.subr.bf16.mxu0 %v4019
    %4147 = vmatpush1.bf16.msra.mxu0 %v4018
    %4148 = vmatprep.subr.bf16.mxu0 %v4023
    %4149 = vmatpush1.bf16.msra.mxu0 %v4022
    %4150 = vmatprep.subr.bf16.mxu0 %v4027
    %4151 = vmatpush1.bf16.msra.mxu0 %v4026
    %4152 = vmatprep.subr.bf16.mxu0 %v4031
    %4153 = vmatpush1.bf16.msra.mxu0 %v4030
    %4154 = vmatprep.subr.bf16.mxu0 %v4035
    %4155 = vmatpush1.bf16.msra.mxu0 %v4034
    %4156 = vmatprep.subr.bf16.mxu0 %v4039
    %4157 = vmatpush1.bf16.msra.mxu0 %v4038
    %4158 = vmatprep.subr.bf16.mxu0 %v4043
    %4159 = vmatpush1.bf16.msra.mxu0 %v4042
    %4160 = vmatprep.subr.bf16.mxu0 %v4047
    %4161 = vmatpush1.bf16.msra.mxu0 %v4046
    %4162 = vmatprep.subr.bf16.mxu0 %v4051
    %4163 = vmatpush1.bf16.msra.mxu0 %v4050
    %4164 = vmatprep.subr.bf16.mxu0 %v4055
    %4165 = vmatpush1.bf16.msra.mxu0 %v4054
    %4166 = vmatprep.subr.bf16.mxu0 %v4059
    %4167 = vmatpush1.bf16.msra.mxu0 %v4058
    %4168 = vmatprep.subr.bf16.mxu0 %v4063
    %4169 = vmatpush1.bf16.msra.mxu0 %v4062
    %4170 = vmatprep.subr.bf16.mxu0 %v4067
    %4171 = vmatpush1.bf16.msra.mxu0 %v4066
    %4172 = vmatprep.subr.bf16.mxu0 %v4071
    %4173 = vmatpush1.bf16.msra.mxu0 %v4070
    %4174 = vmatprep.subr.bf16.mxu0 %v4075
    %4175 = vmatpush1.bf16.msra.mxu0 %v4074
    %4176 = vmatprep.subr.bf16.mxu0 %v4079
    %4177 = vmatpush1.bf16.msra.mxu0 %v4078
    %4178 = vmatprep.mubr.bf16.mxu0 %v3731
    %4179 = vmatmul.mubr.bf16.gmra.mrb[0].mxu0 %v3566
    %v4180 = vpop.f32.mrb[0].mxu0
    %v4181 = vadd.f32 %v3809, %v4180
    %v4182 = vpop.f32.mrb[0].mxu0
    %v4183 = vadd.f32 %v3813, %v4182
    %v4184 = vpop.f32.mrb[0].mxu0
    %v4185 = vadd.f32 %v3809, %v4184
    %v4186 = vpop.f32.mrb[0].mxu0
    %v4187 = vadd.f32 %v3813, %v4186
    %4188 = vmatprep.mubr.bf16.mxu0 %v3732
    %4189 = vmatmul.mubr.bf16.gmra.mrb[0].mxu0 %v3567
    %v4190 = vpop.f32.mrb[0].mxu0
    %v4191 = vadd.f32 %v3809, %v4190
    %v4192 = vpop.f32.mrb[0].mxu0
    %v4193 = vadd.f32 %v3813, %v4192
    %v4194 = vpop.f32.mrb[0].mxu0
    %v4195 = vadd.f32 %v3809, %v4194
    %v4196 = vpop.f32.mrb[0].mxu0
    %v4197 = vadd.f32 %v3813, %v4196
    %4198 = vmatprep.mubr.bf16.mxu0 %v3733
    %4199 = vmatmul.mubr.bf16.gmra.mrb[0].mxu0 %v3568
    %v4200 = vpop.f32.mrb[0].mxu0
    %v4201 = vadd.f32 %v3809, %v4200
    %v4202 = vpop.f32.mrb[0].mxu0
    %v4203 = vadd.f32 %v3813, %v4202
    %v4204 = vpop.f32.mrb[0].mxu0
    %v4205 = vadd.f32 %v3809, %v4204
    %v4206 = vpop.f32.mrb[0].mxu0
    %v4207 = vadd.f32 %v3813, %v4206
    %4208 = vmatprep.mubr.bf16.mxu0 %v3734
    %4209 = vmatmul.mubr.bf16.gmra.mrb[0].mxu0 %v3569
    %v4210 = vpop.f32.mrb[0].mxu0
    %v4211 = vadd.f32 %v3809, %v4210
    %v4212 = vpop.f32.mrb[0].mxu0
    %v4213 = vadd.f32 %v3813, %v4212
    %v4214 = vpop.f32.mrb[0].mxu0
    %v4215 = vadd.f32 %v3809, %v4214
    %v4216 = vpop.f32.mrb[0].mxu0
    %v4217 = vadd.f32 %v3813, %v4216
    %4218 = vmatprep.mubr.bf16.mxu0 %v3735
    %4219 = vmatmul.mubr.bf16.gmra.mrb[0].mxu0 %v3570
    %v4220 = vpop.f32.mrb[0].mxu0
    %v4221 = vadd.f32 %v3809, %v4220
    %v4222 = vpop.f32.mrb[0].mxu0
    %v4223 = vadd.f32 %v3813, %v4222
    %v4224 = vpop.f32.mrb[0].mxu0
    %v4225 = vadd.f32 %v3809, %v4224
    %v4226 = vpop.f32.mrb[0].mxu0
    %v4227 = vadd.f32 %v3813, %v4226
    %4228 = vmatprep.mubr.bf16.mxu0 %v3736
    %4229 = vmatmul.mubr.bf16.gmra.mrb[0].mxu0 %v3571
    %v4230 = vpop.f32.mrb[0].mxu0
    %v4231 = vadd.f32 %v3809, %v4230
    %v4232 = vpop.f32.mrb[0].mxu0
    %v4233 = vadd.f32 %v3813, %v4232
    %v4234 = vpop.f32.mrb[0].mxu0
    %v4235 = vadd.f32 %v3809, %v4234
    %v4236 = vpop.f32.mrb[0].mxu0
    %v4237 = vadd.f32 %v3813, %v4236
    %4238 = vmatprep.mubr.bf16.mxu0 %v3737
    %4239 = vmatmul.mubr.bf16.gmra.mrb[0].mxu0 %v3572
    %v4240 = vpop.f32.mrb[0].mxu0
    %v4241 = vadd.f32 %v3809, %v4240
    %v4242 = vpop.f32.mrb[0].mxu0
    %v4243 = vadd.f32 %v3813, %v4242
    %v4244 = vpop.f32.mrb[0].mxu0
    %v4245 = vpop.f32.mrb[0].mxu0
    %4246 = vdwg.mxu0
    %4247 = vmatprep.subr.bf16.mxu0 %v4021
    %4248 = vmatpush1.bf16.msra.mxu0 %v4020
    %4249 = vmatprep.subr.bf16.mxu0 %v4025
    %4250 = vmatpush1.bf16.msra.mxu0 %v4024
    %4251 = vmatprep.subr.bf16.mxu0 %v4029
    %4252 = vmatpush1.bf16.msra.mxu0 %v4028
    %4253 = vmatprep.subr.bf16.mxu0 %v4033
    %4254 = vmatpush1.bf16.msra.mxu0 %v4032
    %4255 = vmatprep.subr.bf16.mxu0 %v4037
    %4256 = vmatpush1.bf16.msra.mxu0 %v4036
    %4257 = vmatprep.subr.bf16.mxu0 %v4041
    %4258 = vmatpush1.bf16.msra.mxu0 %v4040
    %4259 = vmatprep.subr.bf16.mxu0 %v4045
    %4260 = vmatpush1.bf16.msra.mxu0 %v4044
    %4261 = vmatprep.subr.bf16.mxu0 %v4049
    %4262 = vmatpush1.bf16.msra.mxu0 %v4048
    %4263 = vmatprep.subr.bf16.mxu0 %v4053
    %4264 = vmatpush1.bf16.msra.mxu0 %v4052
    %4265 = vmatprep.subr.bf16.mxu0 %v4057
    %4266 = vmatpush1.bf16.msra.mxu0 %v4056
    %4267 = vmatprep.subr.bf16.mxu0 %v4061
    %4268 = vmatpush1.bf16.msra.mxu0 %v4060
    %4269 = vmatprep.subr.bf16.mxu0 %v4065
    %4270 = vmatpush1.bf16.msra.mxu0 %v4064
    %4271 = vmatprep.subr.bf16.mxu0 %v4069
    %4272 = vmatpush1.bf16.msra.mxu0 %v4068
    %4273 = vmatprep.subr.bf16.mxu0 %v4073
    %4274 = vmatpush1.bf16.msra.mxu0 %v4072
    %4275 = vmatprep.subr.bf16.mxu0 %v4077
    %4276 = vmatpush1.bf16.msra.mxu0 %v4076
    %4277 = vmatprep.subr.bf16.mxu0 %v4081
    %4278 = vmatpush1.bf16.msra.mxu0 %v4080
    %4279 = vmatprep.mubr.bf16.mxu0 %v3731
    %4280 = vmatmul.mubr.bf16.gmra.mrb[0].mxu0 %v3566
    %v4281 = vpop.f32.mrb[0].mxu0
    %v4282 = vadd.f32 %v3817, %v4281
    %v4283 = vpop.f32.mrb[0].mxu0
    %v4284 = vadd.f32 %v3821, %v4283
    %v4285 = vpop.f32.mrb[0].mxu0
    %v4286 = vadd.f32 %v3817, %v4285
    %v4287 = vpop.f32.mrb[0].mxu0
    %v4288 = vadd.f32 %v3821, %v4287
    %4289 = vmatprep.mubr.bf16.mxu0 %v3732
    %4290 = vmatmul.mubr.bf16.gmra.mrb[0].mxu0 %v3567
    %v4291 = vpop.f32.mrb[0].mxu0
    %v4292 = vadd.f32 %v3817, %v4291
    %v4293 = vpop.f32.mrb[0].mxu0
    %v4294 = vadd.f32 %v3821, %v4293
    %v4295 = vpop.f32.mrb[0].mxu0
    %v4296 = vadd.f32 %v3817, %v4295
    %v4297 = vpop.f32.mrb[0].mxu0
    %v4298 = vadd.f32 %v3821, %v4297
    %4299 = vmatprep.mubr.bf16.mxu0 %v3733
    %4300 = vmatmul.mubr.bf16.gmra.mrb[0].mxu0 %v3568
    %v4301 = vpop.f32.mrb[0].mxu0
    %v4302 = vadd.f32 %v3817, %v4301
    %v4303 = vpop.f32.mrb[0].mxu0
    %v4304 = vadd.f32 %v3821, %v4303
    %v4305 = vpop.f32.mrb[0].mxu0
    %v4306 = vadd.f32 %v3817, %v4305
    %v4307 = vpop.f32.mrb[0].mxu0
    %v4308 = vadd.f32 %v3821, %v4307
    %4309 = vmatprep.mubr.bf16.mxu0 %v3734
    %4310 = vmatmul.mubr.bf16.gmra.mrb[0].mxu0 %v3569
    %v4311 = vpop.f32.mrb[0].mxu0
    %v4312 = vadd.f32 %v3817, %v4311
    %v4313 = vpop.f32.mrb[0].mxu0
    %v4314 = vadd.f32 %v3821, %v4313
    %v4315 = vpop.f32.mrb[0].mxu0
    %v4316 = vadd.f32 %v3817, %v4315
    %v4317 = vpop.f32.mrb[0].mxu0
    %v4318 = vadd.f32 %v3821, %v4317
    %4319 = vmatprep.mubr.bf16.mxu0 %v3735
    %4320 = vmatmul.mubr.bf16.gmra.mrb[0].mxu0 %v3570
    %v4321 = vpop.f32.mrb[0].mxu0
    %v4322 = vadd.f32 %v3817, %v4321
    %v4323 = vpop.f32.mrb[0].mxu0
    %v4324 = vadd.f32 %v3821, %v4323
    %v4325 = vpop.f32.mrb[0].mxu0
    %v4326 = vadd.f32 %v3817, %v4325
    %v4327 = vpop.f32.mrb[0].mxu0
    %v4328 = vadd.f32 %v3821, %v4327
    %4329 = vmatprep.mubr.bf16.mxu0 %v3736
    %4330 = vmatmul.mubr.bf16.gmra.mrb[0].mxu0 %v3571
    %v4331 = vpop.f32.mrb[0].mxu0
    %v4332 = vadd.f32 %v3817, %v4331
    %v4333 = vpop.f32.mrb[0].mxu0
    %v4334 = vadd.f32 %v3821, %v4333
    %v4335 = vpop.f32.mrb[0].mxu0
    %v4336 = vadd.f32 %v3817, %v4335
    %v4337 = vpop.f32.mrb[0].mxu0
    %v4338 = vadd.f32 %v3821, %v4337
    %4339 = vmatprep.mubr.bf16.mxu0 %v3737
    %4340 = vmatmul.mubr.bf16.gmra.mrb[0].mxu0 %v3572
    %v4341 = vpop.f32.mrb[0].mxu0
    %v4342 = vadd.f32 %v3817, %v4341
    %v4343 = vpop.f32.mrb[0].mxu0
    %v4344 = vadd.f32 %v3821, %v4343
    %v4345 = vpop.f32.mrb[0].mxu0
    %v4346 = vpop.f32.mrb[0].mxu0
    %4347 = vdwg.mxu0
    %4348 = vst [vmem:[#allocation3] sm:$0xff] %v4181
    %4349 = vst [vmem:[#allocation3 + $0x8] sm:$0xff] %v4183
    %4350 = vst [vmem:[#allocation3 + $0x10] sm:$0xff] %v4282
    %4351 = vst [vmem:[#allocation3 + $0x18] sm:$0xff] %v4284
    %4352 = vst [vmem:[#allocation3 + $0x20] sm:$0xff] %v4185
    %4353 = vst [vmem:[#allocation3 + $0x28] sm:$0xff] %v4187
    %4354 = vst [vmem:[#allocation3 + $0x30] sm:$0xff] %v4286
    %4355 = vst [vmem:[#allocation3 + $0x38] sm:$0xff] %v4288
    %4356 = vst [vmem:[#allocation3 + $0x40] sm:$0xff] %v4191
    %4357 = vst [vmem:[#allocation3 + $0x48] sm:$0xff] %v4193
    %4358 = vst [vmem:[#allocation3 + $0x50] sm:$0xff] %v4292
    %4359 = vst [vmem:[#allocation3 + $0x58] sm:$0xff] %v4294
    %4360 = vst [vmem:[#allocation3 + $0x60] sm:$0xff] %v4195
    %4361 = vst [vmem:[#allocation3 + $0x68] sm:$0xff] %v4197
    %4362 = vst [vmem:[#allocation3 + $0x70] sm:$0xff] %v4296
    %4363 = vst [vmem:[#allocation3 + $0x78] sm:$0xff] %v4298
    %4364 = vst [vmem:[#allocation3 + $0x80] sm:$0xff] %v4201
    %4365 = vst [vmem:[#allocation3 + $0x88] sm:$0xff] %v4203
    %4366 = vst [vmem:[#allocation3 + $0x90] sm:$0xff] %v4302
    %4367 = vst [vmem:[#allocation3 + $0x98] sm:$0xff] %v4304
    %4368 = vst [vmem:[#allocation3 + $0xa0] sm:$0xff] %v4205
    %4369 = vst [vmem:[#allocation3 + $0xa8] sm:$0xff] %v4207
    %4370 = vst [vmem:[#allocation3 + $0xb0] sm:$0xff] %v4306
    %4371 = vst [vmem:[#allocation3 + $0xb8] sm:$0xff] %v4308
    %4372 = vst [vmem:[#allocation3 + $0xc0] sm:$0xff] %v4211
    %4373 = vst [vmem:[#allocation3 + $0xc8] sm:$0xff] %v4213
    %4374 = vst [vmem:[#allocation3 + $0xd0] sm:$0xff] %v4312
    %4375 = vst [vmem:[#allocation3 + $0xd8] sm:$0xff] %v4314
    %4376 = vst [vmem:[#allocation3 + $0xe0] sm:$0xff] %v4215
    %4377 = vst [vmem:[#allocation3 + $0xe8] sm:$0xff] %v4217
    %4378 = vst [vmem:[#allocation3 + $0xf0] sm:$0xff] %v4316
    %4379 = vst [vmem:[#allocation3 + $0xf8] sm:$0xff] %v4318
    %4380 = vst [vmem:[#allocation3 + $0x100] sm:$0xff] %v4221
    %4381 = vst [vmem:[#allocation3 + $0x108] sm:$0xff] %v4223
    %4382 = vst [vmem:[#allocation3 + $0x110] sm:$0xff] %v4322
    %4383 = vst [vmem:[#allocation3 + $0x118] sm:$0xff] %v4324
    %4384 = vst [vmem:[#allocation3 + $0x120] sm:$0xff] %v4225
    %4385 = vst [vmem:[#allocation3 + $0x128] sm:$0xff] %v4227
    %4386 = vst [vmem:[#allocation3 + $0x130] sm:$0xff] %v4326
    %4387 = vst [vmem:[#allocation3 + $0x138] sm:$0xff] %v4328
    %4388 = vst [vmem:[#allocation3 + $0x140] sm:$0xff] %v4231
    %4389 = vst [vmem:[#allocation3 + $0x148] sm:$0xff] %v4233
    %4390 = vst [vmem:[#allocation3 + $0x150] sm:$0xff] %v4332
    %4391 = vst [vmem:[#allocation3 + $0x158] sm:$0xff] %v4334
    %4392 = vst [vmem:[#allocation3 + $0x160] sm:$0xff] %v4235
    %4393 = vst [vmem:[#allocation3 + $0x168] sm:$0xff] %v4237
    %4394 = vst [vmem:[#allocation3 + $0x170] sm:$0xff] %v4336
    %4395 = vst [vmem:[#allocation3 + $0x178] sm:$0xff] %v4338
    %4396 = vst [vmem:[#allocation3 + $0x180] sm:$0xf] %v4241
    %4397 = vst [vmem:[#allocation3 + $0x188] sm:$0xf] %v4243
    %4398 = vst [vmem:[#allocation3 + $0x190] sm:$0xf] %v4342
    %4399 = vst [vmem:[#allocation3 + $0x198] sm:$0xf] %v4344
    %v4400 = vld [vmem:[%s1088] sm:$0xff]
    %v4401 = vld [vmem:[%s1088 + $0x8] sm:$0xff]
    %v4402 = vld [vmem:[%s1088 + $0x10] sm:$0xff]
    %v4403 = vld [vmem:[%s1088 + $0x18] sm:$0xff]
    %v4404 = vld [vmem:[%s1088 + $0x20] sm:$0xff]
    %v4405 = vld [vmem:[%s1088 + $0x28] sm:$0xff]
    %v4406 = vld [vmem:[%s1088 + $0x30] sm:$0xff]
    %v4407 = vld [vmem:[%s1088 + $0x38] sm:$0xff]
    %v4408 = vld [vmem:[%s1088 + $0x40] sm:$0xff]
    %v4409 = vld [vmem:[%s1088 + $0x48] sm:$0xff]
    %v4410 = vld [vmem:[%s1088 + $0x50] sm:$0xff]
    %v4411 = vld [vmem:[%s1088 + $0x58] sm:$0xff]
    %v4412 = vld [vmem:[%s1088 + $0x60] sm:$0xf]
    %v4413 = vpack.c.bf16 %v4401, %v4400
    %v4414 = vpack.c.bf16 %v4403, %v4402
    %v4415 = vpack.c.bf16 %v4405, %v4404
    %v4416 = vpack.c.bf16 %v4407, %v4406
    %v4417 = vpack.c.bf16 %v4409, %v4408
    %v4418 = vpack.c.bf16 %v4411, %v4410
    %v4419 = vpack.c.bf16 %v4412, %v4412
    %v4420 = vld [vmem:[%s8] sm:$0xf]
    %v4421 = vld [vmem:[%s8 + $0x4] sm:$0xf]
    %v4422 = vld [vmem:[%s8 + $0x8] sm:$0xf]
    %v4423 = vld [vmem:[%s8 + $0xc] sm:$0xf]
    %v4424 = vld [vmem:[%s8 + $0x10] sm:$0xf]
    %v4425 = vld [vmem:[%s8 + $0x14] sm:$0xf]
    %v4426 = vld [vmem:[%s8 + $0x18] sm:$0xf]
    %v4427 = vld [vmem:[%s8 + $0x1c] sm:$0xf]
    %v4428 = vld [vmem:[%s8 + $0x20] sm:$0xf]
    %v4429 = vld [vmem:[%s8 + $0x24] sm:$0xf]
    %v4430 = vld [vmem:[%s8 + $0x28] sm:$0xf]
    %v4431 = vld [vmem:[%s8 + $0x2c] sm:$0xf]
    %v4432 = vld [vmem:[%s8 + $0x30] sm:$0x3]
    %v4446 = vunpack.c.l.b16 %v4420
    %v4447 = vunpack.c.l.b16 %v4421
    %v4448 = vunpack.c.l.b16 %v4422
    %v4449 = vunpack.c.l.b16 %v4423
    %v4450 = vunpack.c.l.b16 %v4424
    %v4451 = vunpack.c.l.b16 %v4425
    %v4452 = vunpack.c.l.b16 %v4426
    %v4453 = vunpack.c.l.b16 %v4427
    %v4454 = vunpack.c.l.b16 %v4428
    %v4455 = vunpack.c.l.b16 %v4429
    %v4456 = vunpack.c.l.b16 %v4430
    %v4457 = vunpack.c.l.b16 %v4431
    %v4458 = vunpack.c.l.b16 %v4432
    %v4459 = vpack.c.b16 %v4447, %v4446
    %v4460 = vpack.c.b16 %v4449, %v4448
    %v4461 = vpack.c.b16 %v4451, %v4450
    %v4462 = vpack.c.b16 %v4453, %v4452
    %v4463 = vpack.c.b16 %v4455, %v4454
    %v4464 = vpack.c.b16 %v4457, %v4456
    %v4465 = vpack.c.b16 %v4458, %v4458
    %v4467 = vsel %vm1168, %v4459, 0
    %v4470 = vsel %vm1168, %v4460, 0
    %v4473 = vsel %vm1168, %v4461, 0
    %v4476 = vsel %vm1168, %v4462, 0
    %v4479 = vsel %vm1168, %v4463, 0
    %v4482 = vsel %vm1168, %v4464, 0
    %v4485 = vsel %vm1168, %v4465, 0
    %v4488 = vsel %vm1190, %v4419, 0
    %4490 = vmatprep.subr.bf16.mxu0 0
    %4491 = vmatpush1.bf16.msra.mxu0 %v4413
    %4492 = vmatprep.subr.bf16.mxu0 0
    %4493 = vmatpush1.bf16.msra.mxu0 %v4414
    %4494 = vmatprep.subr.bf16.mxu0 0
    %4495 = vmatpush1.bf16.msra.mxu0 %v4415
    %4496 = vmatprep.subr.bf16.mxu0 0
    %4497 = vmatpush1.bf16.msra.mxu0 %v4416
    %4498 = vmatprep.subr.bf16.mxu0 0
    %4499 = vmatpush1.bf16.msra.mxu0 %v4417
    %4500 = vmatprep.subr.bf16.mxu0 0
    %4501 = vmatpush1.bf16.msra.mxu0 %v4418
    %4502 = vmatprep.subr.bf16.mxu0 0
    %4503 = vmatpush1.bf16.msra.mxu0 %v4488
    %4504 = vmatprep.subr.bf16.mxu0 0
    %4505 = vmatpush1.bf16.msra.mxu0 0
    %4506 = vmatprep.subr.bf16.mxu0 0
    %4507 = vmatpush1.bf16.msra.mxu0 0
    %4508 = vmatprep.subr.bf16.mxu0 0
    %4509 = vmatpush1.bf16.msra.mxu0 0
    %4510 = vmatprep.subr.bf16.mxu0 0
    %4511 = vmatpush1.bf16.msra.mxu0 0
    %4512 = vmatprep.subr.bf16.mxu0 0
    %4513 = vmatpush1.bf16.msra.mxu0 0
    %4514 = vmatprep.subr.bf16.mxu0 0
    %4515 = vmatpush1.bf16.msra.mxu0 0
    %4516 = vmatprep.subr.bf16.mxu0 0
    %4517 = vmatpush1.bf16.msra.mxu0 0
    %4518 = vmatprep.subr.bf16.mxu0 0
    %4519 = vmatpush1.bf16.msra.mxu0 0
    %4520 = vmatprep.subr.bf16.mxu0 0
    %4521 = vmatpush1.bf16.msra.mxu0 0
    %4522 = vmatprep.mubr.bf16.mxu0 0
    %4523 = vmatmul.mubr.bf16.gmra.mrb[0].mxu0 %v4467
    %v4524 = vpop.f32.mrb[0].mxu0
    %v4525 = vadd.f32 0.0, %v4524
    %v4526 = vpop.f32.mrb[0].mxu0
    %v4527 = vpop.f32.mrb[0].mxu0
    %v4528 = vadd.f32 0.0, %v4527
    %v4529 = vpop.f32.mrb[0].mxu0
    %4530 = vmatprep.mubr.bf16.mxu0 0
    %4531 = vmatmul.mubr.bf16.gmra.mrb[0].mxu0 %v4470
    %v4532 = vpop.f32.mrb[0].mxu0
    %v4533 = vadd.f32 0.0, %v4532
    %v4534 = vpop.f32.mrb[0].mxu0
    %v4535 = vpop.f32.mrb[0].mxu0
    %v4536 = vadd.f32 0.0, %v4535
    %v4537 = vpop.f32.mrb[0].mxu0
    %4538 = vmatprep.mubr.bf16.mxu0 0
    %4539 = vmatmul.mubr.bf16.gmra.mrb[0].mxu0 %v4473
    %v4540 = vpop.f32.mrb[0].mxu0
    %v4541 = vadd.f32 0.0, %v4540
    %v4542 = vpop.f32.mrb[0].mxu0
    %v4543 = vpop.f32.mrb[0].mxu0
    %v4544 = vadd.f32 0.0, %v4543
    %v4545 = vpop.f32.mrb[0].mxu0
    %4546 = vmatprep.mubr.bf16.mxu0 0
    %4547 = vmatmul.mubr.bf16.gmra.mrb[0].mxu0 %v4476
    %v4548 = vpop.f32.mrb[0].mxu0
    %v4549 = vadd.f32 0.0, %v4548
    %v4550 = vpop.f32.mrb[0].mxu0
    %v4551 = vpop.f32.mrb[0].mxu0
    %v4552 = vadd.f32 0.0, %v4551
    %v4553 = vpop.f32.mrb[0].mxu0
    %4554 = vmatprep.mubr.bf16.mxu0 0
    %4555 = vmatmul.mubr.bf16.gmra.mrb[0].mxu0 %v4479
    %v4556 = vpop.f32.mrb[0].mxu0
    %v4557 = vadd.f32 0.0, %v4556
    %v4558 = vpop.f32.mrb[0].mxu0
    %v4559 = vpop.f32.mrb[0].mxu0
    %v4560 = vadd.f32 0.0, %v4559
    %v4561 = vpop.f32.mrb[0].mxu0
    %4562 = vmatprep.mubr.bf16.mxu0 0
    %4563 = vmatmul.mubr.bf16.gmra.mrb[0].mxu0 %v4482
    %v4564 = vpop.f32.mrb[0].mxu0
    %v4565 = vadd.f32 0.0, %v4564
    %v4566 = vpop.f32.mrb[0].mxu0
    %v4567 = vpop.f32.mrb[0].mxu0
    %v4568 = vadd.f32 0.0, %v4567
    %v4569 = vpop.f32.mrb[0].mxu0
    %4570 = vmatprep.mubr.bf16.mxu0 0
    %4571 = vmatmul.mubr.bf16.gmra.mrb[0].mxu0 %v4485
    %v4572 = vpop.f32.mrb[0].mxu0
    %v4573 = vadd.f32 0.0, %v4572
    %v4574 = vpop.f32.mrb[0].mxu0
    %v4575 = vpop.f32.mrb[0].mxu0
    %v4576 = vpop.f32.mrb[0].mxu0
    %4577 = vdwg.mxu0
    %v4578 = vpack.c.bf16 %v4528, %v4525
    %v4579 = vpack.c.bf16 %v4536, %v4533
    %v4580 = vpack.c.bf16 %v4544, %v4541
    %v4581 = vpack.c.bf16 %v4552, %v4549
    %v4582 = vpack.c.bf16 %v4560, %v4557
    %v4583 = vpack.c.bf16 %v4568, %v4565
    %v4584 = vpack.c.bf16 %v4573, %v4573
    %v4585 = vld [vmem:[%s3738] sm:$0xff]
    %v4586 = vld [vmem:[%s3738 + $0x8] sm:$0xff]
    %v4587 = vld [vmem:[%s3738 + $0x10] sm:$0xff]
    %v4588 = vld [vmem:[%s3738 + $0x18] sm:$0xff]
    %v4589 = vld [vmem:[%s3738 + $0x20] sm:$0xff]
    %v4590 = vld [vmem:[%s3738 + $0x28] sm:$0xff]
    %v4591 = vld [vmem:[%s3738 + $0x30] sm:$0xff]
    %v4592 = vld [vmem:[%s3738 + $0x38] sm:$0xff]
    %v4593 = vld [vmem:[%s3738 + $0x40] sm:$0xff]
    %v4594 = vld [vmem:[%s3738 + $0x48] sm:$0xff]
    %v4595 = vld [vmem:[%s3738 + $0x50] sm:$0xff]
    %v4596 = vld [vmem:[%s3738 + $0x58] sm:$0xff]
    %v4597 = vld [vmem:[%s3738 + $0x60] sm:$0xff]
    %v4598 = vld [vmem:[%s3738 + $0x68] sm:$0xff]
    %v4599 = vld [vmem:[%s3738 + $0x70] sm:$0xff]
    %v4600 = vld [vmem:[%s3738 + $0x78] sm:$0xff]
    %v4601 = vld [vmem:[%s3738 + $0x80] sm:$0xff]
    %v4602 = vld [vmem:[%s3738 + $0x88] sm:$0xff]
    %v4603 = vld [vmem:[%s3738 + $0x90] sm:$0xff]
    %v4604 = vld [vmem:[%s3738 + $0x98] sm:$0xff]
    %v4605 = vld [vmem:[%s3738 + $0xa0] sm:$0xff]
    %v4606 = vld [vmem:[%s3738 + $0xa8] sm:$0xff]
    %v4607 = vld [vmem:[%s3738 + $0xb0] sm:$0xff]
    %v4608 = vld [vmem:[%s3738 + $0xb8] sm:$0xff]
    %v4609 = vld [vmem:[%s3738 + $0xc0] sm:$0xff]
    %v4610 = vld [vmem:[%s3738 + $0xc8] sm:$0xff]
    %v4611 = vld [vmem:[%s3738 + $0xd0] sm:$0xff]
    %v4612 = vld [vmem:[%s3738 + $0xd8] sm:$0xff]
    %v4613 = vld [vmem:[%s3738 + $0xe0] sm:$0xff]
    %v4614 = vld [vmem:[%s3738 + $0xe8] sm:$0xff]
    %v4615 = vld [vmem:[%s3738 + $0xf0] sm:$0xff]
    %v4616 = vld [vmem:[%s3738 + $0xf8] sm:$0xff]
    %v4617 = vld [vmem:[%s3738 + $0x100] sm:$0xff]
    %v4618 = vld [vmem:[%s3738 + $0x108] sm:$0xff]
    %v4619 = vld [vmem:[%s3738 + $0x110] sm:$0xff]
    %v4620 = vld [vmem:[%s3738 + $0x118] sm:$0xff]
    %v4621 = vld [vmem:[%s3738 + $0x120] sm:$0xff]
    %v4622 = vld [vmem:[%s3738 + $0x128] sm:$0xff]
    %v4623 = vld [vmem:[%s3738 + $0x130] sm:$0xff]
    %v4624 = vld [vmem:[%s3738 + $0x138] sm:$0xff]
    %v4625 = vld [vmem:[%s3738 + $0x140] sm:$0xff]
    %v4626 = vld [vmem:[%s3738 + $0x148] sm:$0xff]
    %v4627 = vld [vmem:[%s3738 + $0x150] sm:$0xff]
    %v4628 = vld [vmem:[%s3738 + $0x158] sm:$0xff]
    %v4629 = vld [vmem:[%s3738 + $0x160] sm:$0xff]
    %v4630 = vld [vmem:[%s3738 + $0x168] sm:$0xff]
    %v4631 = vld [vmem:[%s3738 + $0x170] sm:$0xff]
    %v4632 = vld [vmem:[%s3738 + $0x178] sm:$0xff]
    %v4633 = vld [vmem:[%s3738 + $0x180] sm:$0xff]
    %v4634 = vld [vmem:[%s3738 + $0x188] sm:$0xff]
    %v4635 = vld [vmem:[%s3738 + $0x190] sm:$0xff]
    %v4636 = vld [vmem:[%s3738 + $0x198] sm:$0xff]
    %v4637 = vld [vmem:[%s3738 + $0x1a0] sm:$0xff]
    %v4638 = vld [vmem:[%s3738 + $0x1a8] sm:$0xff]
    %v4639 = vld [vmem:[%s3738 + $0x1b0] sm:$0xff]
    %v4640 = vld [vmem:[%s3738 + $0x1b8] sm:$0xff]
    %v4641 = vld [vmem:[%s3738 + $0x1c0] sm:$0xff]
    %v4642 = vld [vmem:[%s3738 + $0x1c8] sm:$0xff]
    %v4643 = vld [vmem:[%s3738 + $0x1d0] sm:$0xff]
    %v4644 = vld [vmem:[%s3738 + $0x1d8] sm:$0xff]
    %v4645 = vld [vmem:[%s3738 + $0x1e0] sm:$0xff]
    %v4646 = vld [vmem:[%s3738 + $0x1e8] sm:$0xff]
    %v4647 = vld [vmem:[%s3738 + $0x1f0] sm:$0xff]
    %v4648 = vld [vmem:[%s3738 + $0x1f8] sm:$0xff]
    %v4649 = vld [vmem:[%s3803] sm:$0xf]
    %v4651 = vlaneseq
    %v4652 = vshrl.u32 %v4651, 7
    %v4653 = vsub.s32 0, %v4652
    %v4654 = vrot.slane %v4649, %v4653
    %v4655 = vlaneseq
    %v4656 = vshrl.u32 %v4655, 7
    %v4657 = vsub.s32 1, %v4656
    %v4658 = vrot.slane %v4649, %v4657
    %v4659 = vlaneseq
    %v4660 = vshrl.u32 %v4659, 7
    %v4661 = vsub.s32 2, %v4660
    %v4662 = vrot.slane %v4649, %v4661
    %v4663 = vlaneseq
    %v4664 = vshrl.u32 %v4663, 7
    %v4665 = vsub.s32 3, %v4664
    %v4666 = vrot.slane %v4649, %v4665
    %v4735 = vunpack.c.l.b16 %v4585
    %v4736 = vunpack.c.h.b16 %v4585
    %v4737 = vunpack.c.l.b16 %v4586
    %v4738 = vunpack.c.h.b16 %v4586
    %v4739 = vunpack.c.l.b16 %v4587
    %v4740 = vunpack.c.h.b16 %v4587
    %v4741 = vunpack.c.l.b16 %v4588
    %v4742 = vunpack.c.h.b16 %v4588
    %v4743 = vunpack.c.l.b16 %v4589
    %v4744 = vunpack.c.h.b16 %v4589
    %v4745 = vunpack.c.l.b16 %v4590
    %v4746 = vunpack.c.h.b16 %v4590
    %v4747 = vunpack.c.l.b16 %v4591
    %v4748 = vunpack.c.h.b16 %v4591
    %v4749 = vunpack.c.l.b16 %v4592
    %v4750 = vunpack.c.h.b16 %v4592
    %v4751 = vunpack.c.l.b16 %v4593
    %v4752 = vunpack.c.h.b16 %v4593
    %v4753 = vunpack.c.l.b16 %v4594
    %v4754 = vunpack.c.h.b16 %v4594
    %v4755 = vunpack.c.l.b16 %v4595
    %v4756 = vunpack.c.h.b16 %v4595
    %v4757 = vunpack.c.l.b16 %v4596
    %v4758 = vunpack.c.h.b16 %v4596
    %v4759 = vunpack.c.l.b16 %v4597
    %v4760 = vunpack.c.h.b16 %v4597
    %v4761 = vunpack.c.l.b16 %v4598
    %v4762 = vunpack.c.h.b16 %v4598
    %v4763 = vunpack.c.l.b16 %v4599
    %v4764 = vunpack.c.h.b16 %v4599
    %v4765 = vunpack.c.l.b16 %v4600
    %v4766 = vunpack.c.h.b16 %v4600
    %v4767 = vunpack.c.l.b16 %v4601
    %v4768 = vunpack.c.h.b16 %v4601
    %v4769 = vunpack.c.l.b16 %v4602
    %v4770 = vunpack.c.h.b16 %v4602
    %v4771 = vunpack.c.l.b16 %v4603
    %v4772 = vunpack.c.h.b16 %v4603
    %v4773 = vunpack.c.l.b16 %v4604
    %v4774 = vunpack.c.h.b16 %v4604
    %v4775 = vunpack.c.l.b16 %v4605
    %v4776 = vunpack.c.h.b16 %v4605
    %v4777 = vunpack.c.l.b16 %v4606
    %v4778 = vunpack.c.h.b16 %v4606
    %v4779 = vunpack.c.l.b16 %v4607
    %v4780 = vunpack.c.h.b16 %v4607
    %v4781 = vunpack.c.l.b16 %v4608
    %v4782 = vunpack.c.h.b16 %v4608
    %v4783 = vunpack.c.l.b16 %v4609
    %v4784 = vunpack.c.h.b16 %v4609
    %v4785 = vunpack.c.l.b16 %v4610
    %v4786 = vunpack.c.h.b16 %v4610
    %v4787 = vunpack.c.l.b16 %v4611
    %v4788 = vunpack.c.h.b16 %v4611
    %v4789 = vunpack.c.l.b16 %v4612
    %v4790 = vunpack.c.h.b16 %v4612
    %v4791 = vunpack.c.l.b16 %v4613
    %v4792 = vunpack.c.h.b16 %v4613
    %v4793 = vunpack.c.l.b16 %v4614
    %v4794 = vunpack.c.h.b16 %v4614
    %v4795 = vunpack.c.l.b16 %v4615
    %v4796 = vunpack.c.h.b16 %v4615
    %v4797 = vunpack.c.l.b16 %v4616
    %v4798 = vunpack.c.h.b16 %v4616
    %v4799 = vunpack.c.l.b16 %v4617
    %v4800 = vunpack.c.h.b16 %v4617
    %v4801 = vunpack.c.l.b16 %v4618
    %v4802 = vunpack.c.h.b16 %v4618
    %v4803 = vunpack.c.l.b16 %v4619
    %v4804 = vunpack.c.h.b16 %v4619
    %v4805 = vunpack.c.l.b16 %v4620
    %v4806 = vunpack.c.h.b16 %v4620
    %v4807 = vunpack.c.l.b16 %v4621
    %v4808 = vunpack.c.h.b16 %v4621
    %v4809 = vunpack.c.l.b16 %v4622
    %v4810 = vunpack.c.h.b16 %v4622
    %v4811 = vunpack.c.l.b16 %v4623
    %v4812 = vunpack.c.h.b16 %v4623
    %v4813 = vunpack.c.l.b16 %v4624
    %v4814 = vunpack.c.h.b16 %v4624
    %v4815 = vunpack.c.l.b16 %v4625
    %v4816 = vunpack.c.h.b16 %v4625
    %v4817 = vunpack.c.l.b16 %v4626
    %v4818 = vunpack.c.h.b16 %v4626
    %v4819 = vunpack.c.l.b16 %v4627
    %v4820 = vunpack.c.h.b16 %v4627
    %v4821 = vunpack.c.l.b16 %v4628
    %v4822 = vunpack.c.h.b16 %v4628
    %v4823 = vunpack.c.l.b16 %v4629
    %v4824 = vunpack.c.h.b16 %v4629
    %v4825 = vunpack.c.l.b16 %v4630
    %v4826 = vunpack.c.h.b16 %v4630
    %v4827 = vunpack.c.l.b16 %v4631
    %v4828 = vunpack.c.h.b16 %v4631
    %v4829 = vunpack.c.l.b16 %v4632
    %v4830 = vunpack.c.h.b16 %v4632
    %v4831 = vunpack.c.l.b16 %v4633
    %v4832 = vunpack.c.h.b16 %v4633
    %v4833 = vunpack.c.l.b16 %v4634
    %v4834 = vunpack.c.h.b16 %v4634
    %v4835 = vunpack.c.l.b16 %v4635
    %v4836 = vunpack.c.h.b16 %v4635
    %v4837 = vunpack.c.l.b16 %v4636
    %v4838 = vunpack.c.h.b16 %v4636
    %v4839 = vunpack.c.l.b16 %v4637
    %v4840 = vunpack.c.h.b16 %v4637
    %v4841 = vunpack.c.l.b16 %v4638
    %v4842 = vunpack.c.h.b16 %v4638
    %v4843 = vunpack.c.l.b16 %v4639
    %v4844 = vunpack.c.h.b16 %v4639
    %v4845 = vunpack.c.l.b16 %v4640
    %v4846 = vunpack.c.h.b16 %v4640
    %v4847 = vunpack.c.l.b16 %v4641
    %v4848 = vunpack.c.h.b16 %v4641
    %v4849 = vunpack.c.l.b16 %v4642
    %v4850 = vunpack.c.h.b16 %v4642
    %v4851 = vunpack.c.l.b16 %v4643
    %v4852 = vunpack.c.h.b16 %v4643
    %v4853 = vunpack.c.l.b16 %v4644
    %v4854 = vunpack.c.h.b16 %v4644
    %v4855 = vunpack.c.l.b16 %v4645
    %v4856 = vunpack.c.h.b16 %v4645
    %v4857 = vunpack.c.l.b16 %v4646
    %v4858 = vunpack.c.h.b16 %v4646
    %v4859 = vunpack.c.l.b16 %v4647
    %v4860 = vunpack.c.h.b16 %v4647
    %v4861 = vunpack.c.l.b16 %v4648
    %v4862 = vunpack.c.h.b16 %v4648
    %v4863 = vpack.c.b16 %v4739, %v4735
    %v4864 = vpack.c.b16 %v4740, %v4736
    %v4865 = vpack.c.b16 %v4741, %v4737
    %v4866 = vpack.c.b16 %v4742, %v4738
    %v4867 = vpack.c.b16 %v4747, %v4743
    %v4868 = vpack.c.b16 %v4748, %v4744
    %v4869 = vpack.c.b16 %v4749, %v4745
    %v4870 = vpack.c.b16 %v4750, %v4746
    %v4871 = vpack.c.b16 %v4755, %v4751
    %v4872 = vpack.c.b16 %v4756, %v4752
    %v4873 = vpack.c.b16 %v4757, %v4753
    %v4874 = vpack.c.b16 %v4758, %v4754
    %v4875 = vpack.c.b16 %v4763, %v4759
    %v4876 = vpack.c.b16 %v4764, %v4760
    %v4877 = vpack.c.b16 %v4765, %v4761
    %v4878 = vpack.c.b16 %v4766, %v4762
    %v4879 = vpack.c.b16 %v4771, %v4767
    %v4880 = vpack.c.b16 %v4772, %v4768
    %v4881 = vpack.c.b16 %v4773, %v4769
    %v4882 = vpack.c.b16 %v4774, %v4770
    %v4883 = vpack.c.b16 %v4779, %v4775
    %v4884 = vpack.c.b16 %v4780, %v4776
    %v4885 = vpack.c.b16 %v4781, %v4777
    %v4886 = vpack.c.b16 %v4782, %v4778
    %v4887 = vpack.c.b16 %v4787, %v4783
    %v4888 = vpack.c.b16 %v4788, %v4784
    %v4889 = vpack.c.b16 %v4789, %v4785
    %v4890 = vpack.c.b16 %v4790, %v4786
    %v4891 = vpack.c.b16 %v4795, %v4791
    %v4892 = vpack.c.b16 %v4796, %v4792
    %v4893 = vpack.c.b16 %v4797, %v4793
    %v4894 = vpack.c.b16 %v4798, %v4794
    %v4895 = vpack.c.b16 %v4803, %v4799
    %v4896 = vpack.c.b16 %v4804, %v4800
    %v4897 = vpack.c.b16 %v4805, %v4801
    %v4898 = vpack.c.b16 %v4806, %v4802
    %v4899 = vpack.c.b16 %v4811, %v4807
    %v4900 = vpack.c.b16 %v4812, %v4808
    %v4901 = vpack.c.b16 %v4813, %v4809
    %v4902 = vpack.c.b16 %v4814, %v4810
    %v4903 = vpack.c.b16 %v4819, %v4815
    %v4904 = vpack.c.b16 %v4820, %v4816
    %v4905 = vpack.c.b16 %v4821, %v4817
    %v4906 = vpack.c.b16 %v4822, %v4818
    %v4907 = vpack.c.b16 %v4827, %v4823
    %v4908 = vpack.c.b16 %v4828, %v4824
    %v4909 = vpack.c.b16 %v4829, %v4825
    %v4910 = vpack.c.b16 %v4830, %v4826
    %v4911 = vpack.c.b16 %v4835, %v4831
    %v4912 = vpack.c.b16 %v4836, %v4832
    %v4913 = vpack.c.b16 %v4837, %v4833
    %v4914 = vpack.c.b16 %v4838, %v4834
    %v4915 = vpack.c.b16 %v4843, %v4839
    %v4916 = vpack.c.b16 %v4844, %v4840
    %v4917 = vpack.c.b16 %v4845, %v4841
    %v4918 = vpack.c.b16 %v4846, %v4842
    %v4919 = vpack.c.b16 %v4851, %v4847
    %v4920 = vpack.c.b16 %v4852, %v4848
    %v4921 = vpack.c.b16 %v4853, %v4849
    %v4922 = vpack.c.b16 %v4854, %v4850
    %v4923 = vpack.c.b16 %v4859, %v4855
    %v4924 = vpack.c.b16 %v4860, %v4856
    %v4925 = vpack.c.b16 %v4861, %v4857
    %v4926 = vpack.c.b16 %v4862, %v4858
    %4991 = vmatprep.subr.bf16.mxu0 %v4864
    %4992 = vmatpush1.bf16.msra.mxu0 %v4863
    %4993 = vmatprep.subr.bf16.mxu0 %v4868
    %4994 = vmatpush1.bf16.msra.mxu0 %v4867
    %4995 = vmatprep.subr.bf16.mxu0 %v4872
    %4996 = vmatpush1.bf16.msra.mxu0 %v4871
    %4997 = vmatprep.subr.bf16.mxu0 %v4876
    %4998 = vmatpush1.bf16.msra.mxu0 %v4875
    %4999 = vmatprep.subr.bf16.mxu0 %v4880
    %5000 = vmatpush1.bf16.msra.mxu0 %v4879
    %5001 = vmatprep.subr.bf16.mxu0 %v4884
    %5002 = vmatpush1.bf16.msra.mxu0 %v4883
    %5003 = vmatprep.subr.bf16.mxu0 %v4888
    %5004 = vmatpush1.bf16.msra.mxu0 %v4887
    %5005 = vmatprep.subr.bf16.mxu0 %v4892
    %5006 = vmatpush1.bf16.msra.mxu0 %v4891
    %5007 = vmatprep.subr.bf16.mxu0 %v4896
    %5008 = vmatpush1.bf16.msra.mxu0 %v4895
    %5009 = vmatprep.subr.bf16.mxu0 %v4900
    %5010 = vmatpush1.bf16.msra.mxu0 %v4899
    %5011 = vmatprep.subr.bf16.mxu0 %v4904
    %5012 = vmatpush1.bf16.msra.mxu0 %v4903
    %5013 = vmatprep.subr.bf16.mxu0 %v4908
    %5014 = vmatpush1.bf16.msra.mxu0 %v4907
    %5015 = vmatprep.subr.bf16.mxu0 %v4912
    %5016 = vmatpush1.bf16.msra.mxu0 %v4911
    %5017 = vmatprep.subr.bf16.mxu0 %v4916
    %5018 = vmatpush1.bf16.msra.mxu0 %v4915
    %5019 = vmatprep.subr.bf16.mxu0 %v4920
    %5020 = vmatpush1.bf16.msra.mxu0 %v4919
    %5021 = vmatprep.subr.bf16.mxu0 %v4924
    %5022 = vmatpush1.bf16.msra.mxu0 %v4923
    %5023 = vmatprep.mubr.bf16.mxu0 %v4578
    %5024 = vmatmul.mubr.bf16.gmra.mrb[0].mxu0 %v4413
    %v5025 = vpop.f32.mrb[0].mxu0
    %v5026 = vadd.f32 %v4654, %v5025
    %v5027 = vpop.f32.mrb[0].mxu0
    %v5028 = vadd.f32 %v4658, %v5027
    %v5029 = vpop.f32.mrb[0].mxu0
    %v5030 = vadd.f32 %v4654, %v5029
    %v5031 = vpop.f32.mrb[0].mxu0
    %v5032 = vadd.f32 %v4658, %v5031
    %5033 = vmatprep.mubr.bf16.mxu0 %v4579
    %5034 = vmatmul.mubr.bf16.gmra.mrb[0].mxu0 %v4414
    %v5035 = vpop.f32.mrb[0].mxu0
    %v5036 = vadd.f32 %v4654, %v5035
    %v5037 = vpop.f32.mrb[0].mxu0
    %v5038 = vadd.f32 %v4658, %v5037
    %v5039 = vpop.f32.mrb[0].mxu0
    %v5040 = vadd.f32 %v4654, %v5039
    %v5041 = vpop.f32.mrb[0].mxu0
    %v5042 = vadd.f32 %v4658, %v5041
    %5043 = vmatprep.mubr.bf16.mxu0 %v4580
    %5044 = vmatmul.mubr.bf16.gmra.mrb[0].mxu0 %v4415
    %v5045 = vpop.f32.mrb[0].mxu0
    %v5046 = vadd.f32 %v4654, %v5045
    %v5047 = vpop.f32.mrb[0].mxu0
    %v5048 = vadd.f32 %v4658, %v5047
    %v5049 = vpop.f32.mrb[0].mxu0
    %v5050 = vadd.f32 %v4654, %v5049
    %v5051 = vpop.f32.mrb[0].mxu0
    %v5052 = vadd.f32 %v4658, %v5051
    %5053 = vmatprep.mubr.bf16.mxu0 %v4581
    %5054 = vmatmul.mubr.bf16.gmra.mrb[0].mxu0 %v4416
    %v5055 = vpop.f32.mrb[0].mxu0
    %v5056 = vadd.f32 %v4654, %v5055
    %v5057 = vpop.f32.mrb[0].mxu0
    %v5058 = vadd.f32 %v4658, %v5057
    %v5059 = vpop.f32.mrb[0].mxu0
    %v5060 = vadd.f32 %v4654, %v5059
    %v5061 = vpop.f32.mrb[0].mxu0
    %v5062 = vadd.f32 %v4658, %v5061
    %5063 = vmatprep.mubr.bf16.mxu0 %v4582
    %5064 = vmatmul.mubr.bf16.gmra.mrb[0].mxu0 %v4417
    %v5065 = vpop.f32.mrb[0].mxu0
    %v5066 = vadd.f32 %v4654, %v5065
    %v5067 = vpop.f32.mrb[0].mxu0
    %v5068 = vadd.f32 %v4658, %v5067
    %v5069 = vpop.f32.mrb[0].mxu0
    %v5070 = vadd.f32 %v4654, %v5069
    %v5071 = vpop.f32.mrb[0].mxu0
    %v5072 = vadd.f32 %v4658, %v5071
    %5073 = vmatprep.mubr.bf16.mxu0 %v4583
    %5074 = vmatmul.mubr.bf16.gmra.mrb[0].mxu0 %v4418
    %v5075 = vpop.f32.mrb[0].mxu0
    %v5076 = vadd.f32 %v4654, %v5075
    %v5077 = vpop.f32.mrb[0].mxu0
    %v5078 = vadd.f32 %v4658, %v5077
    %v5079 = vpop.f32.mrb[0].mxu0
    %v5080 = vadd.f32 %v4654, %v5079
    %v5081 = vpop.f32.mrb[0].mxu0
    %v5082 = vadd.f32 %v4658, %v5081
    %5083 = vmatprep.mubr.bf16.mxu0 %v4584
    %5084 = vmatmul.mubr.bf16.gmra.mrb[0].mxu0 %v4419
    %v5085 = vpop.f32.mrb[0].mxu0
    %v5086 = vadd.f32 %v4654, %v5085
    %v5087 = vpop.f32.mrb[0].mxu0
    %v5088 = vadd.f32 %v4658, %v5087
    %v5089 = vpop.f32.mrb[0].mxu0
    %v5090 = vpop.f32.mrb[0].mxu0
    %5091 = vdwg.mxu0
    %5092 = vmatprep.subr.bf16.mxu0 %v4866
    %5093 = vmatpush1.bf16.msra.mxu0 %v4865
    %5094 = vmatprep.subr.bf16.mxu0 %v4870
    %5095 = vmatpush1.bf16.msra.mxu0 %v4869
    %5096 = vmatprep.subr.bf16.mxu0 %v4874
    %5097 = vmatpush1.bf16.msra.mxu0 %v4873
    %5098 = vmatprep.subr.bf16.mxu0 %v4878
    %5099 = vmatpush1.bf16.msra.mxu0 %v4877
    %5100 = vmatprep.subr.bf16.mxu0 %v4882
    %5101 = vmatpush1.bf16.msra.mxu0 %v4881
    %5102 = vmatprep.subr.bf16.mxu0 %v4886
    %5103 = vmatpush1.bf16.msra.mxu0 %v4885
    %5104 = vmatprep.subr.bf16.mxu0 %v4890
    %5105 = vmatpush1.bf16.msra.mxu0 %v4889
    %5106 = vmatprep.subr.bf16.mxu0 %v4894
    %5107 = vmatpush1.bf16.msra.mxu0 %v4893
    %5108 = vmatprep.subr.bf16.mxu0 %v4898
    %5109 = vmatpush1.bf16.msra.mxu0 %v4897
    %5110 = vmatprep.subr.bf16.mxu0 %v4902
    %5111 = vmatpush1.bf16.msra.mxu0 %v4901
    %5112 = vmatprep.subr.bf16.mxu0 %v4906
    %5113 = vmatpush1.bf16.msra.mxu0 %v4905
    %5114 = vmatprep.subr.bf16.mxu0 %v4910
    %5115 = vmatpush1.bf16.msra.mxu0 %v4909
    %5116 = vmatprep.subr.bf16.mxu0 %v4914
    %5117 = vmatpush1.bf16.msra.mxu0 %v4913
    %5118 = vmatprep.subr.bf16.mxu0 %v4918
    %5119 = vmatpush1.bf16.msra.mxu0 %v4917
    %5120 = vmatprep.subr.bf16.mxu0 %v4922
    %5121 = vmatpush1.bf16.msra.mxu0 %v4921
    %5122 = vmatprep.subr.bf16.mxu0 %v4926
    %5123 = vmatpush1.bf16.msra.mxu0 %v4925
    %5124 = vmatprep.mubr.bf16.mxu0 %v4578
    %5125 = vmatmul.mubr.bf16.gmra.mrb[0].mxu0 %v4413
    %v5126 = vpop.f32.mrb[0].mxu0
    %v5127 = vadd.f32 %v4662, %v5126
    %v5128 = vpop.f32.mrb[0].mxu0
    %v5129 = vadd.f32 %v4666, %v5128
    %v5130 = vpop.f32.mrb[0].mxu0
    %v5131 = vadd.f32 %v4662, %v5130
    %v5132 = vpop.f32.mrb[0].mxu0
    %v5133 = vadd.f32 %v4666, %v5132
    %5134 = vmatprep.mubr.bf16.mxu0 %v4579
    %5135 = vmatmul.mubr.bf16.gmra.mrb[0].mxu0 %v4414
    %v5136 = vpop.f32.mrb[0].mxu0
    %v5137 = vadd.f32 %v4662, %v5136
    %v5138 = vpop.f32.mrb[0].mxu0
    %v5139 = vadd.f32 %v4666, %v5138
    %v5140 = vpop.f32.mrb[0].mxu0
    %v5141 = vadd.f32 %v4662, %v5140
    %v5142 = vpop.f32.mrb[0].mxu0
    %v5143 = vadd.f32 %v4666, %v5142
    %5144 = vmatprep.mubr.bf16.mxu0 %v4580
    %5145 = vmatmul.mubr.bf16.gmra.mrb[0].mxu0 %v4415
    %v5146 = vpop.f32.mrb[0].mxu0
    %v5147 = vadd.f32 %v4662, %v5146
    %v5148 = vpop.f32.mrb[0].mxu0
    %v5149 = vadd.f32 %v4666, %v5148
    %v5150 = vpop.f32.mrb[0].mxu0
    %v5151 = vadd.f32 %v4662, %v5150
    %v5152 = vpop.f32.mrb[0].mxu0
    %v5153 = vadd.f32 %v4666, %v5152
    %5154 = vmatprep.mubr.bf16.mxu0 %v4581
    %5155 = vmatmul.mubr.bf16.gmra.mrb[0].mxu0 %v4416
    %v5156 = vpop.f32.mrb[0].mxu0
    %v5157 = vadd.f32 %v4662, %v5156
    %v5158 = vpop.f32.mrb[0].mxu0
    %v5159 = vadd.f32 %v4666, %v5158
    %v5160 = vpop.f32.mrb[0].mxu0
    %v5161 = vadd.f32 %v4662, %v5160
    %v5162 = vpop.f32.mrb[0].mxu0
    %v5163 = vadd.f32 %v4666, %v5162
    %5164 = vmatprep.mubr.bf16.mxu0 %v4582
    %5165 = vmatmul.mubr.bf16.gmra.mrb[0].mxu0 %v4417
    %v5166 = vpop.f32.mrb[0].mxu0
    %v5167 = vadd.f32 %v4662, %v5166
    %v5168 = vpop.f32.mrb[0].mxu0
    %v5169 = vadd.f32 %v4666, %v5168
    %v5170 = vpop.f32.mrb[0].mxu0
    %v5171 = vadd.f32 %v4662, %v5170
    %v5172 = vpop.f32.mrb[0].mxu0
    %v5173 = vadd.f32 %v4666, %v5172
    %5174 = vmatprep.mubr.bf16.mxu0 %v4583
    %5175 = vmatmul.mubr.bf16.gmra.mrb[0].mxu0 %v4418
    %v5176 = vpop.f32.mrb[0].mxu0
    %v5177 = vadd.f32 %v4662, %v5176
    %v5178 = vpop.f32.mrb[0].mxu0
    %v5179 = vadd.f32 %v4666, %v5178
    %v5180 = vpop.f32.mrb[0].mxu0
    %v5181 = vadd.f32 %v4662, %v5180
    %v5182 = vpop.f32.mrb[0].mxu0
    %v5183 = vadd.f32 %v4666, %v5182
    %5184 = vmatprep.mubr.bf16.mxu0 %v4584
    %5185 = vmatmul.mubr.bf16.gmra.mrb[0].mxu0 %v4419
    %v5186 = vpop.f32.mrb[0].mxu0
    %v5187 = vadd.f32 %v4662, %v5186
    %v5188 = vpop.f32.mrb[0].mxu0
    %v5189 = vadd.f32 %v4666, %v5188
    %v5190 = vpop.f32.mrb[0].mxu0
    %v5191 = vpop.f32.mrb[0].mxu0
    %5192 = vdwg.mxu0
    %5193 = vst [vmem:[%s2742] sm:$0xff] %v5026
    %5194 = vst [vmem:[%s2742 + $0x8] sm:$0xff] %v5028
    %5195 = vst [vmem:[%s2742 + $0x10] sm:$0xff] %v5127
    %5196 = vst [vmem:[%s2742 + $0x18] sm:$0xff] %v5129
    %5197 = vst [vmem:[%s2742 + $0x20] sm:$0xff] %v5030
    %5198 = vst [vmem:[%s2742 + $0x28] sm:$0xff] %v5032
    %5199 = vst [vmem:[%s2742 + $0x30] sm:$0xff] %v5131
    %5200 = vst [vmem:[%s2742 + $0x38] sm:$0xff] %v5133
    %5201 = vst [vmem:[%s2742 + $0x40] sm:$0xff] %v5036
    %5202 = vst [vmem:[%s2742 + $0x48] sm:$0xff] %v5038
    %5203 = vst [vmem:[%s2742 + $0x50] sm:$0xff] %v5137
    %5204 = vst [vmem:[%s2742 + $0x58] sm:$0xff] %v5139
    %5205 = vst [vmem:[%s2742 + $0x60] sm:$0xff] %v5040
    %5206 = vst [vmem:[%s2742 + $0x68] sm:$0xff] %v5042
    %5207 = vst [vmem:[%s2742 + $0x70] sm:$0xff] %v5141
    %5208 = vst [vmem:[%s2742 + $0x78] sm:$0xff] %v5143
    %5209 = vst [vmem:[%s2742 + $0x80] sm:$0xff] %v5046
    %5210 = vst [vmem:[%s2742 + $0x88] sm:$0xff] %v5048
    %5211 = vst [vmem:[%s2742 + $0x90] sm:$0xff] %v5147
    %5212 = vst [vmem:[%s2742 + $0x98] sm:$0xff] %v5149
    %5213 = vst [vmem:[%s2742 + $0xa0] sm:$0xff] %v5050
    %5214 = vst [vmem:[%s2742 + $0xa8] sm:$0xff] %v5052
    %5215 = vst [vmem:[%s2742 + $0xb0] sm:$0xff] %v5151
    %5216 = vst [vmem:[%s2742 + $0xb8] sm:$0xff] %v5153
    %5217 = vst [vmem:[%s2742 + $0xc0] sm:$0xff] %v5056
    %5218 = vst [vmem:[%s2742 + $0xc8] sm:$0xff] %v5058
    %5219 = vst [vmem:[%s2742 + $0xd0] sm:$0xff] %v5157
    %5220 = vst [vmem:[%s2742 + $0xd8] sm:$0xff] %v5159
    %5221 = vst [vmem:[%s2742 + $0xe0] sm:$0xff] %v5060
    %5222 = vst [vmem:[%s2742 + $0xe8] sm:$0xff] %v5062
    %5223 = vst [vmem:[%s2742 + $0xf0] sm:$0xff] %v5161
    %5224 = vst [vmem:[%s2742 + $0xf8] sm:$0xff] %v5163
    %5225 = vst [vmem:[%s2742 + $0x100] sm:$0xff] %v5066
    %5226 = vst [vmem:[%s2742 + $0x108] sm:$0xff] %v5068
    %5227 = vst [vmem:[%s2742 + $0x110] sm:$0xff] %v5167
    %5228 = vst [vmem:[%s2742 + $0x118] sm:$0xff] %v5169
    %5229 = vst [vmem:[%s2742 + $0x120] sm:$0xff] %v5070
    %5230 = vst [vmem:[%s2742 + $0x128] sm:$0xff] %v5072
    %5231 = vst [vmem:[%s2742 + $0x130] sm:$0xff] %v5171
    %5232 = vst [vmem:[%s2742 + $0x138] sm:$0xff] %v5173
    %5233 = vst [vmem:[%s2742 + $0x140] sm:$0xff] %v5076
    %5234 = vst [vmem:[%s2742 + $0x148] sm:$0xff] %v5078
    %5235 = vst [vmem:[%s2742 + $0x150] sm:$0xff] %v5177
    %5236 = vst [vmem:[%s2742 + $0x158] sm:$0xff] %v5179
    %5237 = vst [vmem:[%s2742 + $0x160] sm:$0xff] %v5080
    %5238 = vst [vmem:[%s2742 + $0x168] sm:$0xff] %v5082
    %5239 = vst [vmem:[%s2742 + $0x170] sm:$0xff] %v5181
    %5240 = vst [vmem:[%s2742 + $0x178] sm:$0xff] %v5183
    %5241 = vst [vmem:[%s2742 + $0x180] sm:$0xf] %v5086
    %5242 = vst [vmem:[%s2742 + $0x188] sm:$0xf] %v5088
    %5243 = vst [vmem:[%s2742 + $0x190] sm:$0xf] %v5187
    %5244 = vst [vmem:[%s2742 + $0x198] sm:$0xf] %v5189
    loop: start=0, step=1, limit=50
    $region65: #{tpu_custom_call.1} parent=1 // loop_pre_header
      _
    $region66: #{tpu_custom_call.1} parent=1 // loop_header
      %s5246 = sphi 0, %s5250
      %p5247 = scmp.ge.s32.totalorder %s5246, 50
      %v5251 = vphi 0.0, %v5992
      %v5252 = vphi 0.0, %v5990
    $region67: #{tpu_custom_call.1} parent=1 // loop_header_branch
      %5249 = sbr.rel (%p5247) target = $region71
    $region68: #{tpu_custom_call.1} parent=1 // loop_body
      %s5253 = smul.u32 %s5246, 2
      %s5254 = sshra.s32 %s5253, 3
      %s5255 = sand.u32 %s5253, 7
      %s5256 = sshra.s32 %s5253, 3
      %s5257 = sand.u32 %s5253, 7
      %s5258 = smul.u32 %s5254, 4
      %s5259 = smul.u32 %s5258, 8
      %s5260 = sadd.s32 %s5259, %s5257
      %s5261 = scalar_lea.vmem [#allocation3], %s5260
      %v5262 = vld [vmem:[%s5261] ss:$8 sm:$0xf]
      %s5263 = sadd.s32 416, %s5260
      %s5264 = scalar_lea.vmem [#allocation3], %s5263
      %v5265 = vld [vmem:[%s5264] ss:$8 sm:$0xf]
      %v5267 = vlaneseq
      %v5268 = vshrl.u32 %v5267, 7
      %v5269 = vsub.s32 0, %v5268
      %v5270 = vrot.slane %v5262, %v5269
      %v5271 = vlaneseq
      %v5272 = vshrl.u32 %v5271, 7
      %v5273 = vsub.s32 1, %v5272
      %v5274 = vrot.slane %v5262, %v5273
      %v5275 = vlaneseq
      %v5276 = vshrl.u32 %v5275, 7
      %v5277 = vsub.s32 2, %v5276
      %v5278 = vrot.slane %v5262, %v5277
      %v5279 = vlaneseq
      %v5280 = vshrl.u32 %v5279, 7
      %v5281 = vsub.s32 3, %v5280
      %v5282 = vrot.slane %v5262, %v5281
      %v5288 = vlaneseq
      %v5289 = vshrl.u32 %v5288, 7
      %v5290 = vsub.s32 0, %v5289
      %v5291 = vrot.slane %v5265, %v5290
      %v5292 = vlaneseq
      %v5293 = vshrl.u32 %v5292, 7
      %v5294 = vsub.s32 1, %v5293
      %v5295 = vrot.slane %v5265, %v5294
      %v5296 = vlaneseq
      %v5297 = vshrl.u32 %v5296, 7
      %v5298 = vsub.s32 2, %v5297
      %v5299 = vrot.slane %v5265, %v5298
      %v5300 = vlaneseq
      %v5301 = vshrl.u32 %v5300, 7
      %v5302 = vsub.s32 3, %v5301
      %v5303 = vrot.slane %v5265, %v5302
      %v5308 = vsel %vm74, %v5270, %v5291
      %v5309 = vsel %vm74, %v5274, %v5295
      %v5310 = vsel %vm74, %v5278, %v5299
      %v5311 = vsel %vm74, %v5282, %v5303
      %v5312 = vpack.c.bf16 %v5251, %v5251
      %s5313 = scalar_lea.vmem [#allocation6], 256
      %v5314 = vld [vmem:[%s5313] sm:$0xff]
      %v5315 = vld [vmem:[%s5313 + $0x8] sm:$0xff]
      %v5316 = vld [vmem:[%s5313 + $0x10] sm:$0xff]
      %v5317 = vld [vmem:[%s5313 + $0x18] sm:$0xff]
      %v5318 = vld [vmem:[%s5313 + $0x20] sm:$0xff]
      %v5319 = vld [vmem:[%s5313 + $0x28] sm:$0xff]
      %v5320 = vld [vmem:[%s5313 + $0x30] sm:$0xff]
      %v5321 = vld [vmem:[%s5313 + $0x38] sm:$0xff]
      %v5322 = vld [vmem:[%s5313 + $0x40] sm:$0xff]
      %v5323 = vld [vmem:[%s5313 + $0x48] sm:$0xff]
      %v5324 = vld [vmem:[%s5313 + $0x50] sm:$0xff]
      %v5325 = vld [vmem:[%s5313 + $0x58] sm:$0xff]
      %v5326 = vld [vmem:[%s5313 + $0x60] sm:$0xff]
      %v5327 = vld [vmem:[%s5313 + $0x68] sm:$0xff]
      %v5328 = vld [vmem:[%s5313 + $0x70] sm:$0xff]
      %v5329 = vld [vmem:[%s5313 + $0x78] sm:$0xff]
      %v5330 = vld [vmem:[%s5313 + $0x80] sm:$0xff]
      %v5331 = vld [vmem:[%s5313 + $0x88] sm:$0xff]
      %v5332 = vld [vmem:[%s5313 + $0x90] sm:$0xff]
      %v5333 = vld [vmem:[%s5313 + $0x98] sm:$0xff]
      %v5334 = vld [vmem:[%s5313 + $0xa0] sm:$0xff]
      %v5335 = vld [vmem:[%s5313 + $0xa8] sm:$0xff]
      %v5336 = vld [vmem:[%s5313 + $0xb0] sm:$0xff]
      %v5337 = vld [vmem:[%s5313 + $0xb8] sm:$0xff]
      %v5338 = vld [vmem:[%s5313 + $0xc0] sm:$0xff]
      %v5339 = vld [vmem:[%s5313 + $0xc8] sm:$0xff]
      %v5340 = vld [vmem:[%s5313 + $0xd0] sm:$0xff]
      %v5341 = vld [vmem:[%s5313 + $0xd8] sm:$0xff]
      %v5342 = vld [vmem:[%s5313 + $0xe0] sm:$0xff]
      %v5343 = vld [vmem:[%s5313 + $0xe8] sm:$0xff]
      %v5344 = vld [vmem:[%s5313 + $0xf0] sm:$0xff]
      %v5345 = vld [vmem:[%s5313 + $0xf8] sm:$0xff]
      %v5378 = vunpack.c.l.b16 %v5314
      %v5379 = vunpack.c.h.b16 %v5314
      %v5380 = vunpack.c.l.b16 %v5315
      %v5381 = vunpack.c.h.b16 %v5315
      %v5382 = vunpack.c.l.b16 %v5316
      %v5383 = vunpack.c.h.b16 %v5316
      %v5384 = vunpack.c.l.b16 %v5317
      %v5385 = vunpack.c.h.b16 %v5317
      %v5386 = vunpack.c.l.b16 %v5318
      %v5387 = vunpack.c.h.b16 %v5318
      %v5388 = vunpack.c.l.b16 %v5319
      %v5389 = vunpack.c.h.b16 %v5319
      %v5390 = vunpack.c.l.b16 %v5320
      %v5391 = vunpack.c.h.b16 %v5320
      %v5392 = vunpack.c.l.b16 %v5321
      %v5393 = vunpack.c.h.b16 %v5321
      %v5394 = vunpack.c.l.b16 %v5322
      %v5395 = vunpack.c.h.b16 %v5322
      %v5396 = vunpack.c.l.b16 %v5323
      %v5397 = vunpack.c.h.b16 %v5323
      %v5398 = vunpack.c.l.b16 %v5324
      %v5399 = vunpack.c.h.b16 %v5324
      %v5400 = vunpack.c.l.b16 %v5325
      %v5401 = vunpack.c.h.b16 %v5325
      %v5402 = vunpack.c.l.b16 %v5326
      %v5403 = vunpack.c.h.b16 %v5326
      %v5404 = vunpack.c.l.b16 %v5327
      %v5405 = vunpack.c.h.b16 %v5327
      %v5406 = vunpack.c.l.b16 %v5328
      %v5407 = vunpack.c.h.b16 %v5328
      %v5408 = vunpack.c.l.b16 %v5329
      %v5409 = vunpack.c.h.b16 %v5329
      %v5410 = vunpack.c.l.b16 %v5330
      %v5411 = vunpack.c.h.b16 %v5330
      %v5412 = vunpack.c.l.b16 %v5331
      %v5413 = vunpack.c.h.b16 %v5331
      %v5414 = vunpack.c.l.b16 %v5332
      %v5415 = vunpack.c.h.b16 %v5332
      %v5416 = vunpack.c.l.b16 %v5333
      %v5417 = vunpack.c.h.b16 %v5333
      %v5418 = vunpack.c.l.b16 %v5334
      %v5419 = vunpack.c.h.b16 %v5334
      %v5420 = vunpack.c.l.b16 %v5335
      %v5421 = vunpack.c.h.b16 %v5335
      %v5422 = vunpack.c.l.b16 %v5336
      %v5423 = vunpack.c.h.b16 %v5336
      %v5424 = vunpack.c.l.b16 %v5337
      %v5425 = vunpack.c.h.b16 %v5337
      %v5426 = vunpack.c.l.b16 %v5338
      %v5427 = vunpack.c.h.b16 %v5338
      %v5428 = vunpack.c.l.b16 %v5339
      %v5429 = vunpack.c.h.b16 %v5339
      %v5430 = vunpack.c.l.b16 %v5340
      %v5431 = vunpack.c.h.b16 %v5340
      %v5432 = vunpack.c.l.b16 %v5341
      %v5433 = vunpack.c.h.b16 %v5341
      %v5434 = vunpack.c.l.b16 %v5342
      %v5435 = vunpack.c.h.b16 %v5342
      %v5436 = vunpack.c.l.b16 %v5343
      %v5437 = vunpack.c.h.b16 %v5343
      %v5438 = vunpack.c.l.b16 %v5344
      %v5439 = vunpack.c.h.b16 %v5344
      %v5440 = vunpack.c.l.b16 %v5345
      %v5441 = vunpack.c.h.b16 %v5345
      %v5442 = vpack.c.b16 %v5382, %v5378
      %v5443 = vpack.c.b16 %v5383, %v5379
      %v5444 = vpack.c.b16 %v5384, %v5380
      %v5445 = vpack.c.b16 %v5385, %v5381
      %v5446 = vpack.c.b16 %v5390, %v5386
      %v5447 = vpack.c.b16 %v5391, %v5387
      %v5448 = vpack.c.b16 %v5392, %v5388
      %v5449 = vpack.c.b16 %v5393, %v5389
      %v5450 = vpack.c.b16 %v5398, %v5394
      %v5451 = vpack.c.b16 %v5399, %v5395
      %v5452 = vpack.c.b16 %v5400, %v5396
      %v5453 = vpack.c.b16 %v5401, %v5397
      %v5454 = vpack.c.b16 %v5406, %v5402
      %v5455 = vpack.c.b16 %v5407, %v5403
      %v5456 = vpack.c.b16 %v5408, %v5404
      %v5457 = vpack.c.b16 %v5409, %v5405
      %v5458 = vpack.c.b16 %v5414, %v5410
      %v5459 = vpack.c.b16 %v5415, %v5411
      %v5460 = vpack.c.b16 %v5416, %v5412
      %v5461 = vpack.c.b16 %v5417, %v5413
      %v5462 = vpack.c.b16 %v5422, %v5418
      %v5463 = vpack.c.b16 %v5423, %v5419
      %v5464 = vpack.c.b16 %v5424, %v5420
      %v5465 = vpack.c.b16 %v5425, %v5421
      %v5466 = vpack.c.b16 %v5430, %v5426
      %v5467 = vpack.c.b16 %v5431, %v5427
      %v5468 = vpack.c.b16 %v5432, %v5428
      %v5469 = vpack.c.b16 %v5433, %v5429
      %v5470 = vpack.c.b16 %v5438, %v5434
      %v5471 = vpack.c.b16 %v5439, %v5435
      %v5472 = vpack.c.b16 %v5440, %v5436
      %v5473 = vpack.c.b16 %v5441, %v5437
      %5506 = vmatprep.subr.bf16.mxu0 %v5443
      %5507 = vmatpush1.bf16.msra.mxu0 %v5442
      %5508 = vmatprep.subr.bf16.mxu0 %v5447
      %5509 = vmatpush1.bf16.msra.mxu0 %v5446
      %5510 = vmatprep.subr.bf16.mxu0 %v5451
      %5511 = vmatpush1.bf16.msra.mxu0 %v5450
      %5512 = vmatprep.subr.bf16.mxu0 %v5455
      %5513 = vmatpush1.bf16.msra.mxu0 %v5454
      %5514 = vmatprep.subr.bf16.mxu0 %v5459
      %5515 = vmatpush1.bf16.msra.mxu0 %v5458
      %5516 = vmatprep.subr.bf16.mxu0 %v5463
      %5517 = vmatpush1.bf16.msra.mxu0 %v5462
      %5518 = vmatprep.subr.bf16.mxu0 %v5467
      %5519 = vmatpush1.bf16.msra.mxu0 %v5466
      %5520 = vmatprep.subr.bf16.mxu0 %v5471
      %5521 = vmatpush1.bf16.msra.mxu0 %v5470
      %5522 = vmatprep.subr.bf16.mxu0 0
      %5523 = vmatpush1.bf16.msra.mxu0 0
      %5524 = vmatprep.subr.bf16.mxu0 0
      %5525 = vmatpush1.bf16.msra.mxu0 0
      %5526 = vmatprep.subr.bf16.mxu0 0
      %5527 = vmatpush1.bf16.msra.mxu0 0
      %5528 = vmatprep.subr.bf16.mxu0 0
      %5529 = vmatpush1.bf16.msra.mxu0 0
      %5530 = vmatprep.subr.bf16.mxu0 0
      %5531 = vmatpush1.bf16.msra.mxu0 0
      %5532 = vmatprep.subr.bf16.mxu0 0
      %5533 = vmatpush1.bf16.msra.mxu0 0
      %5534 = vmatprep.subr.bf16.mxu0 0
      %5535 = vmatpush1.bf16.msra.mxu0 0
      %5536 = vmatprep.subr.bf16.mxu0 0
      %5537 = vmatpush1.bf16.msra.mxu0 0
      %5538 = vmatprep.mubr.bf16.mxu0 0
      %5539 = vmatmul.mubr.bf16.gmra.mrb[0].mxu0 %v5312
      %v5540 = vpop.f32.mrb[0].mxu0
      %v5541 = vadd.f32 0.0, %v5540
      %v5542 = vpop.f32.mrb[0].mxu0
      %v5543 = vadd.f32 0.0, %v5542
      %v5544 = vpop.f32.mrb[0].mxu0
      %v5545 = vpop.f32.mrb[0].mxu0
      %5546 = vdwg.mxu0
      %5547 = vmatprep.subr.bf16.mxu0 %v5445
      %5548 = vmatpush1.bf16.msra.mxu0 %v5444
      %5549 = vmatprep.subr.bf16.mxu0 %v5449
      %5550 = vmatpush1.bf16.msra.mxu0 %v5448
      %5551 = vmatprep.subr.bf16.mxu0 %v5453
      %5552 = vmatpush1.bf16.msra.mxu0 %v5452
      %5553 = vmatprep.subr.bf16.mxu0 %v5457
      %5554 = vmatpush1.bf16.msra.mxu0 %v5456
      %5555 = vmatprep.subr.bf16.mxu0 %v5461
      %5556 = vmatpush1.bf16.msra.mxu0 %v5460
      %5557 = vmatprep.subr.bf16.mxu0 %v5465
      %5558 = vmatpush1.bf16.msra.mxu0 %v5464
      %5559 = vmatprep.subr.bf16.mxu0 %v5469
      %5560 = vmatpush1.bf16.msra.mxu0 %v5468
      %5561 = vmatprep.subr.bf16.mxu0 %v5473
      %5562 = vmatpush1.bf16.msra.mxu0 %v5472
      %5563 = vmatprep.subr.bf16.mxu0 0
      %5564 = vmatpush1.bf16.msra.mxu0 0
      %5565 = vmatprep.subr.bf16.mxu0 0
      %5566 = vmatpush1.bf16.msra.mxu0 0
      %5567 = vmatprep.subr.bf16.mxu0 0
      %5568 = vmatpush1.bf16.msra.mxu0 0
      %5569 = vmatprep.subr.bf16.mxu0 0
      %5570 = vmatpush1.bf16.msra.mxu0 0
      %5571 = vmatprep.subr.bf16.mxu0 0
      %5572 = vmatpush1.bf16.msra.mxu0 0
      %5573 = vmatprep.subr.bf16.mxu0 0
      %5574 = vmatpush1.bf16.msra.mxu0 0
      %5575 = vmatprep.subr.bf16.mxu0 0
      %5576 = vmatpush1.bf16.msra.mxu0 0
      %5577 = vmatprep.subr.bf16.mxu0 0
      %5578 = vmatpush1.bf16.msra.mxu0 0
      %5579 = vmatprep.mubr.bf16.mxu0 0
      %5580 = vmatmul.mubr.bf16.gmra.mrb[0].mxu0 %v5312
      %v5581 = vpop.f32.mrb[0].mxu0
      %v5582 = vadd.f32 0.0, %v5581
      %v5583 = vpop.f32.mrb[0].mxu0
      %v5584 = vadd.f32 0.0, %v5583
      %v5585 = vpop.f32.mrb[0].mxu0
      %v5586 = vpop.f32.mrb[0].mxu0
      %5587 = vdwg.mxu0
      %v5588 = vadd.f32 %v5308, %v5541
      %v5589 = vadd.f32 %v5309, %v5543
      %v5590 = vadd.f32 %v5310, %v5582
      %v5591 = vadd.f32 %v5311, %v5584
      %v5592 = vxor.u32 %v5588, 2147483648
      %v5593 = vmul.f32 %v5592, 1.442695
      %v5594 = vpow.pop %v5593
      %v5595 = vadd.f32 %v5594, 1.0
      %v5596 = vrcp.pop %v5595
      %v5597 = vmul.f32 1.0, %v5596
      %v5598 = vxor.u32 %v5589, 2147483648
      %v5599 = vmul.f32 %v5598, 1.442695
      %v5600 = vpow.pop %v5599
      %v5601 = vadd.f32 %v5600, 1.0
      %v5602 = vrcp.pop %v5601
      %v5603 = vmul.f32 1.0, %v5602
      %v5604 = vtanh.pop %v5590
      %v5605 = vxor.u32 %v5591, 2147483648
      %v5606 = vmul.f32 %v5605, 1.442695
      %v5607 = vpow.pop %v5606
      %v5608 = vadd.f32 %v5607, 1.0
      %v5609 = vrcp.pop %v5608
      %v5610 = vmul.f32 1.0, %v5609
      %v5611 = vmul.f32 %v5603, %v5252
      %v5612 = vmul.f32 %v5597, %v5604
      %v5613 = vadd.f32 %v5611, %v5612
      %v5614 = vtanh.pop %v5613
      %v5615 = vmul.f32 %v5610, %v5614
      %s5616 = ssub.s32 99, %s5253
      %s5617 = scalar_lea.vmem %s12, %s5253
      %vm5618 = vcmask 188416
      %5619 = vst.msk [vmem:[%s5617] sm:$0x1] %vm5618, %v5615
      %s5620 = scalar_lea.vmem %s12, %s5616
      %vm5621 = vcmask 385216
      %5622 = vst.msk [vmem:[%s5620] sm:$0x1] %vm5621, %v5615
      %s5623 = sadd.s32 %s5253, 104
      %s5624 = scalar_lea.vmem %s12, %s5623
      %vm5625 = vcmask 189441
      %5626 = vst.msk [vmem:[%s5624 - $0x1] sm:$0x2] %vm5625, %v5615
      %s5627 = sadd.s32 %s5616, 104
      %s5628 = scalar_lea.vmem %s12, %s5627
      %vm5629 = vcmask 386241
      %5630 = vst.msk [vmem:[%s5628 - $0x1] sm:$0x2] %vm5629, %v5615
      %s5631 = sadd.s32 %s5253, 1
      %s5632 = sshra.s32 %s5631, 3
      %s5633 = sand.u32 %s5631, 7
      %s5634 = sshra.s32 %s5631, 3
      %s5635 = sand.u32 %s5631, 7
      %s5636 = smul.u32 %s5632, 4
      %s5637 = smul.u32 %s5636, 8
      %s5638 = sadd.s32 %s5637, %s5635
      %s5639 = scalar_lea.vmem [#allocation3], %s5638
      %v5640 = vld [vmem:[%s5639] ss:$8 sm:$0xf]
      %s5641 = sadd.s32 416, %s5638
      %s5642 = scalar_lea.vmem [#allocation3], %s5641
      %v5643 = vld [vmem:[%s5642] ss:$8 sm:$0xf]
      %v5645 = vlaneseq
      %v5646 = vshrl.u32 %v5645, 7
      %v5647 = vsub.s32 0, %v5646
      %v5648 = vrot.slane %v5640, %v5647
      %v5649 = vlaneseq
      %v5650 = vshrl.u32 %v5649, 7
      %v5651 = vsub.s32 1, %v5650
      %v5652 = vrot.slane %v5640, %v5651
      %v5653 = vlaneseq
      %v5654 = vshrl.u32 %v5653, 7
      %v5655 = vsub.s32 2, %v5654
      %v5656 = vrot.slane %v5640, %v5655
      %v5657 = vlaneseq
      %v5658 = vshrl.u32 %v5657, 7
      %v5659 = vsub.s32 3, %v5658
      %v5660 = vrot.slane %v5640, %v5659
      %v5666 = vlaneseq
      %v5667 = vshrl.u32 %v5666, 7
      %v5668 = vsub.s32 0, %v5667
      %v5669 = vrot.slane %v5643, %v5668
      %v5670 = vlaneseq
      %v5671 = vshrl.u32 %v5670, 7
      %v5672 = vsub.s32 1, %v5671
      %v5673 = vrot.slane %v5643, %v5672
      %v5674 = vlaneseq
      %v5675 = vshrl.u32 %v5674, 7
      %v5676 = vsub.s32 2, %v5675
      %v5677 = vrot.slane %v5643, %v5676
      %v5678 = vlaneseq
      %v5679 = vshrl.u32 %v5678, 7
      %v5680 = vsub.s32 3, %v5679
      %v5681 = vrot.slane %v5643, %v5680
      %v5686 = vsel %vm74, %v5648, %v5669
      %v5687 = vsel %vm74, %v5652, %v5673
      %v5688 = vsel %vm74, %v5656, %v5677
      %v5689 = vsel %vm74, %v5660, %v5681
      %v5690 = vpack.c.bf16 %v5615, %v5615
      %v5691 = vld [vmem:[%s5313] sm:$0xff]
      %v5692 = vld [vmem:[%s5313 + $0x8] sm:$0xff]
      %v5693 = vld [vmem:[%s5313 + $0x10] sm:$0xff]
      %v5694 = vld [vmem:[%s5313 + $0x18] sm:$0xff]
      %v5695 = vld [vmem:[%s5313 + $0x20] sm:$0xff]
      %v5696 = vld [vmem:[%s5313 + $0x28] sm:$0xff]
      %v5697 = vld [vmem:[%s5313 + $0x30] sm:$0xff]
      %v5698 = vld [vmem:[%s5313 + $0x38] sm:$0xff]
      %v5699 = vld [vmem:[%s5313 + $0x40] sm:$0xff]
      %v5700 = vld [vmem:[%s5313 + $0x48] sm:$0xff]
      %v5701 = vld [vmem:[%s5313 + $0x50] sm:$0xff]
      %v5702 = vld [vmem:[%s5313 + $0x58] sm:$0xff]
      %v5703 = vld [vmem:[%s5313 + $0x60] sm:$0xff]
      %v5704 = vld [vmem:[%s5313 + $0x68] sm:$0xff]
      %v5705 = vld [vmem:[%s5313 + $0x70] sm:$0xff]
      %v5706 = vld [vmem:[%s5313 + $0x78] sm:$0xff]
      %v5707 = vld [vmem:[%s5313 + $0x80] sm:$0xff]
      %v5708 = vld [vmem:[%s5313 + $0x88] sm:$0xff]
      %v5709 = vld [vmem:[%s5313 + $0x90] sm:$0xff]
      %v5710 = vld [vmem:[%s5313 + $0x98] sm:$0xff]
      %v5711 = vld [vmem:[%s5313 + $0xa0] sm:$0xff]
      %v5712 = vld [vmem:[%s5313 + $0xa8] sm:$0xff]
      %v5713 = vld [vmem:[%s5313 + $0xb0] sm:$0xff]
      %v5714 = vld [vmem:[%s5313 + $0xb8] sm:$0xff]
      %v5715 = vld [vmem:[%s5313 + $0xc0] sm:$0xff]
      %v5716 = vld [vmem:[%s5313 + $0xc8] sm:$0xff]
      %v5717 = vld [vmem:[%s5313 + $0xd0] sm:$0xff]
      %v5718 = vld [vmem:[%s5313 + $0xd8] sm:$0xff]
      %v5719 = vld [vmem:[%s5313 + $0xe0] sm:$0xff]
      %v5720 = vld [vmem:[%s5313 + $0xe8] sm:$0xff]
      %v5721 = vld [vmem:[%s5313 + $0xf0] sm:$0xff]
      %v5722 = vld [vmem:[%s5313 + $0xf8] sm:$0xff]
      %v5755 = vunpack.c.l.b16 %v5691
      %v5756 = vunpack.c.h.b16 %v5691
      %v5757 = vunpack.c.l.b16 %v5692
      %v5758 = vunpack.c.h.b16 %v5692
      %v5759 = vunpack.c.l.b16 %v5693
      %v5760 = vunpack.c.h.b16 %v5693
      %v5761 = vunpack.c.l.b16 %v5694
      %v5762 = vunpack.c.h.b16 %v5694
      %v5763 = vunpack.c.l.b16 %v5695
      %v5764 = vunpack.c.h.b16 %v5695
      %v5765 = vunpack.c.l.b16 %v5696
      %v5766 = vunpack.c.h.b16 %v5696
      %v5767 = vunpack.c.l.b16 %v5697
      %v5768 = vunpack.c.h.b16 %v5697
      %v5769 = vunpack.c.l.b16 %v5698
      %v5770 = vunpack.c.h.b16 %v5698
      %v5771 = vunpack.c.l.b16 %v5699
      %v5772 = vunpack.c.h.b16 %v5699
      %v5773 = vunpack.c.l.b16 %v5700
      %v5774 = vunpack.c.h.b16 %v5700
      %v5775 = vunpack.c.l.b16 %v5701
      %v5776 = vunpack.c.h.b16 %v5701
      %v5777 = vunpack.c.l.b16 %v5702
      %v5778 = vunpack.c.h.b16 %v5702
      %v5779 = vunpack.c.l.b16 %v5703
      %v5780 = vunpack.c.h.b16 %v5703
      %v5781 = vunpack.c.l.b16 %v5704
      %v5782 = vunpack.c.h.b16 %v5704
      %v5783 = vunpack.c.l.b16 %v5705
      %v5784 = vunpack.c.h.b16 %v5705
      %v5785 = vunpack.c.l.b16 %v5706
      %v5786 = vunpack.c.h.b16 %v5706
      %v5787 = vunpack.c.l.b16 %v5707
      %v5788 = vunpack.c.h.b16 %v5707
      %v5789 = vunpack.c.l.b16 %v5708
      %v5790 = vunpack.c.h.b16 %v5708
      %v5791 = vunpack.c.l.b16 %v5709
      %v5792 = vunpack.c.h.b16 %v5709
      %v5793 = vunpack.c.l.b16 %v5710
      %v5794 = vunpack.c.h.b16 %v5710
      %v5795 = vunpack.c.l.b16 %v5711
      %v5796 = vunpack.c.h.b16 %v5711
      %v5797 = vunpack.c.l.b16 %v5712
      %v5798 = vunpack.c.h.b16 %v5712
      %v5799 = vunpack.c.l.b16 %v5713
      %v5800 = vunpack.c.h.b16 %v5713
      %v5801 = vunpack.c.l.b16 %v5714
      %v5802 = vunpack.c.h.b16 %v5714
      %v5803 = vunpack.c.l.b16 %v5715
      %v5804 = vunpack.c.h.b16 %v5715
      %v5805 = vunpack.c.l.b16 %v5716
      %v5806 = vunpack.c.h.b16 %v5716
      %v5807 = vunpack.c.l.b16 %v5717
      %v5808 = vunpack.c.h.b16 %v5717
      %v5809 = vunpack.c.l.b16 %v5718
      %v5810 = vunpack.c.h.b16 %v5718
      %v5811 = vunpack.c.l.b16 %v5719
      %v5812 = vunpack.c.h.b16 %v5719
      %v5813 = vunpack.c.l.b16 %v5720
      %v5814 = vunpack.c.h.b16 %v5720
      %v5815 = vunpack.c.l.b16 %v5721
      %v5816 = vunpack.c.h.b16 %v5721
      %v5817 = vunpack.c.l.b16 %v5722
      %v5818 = vunpack.c.h.b16 %v5722
      %v5819 = vpack.c.b16 %v5759, %v5755
      %v5820 = vpack.c.b16 %v5760, %v5756
      %v5821 = vpack.c.b16 %v5761, %v5757
      %v5822 = vpack.c.b16 %v5762, %v5758
      %v5823 = vpack.c.b16 %v5767, %v5763
      %v5824 = vpack.c.b16 %v5768, %v5764
      %v5825 = vpack.c.b16 %v5769, %v5765
      %v5826 = vpack.c.b16 %v5770, %v5766
      %v5827 = vpack.c.b16 %v5775, %v5771
      %v5828 = vpack.c.b16 %v5776, %v5772
      %v5829 = vpack.c.b16 %v5777, %v5773
      %v5830 = vpack.c.b16 %v5778, %v5774
      %v5831 = vpack.c.b16 %v5783, %v5779
      %v5832 = vpack.c.b16 %v5784, %v5780
      %v5833 = vpack.c.b16 %v5785, %v5781
      %v5834 = vpack.c.b16 %v5786, %v5782
      %v5835 = vpack.c.b16 %v5791, %v5787
      %v5836 = vpack.c.b16 %v5792, %v5788
      %v5837 = vpack.c.b16 %v5793, %v5789
      %v5838 = vpack.c.b16 %v5794, %v5790
      %v5839 = vpack.c.b16 %v5799, %v5795
      %v5840 = vpack.c.b16 %v5800, %v5796
      %v5841 = vpack.c.b16 %v5801, %v5797
      %v5842 = vpack.c.b16 %v5802, %v5798
      %v5843 = vpack.c.b16 %v5807, %v5803
      %v5844 = vpack.c.b16 %v5808, %v5804
      %v5845 = vpack.c.b16 %v5809, %v5805
      %v5846 = vpack.c.b16 %v5810, %v5806
      %v5847 = vpack.c.b16 %v5815, %v5811
      %v5848 = vpack.c.b16 %v5816, %v5812
      %v5849 = vpack.c.b16 %v5817, %v5813
      %v5850 = vpack.c.b16 %v5818, %v5814
      %5883 = vmatprep.subr.bf16.mxu0 %v5820
      %5884 = vmatpush1.bf16.msra.mxu0 %v5819
      %5885 = vmatprep.subr.bf16.mxu0 %v5824
      %5886 = vmatpush1.bf16.msra.mxu0 %v5823
      %5887 = vmatprep.subr.bf16.mxu0 %v5828
      %5888 = vmatpush1.bf16.msra.mxu0 %v5827
      %5889 = vmatprep.subr.bf16.mxu0 %v5832
      %5890 = vmatpush1.bf16.msra.mxu0 %v5831
      %5891 = vmatprep.subr.bf16.mxu0 %v5836
      %5892 = vmatpush1.bf16.msra.mxu0 %v5835
      %5893 = vmatprep.subr.bf16.mxu0 %v5840
      %5894 = vmatpush1.bf16.msra.mxu0 %v5839
      %5895 = vmatprep.subr.bf16.mxu0 %v5844
      %5896 = vmatpush1.bf16.msra.mxu0 %v5843
      %5897 = vmatprep.subr.bf16.mxu0 %v5848
      %5898 = vmatpush1.bf16.msra.mxu0 %v5847
      %5899 = vmatprep.subr.bf16.mxu0 0
      %5900 = vmatpush1.bf16.msra.mxu0 0
      %5901 = vmatprep.subr.bf16.mxu0 0
      %5902 = vmatpush1.bf16.msra.mxu0 0
      %5903 = vmatprep.subr.bf16.mxu0 0
      %5904 = vmatpush1.bf16.msra.mxu0 0
      %5905 = vmatprep.subr.bf16.mxu0 0
      %5906 = vmatpush1.bf16.msra.mxu0 0
      %5907 = vmatprep.subr.bf16.mxu0 0
      %5908 = vmatpush1.bf16.msra.mxu0 0
      %5909 = vmatprep.subr.bf16.mxu0 0
      %5910 = vmatpush1.bf16.msra.mxu0 0
      %5911 = vmatprep.subr.bf16.mxu0 0
      %5912 = vmatpush1.bf16.msra.mxu0 0
      %5913 = vmatprep.subr.bf16.mxu0 0
      %5914 = vmatpush1.bf16.msra.mxu0 0
      %5915 = vmatprep.mubr.bf16.mxu0 0
      %5916 = vmatmul.mubr.bf16.gmra.mrb[0].mxu0 %v5690
      %v5917 = vpop.f32.mrb[0].mxu0
      %v5918 = vadd.f32 0.0, %v5917
      %v5919 = vpop.f32.mrb[0].mxu0
      %v5920 = vadd.f32 0.0, %v5919
      %v5921 = vpop.f32.mrb[0].mxu0
      %v5922 = vpop.f32.mrb[0].mxu0
      %5923 = vdwg.mxu0
      %5924 = vmatprep.subr.bf16.mxu0 %v5822
      %5925 = vmatpush1.bf16.msra.mxu0 %v5821
      %5926 = vmatprep.subr.bf16.mxu0 %v5826
      %5927 = vmatpush1.bf16.msra.mxu0 %v5825
      %5928 = vmatprep.subr.bf16.mxu0 %v5830
      %5929 = vmatpush1.bf16.msra.mxu0 %v5829
      %5930 = vmatprep.subr.bf16.mxu0 %v5834
      %5931 = vmatpush1.bf16.msra.mxu0 %v5833
      %5932 = vmatprep.subr.bf16.mxu0 %v5838
      %5933 = vmatpush1.bf16.msra.mxu0 %v5837
      %5934 = vmatprep.subr.bf16.mxu0 %v5842
      %5935 = vmatpush1.bf16.msra.mxu0 %v5841
      %5936 = vmatprep.subr.bf16.mxu0 %v5846
      %5937 = vmatpush1.bf16.msra.mxu0 %v5845
      %5938 = vmatprep.subr.bf16.mxu0 %v5850
      %5939 = vmatpush1.bf16.msra.mxu0 %v5849
      %5940 = vmatprep.subr.bf16.mxu0 0
      %5941 = vmatpush1.bf16.msra.mxu0 0
      %5942 = vmatprep.subr.bf16.mxu0 0
      %5943 = vmatpush1.bf16.msra.mxu0 0
      %5944 = vmatprep.subr.bf16.mxu0 0
      %5945 = vmatpush1.bf16.msra.mxu0 0
      %5946 = vmatprep.subr.bf16.mxu0 0
      %5947 = vmatpush1.bf16.msra.mxu0 0
      %5948 = vmatprep.subr.bf16.mxu0 0
      %5949 = vmatpush1.bf16.msra.mxu0 0
      %5950 = vmatprep.subr.bf16.mxu0 0
      %5951 = vmatpush1.bf16.msra.mxu0 0
      %5952 = vmatprep.subr.bf16.mxu0 0
      %5953 = vmatpush1.bf16.msra.mxu0 0
      %5954 = vmatprep.subr.bf16.mxu0 0
      %5955 = vmatpush1.bf16.msra.mxu0 0
      %5956 = vmatprep.mubr.bf16.mxu0 0
      %5957 = vmatmul.mubr.bf16.gmra.mrb[0].mxu0 %v5690
      %v5958 = vpop.f32.mrb[0].mxu0
      %v5959 = vadd.f32 0.0, %v5958
      %v5960 = vpop.f32.mrb[0].mxu0
      %v5961 = vadd.f32 0.0, %v5960
      %v5962 = vpop.f32.mrb[0].mxu0
      %v5963 = vpop.f32.mrb[0].mxu0
      %5964 = vdwg.mxu0
      %v5965 = vadd.f32 %v5686, %v5918
      %v5966 = vadd.f32 %v5687, %v5920
      %v5967 = vadd.f32 %v5688, %v5959
      %v5968 = vadd.f32 %v5689, %v5961
      %v5969 = vxor.u32 %v5965, 2147483648
      %v5970 = vmul.f32 %v5969, 1.442695
      %v5971 = vpow.pop %v5970
      %v5972 = vadd.f32 %v5971, 1.0
      %v5973 = vrcp.pop %v5972
      %v5974 = vmul.f32 1.0, %v5973
      %v5975 = vxor.u32 %v5966, 2147483648
      %v5976 = vmul.f32 %v5975, 1.442695
      %v5977 = vpow.pop %v5976
      %v5978 = vadd.f32 %v5977, 1.0
      %v5979 = vrcp.pop %v5978
      %v5980 = vmul.f32 1.0, %v5979
      %v5981 = vtanh.pop %v5967
      %v5982 = vxor.u32 %v5968, 2147483648
      %v5983 = vmul.f32 %v5982, 1.442695
      %v5984 = vpow.pop %v5983
      %v5985 = vadd.f32 %v5984, 1.0
      %v5986 = vrcp.pop %v5985
      %v5987 = vmul.f32 1.0, %v5986
      %v5988 = vmul.f32 %v5980, %v5613
      %v5989 = vmul.f32 %v5974, %v5981
      %v5990 = vadd.f32 %v5988, %v5989
      %v5991 = vtanh.pop %v5990
      %v5992 = vmul.f32 %v5987, %v5991
      %s5993 = ssub.s32 98, %s5253
      %s5994 = scalar_lea.vmem %s12, %s5631
      %5995 = vst.msk [vmem:[%s5994] sm:$0x1] %vm5618, %v5992
      %s5996 = scalar_lea.vmem %s12, %s5993
      %5997 = vst.msk [vmem:[%s5996] sm:$0x1] %vm5621, %v5992
      %s5998 = sadd.s32 %s5631, 104
      %s5999 = scalar_lea.vmem %s12, %s5998
      %6000 = vst.msk [vmem:[%s5999 - $0x1] sm:$0x2] %vm5625, %v5992
      %s6001 = sadd.s32 %s5993, 104
      %s6002 = scalar_lea.vmem %s12, %s6001
      %6003 = vst.msk [vmem:[%s6002 - $0x1] sm:$0x2] %vm5629, %v5992
    $region69: #{tpu_custom_call.1} parent=1 // loop_footer
      %s5250 = sadd.s32 1, %s5246
    $region70: #{tpu_custom_call.1} parent=1 // loop_footer_branch
      %5245 = sbr.rel target = $region66
    $region71: #{tpu_custom_call.1} parent=1 // loop_exit
      _
    // Predicated region
    $region72: #{tpu_custom_call.1} parent=1 // pred_check
      _
    $region73: #{tpu_custom_call.1} parent=1 // pred_check_branch
      %6005 = sbr.rel (0) target = $region75
    $region74: #{tpu_custom_call.1} parent=1 // pred_region
      _
    $region75: #{tpu_custom_call.1} parent=1 // pred_fallthru
      _
    // Predicated region
    $region76: #{tpu_custom_call.1} parent=1 // pred_check
      _
    $region77: #{tpu_custom_call.1} parent=1 // pred_check_branch
      %6007 = sbr.rel (0) target = $region79
    $region78: #{tpu_custom_call.1} parent=1 // pred_region
      _
    $region79: #{tpu_custom_call.1} parent=1 // pred_fallthru
      _
    %6008 = vsyncpa [#allocation5], 1
    %6009 = vsyncpa [#allocation7], 1

</llo_original>
